<compile_context>
chip_gen: v7x
topology: tpu7x:2x2x1
jax: 0.10.0
libtpu: 0.0.40
codegen_flags: <defaults>
</compile_context>

<pallas_src>
import functools

import jax
import jax.numpy as jnp
from jax import lax
from jax.experimental import pallas as pl
from jax.experimental.pallas import tpu as pltpu

EPS = 1e-3     # BatchNorm2d(eps=0.001)
LANES = 128    # lane-dense padded channel width


def _pick_chunk(m_total, cap=256):
    """Largest multiple of 16 (fallback 8) <= cap that divides m_total."""
    for step in (16, 8):
        best = 0
        for d in range(step, cap + 1, step):
            if m_total % d == 0:
                best = d
        if best:
            return best
    return m_total


def conv_bn_relu_kernel(x_ref, w_ref, gamma_ref, beta_ref, out_ref, *,
                        n_batch, hout, wout, wp_pad, hext, khs, kws,
                        m_chunk, eps):
    """Shift-and-matmul 3x3 conv + batch-stat BN + ReLU.

    x_ref:     [N*hext*wp_pad, 128] bf16 -- zero-padded NHWC image, flattened
               row-major (each image gets `hext` rows of width `wp_pad`).
    w_ref:     [KH*KW, 128, 128] bf16 -- tap-major (Cin_pad x Cout_pad).
    gamma_ref, beta_ref: [1, 128] f32 (zero-padded affine params).
    out_ref:   [N*hout*wp_pad, 128] f32 -- also the pre-BN staging buffer.
    """
    m_img = hout * wp_pad                         # flattened rows per image
    n_chunks = m_img // m_chunk
    win_rows = m_chunk + (khs - 1) * wp_pad + (kws - 1)
    inv_m = 1.0 / float(n_batch * hout * wout)    # true element count

    # ---- pass 1: conv (bf16 MXU, f32 acc) + masked per-channel sum/sumsq ----
    s = jnp.zeros((1, LANES), jnp.float32)
    ss = jnp.zeros((1, LANES), jnp.float32)
    for n in range(n_batch):
        in_base = n * hext * wp_pad
        out_base = n * m_img
        for c in range(n_chunks):
            o0 = c * m_chunk
            # One contiguous, tile-aligned window load per chunk.
            win = x_ref[pl.ds(in_base + o0, win_rows), :]        # [win,128] bf16
            acc = None
            for kh in range(khs):
                for kw in range(kws):
                    off = kh * wp_pad + kw
                    lhs = win[off:off + m_chunk, :]               # [M,128] bf16
                    p = jnp.dot(lhs, w_ref[kh * kws + kw],
                                preferred_element_type=jnp.float32)
                    acc = p if acc is None else acc + p
            out_ref[pl.ds(out_base + o0, m_chunk), :] = acc       # stash pre-BN

            # Mask out padded width columns (w >= wout) for the statistics.
            pos = lax.broadcasted_iota(jnp.int32, (m_chunk, LANES), 0) + o0
            if wp_pad & (wp_pad - 1) == 0:
                wcol = jnp.bitwise_and(pos, wp_pad - 1)
            else:
                wcol = pos % wp_pad
            masked = jnp.where(wcol < wout, acc, 0.0)
            s = s + jnp.sum(masked, axis=0, keepdims=True)
            ss = ss + jnp.sum(masked * masked, axis=0, keepdims=True)

    # ---- batch statistics (biased variance, PyTorch training-mode norm) ----
    mean = s * inv_m
    var = ss * inv_m - mean * mean
    inv_std = lax.rsqrt(var + eps)
    scale = gamma_ref[...] * inv_std              # [1, 128]
    shift = beta_ref[...] - mean * scale          # [1, 128]

    # ---- pass 2: normalize + affine + ReLU, large in-place chunks ----
    total = n_batch * m_img
    for c in range(total // m_chunk):
        o0 = c * m_chunk
        v = out_ref[pl.ds(o0, m_chunk), :]
        out_ref[pl.ds(o0, m_chunk), :] = jnp.maximum(v * scale + shift, 0.0)


def conv2d_bn_relu(x_nchw, w_oihw, gamma, beta, *, eps=EPS):
    """x_nchw: [N, Cin, H, W] f32, w_oihw: [Cout, Cin, KH, KW] f32."""
    N, Cin, H, W = x_nchw.shape
    Cout, _, KH, KW = w_oihw.shape
    PH, PW = KH // 2, KW // 2                      # padding=(1, 1)
    Hp, Wp = H + 2 * PH, W + 2 * PW
    C = LANES

    # Width padded to a multiple of 32 (sublane friendly, power-of-two modulo);
    # one extra zero row per image so flat tap-shifted slices stay in bounds.
    Wp_pad = ((Wp + 31) // 32) * 32
    Hext = Hp + 1

    # NCHW -> NHWC, spatial zero-pad (+extra bottom row, +right columns),
    # channel zero-pad to 128, flatten rows, cast to bf16.
    x = jnp.transpose(x_nchw, (0, 2, 3, 1))
    xp = jnp.pad(x, ((0, 0),
                     (PH, Hext - H - PH),
                     (PW, Wp_pad - W - PW),
                     (0, C - Cin)))
    xp = xp.reshape(N * Hext * Wp_pad, C).astype(jnp.bfloat16)

    # OIHW -> (KH, KW, Cin, Cout), zero-pad channels -> [KH*KW, 128, 128] bf16.
    w = jnp.transpose(w_oihw, (2, 3, 1, 0))
    w = jnp.pad(w, ((0, 0), (0, 0), (0, C - Cin), (0, C - Cout)))
    w = w.reshape(KH * KW, C, C).astype(jnp.bfloat16)

    g = jnp.pad(gamma, (0, C - Cout)).reshape(1, C).astype(jnp.float32)
    b = jnp.pad(beta, (0, C - Cout)).reshape(1, C).astype(jnp.float32)

    m_img = H * Wp_pad
    m_chunk = _pick_chunk(m_img)
    assert m_img % m_chunk == 0

    kernel = functools.partial(
        conv_bn_relu_kernel, n_batch=N, hout=H, wout=W, wp_pad=Wp_pad,
        hext=Hext, khs=KH, kws=KW, m_chunk=m_chunk, eps=eps)

    out = pl.pallas_call(
        kernel,
        out_shape=jax.ShapeDtypeStruct((N * H * Wp_pad, C), jnp.float32),
        grid_spec=pltpu.PrefetchScalarGridSpec(
            num_scalar_prefetch=0,
            grid=(1,),
            in_specs=[
                pl.BlockSpec((N * Hext * Wp_pad, C), lambda i: (0, 0)),
                pl.BlockSpec((KH * KW, C, C), lambda i: (0, 0, 0)),
                pl.BlockSpec((1, C), lambda i: (0, 0)),
                pl.BlockSpec((1, C), lambda i: (0, 0)),
            ],
            out_specs=pl.BlockSpec((N * H * Wp_pad, C), lambda i: (0, 0)),
        ),
        compiler_params=pltpu.CompilerParams(
            dimension_semantics=("arbitrary",),
        ),
    )(xp, w, g, b)

    # [N*H*Wp_pad, 128] -> [N, H, Wp_pad, 128] -> valid window -> NCHW.
    out = out.reshape(N, H, Wp_pad, C)[:, :, :W, :Cout]
    return jnp.transpose(out, (0, 3, 1, 2))


def reference(x_nchw, w_oihw, gamma, beta):
    conv = lax.conv_general_dilated(
        x_nchw, w_oihw, window_strides=(1, 1), padding=((1, 1), (1, 1)),
        dimension_numbers=("NCHW", "OIHW", "NCHW"))
    mean = conv.mean(axis=(0, 2, 3), keepdims=True)
    var = conv.var(axis=(0, 2, 3), keepdims=True)         # biased
    y = (conv - mean) * lax.rsqrt(var + EPS)
    y = y * gamma.reshape(1, -1, 1, 1) + beta.reshape(1, -1, 1, 1)
    return jnp.maximum(y, 0.0)


if __name__ == "__main__":
    # Shapes implied by the module: Conv2d(96, 96, 3x3), input [1, 96, 25, 25].
    N, Cin, Cout, H, W = 1, 96, 96, 25, 25

    key = jax.random.PRNGKey(0)
    k1, k2, k3, k4 = jax.random.split(key, 4)
    x = jax.random.normal(k1, (N, Cin, H, W), dtype=jnp.float32)
    conv_w = 0.05 * jax.random.normal(k2, (Cout, Cin, 3, 3), dtype=jnp.float32)
    gamma = 1.0 + 0.1 * jax.random.normal(k3, (Cout,), dtype=jnp.float32)
    beta = 0.1 * jax.random.normal(k4, (Cout,), dtype=jnp.float32)

    out = jax.block_until_ready(conv2d_bn_relu(x, conv_w, gamma, beta))

    assert out.shape == (N, Cout, H, W), out.shape
    ref = reference(x, conv_w, gamma, beta)
    max_err = float(jnp.max(jnp.abs(out - ref)))
    if max_err < 5e-2:
        print("KERNEL_OK")
    else:
        print(f"MISMATCH max_err={max_err}")
</pallas_src>

<mosaic_0001>
module attributes {stable_mosaic.version = 11 : i64} {
  func.func @conv_bn_relu_kernel(%arg0: i32, %arg1: memref<896x128xbf16, #tpu.memory_space<vmem>>, %arg2: memref<9x128x128xbf16, #tpu.memory_space<vmem>>, %arg3: memref<1x128xf32, #tpu.memory_space<vmem>>, %arg4: memref<1x128xf32, #tpu.memory_space<vmem>>, %arg5: memref<800x128xf32, #tpu.memory_space<vmem>>) attributes {dimension_semantics = [#tpu.dimension_semantics<arbitrary>], iteration_bounds = array<i64: 1>, scalar_prefetch = 0 : i64, scratch_operands = 0 : i64, tpu.core_type = #tpu.core_type<tc>, window_params = [{pipeline_mode = #tpu.pipeline_mode<synchronous>, transform_indices = @transform_0, window_bounds = array<i64: 896, 128>}, {pipeline_mode = #tpu.pipeline_mode<synchronous>, transform_indices = @transform_1, window_bounds = array<i64: 9, 128, 128>}, {pipeline_mode = #tpu.pipeline_mode<synchronous>, transform_indices = @transform_2, window_bounds = array<i64: 1, 128>}, {pipeline_mode = #tpu.pipeline_mode<synchronous>, transform_indices = @transform_3, window_bounds = array<i64: 1, 128>}, {pipeline_mode = #tpu.pipeline_mode<synchronous>, transform_indices = @transform_4, window_bounds = array<i64: 800, 128>}]} {
    %cst = arith.constant 0.000000e+00 : f32
    %0 = vector.broadcast %cst : f32 to vector<1x128xf32>
    %cst_0 = arith.constant 0.000000e+00 : f32
    %1 = vector.broadcast %cst_0 : f32 to vector<1x128xf32>
    %c0 = arith.constant 0 : index
    %c0_1 = arith.constant 0 : index
    %2 = vector.load %arg1[%c0, %c0_1] : memref<896x128xbf16, #tpu.memory_space<vmem>>, vector<226x128xbf16>
    %3 = vector.extract_strided_slice %2 {offsets = [0, 0], sizes = [160, 128], strides = [1, 1]} : vector<226x128xbf16> to vector<160x128xbf16>
    %c0_2 = arith.constant 0 : index
    %c0_3 = arith.constant 0 : index
    %c0_4 = arith.constant 0 : index
    %4 = vector.load %arg2[%c0_2, %c0_3, %c0_4] : memref<9x128x128xbf16, #tpu.memory_space<vmem>>, vector<1x128x128xbf16>
    %5 = vector.shape_cast %4 : vector<1x128x128xbf16> to vector<128x128xbf16>
    %cst_5 = arith.constant dense<0.000000e+00> : vector<160x128xf32>
    %6 = tpu.matmul %3, %5, %cst_5 {dimension_numbers = #tpu.dot_dimension_numbers<[1], [0], [0], [1], [0, 0, 1, 1], [], []>} : vector<160x128xbf16>, vector<128x128xbf16>, vector<160x128xf32> -> vector<160x128xf32>
    %7 = vector.extract_strided_slice %2 {offsets = [1, 0], sizes = [160, 128], strides = [1, 1]} : vector<226x128xbf16> to vector<160x128xbf16>
    %c1 = arith.constant 1 : index
    %c0_6 = arith.constant 0 : index
    %c0_7 = arith.constant 0 : index
    %8 = vector.load %arg2[%c1, %c0_6, %c0_7] : memref<9x128x128xbf16, #tpu.memory_space<vmem>>, vector<1x128x128xbf16>
    %9 = vector.shape_cast %8 : vector<1x128x128xbf16> to vector<128x128xbf16>
    %cst_8 = arith.constant dense<0.000000e+00> : vector<160x128xf32>
    %10 = tpu.matmul %7, %9, %cst_8 {dimension_numbers = #tpu.dot_dimension_numbers<[1], [0], [0], [1], [0, 0, 1, 1], [], []>} : vector<160x128xbf16>, vector<128x128xbf16>, vector<160x128xf32> -> vector<160x128xf32>
    %11 = arith.addf %6, %10 : vector<160x128xf32>
    %12 = vector.extract_strided_slice %2 {offsets = [2, 0], sizes = [160, 128], strides = [1, 1]} : vector<226x128xbf16> to vector<160x128xbf16>
    %c2 = arith.constant 2 : index
    %c0_9 = arith.constant 0 : index
    %c0_10 = arith.constant 0 : index
    %13 = vector.load %arg2[%c2, %c0_9, %c0_10] : memref<9x128x128xbf16, #tpu.memory_space<vmem>>, vector<1x128x128xbf16>
    %14 = vector.shape_cast %13 : vector<1x128x128xbf16> to vector<128x128xbf16>
    %cst_11 = arith.constant dense<0.000000e+00> : vector<160x128xf32>
    %15 = tpu.matmul %12, %14, %cst_11 {dimension_numbers = #tpu.dot_dimension_numbers<[1], [0], [0], [1], [0, 0, 1, 1], [], []>} : vector<160x128xbf16>, vector<128x128xbf16>, vector<160x128xf32> -> vector<160x128xf32>
    %16 = arith.addf %11, %15 : vector<160x128xf32>
    %17 = vector.extract_strided_slice %2 {offsets = [32, 0], sizes = [160, 128], strides = [1, 1]} : vector<226x128xbf16> to vector<160x128xbf16>
    %c3 = arith.constant 3 : index
    %c0_12 = arith.constant 0 : index
    %c0_13 = arith.constant 0 : index
    %18 = vector.load %arg2[%c3, %c0_12, %c0_13] : memref<9x128x128xbf16, #tpu.memory_space<vmem>>, vector<1x128x128xbf16>
    %19 = vector.shape_cast %18 : vector<1x128x128xbf16> to vector<128x128xbf16>
    %cst_14 = arith.constant dense<0.000000e+00> : vector<160x128xf32>
    %20 = tpu.matmul %17, %19, %cst_14 {dimension_numbers = #tpu.dot_dimension_numbers<[1], [0], [0], [1], [0, 0, 1, 1], [], []>} : vector<160x128xbf16>, vector<128x128xbf16>, vector<160x128xf32> -> vector<160x128xf32>
    %21 = arith.addf %16, %20 : vector<160x128xf32>
    %22 = vector.extract_strided_slice %2 {offsets = [33, 0], sizes = [160, 128], strides = [1, 1]} : vector<226x128xbf16> to vector<160x128xbf16>
    %c4 = arith.constant 4 : index
    %c0_15 = arith.constant 0 : index
    %c0_16 = arith.constant 0 : index
    %23 = vector.load %arg2[%c4, %c0_15, %c0_16] : memref<9x128x128xbf16, #tpu.memory_space<vmem>>, vector<1x128x128xbf16>
    %24 = vector.shape_cast %23 : vector<1x128x128xbf16> to vector<128x128xbf16>
    %cst_17 = arith.constant dense<0.000000e+00> : vector<160x128xf32>
    %25 = tpu.matmul %22, %24, %cst_17 {dimension_numbers = #tpu.dot_dimension_numbers<[1], [0], [0], [1], [0, 0, 1, 1], [], []>} : vector<160x128xbf16>, vector<128x128xbf16>, vector<160x128xf32> -> vector<160x128xf32>
    %26 = arith.addf %21, %25 : vector<160x128xf32>
    %27 = vector.extract_strided_slice %2 {offsets = [34, 0], sizes = [160, 128], strides = [1, 1]} : vector<226x128xbf16> to vector<160x128xbf16>
    %c5 = arith.constant 5 : index
    %c0_18 = arith.constant 0 : index
    %c0_19 = arith.constant 0 : index
    %28 = vector.load %arg2[%c5, %c0_18, %c0_19] : memref<9x128x128xbf16, #tpu.memory_space<vmem>>, vector<1x128x128xbf16>
    %29 = vector.shape_cast %28 : vector<1x128x128xbf16> to vector<128x128xbf16>
    %cst_20 = arith.constant dense<0.000000e+00> : vector<160x128xf32>
    %30 = tpu.matmul %27, %29, %cst_20 {dimension_numbers = #tpu.dot_dimension_numbers<[1], [0], [0], [1], [0, 0, 1, 1], [], []>} : vector<160x128xbf16>, vector<128x128xbf16>, vector<160x128xf32> -> vector<160x128xf32>
    %31 = arith.addf %26, %30 : vector<160x128xf32>
    %32 = vector.extract_strided_slice %2 {offsets = [64, 0], sizes = [160, 128], strides = [1, 1]} : vector<226x128xbf16> to vector<160x128xbf16>
    %c6 = arith.constant 6 : index
    %c0_21 = arith.constant 0 : index
    %c0_22 = arith.constant 0 : index
    %33 = vector.load %arg2[%c6, %c0_21, %c0_22] : memref<9x128x128xbf16, #tpu.memory_space<vmem>>, vector<1x128x128xbf16>
    %34 = vector.shape_cast %33 : vector<1x128x128xbf16> to vector<128x128xbf16>
    %cst_23 = arith.constant dense<0.000000e+00> : vector<160x128xf32>
    %35 = tpu.matmul %32, %34, %cst_23 {dimension_numbers = #tpu.dot_dimension_numbers<[1], [0], [0], [1], [0, 0, 1, 1], [], []>} : vector<160x128xbf16>, vector<128x128xbf16>, vector<160x128xf32> -> vector<160x128xf32>
    %36 = arith.addf %31, %35 : vector<160x128xf32>
    %37 = vector.extract_strided_slice %2 {offsets = [65, 0], sizes = [160, 128], strides = [1, 1]} : vector<226x128xbf16> to vector<160x128xbf16>
    %c7 = arith.constant 7 : index
    %c0_24 = arith.constant 0 : index
    %c0_25 = arith.constant 0 : index
    %38 = vector.load %arg2[%c7, %c0_24, %c0_25] : memref<9x128x128xbf16, #tpu.memory_space<vmem>>, vector<1x128x128xbf16>
    %39 = vector.shape_cast %38 : vector<1x128x128xbf16> to vector<128x128xbf16>
    %cst_26 = arith.constant dense<0.000000e+00> : vector<160x128xf32>
    %40 = tpu.matmul %37, %39, %cst_26 {dimension_numbers = #tpu.dot_dimension_numbers<[1], [0], [0], [1], [0, 0, 1, 1], [], []>} : vector<160x128xbf16>, vector<128x128xbf16>, vector<160x128xf32> -> vector<160x128xf32>
    %41 = arith.addf %36, %40 : vector<160x128xf32>
    %42 = vector.extract_strided_slice %2 {offsets = [66, 0], sizes = [160, 128], strides = [1, 1]} : vector<226x128xbf16> to vector<160x128xbf16>
    %c8 = arith.constant 8 : index
    %c0_27 = arith.constant 0 : index
    %c0_28 = arith.constant 0 : index
    %43 = vector.load %arg2[%c8, %c0_27, %c0_28] : memref<9x128x128xbf16, #tpu.memory_space<vmem>>, vector<1x128x128xbf16>
    %44 = vector.shape_cast %43 : vector<1x128x128xbf16> to vector<128x128xbf16>
    %cst_29 = arith.constant dense<0.000000e+00> : vector<160x128xf32>
    %45 = tpu.matmul %42, %44, %cst_29 {dimension_numbers = #tpu.dot_dimension_numbers<[1], [0], [0], [1], [0, 0, 1, 1], [], []>} : vector<160x128xbf16>, vector<128x128xbf16>, vector<160x128xf32> -> vector<160x128xf32>
    %46 = arith.addf %41, %45 : vector<160x128xf32>
    %c0_30 = arith.constant 0 : index
    %c0_31 = arith.constant 0 : index
    %47 = vector.load %arg5[%c0_30, %c0_31] : memref<800x128xf32, #tpu.memory_space<vmem>>, vector<160x128xf32>
    tpu.vector_store %arg5[%c0_30, %c0_31], %46 {strides = array<i32>} : memref<800x128xf32, #tpu.memory_space<vmem>>, vector<160x128xf32>,
    %48 = tpu.iota {dimensions = array<i32: 0>} : vector<160x128xi32>
    %c0_i32 = arith.constant 0 : i32
    %49 = vector.broadcast %c0_i32 : i32 to vector<160x128xi32>
    %50 = arith.addi %48, %49 : vector<160x128xi32>
    %c31_i32 = arith.constant 31 : i32
    %51 = vector.broadcast %c31_i32 : i32 to vector<160x128xi32>
    %52 = arith.andi %50, %51 : vector<160x128xi32>
    %c25_i32 = arith.constant 25 : i32
    %53 = vector.broadcast %c25_i32 : i32 to vector<160x128xi32>
    %54 = arith.cmpi slt, %52, %53 : vector<160x128xi32>
    %cst_32 = arith.constant 0.000000e+00 : f32
    %55 = vector.broadcast %cst_32 : f32 to vector<160x128xf32>
    %56 = arith.select %54, %46, %55 : vector<160x128xi1>, vector<160x128xf32>
    %cst_33 = arith.constant dense<0.000000e+00> : vector<128xf32>
    %57 = vector.multi_reduction <add>, %56, %cst_33 [0] : vector<160x128xf32> to vector<128xf32>
    %58 = vector.shape_cast %57 : vector<128xf32> to vector<1x128xf32>
    %59 = arith.addf %0, %58 : vector<1x128xf32>
    %60 = arith.mulf %56, %56 : vector<160x128xf32>
    %cst_34 = arith.constant dense<0.000000e+00> : vector<128xf32>
    %61 = vector.multi_reduction <add>, %60, %cst_34 [0] : vector<160x128xf32> to vector<128xf32>
    %62 = vector.shape_cast %61 : vector<128xf32> to vector<1x128xf32>
    %63 = arith.addf %1, %62 : vector<1x128xf32>
    %c160 = arith.constant 160 : index
    %c0_35 = arith.constant 0 : index
    %64 = vector.load %arg1[%c160, %c0_35] : memref<896x128xbf16, #tpu.memory_space<vmem>>, vector<226x128xbf16>
    %65 = vector.extract_strided_slice %64 {offsets = [0, 0], sizes = [160, 128], strides = [1, 1]} : vector<226x128xbf16> to vector<160x128xbf16>
    %c0_36 = arith.constant 0 : index
    %c0_37 = arith.constant 0 : index
    %c0_38 = arith.constant 0 : index
    %66 = vector.load %arg2[%c0_36, %c0_37, %c0_38] : memref<9x128x128xbf16, #tpu.memory_space<vmem>>, vector<1x128x128xbf16>
    %67 = vector.shape_cast %66 : vector<1x128x128xbf16> to vector<128x128xbf16>
    %cst_39 = arith.constant dense<0.000000e+00> : vector<160x128xf32>
    %68 = tpu.matmul %65, %67, %cst_39 {dimension_numbers = #tpu.dot_dimension_numbers<[1], [0], [0], [1], [0, 0, 1, 1], [], []>} : vector<160x128xbf16>, vector<128x128xbf16>, vector<160x128xf32> -> vector<160x128xf32>
    %69 = vector.extract_strided_slice %64 {offsets = [1, 0], sizes = [160, 128], strides = [1, 1]} : vector<226x128xbf16> to vector<160x128xbf16>
    %c1_40 = arith.constant 1 : index
    %c0_41 = arith.constant 0 : index
    %c0_42 = arith.constant 0 : index
    %70 = vector.load %arg2[%c1_40, %c0_41, %c0_42] : memref<9x128x128xbf16, #tpu.memory_space<vmem>>, vector<1x128x128xbf16>
    %71 = vector.shape_cast %70 : vector<1x128x128xbf16> to vector<128x128xbf16>
    %cst_43 = arith.constant dense<0.000000e+00> : vector<160x128xf32>
    %72 = tpu.matmul %69, %71, %cst_43 {dimension_numbers = #tpu.dot_dimension_numbers<[1], [0], [0], [1], [0, 0, 1, 1], [], []>} : vector<160x128xbf16>, vector<128x128xbf16>, vector<160x128xf32> -> vector<160x128xf32>
    %73 = arith.addf %68, %72 : vector<160x128xf32>
    %74 = vector.extract_strided_slice %64 {offsets = [2, 0], sizes = [160, 128], strides = [1, 1]} : vector<226x128xbf16> to vector<160x128xbf16>
    %c2_44 = arith.constant 2 : index
    %c0_45 = arith.constant 0 : index
    %c0_46 = arith.constant 0 : index
    %75 = vector.load %arg2[%c2_44, %c0_45, %c0_46] : memref<9x128x128xbf16, #tpu.memory_space<vmem>>, vector<1x128x128xbf16>
    %76 = vector.shape_cast %75 : vector<1x128x128xbf16> to vector<128x128xbf16>
    %cst_47 = arith.constant dense<0.000000e+00> : vector<160x128xf32>
    %77 = tpu.matmul %74, %76, %cst_47 {dimension_numbers = #tpu.dot_dimension_numbers<[1], [0], [0], [1], [0, 0, 1, 1], [], []>} : vector<160x128xbf16>, vector<128x128xbf16>, vector<160x128xf32> -> vector<160x128xf32>
    %78 = arith.addf %73, %77 : vector<160x128xf32>
    %79 = vector.extract_strided_slice %64 {offsets = [32, 0], sizes = [160, 128], strides = [1, 1]} : vector<226x128xbf16> to vector<160x128xbf16>
    %c3_48 = arith.constant 3 : index
    %c0_49 = arith.constant 0 : index
    %c0_50 = arith.constant 0 : index
    %80 = vector.load %arg2[%c3_48, %c0_49, %c0_50] : memref<9x128x128xbf16, #tpu.memory_space<vmem>>, vector<1x128x128xbf16>
    %81 = vector.shape_cast %80 : vector<1x128x128xbf16> to vector<128x128xbf16>
    %cst_51 = arith.constant dense<0.000000e+00> : vector<160x128xf32>
    %82 = tpu.matmul %79, %81, %cst_51 {dimension_numbers = #tpu.dot_dimension_numbers<[1], [0], [0], [1], [0, 0, 1, 1], [], []>} : vector<160x128xbf16>, vector<128x128xbf16>, vector<160x128xf32> -> vector<160x128xf32>
    %83 = arith.addf %78, %82 : vector<160x128xf32>
    %84 = vector.extract_strided_slice %64 {offsets = [33, 0], sizes = [160, 128], strides = [1, 1]} : vector<226x128xbf16> to vector<160x128xbf16>
    %c4_52 = arith.constant 4 : index
    %c0_53 = arith.constant 0 : index
    %c0_54 = arith.constant 0 : index
    %85 = vector.load %arg2[%c4_52, %c0_53, %c0_54] : memref<9x128x128xbf16, #tpu.memory_space<vmem>>, vector<1x128x128xbf16>
    %86 = vector.shape_cast %85 : vector<1x128x128xbf16> to vector<128x128xbf16>
    %cst_55 = arith.constant dense<0.000000e+00> : vector<160x128xf32>
    %87 = tpu.matmul %84, %86, %cst_55 {dimension_numbers = #tpu.dot_dimension_numbers<[1], [0], [0], [1], [0, 0, 1, 1], [], []>} : vector<160x128xbf16>, vector<128x128xbf16>, vector<160x128xf32> -> vector<160x128xf32>
    %88 = arith.addf %83, %87 : vector<160x128xf32>
    %89 = vector.extract_strided_slice %64 {offsets = [34, 0], sizes = [160, 128], strides = [1, 1]} : vector<226x128xbf16> to vector<160x128xbf16>
    %c5_56 = arith.constant 5 : index
    %c0_57 = arith.constant 0 : index
    %c0_58 = arith.constant 0 : index
    %90 = vector.load %arg2[%c5_56, %c0_57, %c0_58] : memref<9x128x128xbf16, #tpu.memory_space<vmem>>, vector<1x128x128xbf16>
    %91 = vector.shape_cast %90 : vector<1x128x128xbf16> to vector<128x128xbf16>
    %cst_59 = arith.constant dense<0.000000e+00> : vector<160x128xf32>
    %92 = tpu.matmul %89, %91, %cst_59 {dimension_numbers = #tpu.dot_dimension_numbers<[1], [0], [0], [1], [0, 0, 1, 1], [], []>} : vector<160x128xbf16>, vector<128x128xbf16>, vector<160x128xf32> -> vector<160x128xf32>
    %93 = arith.addf %88, %92 : vector<160x128xf32>
    %94 = vector.extract_strided_slice %64 {offsets = [64, 0], sizes = [160, 128], strides = [1, 1]} : vector<226x128xbf16> to vector<160x128xbf16>
    %c6_60 = arith.constant 6 : index
    %c0_61 = arith.constant 0 : index
    %c0_62 = arith.constant 0 : index
    %95 = vector.load %arg2[%c6_60, %c0_61, %c0_62] : memref<9x128x128xbf16, #tpu.memory_space<vmem>>, vector<1x128x128xbf16>
    %96 = vector.shape_cast %95 : vector<1x128x128xbf16> to vector<128x128xbf16>
    %cst_63 = arith.constant dense<0.000000e+00> : vector<160x128xf32>
    %97 = tpu.matmul %94, %96, %cst_63 {dimension_numbers = #tpu.dot_dimension_numbers<[1], [0], [0], [1], [0, 0, 1, 1], [], []>} : vector<160x128xbf16>, vector<128x128xbf16>, vector<160x128xf32> -> vector<160x128xf32>
    %98 = arith.addf %93, %97 : vector<160x128xf32>
    %99 = vector.extract_strided_slice %64 {offsets = [65, 0], sizes = [160, 128], strides = [1, 1]} : vector<226x128xbf16> to vector<160x128xbf16>
    %c7_64 = arith.constant 7 : index
    %c0_65 = arith.constant 0 : index
    %c0_66 = arith.constant 0 : index
    %100 = vector.load %arg2[%c7_64, %c0_65, %c0_66] : memref<9x128x128xbf16, #tpu.memory_space<vmem>>, vector<1x128x128xbf16>
    %101 = vector.shape_cast %100 : vector<1x128x128xbf16> to vector<128x128xbf16>
    %cst_67 = arith.constant dense<0.000000e+00> : vector<160x128xf32>
    %102 = tpu.matmul %99, %101, %cst_67 {dimension_numbers = #tpu.dot_dimension_numbers<[1], [0], [0], [1], [0, 0, 1, 1], [], []>} : vector<160x128xbf16>, vector<128x128xbf16>, vector<160x128xf32> -> vector<160x128xf32>
    %103 = arith.addf %98, %102 : vector<160x128xf32>
    %104 = vector.extract_strided_slice %64 {offsets = [66, 0], sizes = [160, 128], strides = [1, 1]} : vector<226x128xbf16> to vector<160x128xbf16>
    %c8_68 = arith.constant 8 : index
    %c0_69 = arith.constant 0 : index
    %c0_70 = arith.constant 0 : index
    %105 = vector.load %arg2[%c8_68, %c0_69, %c0_70] : memref<9x128x128xbf16, #tpu.memory_space<vmem>>, vector<1x128x128xbf16>
    %106 = vector.shape_cast %105 : vector<1x128x128xbf16> to vector<128x128xbf16>
    %cst_71 = arith.constant dense<0.000000e+00> : vector<160x128xf32>
    %107 = tpu.matmul %104, %106, %cst_71 {dimension_numbers = #tpu.dot_dimension_numbers<[1], [0], [0], [1], [0, 0, 1, 1], [], []>} : vector<160x128xbf16>, vector<128x128xbf16>, vector<160x128xf32> -> vector<160x128xf32>
    %108 = arith.addf %103, %107 : vector<160x128xf32>
    %c160_72 = arith.constant 160 : index
    %c0_73 = arith.constant 0 : index
    %109 = vector.load %arg5[%c160_72, %c0_73] : memref<800x128xf32, #tpu.memory_space<vmem>>, vector<160x128xf32>
    tpu.vector_store %arg5[%c160_72, %c0_73], %108 {strides = array<i32>} : memref<800x128xf32, #tpu.memory_space<vmem>>, vector<160x128xf32>,
    %110 = tpu.iota {dimensions = array<i32: 0>} : vector<160x128xi32>
    %c160_i32 = arith.constant 160 : i32
    %111 = vector.broadcast %c160_i32 : i32 to vector<160x128xi32>
    %112 = arith.addi %110, %111 : vector<160x128xi32>
    %c31_i32_74 = arith.constant 31 : i32
    %113 = vector.broadcast %c31_i32_74 : i32 to vector<160x128xi32>
    %114 = arith.andi %112, %113 : vector<160x128xi32>
    %c25_i32_75 = arith.constant 25 : i32
    %115 = vector.broadcast %c25_i32_75 : i32 to vector<160x128xi32>
    %116 = arith.cmpi slt, %114, %115 : vector<160x128xi32>
    %cst_76 = arith.constant 0.000000e+00 : f32
    %117 = vector.broadcast %cst_76 : f32 to vector<160x128xf32>
    %118 = arith.select %116, %108, %117 : vector<160x128xi1>, vector<160x128xf32>
    %cst_77 = arith.constant dense<0.000000e+00> : vector<128xf32>
    %119 = vector.multi_reduction <add>, %118, %cst_77 [0] : vector<160x128xf32> to vector<128xf32>
    %120 = vector.shape_cast %119 : vector<128xf32> to vector<1x128xf32>
    %121 = arith.addf %59, %120 : vector<1x128xf32>
    %122 = arith.mulf %118, %118 : vector<160x128xf32>
    %cst_78 = arith.constant dense<0.000000e+00> : vector<128xf32>
    %123 = vector.multi_reduction <add>, %122, %cst_78 [0] : vector<160x128xf32> to vector<128xf32>
    %124 = vector.shape_cast %123 : vector<128xf32> to vector<1x128xf32>
    %125 = arith.addf %63, %124 : vector<1x128xf32>
    %c320 = arith.constant 320 : index
    %c0_79 = arith.constant 0 : index
    %126 = vector.load %arg1[%c320, %c0_79] : memref<896x128xbf16, #tpu.memory_space<vmem>>, vector<226x128xbf16>
    %127 = vector.extract_strided_slice %126 {offsets = [0, 0], sizes = [160, 128], strides = [1, 1]} : vector<226x128xbf16> to vector<160x128xbf16>
    %c0_80 = arith.constant 0 : index
    %c0_81 = arith.constant 0 : index
    %c0_82 = arith.constant 0 : index
    %128 = vector.load %arg2[%c0_80, %c0_81, %c0_82] : memref<9x128x128xbf16, #tpu.memory_space<vmem>>, vector<1x128x128xbf16>
    %129 = vector.shape_cast %128 : vector<1x128x128xbf16> to vector<128x128xbf16>
    %cst_83 = arith.constant dense<0.000000e+00> : vector<160x128xf32>
    %130 = tpu.matmul %127, %129, %cst_83 {dimension_numbers = #tpu.dot_dimension_numbers<[1], [0], [0], [1], [0, 0, 1, 1], [], []>} : vector<160x128xbf16>, vector<128x128xbf16>, vector<160x128xf32> -> vector<160x128xf32>
    %131 = vector.extract_strided_slice %126 {offsets = [1, 0], sizes = [160, 128], strides = [1, 1]} : vector<226x128xbf16> to vector<160x128xbf16>
    %c1_84 = arith.constant 1 : index
    %c0_85 = arith.constant 0 : index
    %c0_86 = arith.constant 0 : index
    %132 = vector.load %arg2[%c1_84, %c0_85, %c0_86] : memref<9x128x128xbf16, #tpu.memory_space<vmem>>, vector<1x128x128xbf16>
    %133 = vector.shape_cast %132 : vector<1x128x128xbf16> to vector<128x128xbf16>
    %cst_87 = arith.constant dense<0.000000e+00> : vector<160x128xf32>
    %134 = tpu.matmul %131, %133, %cst_87 {dimension_numbers = #tpu.dot_dimension_numbers<[1], [0], [0], [1], [0, 0, 1, 1], [], []>} : vector<160x128xbf16>, vector<128x128xbf16>, vector<160x128xf32> -> vector<160x128xf32>
    %135 = arith.addf %130, %134 : vector<160x128xf32>
    %136 = vector.extract_strided_slice %126 {offsets = [2, 0], sizes = [160, 128], strides = [1, 1]} : vector<226x128xbf16> to vector<160x128xbf16>
    %c2_88 = arith.constant 2 : index
    %c0_89 = arith.constant 0 : index
    %c0_90 = arith.constant 0 : index
    %137 = vector.load %arg2[%c2_88, %c0_89, %c0_90] : memref<9x128x128xbf16, #tpu.memory_space<vmem>>, vector<1x128x128xbf16>
    %138 = vector.shape_cast %137 : vector<1x128x128xbf16> to vector<128x128xbf16>
    %cst_91 = arith.constant dense<0.000000e+00> : vector<160x128xf32>
    %139 = tpu.matmul %136, %138, %cst_91 {dimension_numbers = #tpu.dot_dimension_numbers<[1], [0], [0], [1], [0, 0, 1, 1], [], []>} : vector<160x128xbf16>, vector<128x128xbf16>, vector<160x128xf32> -> vector<160x128xf32>
    %140 = arith.addf %135, %139 : vector<160x128xf32>
    %141 = vector.extract_strided_slice %126 {offsets = [32, 0], sizes = [160, 128], strides = [1, 1]} : vector<226x128xbf16> to vector<160x128xbf16>
    %c3_92 = arith.constant 3 : index
    %c0_93 = arith.constant 0 : index
    %c0_94 = arith.constant 0 : index
    %142 = vector.load %arg2[%c3_92, %c0_93, %c0_94] : memref<9x128x128xbf16, #tpu.memory_space<vmem>>, vector<1x128x128xbf16>
    %143 = vector.shape_cast %142 : vector<1x128x128xbf16> to vector<128x128xbf16>
    %cst_95 = arith.constant dense<0.000000e+00> : vector<160x128xf32>
    %144 = tpu.matmul %141, %143, %cst_95 {dimension_numbers = #tpu.dot_dimension_numbers<[1], [0], [0], [1], [0, 0, 1, 1], [], []>} : vector<160x128xbf16>, vector<128x128xbf16>, vector<160x128xf32> -> vector<160x128xf32>
    %145 = arith.addf %140, %144 : vector<160x128xf32>
    %146 = vector.extract_strided_slice %126 {offsets = [33, 0], sizes = [160, 128], strides = [1, 1]} : vector<226x128xbf16> to vector<160x128xbf16>
    %c4_96 = arith.constant 4 : index
    %c0_97 = arith.constant 0 : index
    %c0_98 = arith.constant 0 : index
    %147 = vector.load %arg2[%c4_96, %c0_97, %c0_98] : memref<9x128x128xbf16, #tpu.memory_space<vmem>>, vector<1x128x128xbf16>
    %148 = vector.shape_cast %147 : vector<1x128x128xbf16> to vector<128x128xbf16>
    %cst_99 = arith.constant dense<0.000000e+00> : vector<160x128xf32>
    %149 = tpu.matmul %146, %148, %cst_99 {dimension_numbers = #tpu.dot_dimension_numbers<[1], [0], [0], [1], [0, 0, 1, 1], [], []>} : vector<160x128xbf16>, vector<128x128xbf16>, vector<160x128xf32> -> vector<160x128xf32>
    %150 = arith.addf %145, %149 : vector<160x128xf32>
    %151 = vector.extract_strided_slice %126 {offsets = [34, 0], sizes = [160, 128], strides = [1, 1]} : vector<226x128xbf16> to vector<160x128xbf16>
    %c5_100 = arith.constant 5 : index
    %c0_101 = arith.constant 0 : index
    %c0_102 = arith.constant 0 : index
    %152 = vector.load %arg2[%c5_100, %c0_101, %c0_102] : memref<9x128x128xbf16, #tpu.memory_space<vmem>>, vector<1x128x128xbf16>
    %153 = vector.shape_cast %152 : vector<1x128x128xbf16> to vector<128x128xbf16>
    %cst_103 = arith.constant dense<0.000000e+00> : vector<160x128xf32>
    %154 = tpu.matmul %151, %153, %cst_103 {dimension_numbers = #tpu.dot_dimension_numbers<[1], [0], [0], [1], [0, 0, 1, 1], [], []>} : vector<160x128xbf16>, vector<128x128xbf16>, vector<160x128xf32> -> vector<160x128xf32>
    %155 = arith.addf %150, %154 : vector<160x128xf32>
    %156 = vector.extract_strided_slice %126 {offsets = [64, 0], sizes = [160, 128], strides = [1, 1]} : vector<226x128xbf16> to vector<160x128xbf16>
    %c6_104 = arith.constant 6 : index
    %c0_105 = arith.constant 0 : index
    %c0_106 = arith.constant 0 : index
    %157 = vector.load %arg2[%c6_104, %c0_105, %c0_106] : memref<9x128x128xbf16, #tpu.memory_space<vmem>>, vector<1x128x128xbf16>
    %158 = vector.shape_cast %157 : vector<1x128x128xbf16> to vector<128x128xbf16>
    %cst_107 = arith.constant dense<0.000000e+00> : vector<160x128xf32>
    %159 = tpu.matmul %156, %158, %cst_107 {dimension_numbers = #tpu.dot_dimension_numbers<[1], [0], [0], [1], [0, 0, 1, 1], [], []>} : vector<160x128xbf16>, vector<128x128xbf16>, vector<160x128xf32> -> vector<160x128xf32>
    %160 = arith.addf %155, %159 : vector<160x128xf32>
    %161 = vector.extract_strided_slice %126 {offsets = [65, 0], sizes = [160, 128], strides = [1, 1]} : vector<226x128xbf16> to vector<160x128xbf16>
    %c7_108 = arith.constant 7 : index
    %c0_109 = arith.constant 0 : index
    %c0_110 = arith.constant 0 : index
    %162 = vector.load %arg2[%c7_108, %c0_109, %c0_110] : memref<9x128x128xbf16, #tpu.memory_space<vmem>>, vector<1x128x128xbf16>
    %163 = vector.shape_cast %162 : vector<1x128x128xbf16> to vector<128x128xbf16>
    %cst_111 = arith.constant dense<0.000000e+00> : vector<160x128xf32>
    %164 = tpu.matmul %161, %163, %cst_111 {dimension_numbers = #tpu.dot_dimension_numbers<[1], [0], [0], [1], [0, 0, 1, 1], [], []>} : vector<160x128xbf16>, vector<128x128xbf16>, vector<160x128xf32> -> vector<160x128xf32>
    %165 = arith.addf %160, %164 : vector<160x128xf32>
    %166 = vector.extract_strided_slice %126 {offsets = [66, 0], sizes = [160, 128], strides = [1, 1]} : vector<226x128xbf16> to vector<160x128xbf16>
    %c8_112 = arith.constant 8 : index
    %c0_113 = arith.constant 0 : index
    %c0_114 = arith.constant 0 : index
    %167 = vector.load %arg2[%c8_112, %c0_113, %c0_114] : memref<9x128x128xbf16, #tpu.memory_space<vmem>>, vector<1x128x128xbf16>
    %168 = vector.shape_cast %167 : vector<1x128x128xbf16> to vector<128x128xbf16>
    %cst_115 = arith.constant dense<0.000000e+00> : vector<160x128xf32>
    %169 = tpu.matmul %166, %168, %cst_115 {dimension_numbers = #tpu.dot_dimension_numbers<[1], [0], [0], [1], [0, 0, 1, 1], [], []>} : vector<160x128xbf16>, vector<128x128xbf16>, vector<160x128xf32> -> vector<160x128xf32>
    %170 = arith.addf %165, %169 : vector<160x128xf32>
    %c320_116 = arith.constant 320 : index
    %c0_117 = arith.constant 0 : index
    %171 = vector.load %arg5[%c320_116, %c0_117] : memref<800x128xf32, #tpu.memory_space<vmem>>, vector<160x128xf32>
    tpu.vector_store %arg5[%c320_116, %c0_117], %170 {strides = array<i32>} : memref<800x128xf32, #tpu.memory_space<vmem>>, vector<160x128xf32>,
    %172 = tpu.iota {dimensions = array<i32: 0>} : vector<160x128xi32>
    %c320_i32 = arith.constant 320 : i32
    %173 = vector.broadcast %c320_i32 : i32 to vector<160x128xi32>
    %174 = arith.addi %172, %173 : vector<160x128xi32>
    %c31_i32_118 = arith.constant 31 : i32
    %175 = vector.broadcast %c31_i32_118 : i32 to vector<160x128xi32>
    %176 = arith.andi %174, %175 : vector<160x128xi32>
    %c25_i32_119 = arith.constant 25 : i32
    %177 = vector.broadcast %c25_i32_119 : i32 to vector<160x128xi32>
    %178 = arith.cmpi slt, %176, %177 : vector<160x128xi32>
    %cst_120 = arith.constant 0.000000e+00 : f32
    %179 = vector.broadcast %cst_120 : f32 to vector<160x128xf32>
    %180 = arith.select %178, %170, %179 : vector<160x128xi1>, vector<160x128xf32>
    %cst_121 = arith.constant dense<0.000000e+00> : vector<128xf32>
    %181 = vector.multi_reduction <add>, %180, %cst_121 [0] : vector<160x128xf32> to vector<128xf32>
    %182 = vector.shape_cast %181 : vector<128xf32> to vector<1x128xf32>
    %183 = arith.addf %121, %182 : vector<1x128xf32>
    %184 = arith.mulf %180, %180 : vector<160x128xf32>
    %cst_122 = arith.constant dense<0.000000e+00> : vector<128xf32>
    %185 = vector.multi_reduction <add>, %184, %cst_122 [0] : vector<160x128xf32> to vector<128xf32>
    %186 = vector.shape_cast %185 : vector<128xf32> to vector<1x128xf32>
    %187 = arith.addf %125, %186 : vector<1x128xf32>
    %c480 = arith.constant 480 : index
    %c0_123 = arith.constant 0 : index
    %188 = vector.load %arg1[%c480, %c0_123] : memref<896x128xbf16, #tpu.memory_space<vmem>>, vector<226x128xbf16>
    %189 = vector.extract_strided_slice %188 {offsets = [0, 0], sizes = [160, 128], strides = [1, 1]} : vector<226x128xbf16> to vector<160x128xbf16>
    %c0_124 = arith.constant 0 : index
    %c0_125 = arith.constant 0 : index
    %c0_126 = arith.constant 0 : index
    %190 = vector.load %arg2[%c0_124, %c0_125, %c0_126] : memref<9x128x128xbf16, #tpu.memory_space<vmem>>, vector<1x128x128xbf16>
    %191 = vector.shape_cast %190 : vector<1x128x128xbf16> to vector<128x128xbf16>
    %cst_127 = arith.constant dense<0.000000e+00> : vector<160x128xf32>
    %192 = tpu.matmul %189, %191, %cst_127 {dimension_numbers = #tpu.dot_dimension_numbers<[1], [0], [0], [1], [0, 0, 1, 1], [], []>} : vector<160x128xbf16>, vector<128x128xbf16>, vector<160x128xf32> -> vector<160x128xf32>
    %193 = vector.extract_strided_slice %188 {offsets = [1, 0], sizes = [160, 128], strides = [1, 1]} : vector<226x128xbf16> to vector<160x128xbf16>
    %c1_128 = arith.constant 1 : index
    %c0_129 = arith.constant 0 : index
    %c0_130 = arith.constant 0 : index
    %194 = vector.load %arg2[%c1_128, %c0_129, %c0_130] : memref<9x128x128xbf16, #tpu.memory_space<vmem>>, vector<1x128x128xbf16>
    %195 = vector.shape_cast %194 : vector<1x128x128xbf16> to vector<128x128xbf16>
    %cst_131 = arith.constant dense<0.000000e+00> : vector<160x128xf32>
    %196 = tpu.matmul %193, %195, %cst_131 {dimension_numbers = #tpu.dot_dimension_numbers<[1], [0], [0], [1], [0, 0, 1, 1], [], []>} : vector<160x128xbf16>, vector<128x128xbf16>, vector<160x128xf32> -> vector<160x128xf32>
    %197 = arith.addf %192, %196 : vector<160x128xf32>
    %198 = vector.extract_strided_slice %188 {offsets = [2, 0], sizes = [160, 128], strides = [1, 1]} : vector<226x128xbf16> to vector<160x128xbf16>
    %c2_132 = arith.constant 2 : index
    %c0_133 = arith.constant 0 : index
    %c0_134 = arith.constant 0 : index
    %199 = vector.load %arg2[%c2_132, %c0_133, %c0_134] : memref<9x128x128xbf16, #tpu.memory_space<vmem>>, vector<1x128x128xbf16>
    %200 = vector.shape_cast %199 : vector<1x128x128xbf16> to vector<128x128xbf16>
    %cst_135 = arith.constant dense<0.000000e+00> : vector<160x128xf32>
    %201 = tpu.matmul %198, %200, %cst_135 {dimension_numbers = #tpu.dot_dimension_numbers<[1], [0], [0], [1], [0, 0, 1, 1], [], []>} : vector<160x128xbf16>, vector<128x128xbf16>, vector<160x128xf32> -> vector<160x128xf32>
    %202 = arith.addf %197, %201 : vector<160x128xf32>
    %203 = vector.extract_strided_slice %188 {offsets = [32, 0], sizes = [160, 128], strides = [1, 1]} : vector<226x128xbf16> to vector<160x128xbf16>
    %c3_136 = arith.constant 3 : index
    %c0_137 = arith.constant 0 : index
    %c0_138 = arith.constant 0 : index
    %204 = vector.load %arg2[%c3_136, %c0_137, %c0_138] : memref<9x128x128xbf16, #tpu.memory_space<vmem>>, vector<1x128x128xbf16>
    %205 = vector.shape_cast %204 : vector<1x128x128xbf16> to vector<128x128xbf16>
    %cst_139 = arith.constant dense<0.000000e+00> : vector<160x128xf32>
    %206 = tpu.matmul %203, %205, %cst_139 {dimension_numbers = #tpu.dot_dimension_numbers<[1], [0], [0], [1], [0, 0, 1, 1], [], []>} : vector<160x128xbf16>, vector<128x128xbf16>, vector<160x128xf32> -> vector<160x128xf32>
    %207 = arith.addf %202, %206 : vector<160x128xf32>
    %208 = vector.extract_strided_slice %188 {offsets = [33, 0], sizes = [160, 128], strides = [1, 1]} : vector<226x128xbf16> to vector<160x128xbf16>
    %c4_140 = arith.constant 4 : index
    %c0_141 = arith.constant 0 : index
    %c0_142 = arith.constant 0 : index
    %209 = vector.load %arg2[%c4_140, %c0_141, %c0_142] : memref<9x128x128xbf16, #tpu.memory_space<vmem>>, vector<1x128x128xbf16>
    %210 = vector.shape_cast %209 : vector<1x128x128xbf16> to vector<128x128xbf16>
    %cst_143 = arith.constant dense<0.000000e+00> : vector<160x128xf32>
    %211 = tpu.matmul %208, %210, %cst_143 {dimension_numbers = #tpu.dot_dimension_numbers<[1], [0], [0], [1], [0, 0, 1, 1], [], []>} : vector<160x128xbf16>, vector<128x128xbf16>, vector<160x128xf32> -> vector<160x128xf32>
    %212 = arith.addf %207, %211 : vector<160x128xf32>
    %213 = vector.extract_strided_slice %188 {offsets = [34, 0], sizes = [160, 128], strides = [1, 1]} : vector<226x128xbf16> to vector<160x128xbf16>
    %c5_144 = arith.constant 5 : index
    %c0_145 = arith.constant 0 : index
    %c0_146 = arith.constant 0 : index
    %214 = vector.load %arg2[%c5_144, %c0_145, %c0_146] : memref<9x128x128xbf16, #tpu.memory_space<vmem>>, vector<1x128x128xbf16>
    %215 = vector.shape_cast %214 : vector<1x128x128xbf16> to vector<128x128xbf16>
    %cst_147 = arith.constant dense<0.000000e+00> : vector<160x128xf32>
    %216 = tpu.matmul %213, %215, %cst_147 {dimension_numbers = #tpu.dot_dimension_numbers<[1], [0], [0], [1], [0, 0, 1, 1], [], []>} : vector<160x128xbf16>, vector<128x128xbf16>, vector<160x128xf32> -> vector<160x128xf32>
    %217 = arith.addf %212, %216 : vector<160x128xf32>
    %218 = vector.extract_strided_slice %188 {offsets = [64, 0], sizes = [160, 128], strides = [1, 1]} : vector<226x128xbf16> to vector<160x128xbf16>
    %c6_148 = arith.constant 6 : index
    %c0_149 = arith.constant 0 : index
    %c0_150 = arith.constant 0 : index
    %219 = vector.load %arg2[%c6_148, %c0_149, %c0_150] : memref<9x128x128xbf16, #tpu.memory_space<vmem>>, vector<1x128x128xbf16>
    %220 = vector.shape_cast %219 : vector<1x128x128xbf16> to vector<128x128xbf16>
    %cst_151 = arith.constant dense<0.000000e+00> : vector<160x128xf32>
    %221 = tpu.matmul %218, %220, %cst_151 {dimension_numbers = #tpu.dot_dimension_numbers<[1], [0], [0], [1], [0, 0, 1, 1], [], []>} : vector<160x128xbf16>, vector<128x128xbf16>, vector<160x128xf32> -> vector<160x128xf32>
    %222 = arith.addf %217, %221 : vector<160x128xf32>
    %223 = vector.extract_strided_slice %188 {offsets = [65, 0], sizes = [160, 128], strides = [1, 1]} : vector<226x128xbf16> to vector<160x128xbf16>
    %c7_152 = arith.constant 7 : index
    %c0_153 = arith.constant 0 : index
    %c0_154 = arith.constant 0 : index
    %224 = vector.load %arg2[%c7_152, %c0_153, %c0_154] : memref<9x128x128xbf16, #tpu.memory_space<vmem>>, vector<1x128x128xbf16>
    %225 = vector.shape_cast %224 : vector<1x128x128xbf16> to vector<128x128xbf16>
    %cst_155 = arith.constant dense<0.000000e+00> : vector<160x128xf32>
    %226 = tpu.matmul %223, %225, %cst_155 {dimension_numbers = #tpu.dot_dimension_numbers<[1], [0], [0], [1], [0, 0, 1, 1], [], []>} : vector<160x128xbf16>, vector<128x128xbf16>, vector<160x128xf32> -> vector<160x128xf32>
    %227 = arith.addf %222, %226 : vector<160x128xf32>
    %228 = vector.extract_strided_slice %188 {offsets = [66, 0], sizes = [160, 128], strides = [1, 1]} : vector<226x128xbf16> to vector<160x128xbf16>
    %c8_156 = arith.constant 8 : index
    %c0_157 = arith.constant 0 : index
    %c0_158 = arith.constant 0 : index
    %229 = vector.load %arg2[%c8_156, %c0_157, %c0_158] : memref<9x128x128xbf16, #tpu.memory_space<vmem>>, vector<1x128x128xbf16>
    %230 = vector.shape_cast %229 : vector<1x128x128xbf16> to vector<128x128xbf16>
    %cst_159 = arith.constant dense<0.000000e+00> : vector<160x128xf32>
    %231 = tpu.matmul %228, %230, %cst_159 {dimension_numbers = #tpu.dot_dimension_numbers<[1], [0], [0], [1], [0, 0, 1, 1], [], []>} : vector<160x128xbf16>, vector<128x128xbf16>, vector<160x128xf32> -> vector<160x128xf32>
    %232 = arith.addf %227, %231 : vector<160x128xf32>
    %c480_160 = arith.constant 480 : index
    %c0_161 = arith.constant 0 : index
    %233 = vector.load %arg5[%c480_160, %c0_161] : memref<800x128xf32, #tpu.memory_space<vmem>>, vector<160x128xf32>
    tpu.vector_store %arg5[%c480_160, %c0_161], %232 {strides = array<i32>} : memref<800x128xf32, #tpu.memory_space<vmem>>, vector<160x128xf32>,
    %234 = tpu.iota {dimensions = array<i32: 0>} : vector<160x128xi32>
    %c480_i32 = arith.constant 480 : i32
    %235 = vector.broadcast %c480_i32 : i32 to vector<160x128xi32>
    %236 = arith.addi %234, %235 : vector<160x128xi32>
    %c31_i32_162 = arith.constant 31 : i32
    %237 = vector.broadcast %c31_i32_162 : i32 to vector<160x128xi32>
    %238 = arith.andi %236, %237 : vector<160x128xi32>
    %c25_i32_163 = arith.constant 25 : i32
    %239 = vector.broadcast %c25_i32_163 : i32 to vector<160x128xi32>
    %240 = arith.cmpi slt, %238, %239 : vector<160x128xi32>
    %cst_164 = arith.constant 0.000000e+00 : f32
    %241 = vector.broadcast %cst_164 : f32 to vector<160x128xf32>
    %242 = arith.select %240, %232, %241 : vector<160x128xi1>, vector<160x128xf32>
    %cst_165 = arith.constant dense<0.000000e+00> : vector<128xf32>
    %243 = vector.multi_reduction <add>, %242, %cst_165 [0] : vector<160x128xf32> to vector<128xf32>
    %244 = vector.shape_cast %243 : vector<128xf32> to vector<1x128xf32>
    %245 = arith.addf %183, %244 : vector<1x128xf32>
    %246 = arith.mulf %242, %242 : vector<160x128xf32>
    %cst_166 = arith.constant dense<0.000000e+00> : vector<128xf32>
    %247 = vector.multi_reduction <add>, %246, %cst_166 [0] : vector<160x128xf32> to vector<128xf32>
    %248 = vector.shape_cast %247 : vector<128xf32> to vector<1x128xf32>
    %249 = arith.addf %187, %248 : vector<1x128xf32>
    %c640 = arith.constant 640 : index
    %c0_167 = arith.constant 0 : index
    %250 = vector.load %arg1[%c640, %c0_167] : memref<896x128xbf16, #tpu.memory_space<vmem>>, vector<226x128xbf16>
    %251 = vector.extract_strided_slice %250 {offsets = [0, 0], sizes = [160, 128], strides = [1, 1]} : vector<226x128xbf16> to vector<160x128xbf16>
    %c0_168 = arith.constant 0 : index
    %c0_169 = arith.constant 0 : index
    %c0_170 = arith.constant 0 : index
    %252 = vector.load %arg2[%c0_168, %c0_169, %c0_170] : memref<9x128x128xbf16, #tpu.memory_space<vmem>>, vector<1x128x128xbf16>
    %253 = vector.shape_cast %252 : vector<1x128x128xbf16> to vector<128x128xbf16>
    %cst_171 = arith.constant dense<0.000000e+00> : vector<160x128xf32>
    %254 = tpu.matmul %251, %253, %cst_171 {dimension_numbers = #tpu.dot_dimension_numbers<[1], [0], [0], [1], [0, 0, 1, 1], [], []>} : vector<160x128xbf16>, vector<128x128xbf16>, vector<160x128xf32> -> vector<160x128xf32>
    %255 = vector.extract_strided_slice %250 {offsets = [1, 0], sizes = [160, 128], strides = [1, 1]} : vector<226x128xbf16> to vector<160x128xbf16>
    %c1_172 = arith.constant 1 : index
    %c0_173 = arith.constant 0 : index
    %c0_174 = arith.constant 0 : index
    %256 = vector.load %arg2[%c1_172, %c0_173, %c0_174] : memref<9x128x128xbf16, #tpu.memory_space<vmem>>, vector<1x128x128xbf16>
    %257 = vector.shape_cast %256 : vector<1x128x128xbf16> to vector<128x128xbf16>
    %cst_175 = arith.constant dense<0.000000e+00> : vector<160x128xf32>
    %258 = tpu.matmul %255, %257, %cst_175 {dimension_numbers = #tpu.dot_dimension_numbers<[1], [0], [0], [1], [0, 0, 1, 1], [], []>} : vector<160x128xbf16>, vector<128x128xbf16>, vector<160x128xf32> -> vector<160x128xf32>
    %259 = arith.addf %254, %258 : vector<160x128xf32>
    %260 = vector.extract_strided_slice %250 {offsets = [2, 0], sizes = [160, 128], strides = [1, 1]} : vector<226x128xbf16> to vector<160x128xbf16>
    %c2_176 = arith.constant 2 : index
    %c0_177 = arith.constant 0 : index
    %c0_178 = arith.constant 0 : index
    %261 = vector.load %arg2[%c2_176, %c0_177, %c0_178] : memref<9x128x128xbf16, #tpu.memory_space<vmem>>, vector<1x128x128xbf16>
    %262 = vector.shape_cast %261 : vector<1x128x128xbf16> to vector<128x128xbf16>
    %cst_179 = arith.constant dense<0.000000e+00> : vector<160x128xf32>
    %263 = tpu.matmul %260, %262, %cst_179 {dimension_numbers = #tpu.dot_dimension_numbers<[1], [0], [0], [1], [0, 0, 1, 1], [], []>} : vector<160x128xbf16>, vector<128x128xbf16>, vector<160x128xf32> -> vector<160x128xf32>
    %264 = arith.addf %259, %263 : vector<160x128xf32>
    %265 = vector.extract_strided_slice %250 {offsets = [32, 0], sizes = [160, 128], strides = [1, 1]} : vector<226x128xbf16> to vector<160x128xbf16>
    %c3_180 = arith.constant 3 : index
    %c0_181 = arith.constant 0 : index
    %c0_182 = arith.constant 0 : index
    %266 = vector.load %arg2[%c3_180, %c0_181, %c0_182] : memref<9x128x128xbf16, #tpu.memory_space<vmem>>, vector<1x128x128xbf16>
    %267 = vector.shape_cast %266 : vector<1x128x128xbf16> to vector<128x128xbf16>
    %cst_183 = arith.constant dense<0.000000e+00> : vector<160x128xf32>
    %268 = tpu.matmul %265, %267, %cst_183 {dimension_numbers = #tpu.dot_dimension_numbers<[1], [0], [0], [1], [0, 0, 1, 1], [], []>} : vector<160x128xbf16>, vector<128x128xbf16>, vector<160x128xf32> -> vector<160x128xf32>
    %269 = arith.addf %264, %268 : vector<160x128xf32>
    %270 = vector.extract_strided_slice %250 {offsets = [33, 0], sizes = [160, 128], strides = [1, 1]} : vector<226x128xbf16> to vector<160x128xbf16>
    %c4_184 = arith.constant 4 : index
    %c0_185 = arith.constant 0 : index
    %c0_186 = arith.constant 0 : index
    %271 = vector.load %arg2[%c4_184, %c0_185, %c0_186] : memref<9x128x128xbf16, #tpu.memory_space<vmem>>, vector<1x128x128xbf16>
    %272 = vector.shape_cast %271 : vector<1x128x128xbf16> to vector<128x128xbf16>
    %cst_187 = arith.constant dense<0.000000e+00> : vector<160x128xf32>
    %273 = tpu.matmul %270, %272, %cst_187 {dimension_numbers = #tpu.dot_dimension_numbers<[1], [0], [0], [1], [0, 0, 1, 1], [], []>} : vector<160x128xbf16>, vector<128x128xbf16>, vector<160x128xf32> -> vector<160x128xf32>
    %274 = arith.addf %269, %273 : vector<160x128xf32>
    %275 = vector.extract_strided_slice %250 {offsets = [34, 0], sizes = [160, 128], strides = [1, 1]} : vector<226x128xbf16> to vector<160x128xbf16>
    %c5_188 = arith.constant 5 : index
    %c0_189 = arith.constant 0 : index
    %c0_190 = arith.constant 0 : index
    %276 = vector.load %arg2[%c5_188, %c0_189, %c0_190] : memref<9x128x128xbf16, #tpu.memory_space<vmem>>, vector<1x128x128xbf16>
    %277 = vector.shape_cast %276 : vector<1x128x128xbf16> to vector<128x128xbf16>
    %cst_191 = arith.constant dense<0.000000e+00> : vector<160x128xf32>
    %278 = tpu.matmul %275, %277, %cst_191 {dimension_numbers = #tpu.dot_dimension_numbers<[1], [0], [0], [1], [0, 0, 1, 1], [], []>} : vector<160x128xbf16>, vector<128x128xbf16>, vector<160x128xf32> -> vector<160x128xf32>
    %279 = arith.addf %274, %278 : vector<160x128xf32>
    %280 = vector.extract_strided_slice %250 {offsets = [64, 0], sizes = [160, 128], strides = [1, 1]} : vector<226x128xbf16> to vector<160x128xbf16>
    %c6_192 = arith.constant 6 : index
    %c0_193 = arith.constant 0 : index
    %c0_194 = arith.constant 0 : index
    %281 = vector.load %arg2[%c6_192, %c0_193, %c0_194] : memref<9x128x128xbf16, #tpu.memory_space<vmem>>, vector<1x128x128xbf16>
    %282 = vector.shape_cast %281 : vector<1x128x128xbf16> to vector<128x128xbf16>
    %cst_195 = arith.constant dense<0.000000e+00> : vector<160x128xf32>
    %283 = tpu.matmul %280, %282, %cst_195 {dimension_numbers = #tpu.dot_dimension_numbers<[1], [0], [0], [1], [0, 0, 1, 1], [], []>} : vector<160x128xbf16>, vector<128x128xbf16>, vector<160x128xf32> -> vector<160x128xf32>
    %284 = arith.addf %279, %283 : vector<160x128xf32>
    %285 = vector.extract_strided_slice %250 {offsets = [65, 0], sizes = [160, 128], strides = [1, 1]} : vector<226x128xbf16> to vector<160x128xbf16>
    %c7_196 = arith.constant 7 : index
    %c0_197 = arith.constant 0 : index
    %c0_198 = arith.constant 0 : index
    %286 = vector.load %arg2[%c7_196, %c0_197, %c0_198] : memref<9x128x128xbf16, #tpu.memory_space<vmem>>, vector<1x128x128xbf16>
    %287 = vector.shape_cast %286 : vector<1x128x128xbf16> to vector<128x128xbf16>
    %cst_199 = arith.constant dense<0.000000e+00> : vector<160x128xf32>
    %288 = tpu.matmul %285, %287, %cst_199 {dimension_numbers = #tpu.dot_dimension_numbers<[1], [0], [0], [1], [0, 0, 1, 1], [], []>} : vector<160x128xbf16>, vector<128x128xbf16>, vector<160x128xf32> -> vector<160x128xf32>
    %289 = arith.addf %284, %288 : vector<160x128xf32>
    %290 = vector.extract_strided_slice %250 {offsets = [66, 0], sizes = [160, 128], strides = [1, 1]} : vector<226x128xbf16> to vector<160x128xbf16>
    %c8_200 = arith.constant 8 : index
    %c0_201 = arith.constant 0 : index
    %c0_202 = arith.constant 0 : index
    %291 = vector.load %arg2[%c8_200, %c0_201, %c0_202] : memref<9x128x128xbf16, #tpu.memory_space<vmem>>, vector<1x128x128xbf16>
    %292 = vector.shape_cast %291 : vector<1x128x128xbf16> to vector<128x128xbf16>
    %cst_203 = arith.constant dense<0.000000e+00> : vector<160x128xf32>
    %293 = tpu.matmul %290, %292, %cst_203 {dimension_numbers = #tpu.dot_dimension_numbers<[1], [0], [0], [1], [0, 0, 1, 1], [], []>} : vector<160x128xbf16>, vector<128x128xbf16>, vector<160x128xf32> -> vector<160x128xf32>
    %294 = arith.addf %289, %293 : vector<160x128xf32>
    %c640_204 = arith.constant 640 : index
    %c0_205 = arith.constant 0 : index
    %295 = vector.load %arg5[%c640_204, %c0_205] : memref<800x128xf32, #tpu.memory_space<vmem>>, vector<160x128xf32>
    tpu.vector_store %arg5[%c640_204, %c0_205], %294 {strides = array<i32>} : memref<800x128xf32, #tpu.memory_space<vmem>>, vector<160x128xf32>,
    %296 = tpu.iota {dimensions = array<i32: 0>} : vector<160x128xi32>
    %c640_i32 = arith.constant 640 : i32
    %297 = vector.broadcast %c640_i32 : i32 to vector<160x128xi32>
    %298 = arith.addi %296, %297 : vector<160x128xi32>
    %c31_i32_206 = arith.constant 31 : i32
    %299 = vector.broadcast %c31_i32_206 : i32 to vector<160x128xi32>
    %300 = arith.andi %298, %299 : vector<160x128xi32>
    %c25_i32_207 = arith.constant 25 : i32
    %301 = vector.broadcast %c25_i32_207 : i32 to vector<160x128xi32>
    %302 = arith.cmpi slt, %300, %301 : vector<160x128xi32>
    %cst_208 = arith.constant 0.000000e+00 : f32
    %303 = vector.broadcast %cst_208 : f32 to vector<160x128xf32>
    %304 = arith.select %302, %294, %303 : vector<160x128xi1>, vector<160x128xf32>
    %cst_209 = arith.constant dense<0.000000e+00> : vector<128xf32>
    %305 = vector.multi_reduction <add>, %304, %cst_209 [0] : vector<160x128xf32> to vector<128xf32>
    %306 = vector.shape_cast %305 : vector<128xf32> to vector<1x128xf32>
    %307 = arith.addf %245, %306 : vector<1x128xf32>
    %308 = arith.mulf %304, %304 : vector<160x128xf32>
    %cst_210 = arith.constant dense<0.000000e+00> : vector<128xf32>
    %309 = vector.multi_reduction <add>, %308, %cst_210 [0] : vector<160x128xf32> to vector<128xf32>
    %310 = vector.shape_cast %309 : vector<128xf32> to vector<1x128xf32>
    %311 = arith.addf %249, %310 : vector<1x128xf32>
    %cst_211 = arith.constant 1.600000e-03 : f32
    %312 = vector.broadcast %cst_211 : f32 to vector<1x128xf32>
    %313 = arith.mulf %307, %312 : vector<1x128xf32>
    %cst_212 = arith.constant 1.600000e-03 : f32
    %314 = vector.broadcast %cst_212 : f32 to vector<1x128xf32>
    %315 = arith.mulf %311, %314 : vector<1x128xf32>
    %316 = arith.mulf %313, %313 : vector<1x128xf32>
    %317 = arith.subf %315, %316 : vector<1x128xf32>
    %cst_213 = arith.constant 1.000000e-03 : f32
    %318 = vector.broadcast %cst_213 : f32 to vector<1x128xf32>
    %319 = arith.addf %317, %318 : vector<1x128xf32>
    %320 = math.rsqrt %319 : vector<1x128xf32>
    %c0_214 = arith.constant 0 : index
    %c0_215 = arith.constant 0 : index
    %321 = vector.load %arg3[%c0_214, %c0_215] : memref<1x128xf32, #tpu.memory_space<vmem>>, vector<1x128xf32>
    %322 = arith.mulf %321, %320 : vector<1x128xf32>
    %c0_216 = arith.constant 0 : index
    %c0_217 = arith.constant 0 : index
    %323 = vector.load %arg4[%c0_216, %c0_217] : memref<1x128xf32, #tpu.memory_space<vmem>>, vector<1x128xf32>
    %324 = arith.mulf %313, %322 : vector<1x128xf32>
    %325 = arith.subf %323, %324 : vector<1x128xf32>
    %c0_218 = arith.constant 0 : index
    %c0_219 = arith.constant 0 : index
    %326 = vector.load %arg5[%c0_218, %c0_219] : memref<800x128xf32, #tpu.memory_space<vmem>>, vector<160x128xf32>
    %327 = vector.broadcast %322 : vector<1x128xf32> to vector<160x128xf32>
    %328 = arith.mulf %326, %327 : vector<160x128xf32>
    %329 = vector.broadcast %325 : vector<1x128xf32> to vector<160x128xf32>
    %330 = arith.addf %328, %329 : vector<160x128xf32>
    %cst_220 = arith.constant 0.000000e+00 : f32
    %331 = vector.broadcast %cst_220 : f32 to vector<160x128xf32>
    %332 = arith.maximumf %330, %331 : vector<160x128xf32>
    %c0_221 = arith.constant 0 : index
    %c0_222 = arith.constant 0 : index
    %333 = vector.load %arg5[%c0_221, %c0_222] : memref<800x128xf32, #tpu.memory_space<vmem>>, vector<160x128xf32>
    tpu.vector_store %arg5[%c0_221, %c0_222], %332 {strides = array<i32>} : memref<800x128xf32, #tpu.memory_space<vmem>>, vector<160x128xf32>,
    %c160_223 = arith.constant 160 : index
    %c0_224 = arith.constant 0 : index
    %334 = vector.load %arg5[%c160_223, %c0_224] : memref<800x128xf32, #tpu.memory_space<vmem>>, vector<160x128xf32>
    %335 = vector.broadcast %322 : vector<1x128xf32> to vector<160x128xf32>
    %336 = arith.mulf %334, %335 : vector<160x128xf32>
    %337 = vector.broadcast %325 : vector<1x128xf32> to vector<160x128xf32>
    %338 = arith.addf %336, %337 : vector<160x128xf32>
    %cst_225 = arith.constant 0.000000e+00 : f32
    %339 = vector.broadcast %cst_225 : f32 to vector<160x128xf32>
    %340 = arith.maximumf %338, %339 : vector<160x128xf32>
    %c160_226 = arith.constant 160 : index
    %c0_227 = arith.constant 0 : index
    %341 = vector.load %arg5[%c160_226, %c0_227] : memref<800x128xf32, #tpu.memory_space<vmem>>, vector<160x128xf32>
    tpu.vector_store %arg5[%c160_226, %c0_227], %340 {strides = array<i32>} : memref<800x128xf32, #tpu.memory_space<vmem>>, vector<160x128xf32>,
    %c320_228 = arith.constant 320 : index
    %c0_229 = arith.constant 0 : index
    %342 = vector.load %arg5[%c320_228, %c0_229] : memref<800x128xf32, #tpu.memory_space<vmem>>, vector<160x128xf32>
    %343 = vector.broadcast %322 : vector<1x128xf32> to vector<160x128xf32>
    %344 = arith.mulf %342, %343 : vector<160x128xf32>
    %345 = vector.broadcast %325 : vector<1x128xf32> to vector<160x128xf32>
    %346 = arith.addf %344, %345 : vector<160x128xf32>
    %cst_230 = arith.constant 0.000000e+00 : f32
    %347 = vector.broadcast %cst_230 : f32 to vector<160x128xf32>
    %348 = arith.maximumf %346, %347 : vector<160x128xf32>
    %c320_231 = arith.constant 320 : index
    %c0_232 = arith.constant 0 : index
    %349 = vector.load %arg5[%c320_231, %c0_232] : memref<800x128xf32, #tpu.memory_space<vmem>>, vector<160x128xf32>
    tpu.vector_store %arg5[%c320_231, %c0_232], %348 {strides = array<i32>} : memref<800x128xf32, #tpu.memory_space<vmem>>, vector<160x128xf32>,
    %c480_233 = arith.constant 480 : index
    %c0_234 = arith.constant 0 : index
    %350 = vector.load %arg5[%c480_233, %c0_234] : memref<800x128xf32, #tpu.memory_space<vmem>>, vector<160x128xf32>
    %351 = vector.broadcast %322 : vector<1x128xf32> to vector<160x128xf32>
    %352 = arith.mulf %350, %351 : vector<160x128xf32>
    %353 = vector.broadcast %325 : vector<1x128xf32> to vector<160x128xf32>
    %354 = arith.addf %352, %353 : vector<160x128xf32>
    %cst_235 = arith.constant 0.000000e+00 : f32
    %355 = vector.broadcast %cst_235 : f32 to vector<160x128xf32>
    %356 = arith.maximumf %354, %355 : vector<160x128xf32>
    %c480_236 = arith.constant 480 : index
    %c0_237 = arith.constant 0 : index
    %357 = vector.load %arg5[%c480_236, %c0_237] : memref<800x128xf32, #tpu.memory_space<vmem>>, vector<160x128xf32>
    tpu.vector_store %arg5[%c480_236, %c0_237], %356 {strides = array<i32>} : memref<800x128xf32, #tpu.memory_space<vmem>>, vector<160x128xf32>,
    %c640_238 = arith.constant 640 : index
    %c0_239 = arith.constant 0 : index
    %358 = vector.load %arg5[%c640_238, %c0_239] : memref<800x128xf32, #tpu.memory_space<vmem>>, vector<160x128xf32>
    %359 = vector.broadcast %322 : vector<1x128xf32> to vector<160x128xf32>
    %360 = arith.mulf %358, %359 : vector<160x128xf32>
    %361 = vector.broadcast %325 : vector<1x128xf32> to vector<160x128xf32>
    %362 = arith.addf %360, %361 : vector<160x128xf32>
    %cst_240 = arith.constant 0.000000e+00 : f32
    %363 = vector.broadcast %cst_240 : f32 to vector<160x128xf32>
    %364 = arith.maximumf %362, %363 : vector<160x128xf32>
    %c640_241 = arith.constant 640 : index
    %c0_242 = arith.constant 0 : index
    %365 = vector.load %arg5[%c640_241, %c0_242] : memref<800x128xf32, #tpu.memory_space<vmem>>, vector<160x128xf32>
    tpu.vector_store %arg5[%c640_241, %c0_242], %364 {strides = array<i32>} : memref<800x128xf32, #tpu.memory_space<vmem>>, vector<160x128xf32>,
    return
  }
  func.func @transform_0(%arg0: i32) -> (i32, i32) {
    %c0_i32 = arith.constant 0 : i32
    %c0_i32_0 = arith.constant 0 : i32
    %c0_i32_1 = arith.constant 0 : i32
    return %c0_i32, %c0_i32_0 : i32, i32
  }
  func.func @transform_1(%arg0: i32) -> (i32, i32, i32) {
    %c0_i32 = arith.constant 0 : i32
    %c0_i32_0 = arith.constant 0 : i32
    %c0_i32_1 = arith.constant 0 : i32
    %c0_i32_2 = arith.constant 0 : i32
    return %c0_i32, %c0_i32_0, %c0_i32_1 : i32, i32, i32
  }
  func.func @transform_2(%arg0: i32) -> (i32, i32) {
    %c0_i32 = arith.constant 0 : i32
    %c0_i32_0 = arith.constant 0 : i32
    %c0_i32_1 = arith.constant 0 : i32
    return %c0_i32, %c0_i32_0 : i32, i32
  }
  func.func @transform_3(%arg0: i32) -> (i32, i32) {
    %c0_i32 = arith.constant 0 : i32
    %c0_i32_0 = arith.constant 0 : i32
    %c0_i32_1 = arith.constant 0 : i32
    return %c0_i32, %c0_i32_0 : i32, i32
  }
  func.func @transform_4(%arg0: i32) -> (i32, i32) {
    %c0_i32 = arith.constant 0 : i32
    %c0_i32_0 = arith.constant 0 : i32
    %c0_i32_1 = arith.constant 0 : i32
    return %c0_i32, %c0_i32_0 : i32, i32
  }
}

</mosaic_0001>

<llo_original>
// kernel: tpu_custom_call.1
$region0: #{tpu_custom_call.1}
  #allocation0 [shape = 'u32[]', space=smem, size = 0x4, offset = 0x4, fixed_abs, tag = 'smem constant byte address 0x4 - core index']
  #allocation1 [shape = 'u32[144,128]{1,0:T(1,128)}', space=vmem, size = 0x12000, scoped, tag = 'internal scratch']
  %s0 = inlined_call_operand.hbm [shape: bf16[896,128], index: 0, kind: input, shape index: {}]
  %s1 = inlined_call_operand.hbm [shape: bf16[9,128,128], index: 1, kind: input, shape index: {}]
  %s2 = inlined_call_operand.vmem [shape: f32[1,128], index: 2, kind: input, shape index: {}]
  %s3 = inlined_call_operand.vmem [shape: f32[1,128], index: 3, kind: input, shape index: {}]
  %s4 = inlined_call_operand.hbm [shape: f32[800,128], index: 4, kind: output, shape index: {}]
  %s5 = sld [smem:[#allocation0]]
  $region34: #{tpu_custom_call.1} parent=0
    _
  %s7 = ssub.s32 1, %s5
  %s8 = scalar_select 0, %s7, %s5
  $region1: #{tpu_custom_call.1} parent=0
    #allocation2 [shape = 'u8[229376]{0}', space=vmem, size = 0x38000, scoped, tag = 'input window, operand 0, single buffered']
    #allocation3 [shape = 's32[1]{0}', space=sflag, size = 0x4, scoped, tag = 'scoped memory for tpu_custom_call.1']
    #allocation4 [shape = 's32[1]{0}', space=sflag, size = 0x4, scoped, tag = 'scoped memory for tpu_custom_call.1']
    #allocation5 [shape = 'u8[294912]{0}', space=vmem, size = 0x48000, scoped, tag = 'input window, operand 1, single buffered']
    #allocation6 [shape = 's32[1]{0}', space=sflag, size = 0x4, scoped, tag = 'scoped memory for tpu_custom_call.1']
    #allocation7 [shape = 'u8[409600]{0}', space=vmem, size = 0x64000, scoped, tag = 'output window, operand 0, single buffered']
    %9 = vsyncpa [#allocation3], 0
    %10 = vsyncpa [#allocation6], 0
    %11 = vsyncpa [#allocation4], 0
    // Predicated region
    $region2: #{tpu_custom_call.1} parent=1 // pred_check
      _
    $region3: #{tpu_custom_call.1} parent=1 // pred_check_branch
      %13 = sbr.rel (0) target = $region5
    $region4: #{tpu_custom_call.1} parent=1 // pred_region
      %s15 = ssub.s32 7168, 7168
      %16 = vsyncadd [#allocation3], %s15
      %s17 = sshll.u32 [#allocation2], 4
      %s18 = int_to_ptr.vmem [resolvable:$true] %s17
      %23 = dma.hbm_to_vmem [thread:$0]  %s0, 7168, %s18, [#allocation3], 64, 64, 4
    $region5: #{tpu_custom_call.1} parent=1 // pred_fallthru
      _
    // Predicated region
    $region6: #{tpu_custom_call.1} parent=1 // pred_check
      _
    $region7: #{tpu_custom_call.1} parent=1 // pred_check_branch
      %25 = sbr.rel (0) target = $region9
    $region8: #{tpu_custom_call.1} parent=1 // pred_region
      %s27 = ssub.s32 9216, 9216
      %28 = vsyncadd [#allocation6], %s27
      %s29 = sshll.u32 [#allocation5], 4
      %s30 = int_to_ptr.vmem [resolvable:$true] %s29
      %35 = dma.hbm_to_vmem [thread:$0]  %s1, 9216, %s30, [#allocation6], 64, 64, 4
    $region9: #{tpu_custom_call.1} parent=1 // pred_fallthru
      _
    // Predicated region
    $region10: #{tpu_custom_call.1} parent=1 // pred_check
      _
    $region11: #{tpu_custom_call.1} parent=1 // pred_check_branch
      %37 = sbr.rel (0) target = $region13
    $region12: #{tpu_custom_call.1} parent=1 // pred_region
      _
    $region13: #{tpu_custom_call.1} parent=1 // pred_fallthru
      _
    // Predicated region
    $region14: #{tpu_custom_call.1} parent=1 // pred_check
      _
    $region15: #{tpu_custom_call.1} parent=1 // pred_check_branch
      %39 = sbr.rel (0) target = $region17
    $region16: #{tpu_custom_call.1} parent=1 // pred_region
      _
    $region17: #{tpu_custom_call.1} parent=1 // pred_fallthru
      _
    // Predicated region
    $region18: #{tpu_custom_call.1} parent=1 // pred_check
      _
    $region19: #{tpu_custom_call.1} parent=1 // pred_check_branch
      %41 = sbr.rel (0) target = $region21
    $region20: #{tpu_custom_call.1} parent=1 // pred_region
      %42 = dma.done [#allocation3], 7168
    $region21: #{tpu_custom_call.1} parent=1 // pred_fallthru
      _
    // Predicated region
    $region22: #{tpu_custom_call.1} parent=1 // pred_check
      _
    $region23: #{tpu_custom_call.1} parent=1 // pred_check_branch
      %44 = sbr.rel (0) target = $region25
    $region24: #{tpu_custom_call.1} parent=1 // pred_region
      %45 = dma.done [#allocation6], 9216
    $region25: #{tpu_custom_call.1} parent=1 // pred_fallthru
      _
    %v47 = vld [vmem:[#allocation2] sm:$0xf]
    %v48 = vld [vmem:[#allocation2 + $0x4] sm:$0xf]
    %v49 = vld [vmem:[#allocation2 + $0x8] sm:$0xf]
    %v50 = vld [vmem:[#allocation2 + $0xc] sm:$0xf]
    %v51 = vld [vmem:[#allocation2 + $0x10] sm:$0xf]
    %v52 = vld [vmem:[#allocation2 + $0x14] sm:$0xf]
    %v53 = vld [vmem:[#allocation2 + $0x18] sm:$0xf]
    %v54 = vld [vmem:[#allocation2 + $0x1c] sm:$0xf]
    %v55 = vld [vmem:[#allocation2 + $0x20] sm:$0xf]
    %v56 = vld [vmem:[#allocation2 + $0x24] sm:$0xf]
    %v57 = vld [vmem:[#allocation2 + $0x28] sm:$0xf]
    %v58 = vld [vmem:[#allocation2 + $0x2c] sm:$0xf]
    %v59 = vld [vmem:[#allocation2 + $0x30] sm:$0xf]
    %v60 = vld [vmem:[#allocation2 + $0x34] sm:$0xf]
    %v61 = vld [vmem:[#allocation2 + $0x38] sm:$0xf]
    %v62 = vld [vmem:[#allocation2 + $0x3c] sm:$0xf]
    %v63 = vld [vmem:[#allocation2 + $0x40] sm:$0xf]
    %v64 = vld [vmem:[#allocation2 + $0x44] sm:$0xf]
    %v65 = vld [vmem:[#allocation2 + $0x48] sm:$0xf]
    %v66 = vld [vmem:[#allocation2 + $0x4c] sm:$0xf]
    %v67 = vld [vmem:[#allocation2 + $0x50] sm:$0xf]
    %v68 = vld [vmem:[#allocation2 + $0x54] sm:$0xf]
    %v69 = vld [vmem:[#allocation2 + $0x58] sm:$0xf]
    %v70 = vld [vmem:[#allocation2 + $0x5c] sm:$0xf]
    %v71 = vld [vmem:[#allocation2 + $0x60] sm:$0xf]
    %v72 = vld [vmem:[#allocation2 + $0x64] sm:$0xf]
    %v73 = vld [vmem:[#allocation2 + $0x68] sm:$0xf]
    %v74 = vld [vmem:[#allocation2 + $0x6c] sm:$0xf]
    %v75 = vld [vmem:[#allocation2 + $0x70] sm:$0x1]
    %v76 = vld [vmem:[#allocation5] sm:$0xf]
    %v77 = vld [vmem:[#allocation5 + $0x4] sm:$0xf]
    %v78 = vld [vmem:[#allocation5 + $0x8] sm:$0xf]
    %v79 = vld [vmem:[#allocation5 + $0xc] sm:$0xf]
    %v80 = vld [vmem:[#allocation5 + $0x10] sm:$0xf]
    %v81 = vld [vmem:[#allocation5 + $0x14] sm:$0xf]
    %v82 = vld [vmem:[#allocation5 + $0x18] sm:$0xf]
    %v83 = vld [vmem:[#allocation5 + $0x1c] sm:$0xf]
    %v84 = vld [vmem:[#allocation5 + $0x20] sm:$0xf]
    %v85 = vld [vmem:[#allocation5 + $0x24] sm:$0xf]
    %v86 = vld [vmem:[#allocation5 + $0x28] sm:$0xf]
    %v87 = vld [vmem:[#allocation5 + $0x2c] sm:$0xf]
    %v88 = vld [vmem:[#allocation5 + $0x30] sm:$0xf]
    %v89 = vld [vmem:[#allocation5 + $0x34] sm:$0xf]
    %v90 = vld [vmem:[#allocation5 + $0x38] sm:$0xf]
    %v91 = vld [vmem:[#allocation5 + $0x3c] sm:$0xf]
    %s92 = scalar_lea.vmem [#allocation5], 64
    %v93 = vld [vmem:[%s92] sm:$0xf]
    %v94 = vld [vmem:[%s92 + $0x4] sm:$0xf]
    %v95 = vld [vmem:[%s92 + $0x8] sm:$0xf]
    %v96 = vld [vmem:[%s92 + $0xc] sm:$0xf]
    %v97 = vld [vmem:[%s92 + $0x10] sm:$0xf]
    %v98 = vld [vmem:[%s92 + $0x14] sm:$0xf]
    %v99 = vld [vmem:[%s92 + $0x18] sm:$0xf]
    %v100 = vld [vmem:[%s92 + $0x1c] sm:$0xf]
    %v101 = vld [vmem:[%s92 + $0x20] sm:$0xf]
    %v102 = vld [vmem:[%s92 + $0x24] sm:$0xf]
    %v103 = vld [vmem:[%s92 + $0x28] sm:$0xf]
    %v104 = vld [vmem:[%s92 + $0x2c] sm:$0xf]
    %v105 = vld [vmem:[%s92 + $0x30] sm:$0xf]
    %v106 = vld [vmem:[%s92 + $0x34] sm:$0xf]
    %v107 = vld [vmem:[%s92 + $0x38] sm:$0xf]
    %v108 = vld [vmem:[%s92 + $0x3c] sm:$0xf]
    %v130 = vunpack.c.l.b16 %v47
    %v131 = vunpack.c.l.b16 %v48
    %v132 = vunpack.c.l.b16 %v49
    %v133 = vunpack.c.l.b16 %v50
    %v134 = vunpack.c.l.b16 %v51
    %v135 = vunpack.c.l.b16 %v52
    %v136 = vunpack.c.l.b16 %v53
    %v137 = vunpack.c.l.b16 %v54
    %v138 = vunpack.c.l.b16 %v55
    %v139 = vunpack.c.l.b16 %v56
    %v140 = vunpack.c.l.b16 %v57
    %v141 = vunpack.c.l.b16 %v58
    %v142 = vunpack.c.l.b16 %v59
    %v143 = vunpack.c.l.b16 %v60
    %v144 = vunpack.c.l.b16 %v61
    %v145 = vunpack.c.l.b16 %v62
    %v146 = vunpack.c.l.b16 %v63
    %v147 = vunpack.c.l.b16 %v64
    %v148 = vunpack.c.l.b16 %v65
    %v149 = vunpack.c.l.b16 %v66
    %v150 = vunpack.c.l.b16 %v67
    %v151 = vpack.c.b16 %v131, %v130
    %v152 = vpack.c.b16 %v133, %v132
    %v153 = vpack.c.b16 %v135, %v134
    %v154 = vpack.c.b16 %v137, %v136
    %v155 = vpack.c.b16 %v139, %v138
    %v156 = vpack.c.b16 %v141, %v140
    %v157 = vpack.c.b16 %v143, %v142
    %v158 = vpack.c.b16 %v145, %v144
    %v159 = vpack.c.b16 %v147, %v146
    %v160 = vpack.c.b16 %v149, %v148
    %v161 = vpack.c.b16 %v150, %v150
    %vm162 = vsmask.f32 7424
    %v164 = vshrl.u32 %v151, 16
    %v166 = vshll.u32 %v151, 16
    %v168 = vrot.slane %v166, 1
    %v169 = vor.u32 %v164, %v168
    %v171 = vshll.u32 %v152, 16
    %v173 = vrot.slane %v171, 1
    %v174 = vsel %vm162, %v169, %v173
    %v175 = vshrl.u32 %v152, 16
    %v177 = vor.u32 %v175, %v173
    %v179 = vshll.u32 %v153, 16
    %v181 = vrot.slane %v179, 1
    %v182 = vsel %vm162, %v177, %v181
    %v183 = vshrl.u32 %v153, 16
    %v185 = vor.u32 %v183, %v181
    %v187 = vshll.u32 %v154, 16
    %v189 = vrot.slane %v187, 1
    %v190 = vsel %vm162, %v185, %v189
    %v191 = vshrl.u32 %v154, 16
    %v193 = vor.u32 %v191, %v189
    %v195 = vshll.u32 %v155, 16
    %v197 = vrot.slane %v195, 1
    %v198 = vsel %vm162, %v193, %v197
    %v199 = vshrl.u32 %v155, 16
    %v201 = vor.u32 %v199, %v197
    %v203 = vshll.u32 %v156, 16
    %v205 = vrot.slane %v203, 1
    %v206 = vsel %vm162, %v201, %v205
    %v207 = vshrl.u32 %v156, 16
    %v209 = vor.u32 %v207, %v205
    %v211 = vshll.u32 %v157, 16
    %v213 = vrot.slane %v211, 1
    %v214 = vsel %vm162, %v209, %v213
    %v215 = vshrl.u32 %v157, 16
    %v217 = vor.u32 %v215, %v213
    %v219 = vshll.u32 %v158, 16
    %v221 = vrot.slane %v219, 1
    %v222 = vsel %vm162, %v217, %v221
    %v223 = vshrl.u32 %v158, 16
    %v225 = vor.u32 %v223, %v221
    %v227 = vshll.u32 %v159, 16
    %v229 = vrot.slane %v227, 1
    %v230 = vsel %vm162, %v225, %v229
    %v231 = vshrl.u32 %v159, 16
    %v233 = vor.u32 %v231, %v229
    %v235 = vshll.u32 %v160, 16
    %v237 = vrot.slane %v235, 1
    %v238 = vsel %vm162, %v233, %v237
    %v239 = vshrl.u32 %v160, 16
    %v241 = vor.u32 %v239, %v237
    %v243 = vshll.u32 %v161, 16
    %v245 = vrot.slane %v243, 1
    %v246 = vsel %vm162, %v241, %v245
    %v273 = vunpack.c.l.b16 %v93
    %v274 = vunpack.c.l.b16 %v94
    %v275 = vunpack.c.l.b16 %v95
    %v276 = vunpack.c.l.b16 %v96
    %v277 = vunpack.c.l.b16 %v97
    %v278 = vunpack.c.l.b16 %v98
    %v279 = vunpack.c.l.b16 %v99
    %v280 = vunpack.c.l.b16 %v100
    %v281 = vunpack.c.l.b16 %v101
    %v282 = vunpack.c.l.b16 %v102
    %v283 = vunpack.c.l.b16 %v103
    %v284 = vunpack.c.l.b16 %v104
    %v285 = vunpack.c.l.b16 %v105
    %v286 = vunpack.c.l.b16 %v106
    %v287 = vunpack.c.l.b16 %v107
    %v288 = vunpack.c.l.b16 %v108
    %v289 = vpack.c.b16 %v274, %v273
    %v290 = vpack.c.b16 %v276, %v275
    %v291 = vpack.c.b16 %v278, %v277
    %v292 = vpack.c.b16 %v280, %v279
    %v293 = vpack.c.b16 %v282, %v281
    %v294 = vpack.c.b16 %v284, %v283
    %v295 = vpack.c.b16 %v286, %v285
    %v296 = vpack.c.b16 %v288, %v287
    %305 = vmatprep.subr.bf16.mxu0 0
    %306 = vmatpush1.bf16.msra.mxu0 %v289
    %307 = vmatprep.subr.bf16.mxu0 0
    %308 = vmatpush1.bf16.msra.mxu0 %v290
    %309 = vmatprep.subr.bf16.mxu0 0
    %310 = vmatpush1.bf16.msra.mxu0 %v291
    %311 = vmatprep.subr.bf16.mxu0 0
    %312 = vmatpush1.bf16.msra.mxu0 %v292
    %313 = vmatprep.subr.bf16.mxu0 0
    %314 = vmatpush1.bf16.msra.mxu0 %v293
    %315 = vmatprep.subr.bf16.mxu0 0
    %316 = vmatpush1.bf16.msra.mxu0 %v294
    %317 = vmatprep.subr.bf16.mxu0 0
    %318 = vmatpush1.bf16.msra.mxu0 %v295
    %319 = vmatprep.subr.bf16.mxu0 0
    %320 = vmatpush1.bf16.msra.mxu0 %v296
    %321 = vmatprep.subr.bf16.mxu0 0
    %322 = vmatpush1.bf16.msra.mxu0 0
    %323 = vmatprep.subr.bf16.mxu0 0
    %324 = vmatpush1.bf16.msra.mxu0 0
    %325 = vmatprep.subr.bf16.mxu0 0
    %326 = vmatpush1.bf16.msra.mxu0 0
    %327 = vmatprep.subr.bf16.mxu0 0
    %328 = vmatpush1.bf16.msra.mxu0 0
    %329 = vmatprep.subr.bf16.mxu0 0
    %330 = vmatpush1.bf16.msra.mxu0 0
    %331 = vmatprep.subr.bf16.mxu0 0
    %332 = vmatpush1.bf16.msra.mxu0 0
    %333 = vmatprep.subr.bf16.mxu0 0
    %334 = vmatpush1.bf16.msra.mxu0 0
    %335 = vmatprep.subr.bf16.mxu0 0
    %336 = vmatpush1.bf16.msra.mxu0 0
    %337 = vmatprep.mubr.bf16.mxu0 0
    %338 = vmatmul.mubr.bf16.gmra.mrb[0].mxu0 %v174
    %v339 = vpop.f32.mrb[0].mxu0
    %v340 = vadd.f32 0.0, %v339
    %v341 = vpop.f32.mrb[0].mxu0
    %v342 = vpop.f32.mrb[0].mxu0
    %v343 = vadd.f32 0.0, %v342
    %v344 = vpop.f32.mrb[0].mxu0
    %345 = vmatprep.mubr.bf16.mxu0 0
    %346 = vmatmul.mubr.bf16.gmra.mrb[0].mxu0 %v182
    %v347 = vpop.f32.mrb[0].mxu0
    %v348 = vadd.f32 0.0, %v347
    %v349 = vpop.f32.mrb[0].mxu0
    %v350 = vpop.f32.mrb[0].mxu0
    %v351 = vadd.f32 0.0, %v350
    %v352 = vpop.f32.mrb[0].mxu0
    %353 = vmatprep.mubr.bf16.mxu0 0
    %354 = vmatmul.mubr.bf16.gmra.mrb[0].mxu0 %v190
    %v355 = vpop.f32.mrb[0].mxu0
    %v356 = vadd.f32 0.0, %v355
    %v357 = vpop.f32.mrb[0].mxu0
    %v358 = vpop.f32.mrb[0].mxu0
    %v359 = vadd.f32 0.0, %v358
    %v360 = vpop.f32.mrb[0].mxu0
    %361 = vmatprep.mubr.bf16.mxu0 0
    %362 = vmatmul.mubr.bf16.gmra.mrb[0].mxu0 %v198
    %v363 = vpop.f32.mrb[0].mxu0
    %v364 = vadd.f32 0.0, %v363
    %v365 = vpop.f32.mrb[0].mxu0
    %v366 = vpop.f32.mrb[0].mxu0
    %v367 = vadd.f32 0.0, %v366
    %v368 = vpop.f32.mrb[0].mxu0
    %369 = vmatprep.mubr.bf16.mxu0 0
    %370 = vmatmul.mubr.bf16.gmra.mrb[0].mxu0 %v206
    %v371 = vpop.f32.mrb[0].mxu0
    %v372 = vadd.f32 0.0, %v371
    %v373 = vpop.f32.mrb[0].mxu0
    %v374 = vpop.f32.mrb[0].mxu0
    %v375 = vadd.f32 0.0, %v374
    %v376 = vpop.f32.mrb[0].mxu0
    %377 = vmatprep.mubr.bf16.mxu0 0
    %378 = vmatmul.mubr.bf16.gmra.mrb[0].mxu0 %v214
    %v379 = vpop.f32.mrb[0].mxu0
    %v380 = vadd.f32 0.0, %v379
    %v381 = vpop.f32.mrb[0].mxu0
    %v382 = vpop.f32.mrb[0].mxu0
    %v383 = vadd.f32 0.0, %v382
    %v384 = vpop.f32.mrb[0].mxu0
    %385 = vmatprep.mubr.bf16.mxu0 0
    %386 = vmatmul.mubr.bf16.gmra.mrb[0].mxu0 %v222
    %v387 = vpop.f32.mrb[0].mxu0
    %v388 = vadd.f32 0.0, %v387
    %v389 = vpop.f32.mrb[0].mxu0
    %v390 = vpop.f32.mrb[0].mxu0
    %v391 = vadd.f32 0.0, %v390
    %v392 = vpop.f32.mrb[0].mxu0
    %393 = vmatprep.mubr.bf16.mxu0 0
    %394 = vmatmul.mubr.bf16.gmra.mrb[0].mxu0 %v230
    %v395 = vpop.f32.mrb[0].mxu0
    %v396 = vadd.f32 0.0, %v395
    %v397 = vpop.f32.mrb[0].mxu0
    %v398 = vpop.f32.mrb[0].mxu0
    %v399 = vadd.f32 0.0, %v398
    %v400 = vpop.f32.mrb[0].mxu0
    %401 = vmatprep.mubr.bf16.mxu0 0
    %402 = vmatmul.mubr.bf16.gmra.mrb[0].mxu0 %v238
    %v403 = vpop.f32.mrb[0].mxu0
    %v404 = vadd.f32 0.0, %v403
    %v405 = vpop.f32.mrb[0].mxu0
    %v406 = vpop.f32.mrb[0].mxu0
    %v407 = vadd.f32 0.0, %v406
    %v408 = vpop.f32.mrb[0].mxu0
    %409 = vmatprep.mubr.bf16.mxu0 0
    %410 = vmatmul.mubr.bf16.gmra.mrb[0].mxu0 %v246
    %v411 = vpop.f32.mrb[0].mxu0
    %v412 = vadd.f32 0.0, %v411
    %v413 = vpop.f32.mrb[0].mxu0
    %v414 = vpop.f32.mrb[0].mxu0
    %v415 = vadd.f32 0.0, %v414
    %v416 = vpop.f32.mrb[0].mxu0
    %417 = vdwg.mxu0
    %v444 = vunpack.c.l.b16 %v76
    %v445 = vunpack.c.l.b16 %v77
    %v446 = vunpack.c.l.b16 %v78
    %v447 = vunpack.c.l.b16 %v79
    %v448 = vunpack.c.l.b16 %v80
    %v449 = vunpack.c.l.b16 %v81
    %v450 = vunpack.c.l.b16 %v82
    %v451 = vunpack.c.l.b16 %v83
    %v452 = vunpack.c.l.b16 %v84
    %v453 = vunpack.c.l.b16 %v85
    %v454 = vunpack.c.l.b16 %v86
    %v455 = vunpack.c.l.b16 %v87
    %v456 = vunpack.c.l.b16 %v88
    %v457 = vunpack.c.l.b16 %v89
    %v458 = vunpack.c.l.b16 %v90
    %v459 = vunpack.c.l.b16 %v91
    %v460 = vpack.c.b16 %v445, %v444
    %v461 = vpack.c.b16 %v447, %v446
    %v462 = vpack.c.b16 %v449, %v448
    %v463 = vpack.c.b16 %v451, %v450
    %v464 = vpack.c.b16 %v453, %v452
    %v465 = vpack.c.b16 %v455, %v454
    %v466 = vpack.c.b16 %v457, %v456
    %v467 = vpack.c.b16 %v459, %v458
    %476 = vmatprep.subr.bf16.mxu0 0
    %477 = vmatpush1.bf16.msra.mxu0 %v460
    %478 = vmatprep.subr.bf16.mxu0 0
    %479 = vmatpush1.bf16.msra.mxu0 %v461
    %480 = vmatprep.subr.bf16.mxu0 0
    %481 = vmatpush1.bf16.msra.mxu0 %v462
    %482 = vmatprep.subr.bf16.mxu0 0
    %483 = vmatpush1.bf16.msra.mxu0 %v463
    %484 = vmatprep.subr.bf16.mxu0 0
    %485 = vmatpush1.bf16.msra.mxu0 %v464
    %486 = vmatprep.subr.bf16.mxu0 0
    %487 = vmatpush1.bf16.msra.mxu0 %v465
    %488 = vmatprep.subr.bf16.mxu0 0
    %489 = vmatpush1.bf16.msra.mxu0 %v466
    %490 = vmatprep.subr.bf16.mxu0 0
    %491 = vmatpush1.bf16.msra.mxu0 %v467
    %492 = vmatprep.subr.bf16.mxu0 0
    %493 = vmatpush1.bf16.msra.mxu0 0
    %494 = vmatprep.subr.bf16.mxu0 0
    %495 = vmatpush1.bf16.msra.mxu0 0
    %496 = vmatprep.subr.bf16.mxu0 0
    %497 = vmatpush1.bf16.msra.mxu0 0
    %498 = vmatprep.subr.bf16.mxu0 0
    %499 = vmatpush1.bf16.msra.mxu0 0
    %500 = vmatprep.subr.bf16.mxu0 0
    %501 = vmatpush1.bf16.msra.mxu0 0
    %502 = vmatprep.subr.bf16.mxu0 0
    %503 = vmatpush1.bf16.msra.mxu0 0
    %504 = vmatprep.subr.bf16.mxu0 0
    %505 = vmatpush1.bf16.msra.mxu0 0
    %506 = vmatprep.subr.bf16.mxu0 0
    %507 = vmatpush1.bf16.msra.mxu0 0
    %508 = vmatprep.mubr.bf16.mxu0 0
    %509 = vmatmul.mubr.bf16.gmra.mrb[0].mxu0 %v151
    %v510 = vpop.f32.mrb[0].mxu0
    %v511 = vadd.f32 %v340, %v510
    %v512 = vpop.f32.mrb[0].mxu0
    %v513 = vpop.f32.mrb[0].mxu0
    %v514 = vadd.f32 %v343, %v513
    %v515 = vpop.f32.mrb[0].mxu0
    %516 = vmatprep.mubr.bf16.mxu0 0
    %517 = vmatmul.mubr.bf16.gmra.mrb[0].mxu0 %v152
    %v518 = vpop.f32.mrb[0].mxu0
    %v519 = vadd.f32 %v348, %v518
    %v520 = vpop.f32.mrb[0].mxu0
    %v521 = vpop.f32.mrb[0].mxu0
    %v522 = vadd.f32 %v351, %v521
    %v523 = vpop.f32.mrb[0].mxu0
    %524 = vmatprep.mubr.bf16.mxu0 0
    %525 = vmatmul.mubr.bf16.gmra.mrb[0].mxu0 %v153
    %v526 = vpop.f32.mrb[0].mxu0
    %v527 = vadd.f32 %v356, %v526
    %v528 = vpop.f32.mrb[0].mxu0
    %v529 = vpop.f32.mrb[0].mxu0
    %v530 = vadd.f32 %v359, %v529
    %v531 = vpop.f32.mrb[0].mxu0
    %532 = vmatprep.mubr.bf16.mxu0 0
    %533 = vmatmul.mubr.bf16.gmra.mrb[0].mxu0 %v154
    %v534 = vpop.f32.mrb[0].mxu0
    %v535 = vadd.f32 %v364, %v534
    %v536 = vpop.f32.mrb[0].mxu0
    %v537 = vpop.f32.mrb[0].mxu0
    %v538 = vadd.f32 %v367, %v537
    %v539 = vpop.f32.mrb[0].mxu0
    %540 = vmatprep.mubr.bf16.mxu0 0
    %541 = vmatmul.mubr.bf16.gmra.mrb[0].mxu0 %v155
    %v542 = vpop.f32.mrb[0].mxu0
    %v543 = vadd.f32 %v372, %v542
    %v544 = vpop.f32.mrb[0].mxu0
    %v545 = vpop.f32.mrb[0].mxu0
    %v546 = vadd.f32 %v375, %v545
    %v547 = vpop.f32.mrb[0].mxu0
    %548 = vmatprep.mubr.bf16.mxu0 0
    %549 = vmatmul.mubr.bf16.gmra.mrb[0].mxu0 %v156
    %v550 = vpop.f32.mrb[0].mxu0
    %v551 = vadd.f32 %v380, %v550
    %v552 = vpop.f32.mrb[0].mxu0
    %v553 = vpop.f32.mrb[0].mxu0
    %v554 = vadd.f32 %v383, %v553
    %v555 = vpop.f32.mrb[0].mxu0
    %556 = vmatprep.mubr.bf16.mxu0 0
    %557 = vmatmul.mubr.bf16.gmra.mrb[0].mxu0 %v157
    %v558 = vpop.f32.mrb[0].mxu0
    %v559 = vadd.f32 %v388, %v558
    %v560 = vpop.f32.mrb[0].mxu0
    %v561 = vpop.f32.mrb[0].mxu0
    %v562 = vadd.f32 %v391, %v561
    %v563 = vpop.f32.mrb[0].mxu0
    %564 = vmatprep.mubr.bf16.mxu0 0
    %565 = vmatmul.mubr.bf16.gmra.mrb[0].mxu0 %v158
    %v566 = vpop.f32.mrb[0].mxu0
    %v567 = vadd.f32 %v396, %v566
    %v568 = vpop.f32.mrb[0].mxu0
    %v569 = vpop.f32.mrb[0].mxu0
    %v570 = vadd.f32 %v399, %v569
    %v571 = vpop.f32.mrb[0].mxu0
    %572 = vmatprep.mubr.bf16.mxu0 0
    %573 = vmatmul.mubr.bf16.gmra.mrb[0].mxu0 %v159
    %v574 = vpop.f32.mrb[0].mxu0
    %v575 = vadd.f32 %v404, %v574
    %v576 = vpop.f32.mrb[0].mxu0
    %v577 = vpop.f32.mrb[0].mxu0
    %v578 = vadd.f32 %v407, %v577
    %v579 = vpop.f32.mrb[0].mxu0
    %580 = vmatprep.mubr.bf16.mxu0 0
    %581 = vmatmul.mubr.bf16.gmra.mrb[0].mxu0 %v160
    %v582 = vpop.f32.mrb[0].mxu0
    %v583 = vadd.f32 %v412, %v582
    %v584 = vpop.f32.mrb[0].mxu0
    %v585 = vpop.f32.mrb[0].mxu0
    %v586 = vadd.f32 %v415, %v585
    %v587 = vpop.f32.mrb[0].mxu0
    %588 = vdwg.mxu0
    %s589 = scalar_lea.vmem [#allocation5], 128
    %v590 = vld [vmem:[%s589] sm:$0xf]
    %v591 = vld [vmem:[%s589 + $0x4] sm:$0xf]
    %v592 = vld [vmem:[%s589 + $0x8] sm:$0xf]
    %v593 = vld [vmem:[%s589 + $0xc] sm:$0xf]
    %v594 = vld [vmem:[%s589 + $0x10] sm:$0xf]
    %v595 = vld [vmem:[%s589 + $0x14] sm:$0xf]
    %v596 = vld [vmem:[%s589 + $0x18] sm:$0xf]
    %v597 = vld [vmem:[%s589 + $0x1c] sm:$0xf]
    %v598 = vld [vmem:[%s589 + $0x20] sm:$0xf]
    %v599 = vld [vmem:[%s589 + $0x24] sm:$0xf]
    %v600 = vld [vmem:[%s589 + $0x28] sm:$0xf]
    %v601 = vld [vmem:[%s589 + $0x2c] sm:$0xf]
    %v602 = vld [vmem:[%s589 + $0x30] sm:$0xf]
    %v603 = vld [vmem:[%s589 + $0x34] sm:$0xf]
    %v604 = vld [vmem:[%s589 + $0x38] sm:$0xf]
    %v605 = vld [vmem:[%s589 + $0x3c] sm:$0xf]
    %vm606 = vcmask 1046528
    %v607 = vrot.slane %v151, 1
    %v608 = vrot.slane %v152, 1
    %v609 = vsel %vm606, %v607, %v608
    %v610 = vrot.slane %v153, 1
    %v611 = vsel %vm606, %v608, %v610
    %v612 = vrot.slane %v154, 1
    %v613 = vsel %vm606, %v610, %v612
    %v614 = vrot.slane %v155, 1
    %v615 = vsel %vm606, %v612, %v614
    %v616 = vrot.slane %v156, 1
    %v617 = vsel %vm606, %v614, %v616
    %v618 = vrot.slane %v157, 1
    %v619 = vsel %vm606, %v616, %v618
    %v620 = vrot.slane %v158, 1
    %v621 = vsel %vm606, %v618, %v620
    %v622 = vrot.slane %v159, 1
    %v623 = vsel %vm606, %v620, %v622
    %v624 = vrot.slane %v160, 1
    %v625 = vsel %vm606, %v622, %v624
    %v626 = vrot.slane %v161, 1
    %v627 = vsel %vm606, %v624, %v626
    %v654 = vunpack.c.l.b16 %v590
    %v655 = vunpack.c.l.b16 %v591
    %v656 = vunpack.c.l.b16 %v592
    %v657 = vunpack.c.l.b16 %v593
    %v658 = vunpack.c.l.b16 %v594
    %v659 = vunpack.c.l.b16 %v595
    %v660 = vunpack.c.l.b16 %v596
    %v661 = vunpack.c.l.b16 %v597
    %v662 = vunpack.c.l.b16 %v598
    %v663 = vunpack.c.l.b16 %v599
    %v664 = vunpack.c.l.b16 %v600
    %v665 = vunpack.c.l.b16 %v601
    %v666 = vunpack.c.l.b16 %v602
    %v667 = vunpack.c.l.b16 %v603
    %v668 = vunpack.c.l.b16 %v604
    %v669 = vunpack.c.l.b16 %v605
    %v670 = vpack.c.b16 %v655, %v654
    %v671 = vpack.c.b16 %v657, %v656
    %v672 = vpack.c.b16 %v659, %v658
    %v673 = vpack.c.b16 %v661, %v660
    %v674 = vpack.c.b16 %v663, %v662
    %v675 = vpack.c.b16 %v665, %v664
    %v676 = vpack.c.b16 %v667, %v666
    %v677 = vpack.c.b16 %v669, %v668
    %686 = vmatprep.subr.bf16.mxu0 0
    %687 = vmatpush1.bf16.msra.mxu0 %v670
    %688 = vmatprep.subr.bf16.mxu0 0
    %689 = vmatpush1.bf16.msra.mxu0 %v671
    %690 = vmatprep.subr.bf16.mxu0 0
    %691 = vmatpush1.bf16.msra.mxu0 %v672
    %692 = vmatprep.subr.bf16.mxu0 0
    %693 = vmatpush1.bf16.msra.mxu0 %v673
    %694 = vmatprep.subr.bf16.mxu0 0
    %695 = vmatpush1.bf16.msra.mxu0 %v674
    %696 = vmatprep.subr.bf16.mxu0 0
    %697 = vmatpush1.bf16.msra.mxu0 %v675
    %698 = vmatprep.subr.bf16.mxu0 0
    %699 = vmatpush1.bf16.msra.mxu0 %v676
    %700 = vmatprep.subr.bf16.mxu0 0
    %701 = vmatpush1.bf16.msra.mxu0 %v677
    %702 = vmatprep.subr.bf16.mxu0 0
    %703 = vmatpush1.bf16.msra.mxu0 0
    %704 = vmatprep.subr.bf16.mxu0 0
    %705 = vmatpush1.bf16.msra.mxu0 0
    %706 = vmatprep.subr.bf16.mxu0 0
    %707 = vmatpush1.bf16.msra.mxu0 0
    %708 = vmatprep.subr.bf16.mxu0 0
    %709 = vmatpush1.bf16.msra.mxu0 0
    %710 = vmatprep.subr.bf16.mxu0 0
    %711 = vmatpush1.bf16.msra.mxu0 0
    %712 = vmatprep.subr.bf16.mxu0 0
    %713 = vmatpush1.bf16.msra.mxu0 0
    %714 = vmatprep.subr.bf16.mxu0 0
    %715 = vmatpush1.bf16.msra.mxu0 0
    %716 = vmatprep.subr.bf16.mxu0 0
    %717 = vmatpush1.bf16.msra.mxu0 0
    %718 = vmatprep.mubr.bf16.mxu0 0
    %719 = vmatmul.mubr.bf16.gmra.mrb[0].mxu0 %v609
    %v720 = vpop.f32.mrb[0].mxu0
    %v721 = vadd.f32 0.0, %v720
    %v722 = vpop.f32.mrb[0].mxu0
    %v723 = vpop.f32.mrb[0].mxu0
    %v724 = vadd.f32 0.0, %v723
    %v725 = vpop.f32.mrb[0].mxu0
    %726 = vmatprep.mubr.bf16.mxu0 0
    %727 = vmatmul.mubr.bf16.gmra.mrb[0].mxu0 %v611
    %v728 = vpop.f32.mrb[0].mxu0
    %v729 = vadd.f32 0.0, %v728
    %v730 = vpop.f32.mrb[0].mxu0
    %v731 = vpop.f32.mrb[0].mxu0
    %v732 = vadd.f32 0.0, %v731
    %v733 = vpop.f32.mrb[0].mxu0
    %734 = vmatprep.mubr.bf16.mxu0 0
    %735 = vmatmul.mubr.bf16.gmra.mrb[0].mxu0 %v613
    %v736 = vpop.f32.mrb[0].mxu0
    %v737 = vadd.f32 0.0, %v736
    %v738 = vpop.f32.mrb[0].mxu0
    %v739 = vpop.f32.mrb[0].mxu0
    %v740 = vadd.f32 0.0, %v739
    %v741 = vpop.f32.mrb[0].mxu0
    %742 = vmatprep.mubr.bf16.mxu0 0
    %743 = vmatmul.mubr.bf16.gmra.mrb[0].mxu0 %v615
    %v744 = vpop.f32.mrb[0].mxu0
    %v745 = vadd.f32 0.0, %v744
    %v746 = vpop.f32.mrb[0].mxu0
    %v747 = vpop.f32.mrb[0].mxu0
    %v748 = vadd.f32 0.0, %v747
    %v749 = vpop.f32.mrb[0].mxu0
    %750 = vmatprep.mubr.bf16.mxu0 0
    %751 = vmatmul.mubr.bf16.gmra.mrb[0].mxu0 %v617
    %v752 = vpop.f32.mrb[0].mxu0
    %v753 = vadd.f32 0.0, %v752
    %v754 = vpop.f32.mrb[0].mxu0
    %v755 = vpop.f32.mrb[0].mxu0
    %v756 = vadd.f32 0.0, %v755
    %v757 = vpop.f32.mrb[0].mxu0
    %758 = vmatprep.mubr.bf16.mxu0 0
    %759 = vmatmul.mubr.bf16.gmra.mrb[0].mxu0 %v619
    %v760 = vpop.f32.mrb[0].mxu0
    %v761 = vadd.f32 0.0, %v760
    %v762 = vpop.f32.mrb[0].mxu0
    %v763 = vpop.f32.mrb[0].mxu0
    %v764 = vadd.f32 0.0, %v763
    %v765 = vpop.f32.mrb[0].mxu0
    %766 = vmatprep.mubr.bf16.mxu0 0
    %767 = vmatmul.mubr.bf16.gmra.mrb[0].mxu0 %v621
    %v768 = vpop.f32.mrb[0].mxu0
    %v769 = vadd.f32 0.0, %v768
    %v770 = vpop.f32.mrb[0].mxu0
    %v771 = vpop.f32.mrb[0].mxu0
    %v772 = vadd.f32 0.0, %v771
    %v773 = vpop.f32.mrb[0].mxu0
    %774 = vmatprep.mubr.bf16.mxu0 0
    %775 = vmatmul.mubr.bf16.gmra.mrb[0].mxu0 %v623
    %v776 = vpop.f32.mrb[0].mxu0
    %v777 = vadd.f32 0.0, %v776
    %v778 = vpop.f32.mrb[0].mxu0
    %v779 = vpop.f32.mrb[0].mxu0
    %v780 = vadd.f32 0.0, %v779
    %v781 = vpop.f32.mrb[0].mxu0
    %782 = vmatprep.mubr.bf16.mxu0 0
    %783 = vmatmul.mubr.bf16.gmra.mrb[0].mxu0 %v625
    %v784 = vpop.f32.mrb[0].mxu0
    %v785 = vadd.f32 0.0, %v784
    %v786 = vpop.f32.mrb[0].mxu0
    %v787 = vpop.f32.mrb[0].mxu0
    %v788 = vadd.f32 0.0, %v787
    %v789 = vpop.f32.mrb[0].mxu0
    %790 = vmatprep.mubr.bf16.mxu0 0
    %791 = vmatmul.mubr.bf16.gmra.mrb[0].mxu0 %v627
    %v792 = vpop.f32.mrb[0].mxu0
    %v793 = vadd.f32 0.0, %v792
    %v794 = vpop.f32.mrb[0].mxu0
    %v795 = vpop.f32.mrb[0].mxu0
    %v796 = vadd.f32 0.0, %v795
    %v797 = vpop.f32.mrb[0].mxu0
    %798 = vdwg.mxu0
    %v799 = vadd.f32 %v511, %v721
    %v800 = vadd.f32 %v514, %v724
    %v801 = vadd.f32 %v519, %v729
    %v802 = vadd.f32 %v522, %v732
    %v803 = vadd.f32 %v527, %v737
    %v804 = vadd.f32 %v530, %v740
    %v805 = vadd.f32 %v535, %v745
    %v806 = vadd.f32 %v538, %v748
    %v807 = vadd.f32 %v543, %v753
    %v808 = vadd.f32 %v546, %v756
    %v809 = vadd.f32 %v551, %v761
    %v810 = vadd.f32 %v554, %v764
    %v811 = vadd.f32 %v559, %v769
    %v812 = vadd.f32 %v562, %v772
    %v813 = vadd.f32 %v567, %v777
    %v814 = vadd.f32 %v570, %v780
    %v815 = vadd.f32 %v575, %v785
    %v816 = vadd.f32 %v578, %v788
    %v817 = vadd.f32 %v583, %v793
    %v818 = vadd.f32 %v586, %v796
    %s819 = scalar_lea.vmem [#allocation5], 192
    %v820 = vld [vmem:[%s819] sm:$0xf]
    %v821 = vld [vmem:[%s819 + $0x4] sm:$0xf]
    %v822 = vld [vmem:[%s819 + $0x8] sm:$0xf]
    %v823 = vld [vmem:[%s819 + $0xc] sm:$0xf]
    %v824 = vld [vmem:[%s819 + $0x10] sm:$0xf]
    %v825 = vld [vmem:[%s819 + $0x14] sm:$0xf]
    %v826 = vld [vmem:[%s819 + $0x18] sm:$0xf]
    %v827 = vld [vmem:[%s819 + $0x1c] sm:$0xf]
    %v828 = vld [vmem:[%s819 + $0x20] sm:$0xf]
    %v829 = vld [vmem:[%s819 + $0x24] sm:$0xf]
    %v830 = vld [vmem:[%s819 + $0x28] sm:$0xf]
    %v831 = vld [vmem:[%s819 + $0x2c] sm:$0xf]
    %v832 = vld [vmem:[%s819 + $0x30] sm:$0xf]
    %v833 = vld [vmem:[%s819 + $0x34] sm:$0xf]
    %v834 = vld [vmem:[%s819 + $0x38] sm:$0xf]
    %v835 = vld [vmem:[%s819 + $0x3c] sm:$0xf]
    %v839 = vunpack.c.l.b16 %v68
    %v840 = vunpack.c.l.b16 %v69
    %v841 = vunpack.c.l.b16 %v70
    %v842 = vpack.c.b16 %v839, %v150
    %v843 = vpack.c.b16 %v841, %v840
    %v862 = vunpack.c.l.b16 %v820
    %v863 = vunpack.c.l.b16 %v821
    %v864 = vunpack.c.l.b16 %v822
    %v865 = vunpack.c.l.b16 %v823
    %v866 = vunpack.c.l.b16 %v824
    %v867 = vunpack.c.l.b16 %v825
    %v868 = vunpack.c.l.b16 %v826
    %v869 = vunpack.c.l.b16 %v827
    %v870 = vunpack.c.l.b16 %v828
    %v871 = vunpack.c.l.b16 %v829
    %v872 = vunpack.c.l.b16 %v830
    %v873 = vunpack.c.l.b16 %v831
    %v874 = vunpack.c.l.b16 %v832
    %v875 = vunpack.c.l.b16 %v833
    %v876 = vunpack.c.l.b16 %v834
    %v877 = vunpack.c.l.b16 %v835
    %v878 = vpack.c.b16 %v863, %v862
    %v879 = vpack.c.b16 %v865, %v864
    %v880 = vpack.c.b16 %v867, %v866
    %v881 = vpack.c.b16 %v869, %v868
    %v882 = vpack.c.b16 %v871, %v870
    %v883 = vpack.c.b16 %v873, %v872
    %v884 = vpack.c.b16 %v875, %v874
    %v885 = vpack.c.b16 %v877, %v876
    %894 = vmatprep.subr.bf16.mxu0 0
    %895 = vmatpush1.bf16.msra.mxu0 %v878
    %896 = vmatprep.subr.bf16.mxu0 0
    %897 = vmatpush1.bf16.msra.mxu0 %v879
    %898 = vmatprep.subr.bf16.mxu0 0
    %899 = vmatpush1.bf16.msra.mxu0 %v880
    %900 = vmatprep.subr.bf16.mxu0 0
    %901 = vmatpush1.bf16.msra.mxu0 %v881
    %902 = vmatprep.subr.bf16.mxu0 0
    %903 = vmatpush1.bf16.msra.mxu0 %v882
    %904 = vmatprep.subr.bf16.mxu0 0
    %905 = vmatpush1.bf16.msra.mxu0 %v883
    %906 = vmatprep.subr.bf16.mxu0 0
    %907 = vmatpush1.bf16.msra.mxu0 %v884
    %908 = vmatprep.subr.bf16.mxu0 0
    %909 = vmatpush1.bf16.msra.mxu0 %v885
    %910 = vmatprep.subr.bf16.mxu0 0
    %911 = vmatpush1.bf16.msra.mxu0 0
    %912 = vmatprep.subr.bf16.mxu0 0
    %913 = vmatpush1.bf16.msra.mxu0 0
    %914 = vmatprep.subr.bf16.mxu0 0
    %915 = vmatpush1.bf16.msra.mxu0 0
    %916 = vmatprep.subr.bf16.mxu0 0
    %917 = vmatpush1.bf16.msra.mxu0 0
    %918 = vmatprep.subr.bf16.mxu0 0
    %919 = vmatpush1.bf16.msra.mxu0 0
    %920 = vmatprep.subr.bf16.mxu0 0
    %921 = vmatpush1.bf16.msra.mxu0 0
    %922 = vmatprep.subr.bf16.mxu0 0
    %923 = vmatpush1.bf16.msra.mxu0 0
    %924 = vmatprep.subr.bf16.mxu0 0
    %925 = vmatpush1.bf16.msra.mxu0 0
    %926 = vmatprep.mubr.bf16.mxu0 0
    %927 = vmatmul.mubr.bf16.gmra.mrb[0].mxu0 %v153
    %v928 = vpop.f32.mrb[0].mxu0
    %v929 = vadd.f32 0.0, %v928
    %v930 = vpop.f32.mrb[0].mxu0
    %v931 = vpop.f32.mrb[0].mxu0
    %v932 = vadd.f32 0.0, %v931
    %v933 = vpop.f32.mrb[0].mxu0
    %934 = vmatprep.mubr.bf16.mxu0 0
    %935 = vmatmul.mubr.bf16.gmra.mrb[0].mxu0 %v154
    %v936 = vpop.f32.mrb[0].mxu0
    %v937 = vadd.f32 0.0, %v936
    %v938 = vpop.f32.mrb[0].mxu0
    %v939 = vpop.f32.mrb[0].mxu0
    %v940 = vadd.f32 0.0, %v939
    %v941 = vpop.f32.mrb[0].mxu0
    %942 = vmatprep.mubr.bf16.mxu0 0
    %943 = vmatmul.mubr.bf16.gmra.mrb[0].mxu0 %v155
    %v944 = vpop.f32.mrb[0].mxu0
    %v945 = vadd.f32 0.0, %v944
    %v946 = vpop.f32.mrb[0].mxu0
    %v947 = vpop.f32.mrb[0].mxu0
    %v948 = vadd.f32 0.0, %v947
    %v949 = vpop.f32.mrb[0].mxu0
    %950 = vmatprep.mubr.bf16.mxu0 0
    %951 = vmatmul.mubr.bf16.gmra.mrb[0].mxu0 %v156
    %v952 = vpop.f32.mrb[0].mxu0
    %v953 = vadd.f32 0.0, %v952
    %v954 = vpop.f32.mrb[0].mxu0
    %v955 = vpop.f32.mrb[0].mxu0
    %v956 = vadd.f32 0.0, %v955
    %v957 = vpop.f32.mrb[0].mxu0
    %958 = vmatprep.mubr.bf16.mxu0 0
    %959 = vmatmul.mubr.bf16.gmra.mrb[0].mxu0 %v157
    %v960 = vpop.f32.mrb[0].mxu0
    %v961 = vadd.f32 0.0, %v960
    %v962 = vpop.f32.mrb[0].mxu0
    %v963 = vpop.f32.mrb[0].mxu0
    %v964 = vadd.f32 0.0, %v963
    %v965 = vpop.f32.mrb[0].mxu0
    %966 = vmatprep.mubr.bf16.mxu0 0
    %967 = vmatmul.mubr.bf16.gmra.mrb[0].mxu0 %v158
    %v968 = vpop.f32.mrb[0].mxu0
    %v969 = vadd.f32 0.0, %v968
    %v970 = vpop.f32.mrb[0].mxu0
    %v971 = vpop.f32.mrb[0].mxu0
    %v972 = vadd.f32 0.0, %v971
    %v973 = vpop.f32.mrb[0].mxu0
    %974 = vmatprep.mubr.bf16.mxu0 0
    %975 = vmatmul.mubr.bf16.gmra.mrb[0].mxu0 %v159
    %v976 = vpop.f32.mrb[0].mxu0
    %v977 = vadd.f32 0.0, %v976
    %v978 = vpop.f32.mrb[0].mxu0
    %v979 = vpop.f32.mrb[0].mxu0
    %v980 = vadd.f32 0.0, %v979
    %v981 = vpop.f32.mrb[0].mxu0
    %982 = vmatprep.mubr.bf16.mxu0 0
    %983 = vmatmul.mubr.bf16.gmra.mrb[0].mxu0 %v160
    %v984 = vpop.f32.mrb[0].mxu0
    %v985 = vadd.f32 0.0, %v984
    %v986 = vpop.f32.mrb[0].mxu0
    %v987 = vpop.f32.mrb[0].mxu0
    %v988 = vadd.f32 0.0, %v987
    %v989 = vpop.f32.mrb[0].mxu0
    %990 = vmatprep.mubr.bf16.mxu0 0
    %991 = vmatmul.mubr.bf16.gmra.mrb[0].mxu0 %v842
    %v992 = vpop.f32.mrb[0].mxu0
    %v993 = vadd.f32 0.0, %v992
    %v994 = vpop.f32.mrb[0].mxu0
    %v995 = vpop.f32.mrb[0].mxu0
    %v996 = vadd.f32 0.0, %v995
    %v997 = vpop.f32.mrb[0].mxu0
    %998 = vmatprep.mubr.bf16.mxu0 0
    %999 = vmatmul.mubr.bf16.gmra.mrb[0].mxu0 %v843
    %v1000 = vpop.f32.mrb[0].mxu0
    %v1001 = vadd.f32 0.0, %v1000
    %v1002 = vpop.f32.mrb[0].mxu0
    %v1003 = vpop.f32.mrb[0].mxu0
    %v1004 = vadd.f32 0.0, %v1003
    %v1005 = vpop.f32.mrb[0].mxu0
    %1006 = vdwg.mxu0
    %v1007 = vadd.f32 %v799, %v929
    %v1008 = vadd.f32 %v800, %v932
    %v1009 = vadd.f32 %v801, %v937
    %v1010 = vadd.f32 %v802, %v940
    %v1011 = vadd.f32 %v803, %v945
    %v1012 = vadd.f32 %v804, %v948
    %v1013 = vadd.f32 %v805, %v953
    %v1014 = vadd.f32 %v806, %v956
    %v1015 = vadd.f32 %v807, %v961
    %v1016 = vadd.f32 %v808, %v964
    %v1017 = vadd.f32 %v809, %v969
    %v1018 = vadd.f32 %v810, %v972
    %v1019 = vadd.f32 %v811, %v977
    %v1020 = vadd.f32 %v812, %v980
    %v1021 = vadd.f32 %v813, %v985
    %v1022 = vadd.f32 %v814, %v988
    %v1023 = vadd.f32 %v815, %v993
    %v1024 = vadd.f32 %v816, %v996
    %v1025 = vadd.f32 %v817, %v1001
    %v1026 = vadd.f32 %v818, %v1004
    %s1027 = scalar_lea.vmem [#allocation5], 256
    %v1028 = vld [vmem:[%s1027] sm:$0xf]
    %v1029 = vld [vmem:[%s1027 + $0x4] sm:$0xf]
    %v1030 = vld [vmem:[%s1027 + $0x8] sm:$0xf]
    %v1031 = vld [vmem:[%s1027 + $0xc] sm:$0xf]
    %v1032 = vld [vmem:[%s1027 + $0x10] sm:$0xf]
    %v1033 = vld [vmem:[%s1027 + $0x14] sm:$0xf]
    %v1034 = vld [vmem:[%s1027 + $0x18] sm:$0xf]
    %v1035 = vld [vmem:[%s1027 + $0x1c] sm:$0xf]
    %v1036 = vld [vmem:[%s1027 + $0x20] sm:$0xf]
    %v1037 = vld [vmem:[%s1027 + $0x24] sm:$0xf]
    %v1038 = vld [vmem:[%s1027 + $0x28] sm:$0xf]
    %v1039 = vld [vmem:[%s1027 + $0x2c] sm:$0xf]
    %v1040 = vld [vmem:[%s1027 + $0x30] sm:$0xf]
    %v1041 = vld [vmem:[%s1027 + $0x34] sm:$0xf]
    %v1042 = vld [vmem:[%s1027 + $0x38] sm:$0xf]
    %v1043 = vld [vmem:[%s1027 + $0x3c] sm:$0xf]
    %v1045 = vunpack.c.l.b16 %v71
    %v1046 = vpack.c.b16 %v1045, %v1045
    %v1048 = vshll.u32 %v842, 16
    %v1050 = vrot.slane %v1048, 1
    %v1051 = vsel %vm162, %v241, %v1050
    %v1052 = vshrl.u32 %v842, 16
    %v1054 = vor.u32 %v1052, %v1050
    %v1056 = vshll.u32 %v843, 16
    %v1058 = vrot.slane %v1056, 1
    %v1059 = vsel %vm162, %v1054, %v1058
    %v1060 = vshrl.u32 %v843, 16
    %v1062 = vor.u32 %v1060, %v1058
    %v1064 = vshll.u32 %v1046, 16
    %v1066 = vrot.slane %v1064, 1
    %v1067 = vsel %vm162, %v1062, %v1066
    %v1087 = vunpack.c.l.b16 %v1028
    %v1088 = vunpack.c.l.b16 %v1029
    %v1089 = vunpack.c.l.b16 %v1030
    %v1090 = vunpack.c.l.b16 %v1031
    %v1091 = vunpack.c.l.b16 %v1032
    %v1092 = vunpack.c.l.b16 %v1033
    %v1093 = vunpack.c.l.b16 %v1034
    %v1094 = vunpack.c.l.b16 %v1035
    %v1095 = vunpack.c.l.b16 %v1036
    %v1096 = vunpack.c.l.b16 %v1037
    %v1097 = vunpack.c.l.b16 %v1038
    %v1098 = vunpack.c.l.b16 %v1039
    %v1099 = vunpack.c.l.b16 %v1040
    %v1100 = vunpack.c.l.b16 %v1041
    %v1101 = vunpack.c.l.b16 %v1042
    %v1102 = vunpack.c.l.b16 %v1043
    %v1103 = vpack.c.b16 %v1088, %v1087
    %v1104 = vpack.c.b16 %v1090, %v1089
    %v1105 = vpack.c.b16 %v1092, %v1091
    %v1106 = vpack.c.b16 %v1094, %v1093
    %v1107 = vpack.c.b16 %v1096, %v1095
    %v1108 = vpack.c.b16 %v1098, %v1097
    %v1109 = vpack.c.b16 %v1100, %v1099
    %v1110 = vpack.c.b16 %v1102, %v1101
    %1119 = vmatprep.subr.bf16.mxu0 0
    %1120 = vmatpush1.bf16.msra.mxu0 %v1103
    %1121 = vmatprep.subr.bf16.mxu0 0
    %1122 = vmatpush1.bf16.msra.mxu0 %v1104
    %1123 = vmatprep.subr.bf16.mxu0 0
    %1124 = vmatpush1.bf16.msra.mxu0 %v1105
    %1125 = vmatprep.subr.bf16.mxu0 0
    %1126 = vmatpush1.bf16.msra.mxu0 %v1106
    %1127 = vmatprep.subr.bf16.mxu0 0
    %1128 = vmatpush1.bf16.msra.mxu0 %v1107
    %1129 = vmatprep.subr.bf16.mxu0 0
    %1130 = vmatpush1.bf16.msra.mxu0 %v1108
    %1131 = vmatprep.subr.bf16.mxu0 0
    %1132 = vmatpush1.bf16.msra.mxu0 %v1109
    %1133 = vmatprep.subr.bf16.mxu0 0
    %1134 = vmatpush1.bf16.msra.mxu0 %v1110
    %1135 = vmatprep.subr.bf16.mxu0 0
    %1136 = vmatpush1.bf16.msra.mxu0 0
    %1137 = vmatprep.subr.bf16.mxu0 0
    %1138 = vmatpush1.bf16.msra.mxu0 0
    %1139 = vmatprep.subr.bf16.mxu0 0
    %1140 = vmatpush1.bf16.msra.mxu0 0
    %1141 = vmatprep.subr.bf16.mxu0 0
    %1142 = vmatpush1.bf16.msra.mxu0 0
    %1143 = vmatprep.subr.bf16.mxu0 0
    %1144 = vmatpush1.bf16.msra.mxu0 0
    %1145 = vmatprep.subr.bf16.mxu0 0
    %1146 = vmatpush1.bf16.msra.mxu0 0
    %1147 = vmatprep.subr.bf16.mxu0 0
    %1148 = vmatpush1.bf16.msra.mxu0 0
    %1149 = vmatprep.subr.bf16.mxu0 0
    %1150 = vmatpush1.bf16.msra.mxu0 0
    %1151 = vmatprep.mubr.bf16.mxu0 0
    %1152 = vmatmul.mubr.bf16.gmra.mrb[0].mxu0 %v190
    %v1153 = vpop.f32.mrb[0].mxu0
    %v1154 = vadd.f32 0.0, %v1153
    %v1155 = vpop.f32.mrb[0].mxu0
    %v1156 = vpop.f32.mrb[0].mxu0
    %v1157 = vadd.f32 0.0, %v1156
    %v1158 = vpop.f32.mrb[0].mxu0
    %1159 = vmatprep.mubr.bf16.mxu0 0
    %1160 = vmatmul.mubr.bf16.gmra.mrb[0].mxu0 %v198
    %v1161 = vpop.f32.mrb[0].mxu0
    %v1162 = vadd.f32 0.0, %v1161
    %v1163 = vpop.f32.mrb[0].mxu0
    %v1164 = vpop.f32.mrb[0].mxu0
    %v1165 = vadd.f32 0.0, %v1164
    %v1166 = vpop.f32.mrb[0].mxu0
    %1167 = vmatprep.mubr.bf16.mxu0 0
    %1168 = vmatmul.mubr.bf16.gmra.mrb[0].mxu0 %v206
    %v1169 = vpop.f32.mrb[0].mxu0
    %v1170 = vadd.f32 0.0, %v1169
    %v1171 = vpop.f32.mrb[0].mxu0
    %v1172 = vpop.f32.mrb[0].mxu0
    %v1173 = vadd.f32 0.0, %v1172
    %v1174 = vpop.f32.mrb[0].mxu0
    %1175 = vmatprep.mubr.bf16.mxu0 0
    %1176 = vmatmul.mubr.bf16.gmra.mrb[0].mxu0 %v214
    %v1177 = vpop.f32.mrb[0].mxu0
    %v1178 = vadd.f32 0.0, %v1177
    %v1179 = vpop.f32.mrb[0].mxu0
    %v1180 = vpop.f32.mrb[0].mxu0
    %v1181 = vadd.f32 0.0, %v1180
    %v1182 = vpop.f32.mrb[0].mxu0
    %1183 = vmatprep.mubr.bf16.mxu0 0
    %1184 = vmatmul.mubr.bf16.gmra.mrb[0].mxu0 %v222
    %v1185 = vpop.f32.mrb[0].mxu0
    %v1186 = vadd.f32 0.0, %v1185
    %v1187 = vpop.f32.mrb[0].mxu0
    %v1188 = vpop.f32.mrb[0].mxu0
    %v1189 = vadd.f32 0.0, %v1188
    %v1190 = vpop.f32.mrb[0].mxu0
    %1191 = vmatprep.mubr.bf16.mxu0 0
    %1192 = vmatmul.mubr.bf16.gmra.mrb[0].mxu0 %v230
    %v1193 = vpop.f32.mrb[0].mxu0
    %v1194 = vadd.f32 0.0, %v1193
    %v1195 = vpop.f32.mrb[0].mxu0
    %v1196 = vpop.f32.mrb[0].mxu0
    %v1197 = vadd.f32 0.0, %v1196
    %v1198 = vpop.f32.mrb[0].mxu0
    %1199 = vmatprep.mubr.bf16.mxu0 0
    %1200 = vmatmul.mubr.bf16.gmra.mrb[0].mxu0 %v238
    %v1201 = vpop.f32.mrb[0].mxu0
    %v1202 = vadd.f32 0.0, %v1201
    %v1203 = vpop.f32.mrb[0].mxu0
    %v1204 = vpop.f32.mrb[0].mxu0
    %v1205 = vadd.f32 0.0, %v1204
    %v1206 = vpop.f32.mrb[0].mxu0
    %1207 = vmatprep.mubr.bf16.mxu0 0
    %1208 = vmatmul.mubr.bf16.gmra.mrb[0].mxu0 %v1051
    %v1209 = vpop.f32.mrb[0].mxu0
    %v1210 = vadd.f32 0.0, %v1209
    %v1211 = vpop.f32.mrb[0].mxu0
    %v1212 = vpop.f32.mrb[0].mxu0
    %v1213 = vadd.f32 0.0, %v1212
    %v1214 = vpop.f32.mrb[0].mxu0
    %1215 = vmatprep.mubr.bf16.mxu0 0
    %1216 = vmatmul.mubr.bf16.gmra.mrb[0].mxu0 %v1059
    %v1217 = vpop.f32.mrb[0].mxu0
    %v1218 = vadd.f32 0.0, %v1217
    %v1219 = vpop.f32.mrb[0].mxu0
    %v1220 = vpop.f32.mrb[0].mxu0
    %v1221 = vadd.f32 0.0, %v1220
    %v1222 = vpop.f32.mrb[0].mxu0
    %1223 = vmatprep.mubr.bf16.mxu0 0
    %1224 = vmatmul.mubr.bf16.gmra.mrb[0].mxu0 %v1067
    %v1225 = vpop.f32.mrb[0].mxu0
    %v1226 = vadd.f32 0.0, %v1225
    %v1227 = vpop.f32.mrb[0].mxu0
    %v1228 = vpop.f32.mrb[0].mxu0
    %v1229 = vadd.f32 0.0, %v1228
    %v1230 = vpop.f32.mrb[0].mxu0
    %1231 = vdwg.mxu0
    %v1232 = vadd.f32 %v1007, %v1154
    %v1233 = vadd.f32 %v1008, %v1157
    %v1234 = vadd.f32 %v1009, %v1162
    %v1235 = vadd.f32 %v1010, %v1165
    %v1236 = vadd.f32 %v1011, %v1170
    %v1237 = vadd.f32 %v1012, %v1173
    %v1238 = vadd.f32 %v1013, %v1178
    %v1239 = vadd.f32 %v1014, %v1181
    %v1240 = vadd.f32 %v1015, %v1186
    %v1241 = vadd.f32 %v1016, %v1189
    %v1242 = vadd.f32 %v1017, %v1194
    %v1243 = vadd.f32 %v1018, %v1197
    %v1244 = vadd.f32 %v1019, %v1202
    %v1245 = vadd.f32 %v1020, %v1205
    %v1246 = vadd.f32 %v1021, %v1210
    %v1247 = vadd.f32 %v1022, %v1213
    %v1248 = vadd.f32 %v1023, %v1218
    %v1249 = vadd.f32 %v1024, %v1221
    %v1250 = vadd.f32 %v1025, %v1226
    %v1251 = vadd.f32 %v1026, %v1229
    %s1252 = scalar_lea.vmem [#allocation5], 320
    %v1253 = vld [vmem:[%s1252] sm:$0xf]
    %v1254 = vld [vmem:[%s1252 + $0x4] sm:$0xf]
    %v1255 = vld [vmem:[%s1252 + $0x8] sm:$0xf]
    %v1256 = vld [vmem:[%s1252 + $0xc] sm:$0xf]
    %v1257 = vld [vmem:[%s1252 + $0x10] sm:$0xf]
    %v1258 = vld [vmem:[%s1252 + $0x14] sm:$0xf]
    %v1259 = vld [vmem:[%s1252 + $0x18] sm:$0xf]
    %v1260 = vld [vmem:[%s1252 + $0x1c] sm:$0xf]
    %v1261 = vld [vmem:[%s1252 + $0x20] sm:$0xf]
    %v1262 = vld [vmem:[%s1252 + $0x24] sm:$0xf]
    %v1263 = vld [vmem:[%s1252 + $0x28] sm:$0xf]
    %v1264 = vld [vmem:[%s1252 + $0x2c] sm:$0xf]
    %v1265 = vld [vmem:[%s1252 + $0x30] sm:$0xf]
    %v1266 = vld [vmem:[%s1252 + $0x34] sm:$0xf]
    %v1267 = vld [vmem:[%s1252 + $0x38] sm:$0xf]
    %v1268 = vld [vmem:[%s1252 + $0x3c] sm:$0xf]
    %v1269 = vrot.slane %v842, 1
    %v1270 = vsel %vm606, %v624, %v1269
    %v1271 = vrot.slane %v843, 1
    %v1272 = vsel %vm606, %v1269, %v1271
    %v1273 = vrot.slane %v1046, 1
    %v1274 = vsel %vm606, %v1271, %v1273
    %v1294 = vunpack.c.l.b16 %v1253
    %v1295 = vunpack.c.l.b16 %v1254
    %v1296 = vunpack.c.l.b16 %v1255
    %v1297 = vunpack.c.l.b16 %v1256
    %v1298 = vunpack.c.l.b16 %v1257
    %v1299 = vunpack.c.l.b16 %v1258
    %v1300 = vunpack.c.l.b16 %v1259
    %v1301 = vunpack.c.l.b16 %v1260
    %v1302 = vunpack.c.l.b16 %v1261
    %v1303 = vunpack.c.l.b16 %v1262
    %v1304 = vunpack.c.l.b16 %v1263
    %v1305 = vunpack.c.l.b16 %v1264
    %v1306 = vunpack.c.l.b16 %v1265
    %v1307 = vunpack.c.l.b16 %v1266
    %v1308 = vunpack.c.l.b16 %v1267
    %v1309 = vunpack.c.l.b16 %v1268
    %v1310 = vpack.c.b16 %v1295, %v1294
    %v1311 = vpack.c.b16 %v1297, %v1296
    %v1312 = vpack.c.b16 %v1299, %v1298
    %v1313 = vpack.c.b16 %v1301, %v1300
    %v1314 = vpack.c.b16 %v1303, %v1302
    %v1315 = vpack.c.b16 %v1305, %v1304
    %v1316 = vpack.c.b16 %v1307, %v1306
    %v1317 = vpack.c.b16 %v1309, %v1308
    %1326 = vmatprep.subr.bf16.mxu0 0
    %1327 = vmatpush1.bf16.msra.mxu0 %v1310
    %1328 = vmatprep.subr.bf16.mxu0 0
    %1329 = vmatpush1.bf16.msra.mxu0 %v1311
    %1330 = vmatprep.subr.bf16.mxu0 0
    %1331 = vmatpush1.bf16.msra.mxu0 %v1312
    %1332 = vmatprep.subr.bf16.mxu0 0
    %1333 = vmatpush1.bf16.msra.mxu0 %v1313
    %1334 = vmatprep.subr.bf16.mxu0 0
    %1335 = vmatpush1.bf16.msra.mxu0 %v1314
    %1336 = vmatprep.subr.bf16.mxu0 0
    %1337 = vmatpush1.bf16.msra.mxu0 %v1315
    %1338 = vmatprep.subr.bf16.mxu0 0
    %1339 = vmatpush1.bf16.msra.mxu0 %v1316
    %1340 = vmatprep.subr.bf16.mxu0 0
    %1341 = vmatpush1.bf16.msra.mxu0 %v1317
    %1342 = vmatprep.subr.bf16.mxu0 0
    %1343 = vmatpush1.bf16.msra.mxu0 0
    %1344 = vmatprep.subr.bf16.mxu0 0
    %1345 = vmatpush1.bf16.msra.mxu0 0
    %1346 = vmatprep.subr.bf16.mxu0 0
    %1347 = vmatpush1.bf16.msra.mxu0 0
    %1348 = vmatprep.subr.bf16.mxu0 0
    %1349 = vmatpush1.bf16.msra.mxu0 0
    %1350 = vmatprep.subr.bf16.mxu0 0
    %1351 = vmatpush1.bf16.msra.mxu0 0
    %1352 = vmatprep.subr.bf16.mxu0 0
    %1353 = vmatpush1.bf16.msra.mxu0 0
    %1354 = vmatprep.subr.bf16.mxu0 0
    %1355 = vmatpush1.bf16.msra.mxu0 0
    %1356 = vmatprep.subr.bf16.mxu0 0
    %1357 = vmatpush1.bf16.msra.mxu0 0
    %1358 = vmatprep.mubr.bf16.mxu0 0
    %1359 = vmatmul.mubr.bf16.gmra.mrb[0].mxu0 %v613
    %v1360 = vpop.f32.mrb[0].mxu0
    %v1361 = vadd.f32 0.0, %v1360
    %v1362 = vpop.f32.mrb[0].mxu0
    %v1363 = vpop.f32.mrb[0].mxu0
    %v1364 = vadd.f32 0.0, %v1363
    %v1365 = vpop.f32.mrb[0].mxu0
    %1366 = vmatprep.mubr.bf16.mxu0 0
    %1367 = vmatmul.mubr.bf16.gmra.mrb[0].mxu0 %v615
    %v1368 = vpop.f32.mrb[0].mxu0
    %v1369 = vadd.f32 0.0, %v1368
    %v1370 = vpop.f32.mrb[0].mxu0
    %v1371 = vpop.f32.mrb[0].mxu0
    %v1372 = vadd.f32 0.0, %v1371
    %v1373 = vpop.f32.mrb[0].mxu0
    %1374 = vmatprep.mubr.bf16.mxu0 0
    %1375 = vmatmul.mubr.bf16.gmra.mrb[0].mxu0 %v617
    %v1376 = vpop.f32.mrb[0].mxu0
    %v1377 = vadd.f32 0.0, %v1376
    %v1378 = vpop.f32.mrb[0].mxu0
    %v1379 = vpop.f32.mrb[0].mxu0
    %v1380 = vadd.f32 0.0, %v1379
    %v1381 = vpop.f32.mrb[0].mxu0
    %1382 = vmatprep.mubr.bf16.mxu0 0
    %1383 = vmatmul.mubr.bf16.gmra.mrb[0].mxu0 %v619
    %v1384 = vpop.f32.mrb[0].mxu0
    %v1385 = vadd.f32 0.0, %v1384
    %v1386 = vpop.f32.mrb[0].mxu0
    %v1387 = vpop.f32.mrb[0].mxu0
    %v1388 = vadd.f32 0.0, %v1387
    %v1389 = vpop.f32.mrb[0].mxu0
    %1390 = vmatprep.mubr.bf16.mxu0 0
    %1391 = vmatmul.mubr.bf16.gmra.mrb[0].mxu0 %v621
    %v1392 = vpop.f32.mrb[0].mxu0
    %v1393 = vadd.f32 0.0, %v1392
    %v1394 = vpop.f32.mrb[0].mxu0
    %v1395 = vpop.f32.mrb[0].mxu0
    %v1396 = vadd.f32 0.0, %v1395
    %v1397 = vpop.f32.mrb[0].mxu0
    %1398 = vmatprep.mubr.bf16.mxu0 0
    %1399 = vmatmul.mubr.bf16.gmra.mrb[0].mxu0 %v623
    %v1400 = vpop.f32.mrb[0].mxu0
    %v1401 = vadd.f32 0.0, %v1400
    %v1402 = vpop.f32.mrb[0].mxu0
    %v1403 = vpop.f32.mrb[0].mxu0
    %v1404 = vadd.f32 0.0, %v1403
    %v1405 = vpop.f32.mrb[0].mxu0
    %1406 = vmatprep.mubr.bf16.mxu0 0
    %1407 = vmatmul.mubr.bf16.gmra.mrb[0].mxu0 %v625
    %v1408 = vpop.f32.mrb[0].mxu0
    %v1409 = vadd.f32 0.0, %v1408
    %v1410 = vpop.f32.mrb[0].mxu0
    %v1411 = vpop.f32.mrb[0].mxu0
    %v1412 = vadd.f32 0.0, %v1411
    %v1413 = vpop.f32.mrb[0].mxu0
    %1414 = vmatprep.mubr.bf16.mxu0 0
    %1415 = vmatmul.mubr.bf16.gmra.mrb[0].mxu0 %v1270
    %v1416 = vpop.f32.mrb[0].mxu0
    %v1417 = vadd.f32 0.0, %v1416
    %v1418 = vpop.f32.mrb[0].mxu0
    %v1419 = vpop.f32.mrb[0].mxu0
    %v1420 = vadd.f32 0.0, %v1419
    %v1421 = vpop.f32.mrb[0].mxu0
    %1422 = vmatprep.mubr.bf16.mxu0 0
    %1423 = vmatmul.mubr.bf16.gmra.mrb[0].mxu0 %v1272
    %v1424 = vpop.f32.mrb[0].mxu0
    %v1425 = vadd.f32 0.0, %v1424
    %v1426 = vpop.f32.mrb[0].mxu0
    %v1427 = vpop.f32.mrb[0].mxu0
    %v1428 = vadd.f32 0.0, %v1427
    %v1429 = vpop.f32.mrb[0].mxu0
    %1430 = vmatprep.mubr.bf16.mxu0 0
    %1431 = vmatmul.mubr.bf16.gmra.mrb[0].mxu0 %v1274
    %v1432 = vpop.f32.mrb[0].mxu0
    %v1433 = vadd.f32 0.0, %v1432
    %v1434 = vpop.f32.mrb[0].mxu0
    %v1435 = vpop.f32.mrb[0].mxu0
    %v1436 = vadd.f32 0.0, %v1435
    %v1437 = vpop.f32.mrb[0].mxu0
    %1438 = vdwg.mxu0
    %v1439 = vadd.f32 %v1232, %v1361
    %v1440 = vadd.f32 %v1233, %v1364
    %v1441 = vadd.f32 %v1234, %v1369
    %v1442 = vadd.f32 %v1235, %v1372
    %v1443 = vadd.f32 %v1236, %v1377
    %v1444 = vadd.f32 %v1237, %v1380
    %v1445 = vadd.f32 %v1238, %v1385
    %v1446 = vadd.f32 %v1239, %v1388
    %v1447 = vadd.f32 %v1240, %v1393
    %v1448 = vadd.f32 %v1241, %v1396
    %v1449 = vadd.f32 %v1242, %v1401
    %v1450 = vadd.f32 %v1243, %v1404
    %v1451 = vadd.f32 %v1244, %v1409
    %v1452 = vadd.f32 %v1245, %v1412
    %v1453 = vadd.f32 %v1246, %v1417
    %v1454 = vadd.f32 %v1247, %v1420
    %v1455 = vadd.f32 %v1248, %v1425
    %v1456 = vadd.f32 %v1249, %v1428
    %v1457 = vadd.f32 %v1250, %v1433
    %v1458 = vadd.f32 %v1251, %v1436
    %s1459 = scalar_lea.vmem [#allocation5], 384
    %v1460 = vld [vmem:[%s1459] sm:$0xf]
    %v1461 = vld [vmem:[%s1459 + $0x4] sm:$0xf]
    %v1462 = vld [vmem:[%s1459 + $0x8] sm:$0xf]
    %v1463 = vld [vmem:[%s1459 + $0xc] sm:$0xf]
    %v1464 = vld [vmem:[%s1459 + $0x10] sm:$0xf]
    %v1465 = vld [vmem:[%s1459 + $0x14] sm:$0xf]
    %v1466 = vld [vmem:[%s1459 + $0x18] sm:$0xf]
    %v1467 = vld [vmem:[%s1459 + $0x1c] sm:$0xf]
    %v1468 = vld [vmem:[%s1459 + $0x20] sm:$0xf]
    %v1469 = vld [vmem:[%s1459 + $0x24] sm:$0xf]
    %v1470 = vld [vmem:[%s1459 + $0x28] sm:$0xf]
    %v1471 = vld [vmem:[%s1459 + $0x2c] sm:$0xf]
    %v1472 = vld [vmem:[%s1459 + $0x30] sm:$0xf]
    %v1473 = vld [vmem:[%s1459 + $0x34] sm:$0xf]
    %v1474 = vld [vmem:[%s1459 + $0x38] sm:$0xf]
    %v1475 = vld [vmem:[%s1459 + $0x3c] sm:$0xf]
    %v1479 = vunpack.c.l.b16 %v72
    %v1480 = vunpack.c.l.b16 %v73
    %v1481 = vunpack.c.l.b16 %v74
    %v1482 = vpack.c.b16 %v1479, %v1045
    %v1483 = vpack.c.b16 %v1481, %v1480
    %v1502 = vunpack.c.l.b16 %v1460
    %v1503 = vunpack.c.l.b16 %v1461
    %v1504 = vunpack.c.l.b16 %v1462
    %v1505 = vunpack.c.l.b16 %v1463
    %v1506 = vunpack.c.l.b16 %v1464
    %v1507 = vunpack.c.l.b16 %v1465
    %v1508 = vunpack.c.l.b16 %v1466
    %v1509 = vunpack.c.l.b16 %v1467
    %v1510 = vunpack.c.l.b16 %v1468
    %v1511 = vunpack.c.l.b16 %v1469
    %v1512 = vunpack.c.l.b16 %v1470
    %v1513 = vunpack.c.l.b16 %v1471
    %v1514 = vunpack.c.l.b16 %v1472
    %v1515 = vunpack.c.l.b16 %v1473
    %v1516 = vunpack.c.l.b16 %v1474
    %v1517 = vunpack.c.l.b16 %v1475
    %v1518 = vpack.c.b16 %v1503, %v1502
    %v1519 = vpack.c.b16 %v1505, %v1504
    %v1520 = vpack.c.b16 %v1507, %v1506
    %v1521 = vpack.c.b16 %v1509, %v1508
    %v1522 = vpack.c.b16 %v1511, %v1510
    %v1523 = vpack.c.b16 %v1513, %v1512
    %v1524 = vpack.c.b16 %v1515, %v1514
    %v1525 = vpack.c.b16 %v1517, %v1516
    %1534 = vmatprep.subr.bf16.mxu0 0
    %1535 = vmatpush1.bf16.msra.mxu0 %v1518
    %1536 = vmatprep.subr.bf16.mxu0 0
    %1537 = vmatpush1.bf16.msra.mxu0 %v1519
    %1538 = vmatprep.subr.bf16.mxu0 0
    %1539 = vmatpush1.bf16.msra.mxu0 %v1520
    %1540 = vmatprep.subr.bf16.mxu0 0
    %1541 = vmatpush1.bf16.msra.mxu0 %v1521
    %1542 = vmatprep.subr.bf16.mxu0 0
    %1543 = vmatpush1.bf16.msra.mxu0 %v1522
    %1544 = vmatprep.subr.bf16.mxu0 0
    %1545 = vmatpush1.bf16.msra.mxu0 %v1523
    %1546 = vmatprep.subr.bf16.mxu0 0
    %1547 = vmatpush1.bf16.msra.mxu0 %v1524
    %1548 = vmatprep.subr.bf16.mxu0 0
    %1549 = vmatpush1.bf16.msra.mxu0 %v1525
    %1550 = vmatprep.subr.bf16.mxu0 0
    %1551 = vmatpush1.bf16.msra.mxu0 0
    %1552 = vmatprep.subr.bf16.mxu0 0
    %1553 = vmatpush1.bf16.msra.mxu0 0
    %1554 = vmatprep.subr.bf16.mxu0 0
    %1555 = vmatpush1.bf16.msra.mxu0 0
    %1556 = vmatprep.subr.bf16.mxu0 0
    %1557 = vmatpush1.bf16.msra.mxu0 0
    %1558 = vmatprep.subr.bf16.mxu0 0
    %1559 = vmatpush1.bf16.msra.mxu0 0
    %1560 = vmatprep.subr.bf16.mxu0 0
    %1561 = vmatpush1.bf16.msra.mxu0 0
    %1562 = vmatprep.subr.bf16.mxu0 0
    %1563 = vmatpush1.bf16.msra.mxu0 0
    %1564 = vmatprep.subr.bf16.mxu0 0
    %1565 = vmatpush1.bf16.msra.mxu0 0
    %1566 = vmatprep.mubr.bf16.mxu0 0
    %1567 = vmatmul.mubr.bf16.gmra.mrb[0].mxu0 %v155
    %v1568 = vpop.f32.mrb[0].mxu0
    %v1569 = vadd.f32 0.0, %v1568
    %v1570 = vpop.f32.mrb[0].mxu0
    %v1571 = vpop.f32.mrb[0].mxu0
    %v1572 = vadd.f32 0.0, %v1571
    %v1573 = vpop.f32.mrb[0].mxu0
    %1574 = vmatprep.mubr.bf16.mxu0 0
    %1575 = vmatmul.mubr.bf16.gmra.mrb[0].mxu0 %v156
    %v1576 = vpop.f32.mrb[0].mxu0
    %v1577 = vadd.f32 0.0, %v1576
    %v1578 = vpop.f32.mrb[0].mxu0
    %v1579 = vpop.f32.mrb[0].mxu0
    %v1580 = vadd.f32 0.0, %v1579
    %v1581 = vpop.f32.mrb[0].mxu0
    %1582 = vmatprep.mubr.bf16.mxu0 0
    %1583 = vmatmul.mubr.bf16.gmra.mrb[0].mxu0 %v157
    %v1584 = vpop.f32.mrb[0].mxu0
    %v1585 = vadd.f32 0.0, %v1584
    %v1586 = vpop.f32.mrb[0].mxu0
    %v1587 = vpop.f32.mrb[0].mxu0
    %v1588 = vadd.f32 0.0, %v1587
    %v1589 = vpop.f32.mrb[0].mxu0
    %1590 = vmatprep.mubr.bf16.mxu0 0
    %1591 = vmatmul.mubr.bf16.gmra.mrb[0].mxu0 %v158
    %v1592 = vpop.f32.mrb[0].mxu0
    %v1593 = vadd.f32 0.0, %v1592
    %v1594 = vpop.f32.mrb[0].mxu0
    %v1595 = vpop.f32.mrb[0].mxu0
    %v1596 = vadd.f32 0.0, %v1595
    %v1597 = vpop.f32.mrb[0].mxu0
    %1598 = vmatprep.mubr.bf16.mxu0 0
    %1599 = vmatmul.mubr.bf16.gmra.mrb[0].mxu0 %v159
    %v1600 = vpop.f32.mrb[0].mxu0
    %v1601 = vadd.f32 0.0, %v1600
    %v1602 = vpop.f32.mrb[0].mxu0
    %v1603 = vpop.f32.mrb[0].mxu0
    %v1604 = vadd.f32 0.0, %v1603
    %v1605 = vpop.f32.mrb[0].mxu0
    %1606 = vmatprep.mubr.bf16.mxu0 0
    %1607 = vmatmul.mubr.bf16.gmra.mrb[0].mxu0 %v160
    %v1608 = vpop.f32.mrb[0].mxu0
    %v1609 = vadd.f32 0.0, %v1608
    %v1610 = vpop.f32.mrb[0].mxu0
    %v1611 = vpop.f32.mrb[0].mxu0
    %v1612 = vadd.f32 0.0, %v1611
    %v1613 = vpop.f32.mrb[0].mxu0
    %1614 = vmatprep.mubr.bf16.mxu0 0
    %1615 = vmatmul.mubr.bf16.gmra.mrb[0].mxu0 %v842
    %v1616 = vpop.f32.mrb[0].mxu0
    %v1617 = vadd.f32 0.0, %v1616
    %v1618 = vpop.f32.mrb[0].mxu0
    %v1619 = vpop.f32.mrb[0].mxu0
    %v1620 = vadd.f32 0.0, %v1619
    %v1621 = vpop.f32.mrb[0].mxu0
    %1622 = vmatprep.mubr.bf16.mxu0 0
    %1623 = vmatmul.mubr.bf16.gmra.mrb[0].mxu0 %v843
    %v1624 = vpop.f32.mrb[0].mxu0
    %v1625 = vadd.f32 0.0, %v1624
    %v1626 = vpop.f32.mrb[0].mxu0
    %v1627 = vpop.f32.mrb[0].mxu0
    %v1628 = vadd.f32 0.0, %v1627
    %v1629 = vpop.f32.mrb[0].mxu0
    %1630 = vmatprep.mubr.bf16.mxu0 0
    %1631 = vmatmul.mubr.bf16.gmra.mrb[0].mxu0 %v1482
    %v1632 = vpop.f32.mrb[0].mxu0
    %v1633 = vadd.f32 0.0, %v1632
    %v1634 = vpop.f32.mrb[0].mxu0
    %v1635 = vpop.f32.mrb[0].mxu0
    %v1636 = vadd.f32 0.0, %v1635
    %v1637 = vpop.f32.mrb[0].mxu0
    %1638 = vmatprep.mubr.bf16.mxu0 0
    %1639 = vmatmul.mubr.bf16.gmra.mrb[0].mxu0 %v1483
    %v1640 = vpop.f32.mrb[0].mxu0
    %v1641 = vadd.f32 0.0, %v1640
    %v1642 = vpop.f32.mrb[0].mxu0
    %v1643 = vpop.f32.mrb[0].mxu0
    %v1644 = vadd.f32 0.0, %v1643
    %v1645 = vpop.f32.mrb[0].mxu0
    %1646 = vdwg.mxu0
    %v1647 = vadd.f32 %v1439, %v1569
    %v1648 = vadd.f32 %v1440, %v1572
    %v1649 = vadd.f32 %v1441, %v1577
    %v1650 = vadd.f32 %v1442, %v1580
    %v1651 = vadd.f32 %v1443, %v1585
    %v1652 = vadd.f32 %v1444, %v1588
    %v1653 = vadd.f32 %v1445, %v1593
    %v1654 = vadd.f32 %v1446, %v1596
    %v1655 = vadd.f32 %v1447, %v1601
    %v1656 = vadd.f32 %v1448, %v1604
    %v1657 = vadd.f32 %v1449, %v1609
    %v1658 = vadd.f32 %v1450, %v1612
    %v1659 = vadd.f32 %v1451, %v1617
    %v1660 = vadd.f32 %v1452, %v1620
    %v1661 = vadd.f32 %v1453, %v1625
    %v1662 = vadd.f32 %v1454, %v1628
    %v1663 = vadd.f32 %v1455, %v1633
    %v1664 = vadd.f32 %v1456, %v1636
    %v1665 = vadd.f32 %v1457, %v1641
    %v1666 = vadd.f32 %v1458, %v1644
    %s1667 = scalar_lea.vmem [#allocation5], 448
    %v1668 = vld [vmem:[%s1667] sm:$0xf]
    %v1669 = vld [vmem:[%s1667 + $0x4] sm:$0xf]
    %v1670 = vld [vmem:[%s1667 + $0x8] sm:$0xf]
    %v1671 = vld [vmem:[%s1667 + $0xc] sm:$0xf]
    %v1672 = vld [vmem:[%s1667 + $0x10] sm:$0xf]
    %v1673 = vld [vmem:[%s1667 + $0x14] sm:$0xf]
    %v1674 = vld [vmem:[%s1667 + $0x18] sm:$0xf]
    %v1675 = vld [vmem:[%s1667 + $0x1c] sm:$0xf]
    %v1676 = vld [vmem:[%s1667 + $0x20] sm:$0xf]
    %v1677 = vld [vmem:[%s1667 + $0x24] sm:$0xf]
    %v1678 = vld [vmem:[%s1667 + $0x28] sm:$0xf]
    %v1679 = vld [vmem:[%s1667 + $0x2c] sm:$0xf]
    %v1680 = vld [vmem:[%s1667 + $0x30] sm:$0xf]
    %v1681 = vld [vmem:[%s1667 + $0x34] sm:$0xf]
    %v1682 = vld [vmem:[%s1667 + $0x38] sm:$0xf]
    %v1683 = vld [vmem:[%s1667 + $0x3c] sm:$0xf]
    %v1685 = vunpack.c.l.b16 %v75
    %v1686 = vpack.c.b16 %v1685, %v1685
    %v1688 = vshll.u32 %v1482, 16
    %v1690 = vrot.slane %v1688, 1
    %v1691 = vsel %vm162, %v1062, %v1690
    %v1692 = vshrl.u32 %v1482, 16
    %v1694 = vor.u32 %v1692, %v1690
    %v1696 = vshll.u32 %v1483, 16
    %v1698 = vrot.slane %v1696, 1
    %v1699 = vsel %vm162, %v1694, %v1698
    %v1700 = vshrl.u32 %v1483, 16
    %v1702 = vor.u32 %v1700, %v1698
    %v1704 = vshll.u32 %v1686, 16
    %v1706 = vrot.slane %v1704, 1
    %v1707 = vsel %vm162, %v1702, %v1706
    %v1727 = vunpack.c.l.b16 %v1668
    %v1728 = vunpack.c.l.b16 %v1669
    %v1729 = vunpack.c.l.b16 %v1670
    %v1730 = vunpack.c.l.b16 %v1671
    %v1731 = vunpack.c.l.b16 %v1672
    %v1732 = vunpack.c.l.b16 %v1673
    %v1733 = vunpack.c.l.b16 %v1674
    %v1734 = vunpack.c.l.b16 %v1675
    %v1735 = vunpack.c.l.b16 %v1676
    %v1736 = vunpack.c.l.b16 %v1677
    %v1737 = vunpack.c.l.b16 %v1678
    %v1738 = vunpack.c.l.b16 %v1679
    %v1739 = vunpack.c.l.b16 %v1680
    %v1740 = vunpack.c.l.b16 %v1681
    %v1741 = vunpack.c.l.b16 %v1682
    %v1742 = vunpack.c.l.b16 %v1683
    %v1743 = vpack.c.b16 %v1728, %v1727
    %v1744 = vpack.c.b16 %v1730, %v1729
    %v1745 = vpack.c.b16 %v1732, %v1731
    %v1746 = vpack.c.b16 %v1734, %v1733
    %v1747 = vpack.c.b16 %v1736, %v1735
    %v1748 = vpack.c.b16 %v1738, %v1737
    %v1749 = vpack.c.b16 %v1740, %v1739
    %v1750 = vpack.c.b16 %v1742, %v1741
    %1759 = vmatprep.subr.bf16.mxu0 0
    %1760 = vmatpush1.bf16.msra.mxu0 %v1743
    %1761 = vmatprep.subr.bf16.mxu0 0
    %1762 = vmatpush1.bf16.msra.mxu0 %v1744
    %1763 = vmatprep.subr.bf16.mxu0 0
    %1764 = vmatpush1.bf16.msra.mxu0 %v1745
    %1765 = vmatprep.subr.bf16.mxu0 0
    %1766 = vmatpush1.bf16.msra.mxu0 %v1746
    %1767 = vmatprep.subr.bf16.mxu0 0
    %1768 = vmatpush1.bf16.msra.mxu0 %v1747
    %1769 = vmatprep.subr.bf16.mxu0 0
    %1770 = vmatpush1.bf16.msra.mxu0 %v1748
    %1771 = vmatprep.subr.bf16.mxu0 0
    %1772 = vmatpush1.bf16.msra.mxu0 %v1749
    %1773 = vmatprep.subr.bf16.mxu0 0
    %1774 = vmatpush1.bf16.msra.mxu0 %v1750
    %1775 = vmatprep.subr.bf16.mxu0 0
    %1776 = vmatpush1.bf16.msra.mxu0 0
    %1777 = vmatprep.subr.bf16.mxu0 0
    %1778 = vmatpush1.bf16.msra.mxu0 0
    %1779 = vmatprep.subr.bf16.mxu0 0
    %1780 = vmatpush1.bf16.msra.mxu0 0
    %1781 = vmatprep.subr.bf16.mxu0 0
    %1782 = vmatpush1.bf16.msra.mxu0 0
    %1783 = vmatprep.subr.bf16.mxu0 0
    %1784 = vmatpush1.bf16.msra.mxu0 0
    %1785 = vmatprep.subr.bf16.mxu0 0
    %1786 = vmatpush1.bf16.msra.mxu0 0
    %1787 = vmatprep.subr.bf16.mxu0 0
    %1788 = vmatpush1.bf16.msra.mxu0 0
    %1789 = vmatprep.subr.bf16.mxu0 0
    %1790 = vmatpush1.bf16.msra.mxu0 0
    %1791 = vmatprep.mubr.bf16.mxu0 0
    %1792 = vmatmul.mubr.bf16.gmra.mrb[0].mxu0 %v206
    %v1793 = vpop.f32.mrb[0].mxu0
    %v1794 = vadd.f32 0.0, %v1793
    %v1795 = vpop.f32.mrb[0].mxu0
    %v1796 = vpop.f32.mrb[0].mxu0
    %v1797 = vadd.f32 0.0, %v1796
    %v1798 = vpop.f32.mrb[0].mxu0
    %1799 = vmatprep.mubr.bf16.mxu0 0
    %1800 = vmatmul.mubr.bf16.gmra.mrb[0].mxu0 %v214
    %v1801 = vpop.f32.mrb[0].mxu0
    %v1802 = vadd.f32 0.0, %v1801
    %v1803 = vpop.f32.mrb[0].mxu0
    %v1804 = vpop.f32.mrb[0].mxu0
    %v1805 = vadd.f32 0.0, %v1804
    %v1806 = vpop.f32.mrb[0].mxu0
    %1807 = vmatprep.mubr.bf16.mxu0 0
    %1808 = vmatmul.mubr.bf16.gmra.mrb[0].mxu0 %v222
    %v1809 = vpop.f32.mrb[0].mxu0
    %v1810 = vadd.f32 0.0, %v1809
    %v1811 = vpop.f32.mrb[0].mxu0
    %v1812 = vpop.f32.mrb[0].mxu0
    %v1813 = vadd.f32 0.0, %v1812
    %v1814 = vpop.f32.mrb[0].mxu0
    %1815 = vmatprep.mubr.bf16.mxu0 0
    %1816 = vmatmul.mubr.bf16.gmra.mrb[0].mxu0 %v230
    %v1817 = vpop.f32.mrb[0].mxu0
    %v1818 = vadd.f32 0.0, %v1817
    %v1819 = vpop.f32.mrb[0].mxu0
    %v1820 = vpop.f32.mrb[0].mxu0
    %v1821 = vadd.f32 0.0, %v1820
    %v1822 = vpop.f32.mrb[0].mxu0
    %1823 = vmatprep.mubr.bf16.mxu0 0
    %1824 = vmatmul.mubr.bf16.gmra.mrb[0].mxu0 %v238
    %v1825 = vpop.f32.mrb[0].mxu0
    %v1826 = vadd.f32 0.0, %v1825
    %v1827 = vpop.f32.mrb[0].mxu0
    %v1828 = vpop.f32.mrb[0].mxu0
    %v1829 = vadd.f32 0.0, %v1828
    %v1830 = vpop.f32.mrb[0].mxu0
    %1831 = vmatprep.mubr.bf16.mxu0 0
    %1832 = vmatmul.mubr.bf16.gmra.mrb[0].mxu0 %v1051
    %v1833 = vpop.f32.mrb[0].mxu0
    %v1834 = vadd.f32 0.0, %v1833
    %v1835 = vpop.f32.mrb[0].mxu0
    %v1836 = vpop.f32.mrb[0].mxu0
    %v1837 = vadd.f32 0.0, %v1836
    %v1838 = vpop.f32.mrb[0].mxu0
    %1839 = vmatprep.mubr.bf16.mxu0 0
    %1840 = vmatmul.mubr.bf16.gmra.mrb[0].mxu0 %v1059
    %v1841 = vpop.f32.mrb[0].mxu0
    %v1842 = vadd.f32 0.0, %v1841
    %v1843 = vpop.f32.mrb[0].mxu0
    %v1844 = vpop.f32.mrb[0].mxu0
    %v1845 = vadd.f32 0.0, %v1844
    %v1846 = vpop.f32.mrb[0].mxu0
    %1847 = vmatprep.mubr.bf16.mxu0 0
    %1848 = vmatmul.mubr.bf16.gmra.mrb[0].mxu0 %v1691
    %v1849 = vpop.f32.mrb[0].mxu0
    %v1850 = vadd.f32 0.0, %v1849
    %v1851 = vpop.f32.mrb[0].mxu0
    %v1852 = vpop.f32.mrb[0].mxu0
    %v1853 = vadd.f32 0.0, %v1852
    %v1854 = vpop.f32.mrb[0].mxu0
    %1855 = vmatprep.mubr.bf16.mxu0 0
    %1856 = vmatmul.mubr.bf16.gmra.mrb[0].mxu0 %v1699
    %v1857 = vpop.f32.mrb[0].mxu0
    %v1858 = vadd.f32 0.0, %v1857
    %v1859 = vpop.f32.mrb[0].mxu0
    %v1860 = vpop.f32.mrb[0].mxu0
    %v1861 = vadd.f32 0.0, %v1860
    %v1862 = vpop.f32.mrb[0].mxu0
    %1863 = vmatprep.mubr.bf16.mxu0 0
    %1864 = vmatmul.mubr.bf16.gmra.mrb[0].mxu0 %v1707
    %v1865 = vpop.f32.mrb[0].mxu0
    %v1866 = vadd.f32 0.0, %v1865
    %v1867 = vpop.f32.mrb[0].mxu0
    %v1868 = vpop.f32.mrb[0].mxu0
    %v1869 = vadd.f32 0.0, %v1868
    %v1870 = vpop.f32.mrb[0].mxu0
    %1871 = vdwg.mxu0
    %v1872 = vadd.f32 %v1647, %v1794
    %v1873 = vadd.f32 %v1648, %v1797
    %v1874 = vadd.f32 %v1649, %v1802
    %v1875 = vadd.f32 %v1650, %v1805
    %v1876 = vadd.f32 %v1651, %v1810
    %v1877 = vadd.f32 %v1652, %v1813
    %v1878 = vadd.f32 %v1653, %v1818
    %v1879 = vadd.f32 %v1654, %v1821
    %v1880 = vadd.f32 %v1655, %v1826
    %v1881 = vadd.f32 %v1656, %v1829
    %v1882 = vadd.f32 %v1657, %v1834
    %v1883 = vadd.f32 %v1658, %v1837
    %v1884 = vadd.f32 %v1659, %v1842
    %v1885 = vadd.f32 %v1660, %v1845
    %v1886 = vadd.f32 %v1661, %v1850
    %v1887 = vadd.f32 %v1662, %v1853
    %v1888 = vadd.f32 %v1663, %v1858
    %v1889 = vadd.f32 %v1664, %v1861
    %v1890 = vadd.f32 %v1665, %v1866
    %v1891 = vadd.f32 %v1666, %v1869
    %s1892 = scalar_lea.vmem [#allocation5], 512
    %v1893 = vld [vmem:[%s1892] sm:$0xf]
    %v1894 = vld [vmem:[%s1892 + $0x4] sm:$0xf]
    %v1895 = vld [vmem:[%s1892 + $0x8] sm:$0xf]
    %v1896 = vld [vmem:[%s1892 + $0xc] sm:$0xf]
    %v1897 = vld [vmem:[%s1892 + $0x10] sm:$0xf]
    %v1898 = vld [vmem:[%s1892 + $0x14] sm:$0xf]
    %v1899 = vld [vmem:[%s1892 + $0x18] sm:$0xf]
    %v1900 = vld [vmem:[%s1892 + $0x1c] sm:$0xf]
    %v1901 = vld [vmem:[%s1892 + $0x20] sm:$0xf]
    %v1902 = vld [vmem:[%s1892 + $0x24] sm:$0xf]
    %v1903 = vld [vmem:[%s1892 + $0x28] sm:$0xf]
    %v1904 = vld [vmem:[%s1892 + $0x2c] sm:$0xf]
    %v1905 = vld [vmem:[%s1892 + $0x30] sm:$0xf]
    %v1906 = vld [vmem:[%s1892 + $0x34] sm:$0xf]
    %v1907 = vld [vmem:[%s1892 + $0x38] sm:$0xf]
    %v1908 = vld [vmem:[%s1892 + $0x3c] sm:$0xf]
    %v1909 = vrot.slane %v1482, 1
    %v1910 = vsel %vm606, %v1271, %v1909
    %v1911 = vrot.slane %v1483, 1
    %v1912 = vsel %vm606, %v1909, %v1911
    %v1913 = vrot.slane %v1686, 1
    %v1914 = vsel %vm606, %v1911, %v1913
    %v1934 = vunpack.c.l.b16 %v1893
    %v1935 = vunpack.c.l.b16 %v1894
    %v1936 = vunpack.c.l.b16 %v1895
    %v1937 = vunpack.c.l.b16 %v1896
    %v1938 = vunpack.c.l.b16 %v1897
    %v1939 = vunpack.c.l.b16 %v1898
    %v1940 = vunpack.c.l.b16 %v1899
    %v1941 = vunpack.c.l.b16 %v1900
    %v1942 = vunpack.c.l.b16 %v1901
    %v1943 = vunpack.c.l.b16 %v1902
    %v1944 = vunpack.c.l.b16 %v1903
    %v1945 = vunpack.c.l.b16 %v1904
    %v1946 = vunpack.c.l.b16 %v1905
    %v1947 = vunpack.c.l.b16 %v1906
    %v1948 = vunpack.c.l.b16 %v1907
    %v1949 = vunpack.c.l.b16 %v1908
    %v1950 = vpack.c.b16 %v1935, %v1934
    %v1951 = vpack.c.b16 %v1937, %v1936
    %v1952 = vpack.c.b16 %v1939, %v1938
    %v1953 = vpack.c.b16 %v1941, %v1940
    %v1954 = vpack.c.b16 %v1943, %v1942
    %v1955 = vpack.c.b16 %v1945, %v1944
    %v1956 = vpack.c.b16 %v1947, %v1946
    %v1957 = vpack.c.b16 %v1949, %v1948
    %1966 = vmatprep.subr.bf16.mxu0 0
    %1967 = vmatpush1.bf16.msra.mxu0 %v1950
    %1968 = vmatprep.subr.bf16.mxu0 0
    %1969 = vmatpush1.bf16.msra.mxu0 %v1951
    %1970 = vmatprep.subr.bf16.mxu0 0
    %1971 = vmatpush1.bf16.msra.mxu0 %v1952
    %1972 = vmatprep.subr.bf16.mxu0 0
    %1973 = vmatpush1.bf16.msra.mxu0 %v1953
    %1974 = vmatprep.subr.bf16.mxu0 0
    %1975 = vmatpush1.bf16.msra.mxu0 %v1954
    %1976 = vmatprep.subr.bf16.mxu0 0
    %1977 = vmatpush1.bf16.msra.mxu0 %v1955
    %1978 = vmatprep.subr.bf16.mxu0 0
    %1979 = vmatpush1.bf16.msra.mxu0 %v1956
    %1980 = vmatprep.subr.bf16.mxu0 0
    %1981 = vmatpush1.bf16.msra.mxu0 %v1957
    %1982 = vmatprep.subr.bf16.mxu0 0
    %1983 = vmatpush1.bf16.msra.mxu0 0
    %1984 = vmatprep.subr.bf16.mxu0 0
    %1985 = vmatpush1.bf16.msra.mxu0 0
    %1986 = vmatprep.subr.bf16.mxu0 0
    %1987 = vmatpush1.bf16.msra.mxu0 0
    %1988 = vmatprep.subr.bf16.mxu0 0
    %1989 = vmatpush1.bf16.msra.mxu0 0
    %1990 = vmatprep.subr.bf16.mxu0 0
    %1991 = vmatpush1.bf16.msra.mxu0 0
    %1992 = vmatprep.subr.bf16.mxu0 0
    %1993 = vmatpush1.bf16.msra.mxu0 0
    %1994 = vmatprep.subr.bf16.mxu0 0
    %1995 = vmatpush1.bf16.msra.mxu0 0
    %1996 = vmatprep.subr.bf16.mxu0 0
    %1997 = vmatpush1.bf16.msra.mxu0 0
    %1998 = vmatprep.mubr.bf16.mxu0 0
    %1999 = vmatmul.mubr.bf16.gmra.mrb[0].mxu0 %v617
    %v2000 = vpop.f32.mrb[0].mxu0
    %v2001 = vadd.f32 0.0, %v2000
    %v2002 = vpop.f32.mrb[0].mxu0
    %v2003 = vpop.f32.mrb[0].mxu0
    %v2004 = vadd.f32 0.0, %v2003
    %v2005 = vpop.f32.mrb[0].mxu0
    %2006 = vmatprep.mubr.bf16.mxu0 0
    %2007 = vmatmul.mubr.bf16.gmra.mrb[0].mxu0 %v619
    %v2008 = vpop.f32.mrb[0].mxu0
    %v2009 = vadd.f32 0.0, %v2008
    %v2010 = vpop.f32.mrb[0].mxu0
    %v2011 = vpop.f32.mrb[0].mxu0
    %v2012 = vadd.f32 0.0, %v2011
    %v2013 = vpop.f32.mrb[0].mxu0
    %2014 = vmatprep.mubr.bf16.mxu0 0
    %2015 = vmatmul.mubr.bf16.gmra.mrb[0].mxu0 %v621
    %v2016 = vpop.f32.mrb[0].mxu0
    %v2017 = vadd.f32 0.0, %v2016
    %v2018 = vpop.f32.mrb[0].mxu0
    %v2019 = vpop.f32.mrb[0].mxu0
    %v2020 = vadd.f32 0.0, %v2019
    %v2021 = vpop.f32.mrb[0].mxu0
    %2022 = vmatprep.mubr.bf16.mxu0 0
    %2023 = vmatmul.mubr.bf16.gmra.mrb[0].mxu0 %v623
    %v2024 = vpop.f32.mrb[0].mxu0
    %v2025 = vadd.f32 0.0, %v2024
    %v2026 = vpop.f32.mrb[0].mxu0
    %v2027 = vpop.f32.mrb[0].mxu0
    %v2028 = vadd.f32 0.0, %v2027
    %v2029 = vpop.f32.mrb[0].mxu0
    %2030 = vmatprep.mubr.bf16.mxu0 0
    %2031 = vmatmul.mubr.bf16.gmra.mrb[0].mxu0 %v625
    %v2032 = vpop.f32.mrb[0].mxu0
    %v2033 = vadd.f32 0.0, %v2032
    %v2034 = vpop.f32.mrb[0].mxu0
    %v2035 = vpop.f32.mrb[0].mxu0
    %v2036 = vadd.f32 0.0, %v2035
    %v2037 = vpop.f32.mrb[0].mxu0
    %2038 = vmatprep.mubr.bf16.mxu0 0
    %2039 = vmatmul.mubr.bf16.gmra.mrb[0].mxu0 %v1270
    %v2040 = vpop.f32.mrb[0].mxu0
    %v2041 = vadd.f32 0.0, %v2040
    %v2042 = vpop.f32.mrb[0].mxu0
    %v2043 = vpop.f32.mrb[0].mxu0
    %v2044 = vadd.f32 0.0, %v2043
    %v2045 = vpop.f32.mrb[0].mxu0
    %2046 = vmatprep.mubr.bf16.mxu0 0
    %2047 = vmatmul.mubr.bf16.gmra.mrb[0].mxu0 %v1272
    %v2048 = vpop.f32.mrb[0].mxu0
    %v2049 = vadd.f32 0.0, %v2048
    %v2050 = vpop.f32.mrb[0].mxu0
    %v2051 = vpop.f32.mrb[0].mxu0
    %v2052 = vadd.f32 0.0, %v2051
    %v2053 = vpop.f32.mrb[0].mxu0
    %2054 = vmatprep.mubr.bf16.mxu0 0
    %2055 = vmatmul.mubr.bf16.gmra.mrb[0].mxu0 %v1910
    %v2056 = vpop.f32.mrb[0].mxu0
    %v2057 = vadd.f32 0.0, %v2056
    %v2058 = vpop.f32.mrb[0].mxu0
    %v2059 = vpop.f32.mrb[0].mxu0
    %v2060 = vadd.f32 0.0, %v2059
    %v2061 = vpop.f32.mrb[0].mxu0
    %2062 = vmatprep.mubr.bf16.mxu0 0
    %2063 = vmatmul.mubr.bf16.gmra.mrb[0].mxu0 %v1912
    %v2064 = vpop.f32.mrb[0].mxu0
    %v2065 = vadd.f32 0.0, %v2064
    %v2066 = vpop.f32.mrb[0].mxu0
    %v2067 = vpop.f32.mrb[0].mxu0
    %v2068 = vadd.f32 0.0, %v2067
    %v2069 = vpop.f32.mrb[0].mxu0
    %2070 = vmatprep.mubr.bf16.mxu0 0
    %2071 = vmatmul.mubr.bf16.gmra.mrb[0].mxu0 %v1914
    %v2072 = vpop.f32.mrb[0].mxu0
    %v2073 = vadd.f32 0.0, %v2072
    %v2074 = vpop.f32.mrb[0].mxu0
    %v2075 = vpop.f32.mrb[0].mxu0
    %v2076 = vadd.f32 0.0, %v2075
    %v2077 = vpop.f32.mrb[0].mxu0
    %2078 = vdwg.mxu0
    %v2079 = vadd.f32 %v1872, %v2001
    %v2080 = vadd.f32 %v1873, %v2004
    %v2081 = vadd.f32 %v1874, %v2009
    %v2082 = vadd.f32 %v1875, %v2012
    %v2083 = vadd.f32 %v1876, %v2017
    %v2084 = vadd.f32 %v1877, %v2020
    %v2085 = vadd.f32 %v1878, %v2025
    %v2086 = vadd.f32 %v1879, %v2028
    %v2087 = vadd.f32 %v1880, %v2033
    %v2088 = vadd.f32 %v1881, %v2036
    %v2089 = vadd.f32 %v1882, %v2041
    %v2090 = vadd.f32 %v1883, %v2044
    %v2091 = vadd.f32 %v1884, %v2049
    %v2092 = vadd.f32 %v1885, %v2052
    %v2093 = vadd.f32 %v1886, %v2057
    %v2094 = vadd.f32 %v1887, %v2060
    %v2095 = vadd.f32 %v1888, %v2065
    %v2096 = vadd.f32 %v1889, %v2068
    %v2097 = vadd.f32 %v1890, %v2073
    %v2098 = vadd.f32 %v1891, %v2076
    %2099 = vst [vmem:[#allocation7] sm:$0xff] %v2079
    %2100 = vst [vmem:[#allocation7 + $0x8] sm:$0xff] %v2080
    %2101 = vst [vmem:[#allocation7 + $0x10] sm:$0xff] %v2081
    %2102 = vst [vmem:[#allocation7 + $0x18] sm:$0xff] %v2082
    %2103 = vst [vmem:[#allocation7 + $0x20] sm:$0xff] %v2083
    %2104 = vst [vmem:[#allocation7 + $0x28] sm:$0xff] %v2084
    %2105 = vst [vmem:[#allocation7 + $0x30] sm:$0xff] %v2085
    %2106 = vst [vmem:[#allocation7 + $0x38] sm:$0xff] %v2086
    %2107 = vst [vmem:[#allocation7 + $0x40] sm:$0xff] %v2087
    %2108 = vst [vmem:[#allocation7 + $0x48] sm:$0xff] %v2088
    %2109 = vst [vmem:[#allocation7 + $0x50] sm:$0xff] %v2089
    %2110 = vst [vmem:[#allocation7 + $0x58] sm:$0xff] %v2090
    %2111 = vst [vmem:[#allocation7 + $0x60] sm:$0xff] %v2091
    %2112 = vst [vmem:[#allocation7 + $0x68] sm:$0xff] %v2092
    %2113 = vst [vmem:[#allocation7 + $0x70] sm:$0xff] %v2093
    %2114 = vst [vmem:[#allocation7 + $0x78] sm:$0xff] %v2094
    %2115 = vst [vmem:[#allocation7 + $0x80] sm:$0xff] %v2095
    %2116 = vst [vmem:[#allocation7 + $0x88] sm:$0xff] %v2096
    %2117 = vst [vmem:[#allocation7 + $0x90] sm:$0xff] %v2097
    %2118 = vst [vmem:[#allocation7 + $0x98] sm:$0xff] %v2098
    %v2119 = vlaneseq
    %v2120 = vshrl.u32 %v2119, 7
    %v2121 = vadd.s32 %v2120, 8
    %v2122 = vadd.s32 %v2120, 16
    %v2123 = vadd.s32 %v2120, 24
    %v2124 = vadd.s32 %v2120, 32
    %v2125 = vadd.s32 %v2120, 40
    %v2126 = vadd.s32 %v2120, 48
    %v2127 = vadd.s32 %v2120, 56
    %v2128 = vadd.s32 %v2120, 64
    %v2129 = vadd.s32 %v2120, 72
    %v2130 = vadd.s32 %v2120, 80
    %v2131 = vadd.s32 %v2120, 88
    %v2132 = vadd.s32 %v2120, 96
    %v2133 = vadd.s32 %v2120, 104
    %v2134 = vadd.s32 %v2120, 112
    %v2135 = vadd.s32 %v2120, 120
    %v2136 = vadd.s32 %v2120, 128
    %v2137 = vadd.s32 %v2120, 136
    %v2138 = vadd.s32 %v2120, 144
    %v2139 = vadd.s32 %v2120, 152
    %v2140 = vand.u32 %v2120, 31
    %v2141 = vand.u32 %v2121, 31
    %v2142 = vand.u32 %v2122, 31
    %v2143 = vand.u32 %v2123, 31
    %v2144 = vand.u32 %v2124, 31
    %v2145 = vand.u32 %v2125, 31
    %v2146 = vand.u32 %v2126, 31
    %v2147 = vand.u32 %v2127, 31
    %v2148 = vand.u32 %v2128, 31
    %v2149 = vand.u32 %v2129, 31
    %v2150 = vand.u32 %v2130, 31
    %v2151 = vand.u32 %v2131, 31
    %v2152 = vand.u32 %v2132, 31
    %v2153 = vand.u32 %v2133, 31
    %v2154 = vand.u32 %v2134, 31
    %v2155 = vand.u32 %v2135, 31
    %v2156 = vand.u32 %v2136, 31
    %v2157 = vand.u32 %v2137, 31
    %v2158 = vand.u32 %v2138, 31
    %v2159 = vand.u32 %v2139, 31
    %vm2160 = vcmp.lt.s32.totalorder %v2140, 25
    %vm2161 = vcmp.lt.s32.totalorder %v2141, 25
    %vm2162 = vcmp.lt.s32.totalorder %v2142, 25
    %vm2163 = vcmp.lt.s32.totalorder %v2143, 25
    %vm2164 = vcmp.lt.s32.totalorder %v2144, 25
    %vm2165 = vcmp.lt.s32.totalorder %v2145, 25
    %vm2166 = vcmp.lt.s32.totalorder %v2146, 25
    %vm2167 = vcmp.lt.s32.totalorder %v2147, 25
    %vm2168 = vcmp.lt.s32.totalorder %v2148, 25
    %vm2169 = vcmp.lt.s32.totalorder %v2149, 25
    %vm2170 = vcmp.lt.s32.totalorder %v2150, 25
    %vm2171 = vcmp.lt.s32.totalorder %v2151, 25
    %vm2172 = vcmp.lt.s32.totalorder %v2152, 25
    %vm2173 = vcmp.lt.s32.totalorder %v2153, 25
    %vm2174 = vcmp.lt.s32.totalorder %v2154, 25
    %vm2175 = vcmp.lt.s32.totalorder %v2155, 25
    %vm2176 = vcmp.lt.s32.totalorder %v2156, 25
    %vm2177 = vcmp.lt.s32.totalorder %v2157, 25
    %vm2178 = vcmp.lt.s32.totalorder %v2158, 25
    %vm2179 = vcmp.lt.s32.totalorder %v2159, 25
    %v2180 = vsel %vm2160, %v2079, 0.0
    %v2181 = vsel %vm2161, %v2080, 0.0
    %v2182 = vsel %vm2162, %v2081, 0.0
    %v2183 = vsel %vm2163, %v2082, 0.0
    %v2184 = vsel %vm2164, %v2083, 0.0
    %v2185 = vsel %vm2165, %v2084, 0.0
    %v2186 = vsel %vm2166, %v2085, 0.0
    %v2187 = vsel %vm2167, %v2086, 0.0
    %v2188 = vsel %vm2168, %v2087, 0.0
    %v2189 = vsel %vm2169, %v2088, 0.0
    %v2190 = vsel %vm2170, %v2089, 0.0
    %v2191 = vsel %vm2171, %v2090, 0.0
    %v2192 = vsel %vm2172, %v2091, 0.0
    %v2193 = vsel %vm2173, %v2092, 0.0
    %v2194 = vsel %vm2174, %v2093, 0.0
    %v2195 = vsel %vm2175, %v2094, 0.0
    %v2196 = vsel %vm2176, %v2095, 0.0
    %v2197 = vsel %vm2177, %v2096, 0.0
    %v2198 = vsel %vm2178, %v2097, 0.0
    %v2199 = vsel %vm2179, %v2098, 0.0
    %v2200 = vadd.f32 %v2180, %v2181
    %v2201 = vadd.f32 %v2200, %v2182
    %v2202 = vadd.f32 %v2201, %v2183
    %v2203 = vadd.f32 %v2202, %v2184
    %v2204 = vadd.f32 %v2203, %v2185
    %v2205 = vadd.f32 %v2204, %v2186
    %v2206 = vadd.f32 %v2205, %v2187
    %v2207 = vadd.f32 %v2206, %v2188
    %v2208 = vadd.f32 %v2207, %v2189
    %v2209 = vadd.f32 %v2208, %v2190
    %v2210 = vadd.f32 %v2209, %v2191
    %v2211 = vadd.f32 %v2210, %v2192
    %v2212 = vadd.f32 %v2211, %v2193
    %v2213 = vadd.f32 %v2212, %v2194
    %v2214 = vadd.f32 %v2213, %v2195
    %v2215 = vadd.f32 %v2214, %v2196
    %v2216 = vadd.f32 %v2215, %v2197
    %v2217 = vadd.f32 %v2216, %v2198
    %v2218 = vadd.f32 %v2217, %v2199
    %v2219 = vrot.slane %v2218, 4
    %v2220 = vadd.f32 %v2218, %v2219
    %v2221 = vrot.slane %v2220, 2
    %v2222 = vadd.f32 %v2220, %v2221
    %v2223 = vrot.slane %v2222, 1
    %v2224 = vadd.f32 %v2222, %v2223
    %v2225 = vadd.f32 %v2224, 0.0
    %v2226 = vmul.f32 %v2180, %v2180
    %v2227 = vmul.f32 %v2181, %v2181
    %v2228 = vmul.f32 %v2182, %v2182
    %v2229 = vmul.f32 %v2183, %v2183
    %v2230 = vmul.f32 %v2184, %v2184
    %v2231 = vmul.f32 %v2185, %v2185
    %v2232 = vmul.f32 %v2186, %v2186
    %v2233 = vmul.f32 %v2187, %v2187
    %v2234 = vmul.f32 %v2188, %v2188
    %v2235 = vmul.f32 %v2189, %v2189
    %v2236 = vmul.f32 %v2190, %v2190
    %v2237 = vmul.f32 %v2191, %v2191
    %v2238 = vmul.f32 %v2192, %v2192
    %v2239 = vmul.f32 %v2193, %v2193
    %v2240 = vmul.f32 %v2194, %v2194
    %v2241 = vmul.f32 %v2195, %v2195
    %v2242 = vmul.f32 %v2196, %v2196
    %v2243 = vmul.f32 %v2197, %v2197
    %v2244 = vmul.f32 %v2198, %v2198
    %v2245 = vmul.f32 %v2199, %v2199
    %v2246 = vadd.f32 %v2226, %v2227
    %v2247 = vadd.f32 %v2246, %v2228
    %v2248 = vadd.f32 %v2247, %v2229
    %v2249 = vadd.f32 %v2248, %v2230
    %v2250 = vadd.f32 %v2249, %v2231
    %v2251 = vadd.f32 %v2250, %v2232
    %v2252 = vadd.f32 %v2251, %v2233
    %v2253 = vadd.f32 %v2252, %v2234
    %v2254 = vadd.f32 %v2253, %v2235
    %v2255 = vadd.f32 %v2254, %v2236
    %v2256 = vadd.f32 %v2255, %v2237
    %v2257 = vadd.f32 %v2256, %v2238
    %v2258 = vadd.f32 %v2257, %v2239
    %v2259 = vadd.f32 %v2258, %v2240
    %v2260 = vadd.f32 %v2259, %v2241
    %v2261 = vadd.f32 %v2260, %v2242
    %v2262 = vadd.f32 %v2261, %v2243
    %v2263 = vadd.f32 %v2262, %v2244
    %v2264 = vadd.f32 %v2263, %v2245
    %v2265 = vrot.slane %v2264, 4
    %v2266 = vadd.f32 %v2264, %v2265
    %v2267 = vrot.slane %v2266, 2
    %v2268 = vadd.f32 %v2266, %v2267
    %v2269 = vrot.slane %v2268, 1
    %v2270 = vadd.f32 %v2268, %v2269
    %v2271 = vadd.f32 %v2270, 0.0
    %v2272 = vld [vmem:[#allocation2 + $0x50] sm:$0xf]
    %v2273 = vld [vmem:[#allocation2 + $0x54] sm:$0xf]
    %v2274 = vld [vmem:[#allocation2 + $0x58] sm:$0xf]
    %v2275 = vld [vmem:[#allocation2 + $0x5c] sm:$0xf]
    %v2276 = vld [vmem:[#allocation2 + $0x60] sm:$0xf]
    %v2277 = vld [vmem:[#allocation2 + $0x64] sm:$0xf]
    %v2278 = vld [vmem:[#allocation2 + $0x68] sm:$0xf]
    %v2279 = vld [vmem:[#allocation2 + $0x6c] sm:$0xf]
    %v2280 = vld [vmem:[#allocation2 + $0x70] sm:$0xf]
    %v2281 = vld [vmem:[#allocation2 + $0x74] sm:$0xf]
    %v2282 = vld [vmem:[#allocation2 + $0x78] sm:$0xf]
    %v2283 = vld [vmem:[#allocation2 + $0x7c] sm:$0xf]
    %v2284 = vld [vmem:[#allocation2 + $0x80] sm:$0xf]
    %v2285 = vld [vmem:[#allocation2 + $0x84] sm:$0xf]
    %v2286 = vld [vmem:[#allocation2 + $0x88] sm:$0xf]
    %v2287 = vld [vmem:[#allocation2 + $0x8c] sm:$0xf]
    %v2288 = vld [vmem:[#allocation2 + $0x90] sm:$0xf]
    %v2289 = vld [vmem:[#allocation2 + $0x94] sm:$0xf]
    %v2290 = vld [vmem:[#allocation2 + $0x98] sm:$0xf]
    %v2291 = vld [vmem:[#allocation2 + $0x9c] sm:$0xf]
    %v2292 = vld [vmem:[#allocation2 + $0xa0] sm:$0xf]
    %v2293 = vld [vmem:[#allocation2 + $0xa4] sm:$0xf]
    %v2294 = vld [vmem:[#allocation2 + $0xa8] sm:$0xf]
    %v2295 = vld [vmem:[#allocation2 + $0xac] sm:$0xf]
    %v2296 = vld [vmem:[#allocation2 + $0xb0] sm:$0xf]
    %v2297 = vld [vmem:[#allocation2 + $0xb4] sm:$0xf]
    %v2298 = vld [vmem:[#allocation2 + $0xb8] sm:$0xf]
    %v2299 = vld [vmem:[#allocation2 + $0xbc] sm:$0xf]
    %v2300 = vld [vmem:[#allocation2 + $0xc0] sm:$0x1]
    %v2301 = vld [vmem:[#allocation5] sm:$0xf]
    %v2302 = vld [vmem:[#allocation5 + $0x4] sm:$0xf]
    %v2303 = vld [vmem:[#allocation5 + $0x8] sm:$0xf]
    %v2304 = vld [vmem:[#allocation5 + $0xc] sm:$0xf]
    %v2305 = vld [vmem:[#allocation5 + $0x10] sm:$0xf]
    %v2306 = vld [vmem:[#allocation5 + $0x14] sm:$0xf]
    %v2307 = vld [vmem:[#allocation5 + $0x18] sm:$0xf]
    %v2308 = vld [vmem:[#allocation5 + $0x1c] sm:$0xf]
    %v2309 = vld [vmem:[#allocation5 + $0x20] sm:$0xf]
    %v2310 = vld [vmem:[#allocation5 + $0x24] sm:$0xf]
    %v2311 = vld [vmem:[#allocation5 + $0x28] sm:$0xf]
    %v2312 = vld [vmem:[#allocation5 + $0x2c] sm:$0xf]
    %v2313 = vld [vmem:[#allocation5 + $0x30] sm:$0xf]
    %v2314 = vld [vmem:[#allocation5 + $0x34] sm:$0xf]
    %v2315 = vld [vmem:[#allocation5 + $0x38] sm:$0xf]
    %v2316 = vld [vmem:[#allocation5 + $0x3c] sm:$0xf]
    %v2317 = vld [vmem:[%s92] sm:$0xf]
    %v2318 = vld [vmem:[%s92 + $0x4] sm:$0xf]
    %v2319 = vld [vmem:[%s92 + $0x8] sm:$0xf]
    %v2320 = vld [vmem:[%s92 + $0xc] sm:$0xf]
    %v2321 = vld [vmem:[%s92 + $0x10] sm:$0xf]
    %v2322 = vld [vmem:[%s92 + $0x14] sm:$0xf]
    %v2323 = vld [vmem:[%s92 + $0x18] sm:$0xf]
    %v2324 = vld [vmem:[%s92 + $0x1c] sm:$0xf]
    %v2325 = vld [vmem:[%s92 + $0x20] sm:$0xf]
    %v2326 = vld [vmem:[%s92 + $0x24] sm:$0xf]
    %v2327 = vld [vmem:[%s92 + $0x28] sm:$0xf]
    %v2328 = vld [vmem:[%s92 + $0x2c] sm:$0xf]
    %v2329 = vld [vmem:[%s92 + $0x30] sm:$0xf]
    %v2330 = vld [vmem:[%s92 + $0x34] sm:$0xf]
    %v2331 = vld [vmem:[%s92 + $0x38] sm:$0xf]
    %v2332 = vld [vmem:[%s92 + $0x3c] sm:$0xf]
    %v2354 = vunpack.c.l.b16 %v2272
    %v2355 = vunpack.c.l.b16 %v2273
    %v2356 = vunpack.c.l.b16 %v2274
    %v2357 = vunpack.c.l.b16 %v2275
    %v2358 = vunpack.c.l.b16 %v2276
    %v2359 = vunpack.c.l.b16 %v2277
    %v2360 = vunpack.c.l.b16 %v2278
    %v2361 = vunpack.c.l.b16 %v2279
    %v2362 = vunpack.c.l.b16 %v2280
    %v2363 = vunpack.c.l.b16 %v2281
    %v2364 = vunpack.c.l.b16 %v2282
    %v2365 = vunpack.c.l.b16 %v2283
    %v2366 = vunpack.c.l.b16 %v2284
    %v2367 = vunpack.c.l.b16 %v2285
    %v2368 = vunpack.c.l.b16 %v2286
    %v2369 = vunpack.c.l.b16 %v2287
    %v2370 = vunpack.c.l.b16 %v2288
    %v2371 = vunpack.c.l.b16 %v2289
    %v2372 = vunpack.c.l.b16 %v2290
    %v2373 = vunpack.c.l.b16 %v2291
    %v2374 = vunpack.c.l.b16 %v2292
    %v2375 = vpack.c.b16 %v2355, %v2354
    %v2376 = vpack.c.b16 %v2357, %v2356
    %v2377 = vpack.c.b16 %v2359, %v2358
    %v2378 = vpack.c.b16 %v2361, %v2360
    %v2379 = vpack.c.b16 %v2363, %v2362
    %v2380 = vpack.c.b16 %v2365, %v2364
    %v2381 = vpack.c.b16 %v2367, %v2366
    %v2382 = vpack.c.b16 %v2369, %v2368
    %v2383 = vpack.c.b16 %v2371, %v2370
    %v2384 = vpack.c.b16 %v2373, %v2372
    %v2385 = vpack.c.b16 %v2374, %v2374
    %v2387 = vshrl.u32 %v2375, 16
    %v2389 = vshll.u32 %v2375, 16
    %v2391 = vrot.slane %v2389, 1
    %v2392 = vor.u32 %v2387, %v2391
    %v2394 = vshll.u32 %v2376, 16
    %v2396 = vrot.slane %v2394, 1
    %v2397 = vsel %vm162, %v2392, %v2396
    %v2398 = vshrl.u32 %v2376, 16
    %v2400 = vor.u32 %v2398, %v2396
    %v2402 = vshll.u32 %v2377, 16
    %v2404 = vrot.slane %v2402, 1
    %v2405 = vsel %vm162, %v2400, %v2404
    %v2406 = vshrl.u32 %v2377, 16
    %v2408 = vor.u32 %v2406, %v2404
    %v2410 = vshll.u32 %v2378, 16
    %v2412 = vrot.slane %v2410, 1
    %v2413 = vsel %vm162, %v2408, %v2412
    %v2414 = vshrl.u32 %v2378, 16
    %v2416 = vor.u32 %v2414, %v2412
    %v2418 = vshll.u32 %v2379, 16
    %v2420 = vrot.slane %v2418, 1
    %v2421 = vsel %vm162, %v2416, %v2420
    %v2422 = vshrl.u32 %v2379, 16
    %v2424 = vor.u32 %v2422, %v2420
    %v2426 = vshll.u32 %v2380, 16
    %v2428 = vrot.slane %v2426, 1
    %v2429 = vsel %vm162, %v2424, %v2428
    %v2430 = vshrl.u32 %v2380, 16
    %v2432 = vor.u32 %v2430, %v2428
    %v2434 = vshll.u32 %v2381, 16
    %v2436 = vrot.slane %v2434, 1
    %v2437 = vsel %vm162, %v2432, %v2436
    %v2438 = vshrl.u32 %v2381, 16
    %v2440 = vor.u32 %v2438, %v2436
    %v2442 = vshll.u32 %v2382, 16
    %v2444 = vrot.slane %v2442, 1
    %v2445 = vsel %vm162, %v2440, %v2444
    %v2446 = vshrl.u32 %v2382, 16
    %v2448 = vor.u32 %v2446, %v2444
    %v2450 = vshll.u32 %v2383, 16
    %v2452 = vrot.slane %v2450, 1
    %v2453 = vsel %vm162, %v2448, %v2452
    %v2454 = vshrl.u32 %v2383, 16
    %v2456 = vor.u32 %v2454, %v2452
    %v2458 = vshll.u32 %v2384, 16
    %v2460 = vrot.slane %v2458, 1
    %v2461 = vsel %vm162, %v2456, %v2460
    %v2462 = vshrl.u32 %v2384, 16
    %v2464 = vor.u32 %v2462, %v2460
    %v2466 = vshll.u32 %v2385, 16
    %v2468 = vrot.slane %v2466, 1
    %v2469 = vsel %vm162, %v2464, %v2468
    %v2496 = vunpack.c.l.b16 %v2317
    %v2497 = vunpack.c.l.b16 %v2318
    %v2498 = vunpack.c.l.b16 %v2319
    %v2499 = vunpack.c.l.b16 %v2320
    %v2500 = vunpack.c.l.b16 %v2321
    %v2501 = vunpack.c.l.b16 %v2322
    %v2502 = vunpack.c.l.b16 %v2323
    %v2503 = vunpack.c.l.b16 %v2324
    %v2504 = vunpack.c.l.b16 %v2325
    %v2505 = vunpack.c.l.b16 %v2326
    %v2506 = vunpack.c.l.b16 %v2327
    %v2507 = vunpack.c.l.b16 %v2328
    %v2508 = vunpack.c.l.b16 %v2329
    %v2509 = vunpack.c.l.b16 %v2330
    %v2510 = vunpack.c.l.b16 %v2331
    %v2511 = vunpack.c.l.b16 %v2332
    %v2512 = vpack.c.b16 %v2497, %v2496
    %v2513 = vpack.c.b16 %v2499, %v2498
    %v2514 = vpack.c.b16 %v2501, %v2500
    %v2515 = vpack.c.b16 %v2503, %v2502
    %v2516 = vpack.c.b16 %v2505, %v2504
    %v2517 = vpack.c.b16 %v2507, %v2506
    %v2518 = vpack.c.b16 %v2509, %v2508
    %v2519 = vpack.c.b16 %v2511, %v2510
    %2528 = vmatprep.subr.bf16.mxu0 0
    %2529 = vmatpush1.bf16.msra.mxu0 %v2512
    %2530 = vmatprep.subr.bf16.mxu0 0
    %2531 = vmatpush1.bf16.msra.mxu0 %v2513
    %2532 = vmatprep.subr.bf16.mxu0 0
    %2533 = vmatpush1.bf16.msra.mxu0 %v2514
    %2534 = vmatprep.subr.bf16.mxu0 0
    %2535 = vmatpush1.bf16.msra.mxu0 %v2515
    %2536 = vmatprep.subr.bf16.mxu0 0
    %2537 = vmatpush1.bf16.msra.mxu0 %v2516
    %2538 = vmatprep.subr.bf16.mxu0 0
    %2539 = vmatpush1.bf16.msra.mxu0 %v2517
    %2540 = vmatprep.subr.bf16.mxu0 0
    %2541 = vmatpush1.bf16.msra.mxu0 %v2518
    %2542 = vmatprep.subr.bf16.mxu0 0
    %2543 = vmatpush1.bf16.msra.mxu0 %v2519
    %2544 = vmatprep.subr.bf16.mxu0 0
    %2545 = vmatpush1.bf16.msra.mxu0 0
    %2546 = vmatprep.subr.bf16.mxu0 0
    %2547 = vmatpush1.bf16.msra.mxu0 0
    %2548 = vmatprep.subr.bf16.mxu0 0
    %2549 = vmatpush1.bf16.msra.mxu0 0
    %2550 = vmatprep.subr.bf16.mxu0 0
    %2551 = vmatpush1.bf16.msra.mxu0 0
    %2552 = vmatprep.subr.bf16.mxu0 0
    %2553 = vmatpush1.bf16.msra.mxu0 0
    %2554 = vmatprep.subr.bf16.mxu0 0
    %2555 = vmatpush1.bf16.msra.mxu0 0
    %2556 = vmatprep.subr.bf16.mxu0 0
    %2557 = vmatpush1.bf16.msra.mxu0 0
    %2558 = vmatprep.subr.bf16.mxu0 0
    %2559 = vmatpush1.bf16.msra.mxu0 0
    %2560 = vmatprep.mubr.bf16.mxu0 0
    %2561 = vmatmul.mubr.bf16.gmra.mrb[0].mxu0 %v2397
    %v2562 = vpop.f32.mrb[0].mxu0
    %v2563 = vadd.f32 0.0, %v2562
    %v2564 = vpop.f32.mrb[0].mxu0
    %v2565 = vpop.f32.mrb[0].mxu0
    %v2566 = vadd.f32 0.0, %v2565
    %v2567 = vpop.f32.mrb[0].mxu0
    %2568 = vmatprep.mubr.bf16.mxu0 0
    %2569 = vmatmul.mubr.bf16.gmra.mrb[0].mxu0 %v2405
    %v2570 = vpop.f32.mrb[0].mxu0
    %v2571 = vadd.f32 0.0, %v2570
    %v2572 = vpop.f32.mrb[0].mxu0
    %v2573 = vpop.f32.mrb[0].mxu0
    %v2574 = vadd.f32 0.0, %v2573
    %v2575 = vpop.f32.mrb[0].mxu0
    %2576 = vmatprep.mubr.bf16.mxu0 0
    %2577 = vmatmul.mubr.bf16.gmra.mrb[0].mxu0 %v2413
    %v2578 = vpop.f32.mrb[0].mxu0
    %v2579 = vadd.f32 0.0, %v2578
    %v2580 = vpop.f32.mrb[0].mxu0
    %v2581 = vpop.f32.mrb[0].mxu0
    %v2582 = vadd.f32 0.0, %v2581
    %v2583 = vpop.f32.mrb[0].mxu0
    %2584 = vmatprep.mubr.bf16.mxu0 0
    %2585 = vmatmul.mubr.bf16.gmra.mrb[0].mxu0 %v2421
    %v2586 = vpop.f32.mrb[0].mxu0
    %v2587 = vadd.f32 0.0, %v2586
    %v2588 = vpop.f32.mrb[0].mxu0
    %v2589 = vpop.f32.mrb[0].mxu0
    %v2590 = vadd.f32 0.0, %v2589
    %v2591 = vpop.f32.mrb[0].mxu0
    %2592 = vmatprep.mubr.bf16.mxu0 0
    %2593 = vmatmul.mubr.bf16.gmra.mrb[0].mxu0 %v2429
    %v2594 = vpop.f32.mrb[0].mxu0
    %v2595 = vadd.f32 0.0, %v2594
    %v2596 = vpop.f32.mrb[0].mxu0
    %v2597 = vpop.f32.mrb[0].mxu0
    %v2598 = vadd.f32 0.0, %v2597
    %v2599 = vpop.f32.mrb[0].mxu0
    %2600 = vmatprep.mubr.bf16.mxu0 0
    %2601 = vmatmul.mubr.bf16.gmra.mrb[0].mxu0 %v2437
    %v2602 = vpop.f32.mrb[0].mxu0
    %v2603 = vadd.f32 0.0, %v2602
    %v2604 = vpop.f32.mrb[0].mxu0
    %v2605 = vpop.f32.mrb[0].mxu0
    %v2606 = vadd.f32 0.0, %v2605
    %v2607 = vpop.f32.mrb[0].mxu0
    %2608 = vmatprep.mubr.bf16.mxu0 0
    %2609 = vmatmul.mubr.bf16.gmra.mrb[0].mxu0 %v2445
    %v2610 = vpop.f32.mrb[0].mxu0
    %v2611 = vadd.f32 0.0, %v2610
    %v2612 = vpop.f32.mrb[0].mxu0
    %v2613 = vpop.f32.mrb[0].mxu0
    %v2614 = vadd.f32 0.0, %v2613
    %v2615 = vpop.f32.mrb[0].mxu0
    %2616 = vmatprep.mubr.bf16.mxu0 0
    %2617 = vmatmul.mubr.bf16.gmra.mrb[0].mxu0 %v2453
    %v2618 = vpop.f32.mrb[0].mxu0
    %v2619 = vadd.f32 0.0, %v2618
    %v2620 = vpop.f32.mrb[0].mxu0
    %v2621 = vpop.f32.mrb[0].mxu0
    %v2622 = vadd.f32 0.0, %v2621
    %v2623 = vpop.f32.mrb[0].mxu0
    %2624 = vmatprep.mubr.bf16.mxu0 0
    %2625 = vmatmul.mubr.bf16.gmra.mrb[0].mxu0 %v2461
    %v2626 = vpop.f32.mrb[0].mxu0
    %v2627 = vadd.f32 0.0, %v2626
    %v2628 = vpop.f32.mrb[0].mxu0
    %v2629 = vpop.f32.mrb[0].mxu0
    %v2630 = vadd.f32 0.0, %v2629
    %v2631 = vpop.f32.mrb[0].mxu0
    %2632 = vmatprep.mubr.bf16.mxu0 0
    %2633 = vmatmul.mubr.bf16.gmra.mrb[0].mxu0 %v2469
    %v2634 = vpop.f32.mrb[0].mxu0
    %v2635 = vadd.f32 0.0, %v2634
    %v2636 = vpop.f32.mrb[0].mxu0
    %v2637 = vpop.f32.mrb[0].mxu0
    %v2638 = vadd.f32 0.0, %v2637
    %v2639 = vpop.f32.mrb[0].mxu0
    %2640 = vdwg.mxu0
    %v2667 = vunpack.c.l.b16 %v2301
    %v2668 = vunpack.c.l.b16 %v2302
    %v2669 = vunpack.c.l.b16 %v2303
    %v2670 = vunpack.c.l.b16 %v2304
    %v2671 = vunpack.c.l.b16 %v2305
    %v2672 = vunpack.c.l.b16 %v2306
    %v2673 = vunpack.c.l.b16 %v2307
    %v2674 = vunpack.c.l.b16 %v2308
    %v2675 = vunpack.c.l.b16 %v2309
    %v2676 = vunpack.c.l.b16 %v2310
    %v2677 = vunpack.c.l.b16 %v2311
    %v2678 = vunpack.c.l.b16 %v2312
    %v2679 = vunpack.c.l.b16 %v2313
    %v2680 = vunpack.c.l.b16 %v2314
    %v2681 = vunpack.c.l.b16 %v2315
    %v2682 = vunpack.c.l.b16 %v2316
    %v2683 = vpack.c.b16 %v2668, %v2667
    %v2684 = vpack.c.b16 %v2670, %v2669
    %v2685 = vpack.c.b16 %v2672, %v2671
    %v2686 = vpack.c.b16 %v2674, %v2673
    %v2687 = vpack.c.b16 %v2676, %v2675
    %v2688 = vpack.c.b16 %v2678, %v2677
    %v2689 = vpack.c.b16 %v2680, %v2679
    %v2690 = vpack.c.b16 %v2682, %v2681
    %2699 = vmatprep.subr.bf16.mxu0 0
    %2700 = vmatpush1.bf16.msra.mxu0 %v2683
    %2701 = vmatprep.subr.bf16.mxu0 0
    %2702 = vmatpush1.bf16.msra.mxu0 %v2684
    %2703 = vmatprep.subr.bf16.mxu0 0
    %2704 = vmatpush1.bf16.msra.mxu0 %v2685
    %2705 = vmatprep.subr.bf16.mxu0 0
    %2706 = vmatpush1.bf16.msra.mxu0 %v2686
    %2707 = vmatprep.subr.bf16.mxu0 0
    %2708 = vmatpush1.bf16.msra.mxu0 %v2687
    %2709 = vmatprep.subr.bf16.mxu0 0
    %2710 = vmatpush1.bf16.msra.mxu0 %v2688
    %2711 = vmatprep.subr.bf16.mxu0 0
    %2712 = vmatpush1.bf16.msra.mxu0 %v2689
    %2713 = vmatprep.subr.bf16.mxu0 0
    %2714 = vmatpush1.bf16.msra.mxu0 %v2690
    %2715 = vmatprep.subr.bf16.mxu0 0
    %2716 = vmatpush1.bf16.msra.mxu0 0
    %2717 = vmatprep.subr.bf16.mxu0 0
    %2718 = vmatpush1.bf16.msra.mxu0 0
    %2719 = vmatprep.subr.bf16.mxu0 0
    %2720 = vmatpush1.bf16.msra.mxu0 0
    %2721 = vmatprep.subr.bf16.mxu0 0
    %2722 = vmatpush1.bf16.msra.mxu0 0
    %2723 = vmatprep.subr.bf16.mxu0 0
    %2724 = vmatpush1.bf16.msra.mxu0 0
    %2725 = vmatprep.subr.bf16.mxu0 0
    %2726 = vmatpush1.bf16.msra.mxu0 0
    %2727 = vmatprep.subr.bf16.mxu0 0
    %2728 = vmatpush1.bf16.msra.mxu0 0
    %2729 = vmatprep.subr.bf16.mxu0 0
    %2730 = vmatpush1.bf16.msra.mxu0 0
    %2731 = vmatprep.mubr.bf16.mxu0 0
    %2732 = vmatmul.mubr.bf16.gmra.mrb[0].mxu0 %v2375
    %v2733 = vpop.f32.mrb[0].mxu0
    %v2734 = vadd.f32 %v2563, %v2733
    %v2735 = vpop.f32.mrb[0].mxu0
    %v2736 = vpop.f32.mrb[0].mxu0
    %v2737 = vadd.f32 %v2566, %v2736
    %v2738 = vpop.f32.mrb[0].mxu0
    %2739 = vmatprep.mubr.bf16.mxu0 0
    %2740 = vmatmul.mubr.bf16.gmra.mrb[0].mxu0 %v2376
    %v2741 = vpop.f32.mrb[0].mxu0
    %v2742 = vadd.f32 %v2571, %v2741
    %v2743 = vpop.f32.mrb[0].mxu0
    %v2744 = vpop.f32.mrb[0].mxu0
    %v2745 = vadd.f32 %v2574, %v2744
    %v2746 = vpop.f32.mrb[0].mxu0
    %2747 = vmatprep.mubr.bf16.mxu0 0
    %2748 = vmatmul.mubr.bf16.gmra.mrb[0].mxu0 %v2377
    %v2749 = vpop.f32.mrb[0].mxu0
    %v2750 = vadd.f32 %v2579, %v2749
    %v2751 = vpop.f32.mrb[0].mxu0
    %v2752 = vpop.f32.mrb[0].mxu0
    %v2753 = vadd.f32 %v2582, %v2752
    %v2754 = vpop.f32.mrb[0].mxu0
    %2755 = vmatprep.mubr.bf16.mxu0 0
    %2756 = vmatmul.mubr.bf16.gmra.mrb[0].mxu0 %v2378
    %v2757 = vpop.f32.mrb[0].mxu0
    %v2758 = vadd.f32 %v2587, %v2757
    %v2759 = vpop.f32.mrb[0].mxu0
    %v2760 = vpop.f32.mrb[0].mxu0
    %v2761 = vadd.f32 %v2590, %v2760
    %v2762 = vpop.f32.mrb[0].mxu0
    %2763 = vmatprep.mubr.bf16.mxu0 0
    %2764 = vmatmul.mubr.bf16.gmra.mrb[0].mxu0 %v2379
    %v2765 = vpop.f32.mrb[0].mxu0
    %v2766 = vadd.f32 %v2595, %v2765
    %v2767 = vpop.f32.mrb[0].mxu0
    %v2768 = vpop.f32.mrb[0].mxu0
    %v2769 = vadd.f32 %v2598, %v2768
    %v2770 = vpop.f32.mrb[0].mxu0
    %2771 = vmatprep.mubr.bf16.mxu0 0
    %2772 = vmatmul.mubr.bf16.gmra.mrb[0].mxu0 %v2380
    %v2773 = vpop.f32.mrb[0].mxu0
    %v2774 = vadd.f32 %v2603, %v2773
    %v2775 = vpop.f32.mrb[0].mxu0
    %v2776 = vpop.f32.mrb[0].mxu0
    %v2777 = vadd.f32 %v2606, %v2776
    %v2778 = vpop.f32.mrb[0].mxu0
    %2779 = vmatprep.mubr.bf16.mxu0 0
    %2780 = vmatmul.mubr.bf16.gmra.mrb[0].mxu0 %v2381
    %v2781 = vpop.f32.mrb[0].mxu0
    %v2782 = vadd.f32 %v2611, %v2781
    %v2783 = vpop.f32.mrb[0].mxu0
    %v2784 = vpop.f32.mrb[0].mxu0
    %v2785 = vadd.f32 %v2614, %v2784
    %v2786 = vpop.f32.mrb[0].mxu0
    %2787 = vmatprep.mubr.bf16.mxu0 0
    %2788 = vmatmul.mubr.bf16.gmra.mrb[0].mxu0 %v2382
    %v2789 = vpop.f32.mrb[0].mxu0
    %v2790 = vadd.f32 %v2619, %v2789
    %v2791 = vpop.f32.mrb[0].mxu0
    %v2792 = vpop.f32.mrb[0].mxu0
    %v2793 = vadd.f32 %v2622, %v2792
    %v2794 = vpop.f32.mrb[0].mxu0
    %2795 = vmatprep.mubr.bf16.mxu0 0
    %2796 = vmatmul.mubr.bf16.gmra.mrb[0].mxu0 %v2383
    %v2797 = vpop.f32.mrb[0].mxu0
    %v2798 = vadd.f32 %v2627, %v2797
    %v2799 = vpop.f32.mrb[0].mxu0
    %v2800 = vpop.f32.mrb[0].mxu0
    %v2801 = vadd.f32 %v2630, %v2800
    %v2802 = vpop.f32.mrb[0].mxu0
    %2803 = vmatprep.mubr.bf16.mxu0 0
    %2804 = vmatmul.mubr.bf16.gmra.mrb[0].mxu0 %v2384
    %v2805 = vpop.f32.mrb[0].mxu0
    %v2806 = vadd.f32 %v2635, %v2805
    %v2807 = vpop.f32.mrb[0].mxu0
    %v2808 = vpop.f32.mrb[0].mxu0
    %v2809 = vadd.f32 %v2638, %v2808
    %v2810 = vpop.f32.mrb[0].mxu0
    %2811 = vdwg.mxu0
    %v2812 = vld [vmem:[%s589] sm:$0xf]
    %v2813 = vld [vmem:[%s589 + $0x4] sm:$0xf]
    %v2814 = vld [vmem:[%s589 + $0x8] sm:$0xf]
    %v2815 = vld [vmem:[%s589 + $0xc] sm:$0xf]
    %v2816 = vld [vmem:[%s589 + $0x10] sm:$0xf]
    %v2817 = vld [vmem:[%s589 + $0x14] sm:$0xf]
    %v2818 = vld [vmem:[%s589 + $0x18] sm:$0xf]
    %v2819 = vld [vmem:[%s589 + $0x1c] sm:$0xf]
    %v2820 = vld [vmem:[%s589 + $0x20] sm:$0xf]
    %v2821 = vld [vmem:[%s589 + $0x24] sm:$0xf]
    %v2822 = vld [vmem:[%s589 + $0x28] sm:$0xf]
    %v2823 = vld [vmem:[%s589 + $0x2c] sm:$0xf]
    %v2824 = vld [vmem:[%s589 + $0x30] sm:$0xf]
    %v2825 = vld [vmem:[%s589 + $0x34] sm:$0xf]
    %v2826 = vld [vmem:[%s589 + $0x38] sm:$0xf]
    %v2827 = vld [vmem:[%s589 + $0x3c] sm:$0xf]
    %v2828 = vrot.slane %v2375, 1
    %v2829 = vrot.slane %v2376, 1
    %v2830 = vsel %vm606, %v2828, %v2829
    %v2831 = vrot.slane %v2377, 1
    %v2832 = vsel %vm606, %v2829, %v2831
    %v2833 = vrot.slane %v2378, 1
    %v2834 = vsel %vm606, %v2831, %v2833
    %v2835 = vrot.slane %v2379, 1
    %v2836 = vsel %vm606, %v2833, %v2835
    %v2837 = vrot.slane %v2380, 1
    %v2838 = vsel %vm606, %v2835, %v2837
    %v2839 = vrot.slane %v2381, 1
    %v2840 = vsel %vm606, %v2837, %v2839
    %v2841 = vrot.slane %v2382, 1
    %v2842 = vsel %vm606, %v2839, %v2841
    %v2843 = vrot.slane %v2383, 1
    %v2844 = vsel %vm606, %v2841, %v2843
    %v2845 = vrot.slane %v2384, 1
    %v2846 = vsel %vm606, %v2843, %v2845
    %v2847 = vrot.slane %v2385, 1
    %v2848 = vsel %vm606, %v2845, %v2847
    %v2875 = vunpack.c.l.b16 %v2812
    %v2876 = vunpack.c.l.b16 %v2813
    %v2877 = vunpack.c.l.b16 %v2814
    %v2878 = vunpack.c.l.b16 %v2815
    %v2879 = vunpack.c.l.b16 %v2816
    %v2880 = vunpack.c.l.b16 %v2817
    %v2881 = vunpack.c.l.b16 %v2818
    %v2882 = vunpack.c.l.b16 %v2819
    %v2883 = vunpack.c.l.b16 %v2820
    %v2884 = vunpack.c.l.b16 %v2821
    %v2885 = vunpack.c.l.b16 %v2822
    %v2886 = vunpack.c.l.b16 %v2823
    %v2887 = vunpack.c.l.b16 %v2824
    %v2888 = vunpack.c.l.b16 %v2825
    %v2889 = vunpack.c.l.b16 %v2826
    %v2890 = vunpack.c.l.b16 %v2827
    %v2891 = vpack.c.b16 %v2876, %v2875
    %v2892 = vpack.c.b16 %v2878, %v2877
    %v2893 = vpack.c.b16 %v2880, %v2879
    %v2894 = vpack.c.b16 %v2882, %v2881
    %v2895 = vpack.c.b16 %v2884, %v2883
    %v2896 = vpack.c.b16 %v2886, %v2885
    %v2897 = vpack.c.b16 %v2888, %v2887
    %v2898 = vpack.c.b16 %v2890, %v2889
    %2907 = vmatprep.subr.bf16.mxu0 0
    %2908 = vmatpush1.bf16.msra.mxu0 %v2891
    %2909 = vmatprep.subr.bf16.mxu0 0
    %2910 = vmatpush1.bf16.msra.mxu0 %v2892
    %2911 = vmatprep.subr.bf16.mxu0 0
    %2912 = vmatpush1.bf16.msra.mxu0 %v2893
    %2913 = vmatprep.subr.bf16.mxu0 0
    %2914 = vmatpush1.bf16.msra.mxu0 %v2894
    %2915 = vmatprep.subr.bf16.mxu0 0
    %2916 = vmatpush1.bf16.msra.mxu0 %v2895
    %2917 = vmatprep.subr.bf16.mxu0 0
    %2918 = vmatpush1.bf16.msra.mxu0 %v2896
    %2919 = vmatprep.subr.bf16.mxu0 0
    %2920 = vmatpush1.bf16.msra.mxu0 %v2897
    %2921 = vmatprep.subr.bf16.mxu0 0
    %2922 = vmatpush1.bf16.msra.mxu0 %v2898
    %2923 = vmatprep.subr.bf16.mxu0 0
    %2924 = vmatpush1.bf16.msra.mxu0 0
    %2925 = vmatprep.subr.bf16.mxu0 0
    %2926 = vmatpush1.bf16.msra.mxu0 0
    %2927 = vmatprep.subr.bf16.mxu0 0
    %2928 = vmatpush1.bf16.msra.mxu0 0
    %2929 = vmatprep.subr.bf16.mxu0 0
    %2930 = vmatpush1.bf16.msra.mxu0 0
    %2931 = vmatprep.subr.bf16.mxu0 0
    %2932 = vmatpush1.bf16.msra.mxu0 0
    %2933 = vmatprep.subr.bf16.mxu0 0
    %2934 = vmatpush1.bf16.msra.mxu0 0
    %2935 = vmatprep.subr.bf16.mxu0 0
    %2936 = vmatpush1.bf16.msra.mxu0 0
    %2937 = vmatprep.subr.bf16.mxu0 0
    %2938 = vmatpush1.bf16.msra.mxu0 0
    %2939 = vmatprep.mubr.bf16.mxu0 0
    %2940 = vmatmul.mubr.bf16.gmra.mrb[0].mxu0 %v2830
    %v2941 = vpop.f32.mrb[0].mxu0
    %v2942 = vadd.f32 0.0, %v2941
    %v2943 = vpop.f32.mrb[0].mxu0
    %v2944 = vpop.f32.mrb[0].mxu0
    %v2945 = vadd.f32 0.0, %v2944
    %v2946 = vpop.f32.mrb[0].mxu0
    %2947 = vmatprep.mubr.bf16.mxu0 0
    %2948 = vmatmul.mubr.bf16.gmra.mrb[0].mxu0 %v2832
    %v2949 = vpop.f32.mrb[0].mxu0
    %v2950 = vadd.f32 0.0, %v2949
    %v2951 = vpop.f32.mrb[0].mxu0
    %v2952 = vpop.f32.mrb[0].mxu0
    %v2953 = vadd.f32 0.0, %v2952
    %v2954 = vpop.f32.mrb[0].mxu0
    %2955 = vmatprep.mubr.bf16.mxu0 0
    %2956 = vmatmul.mubr.bf16.gmra.mrb[0].mxu0 %v2834
    %v2957 = vpop.f32.mrb[0].mxu0
    %v2958 = vadd.f32 0.0, %v2957
    %v2959 = vpop.f32.mrb[0].mxu0
    %v2960 = vpop.f32.mrb[0].mxu0
    %v2961 = vadd.f32 0.0, %v2960
    %v2962 = vpop.f32.mrb[0].mxu0
    %2963 = vmatprep.mubr.bf16.mxu0 0
    %2964 = vmatmul.mubr.bf16.gmra.mrb[0].mxu0 %v2836
    %v2965 = vpop.f32.mrb[0].mxu0
    %v2966 = vadd.f32 0.0, %v2965
    %v2967 = vpop.f32.mrb[0].mxu0
    %v2968 = vpop.f32.mrb[0].mxu0
    %v2969 = vadd.f32 0.0, %v2968
    %v2970 = vpop.f32.mrb[0].mxu0
    %2971 = vmatprep.mubr.bf16.mxu0 0
    %2972 = vmatmul.mubr.bf16.gmra.mrb[0].mxu0 %v2838
    %v2973 = vpop.f32.mrb[0].mxu0
    %v2974 = vadd.f32 0.0, %v2973
    %v2975 = vpop.f32.mrb[0].mxu0
    %v2976 = vpop.f32.mrb[0].mxu0
    %v2977 = vadd.f32 0.0, %v2976
    %v2978 = vpop.f32.mrb[0].mxu0
    %2979 = vmatprep.mubr.bf16.mxu0 0
    %2980 = vmatmul.mubr.bf16.gmra.mrb[0].mxu0 %v2840
    %v2981 = vpop.f32.mrb[0].mxu0
    %v2982 = vadd.f32 0.0, %v2981
    %v2983 = vpop.f32.mrb[0].mxu0
    %v2984 = vpop.f32.mrb[0].mxu0
    %v2985 = vadd.f32 0.0, %v2984
    %v2986 = vpop.f32.mrb[0].mxu0
    %2987 = vmatprep.mubr.bf16.mxu0 0
    %2988 = vmatmul.mubr.bf16.gmra.mrb[0].mxu0 %v2842
    %v2989 = vpop.f32.mrb[0].mxu0
    %v2990 = vadd.f32 0.0, %v2989
    %v2991 = vpop.f32.mrb[0].mxu0
    %v2992 = vpop.f32.mrb[0].mxu0
    %v2993 = vadd.f32 0.0, %v2992
    %v2994 = vpop.f32.mrb[0].mxu0
    %2995 = vmatprep.mubr.bf16.mxu0 0
    %2996 = vmatmul.mubr.bf16.gmra.mrb[0].mxu0 %v2844
    %v2997 = vpop.f32.mrb[0].mxu0
    %v2998 = vadd.f32 0.0, %v2997
    %v2999 = vpop.f32.mrb[0].mxu0
    %v3000 = vpop.f32.mrb[0].mxu0
    %v3001 = vadd.f32 0.0, %v3000
    %v3002 = vpop.f32.mrb[0].mxu0
    %3003 = vmatprep.mubr.bf16.mxu0 0
    %3004 = vmatmul.mubr.bf16.gmra.mrb[0].mxu0 %v2846
    %v3005 = vpop.f32.mrb[0].mxu0
    %v3006 = vadd.f32 0.0, %v3005
    %v3007 = vpop.f32.mrb[0].mxu0
    %v3008 = vpop.f32.mrb[0].mxu0
    %v3009 = vadd.f32 0.0, %v3008
    %v3010 = vpop.f32.mrb[0].mxu0
    %3011 = vmatprep.mubr.bf16.mxu0 0
    %3012 = vmatmul.mubr.bf16.gmra.mrb[0].mxu0 %v2848
    %v3013 = vpop.f32.mrb[0].mxu0
    %v3014 = vadd.f32 0.0, %v3013
    %v3015 = vpop.f32.mrb[0].mxu0
    %v3016 = vpop.f32.mrb[0].mxu0
    %v3017 = vadd.f32 0.0, %v3016
    %v3018 = vpop.f32.mrb[0].mxu0
    %3019 = vdwg.mxu0
    %v3020 = vadd.f32 %v2734, %v2942
    %v3021 = vadd.f32 %v2737, %v2945
    %v3022 = vadd.f32 %v2742, %v2950
    %v3023 = vadd.f32 %v2745, %v2953
    %v3024 = vadd.f32 %v2750, %v2958
    %v3025 = vadd.f32 %v2753, %v2961
    %v3026 = vadd.f32 %v2758, %v2966
    %v3027 = vadd.f32 %v2761, %v2969
    %v3028 = vadd.f32 %v2766, %v2974
    %v3029 = vadd.f32 %v2769, %v2977
    %v3030 = vadd.f32 %v2774, %v2982
    %v3031 = vadd.f32 %v2777, %v2985
    %v3032 = vadd.f32 %v2782, %v2990
    %v3033 = vadd.f32 %v2785, %v2993
    %v3034 = vadd.f32 %v2790, %v2998
    %v3035 = vadd.f32 %v2793, %v3001
    %v3036 = vadd.f32 %v2798, %v3006
    %v3037 = vadd.f32 %v2801, %v3009
    %v3038 = vadd.f32 %v2806, %v3014
    %v3039 = vadd.f32 %v2809, %v3017
    %v3040 = vld [vmem:[%s819] sm:$0xf]
    %v3041 = vld [vmem:[%s819 + $0x4] sm:$0xf]
    %v3042 = vld [vmem:[%s819 + $0x8] sm:$0xf]
    %v3043 = vld [vmem:[%s819 + $0xc] sm:$0xf]
    %v3044 = vld [vmem:[%s819 + $0x10] sm:$0xf]
    %v3045 = vld [vmem:[%s819 + $0x14] sm:$0xf]
    %v3046 = vld [vmem:[%s819 + $0x18] sm:$0xf]
    %v3047 = vld [vmem:[%s819 + $0x1c] sm:$0xf]
    %v3048 = vld [vmem:[%s819 + $0x20] sm:$0xf]
    %v3049 = vld [vmem:[%s819 + $0x24] sm:$0xf]
    %v3050 = vld [vmem:[%s819 + $0x28] sm:$0xf]
    %v3051 = vld [vmem:[%s819 + $0x2c] sm:$0xf]
    %v3052 = vld [vmem:[%s819 + $0x30] sm:$0xf]
    %v3053 = vld [vmem:[%s819 + $0x34] sm:$0xf]
    %v3054 = vld [vmem:[%s819 + $0x38] sm:$0xf]
    %v3055 = vld [vmem:[%s819 + $0x3c] sm:$0xf]
    %v3059 = vunpack.c.l.b16 %v2293
    %v3060 = vunpack.c.l.b16 %v2294
    %v3061 = vunpack.c.l.b16 %v2295
    %v3062 = vpack.c.b16 %v3059, %v2374
    %v3063 = vpack.c.b16 %v3061, %v3060
    %v3082 = vunpack.c.l.b16 %v3040
    %v3083 = vunpack.c.l.b16 %v3041
    %v3084 = vunpack.c.l.b16 %v3042
    %v3085 = vunpack.c.l.b16 %v3043
    %v3086 = vunpack.c.l.b16 %v3044
    %v3087 = vunpack.c.l.b16 %v3045
    %v3088 = vunpack.c.l.b16 %v3046
    %v3089 = vunpack.c.l.b16 %v3047
    %v3090 = vunpack.c.l.b16 %v3048
    %v3091 = vunpack.c.l.b16 %v3049
    %v3092 = vunpack.c.l.b16 %v3050
    %v3093 = vunpack.c.l.b16 %v3051
    %v3094 = vunpack.c.l.b16 %v3052
    %v3095 = vunpack.c.l.b16 %v3053
    %v3096 = vunpack.c.l.b16 %v3054
    %v3097 = vunpack.c.l.b16 %v3055
    %v3098 = vpack.c.b16 %v3083, %v3082
    %v3099 = vpack.c.b16 %v3085, %v3084
    %v3100 = vpack.c.b16 %v3087, %v3086
    %v3101 = vpack.c.b16 %v3089, %v3088
    %v3102 = vpack.c.b16 %v3091, %v3090
    %v3103 = vpack.c.b16 %v3093, %v3092
    %v3104 = vpack.c.b16 %v3095, %v3094
    %v3105 = vpack.c.b16 %v3097, %v3096
    %3114 = vmatprep.subr.bf16.mxu0 0
    %3115 = vmatpush1.bf16.msra.mxu0 %v3098
    %3116 = vmatprep.subr.bf16.mxu0 0
    %3117 = vmatpush1.bf16.msra.mxu0 %v3099
    %3118 = vmatprep.subr.bf16.mxu0 0
    %3119 = vmatpush1.bf16.msra.mxu0 %v3100
    %3120 = vmatprep.subr.bf16.mxu0 0
    %3121 = vmatpush1.bf16.msra.mxu0 %v3101
    %3122 = vmatprep.subr.bf16.mxu0 0
    %3123 = vmatpush1.bf16.msra.mxu0 %v3102
    %3124 = vmatprep.subr.bf16.mxu0 0
    %3125 = vmatpush1.bf16.msra.mxu0 %v3103
    %3126 = vmatprep.subr.bf16.mxu0 0
    %3127 = vmatpush1.bf16.msra.mxu0 %v3104
    %3128 = vmatprep.subr.bf16.mxu0 0
    %3129 = vmatpush1.bf16.msra.mxu0 %v3105
    %3130 = vmatprep.subr.bf16.mxu0 0
    %3131 = vmatpush1.bf16.msra.mxu0 0
    %3132 = vmatprep.subr.bf16.mxu0 0
    %3133 = vmatpush1.bf16.msra.mxu0 0
    %3134 = vmatprep.subr.bf16.mxu0 0
    %3135 = vmatpush1.bf16.msra.mxu0 0
    %3136 = vmatprep.subr.bf16.mxu0 0
    %3137 = vmatpush1.bf16.msra.mxu0 0
    %3138 = vmatprep.subr.bf16.mxu0 0
    %3139 = vmatpush1.bf16.msra.mxu0 0
    %3140 = vmatprep.subr.bf16.mxu0 0
    %3141 = vmatpush1.bf16.msra.mxu0 0
    %3142 = vmatprep.subr.bf16.mxu0 0
    %3143 = vmatpush1.bf16.msra.mxu0 0
    %3144 = vmatprep.subr.bf16.mxu0 0
    %3145 = vmatpush1.bf16.msra.mxu0 0
    %3146 = vmatprep.mubr.bf16.mxu0 0
    %3147 = vmatmul.mubr.bf16.gmra.mrb[0].mxu0 %v2377
    %v3148 = vpop.f32.mrb[0].mxu0
    %v3149 = vadd.f32 0.0, %v3148
    %v3150 = vpop.f32.mrb[0].mxu0
    %v3151 = vpop.f32.mrb[0].mxu0
    %v3152 = vadd.f32 0.0, %v3151
    %v3153 = vpop.f32.mrb[0].mxu0
    %3154 = vmatprep.mubr.bf16.mxu0 0
    %3155 = vmatmul.mubr.bf16.gmra.mrb[0].mxu0 %v2378
    %v3156 = vpop.f32.mrb[0].mxu0
    %v3157 = vadd.f32 0.0, %v3156
    %v3158 = vpop.f32.mrb[0].mxu0
    %v3159 = vpop.f32.mrb[0].mxu0
    %v3160 = vadd.f32 0.0, %v3159
    %v3161 = vpop.f32.mrb[0].mxu0
    %3162 = vmatprep.mubr.bf16.mxu0 0
    %3163 = vmatmul.mubr.bf16.gmra.mrb[0].mxu0 %v2379
    %v3164 = vpop.f32.mrb[0].mxu0
    %v3165 = vadd.f32 0.0, %v3164
    %v3166 = vpop.f32.mrb[0].mxu0
    %v3167 = vpop.f32.mrb[0].mxu0
    %v3168 = vadd.f32 0.0, %v3167
    %v3169 = vpop.f32.mrb[0].mxu0
    %3170 = vmatprep.mubr.bf16.mxu0 0
    %3171 = vmatmul.mubr.bf16.gmra.mrb[0].mxu0 %v2380
    %v3172 = vpop.f32.mrb[0].mxu0
    %v3173 = vadd.f32 0.0, %v3172
    %v3174 = vpop.f32.mrb[0].mxu0
    %v3175 = vpop.f32.mrb[0].mxu0
    %v3176 = vadd.f32 0.0, %v3175
    %v3177 = vpop.f32.mrb[0].mxu0
    %3178 = vmatprep.mubr.bf16.mxu0 0
    %3179 = vmatmul.mubr.bf16.gmra.mrb[0].mxu0 %v2381
    %v3180 = vpop.f32.mrb[0].mxu0
    %v3181 = vadd.f32 0.0, %v3180
    %v3182 = vpop.f32.mrb[0].mxu0
    %v3183 = vpop.f32.mrb[0].mxu0
    %v3184 = vadd.f32 0.0, %v3183
    %v3185 = vpop.f32.mrb[0].mxu0
    %3186 = vmatprep.mubr.bf16.mxu0 0
    %3187 = vmatmul.mubr.bf16.gmra.mrb[0].mxu0 %v2382
    %v3188 = vpop.f32.mrb[0].mxu0
    %v3189 = vadd.f32 0.0, %v3188
    %v3190 = vpop.f32.mrb[0].mxu0
    %v3191 = vpop.f32.mrb[0].mxu0
    %v3192 = vadd.f32 0.0, %v3191
    %v3193 = vpop.f32.mrb[0].mxu0
    %3194 = vmatprep.mubr.bf16.mxu0 0
    %3195 = vmatmul.mubr.bf16.gmra.mrb[0].mxu0 %v2383
    %v3196 = vpop.f32.mrb[0].mxu0
    %v3197 = vadd.f32 0.0, %v3196
    %v3198 = vpop.f32.mrb[0].mxu0
    %v3199 = vpop.f32.mrb[0].mxu0
    %v3200 = vadd.f32 0.0, %v3199
    %v3201 = vpop.f32.mrb[0].mxu0
    %3202 = vmatprep.mubr.bf16.mxu0 0
    %3203 = vmatmul.mubr.bf16.gmra.mrb[0].mxu0 %v2384
    %v3204 = vpop.f32.mrb[0].mxu0
    %v3205 = vadd.f32 0.0, %v3204
    %v3206 = vpop.f32.mrb[0].mxu0
    %v3207 = vpop.f32.mrb[0].mxu0
    %v3208 = vadd.f32 0.0, %v3207
    %v3209 = vpop.f32.mrb[0].mxu0
    %3210 = vmatprep.mubr.bf16.mxu0 0
    %3211 = vmatmul.mubr.bf16.gmra.mrb[0].mxu0 %v3062
    %v3212 = vpop.f32.mrb[0].mxu0
    %v3213 = vadd.f32 0.0, %v3212
    %v3214 = vpop.f32.mrb[0].mxu0
    %v3215 = vpop.f32.mrb[0].mxu0
    %v3216 = vadd.f32 0.0, %v3215
    %v3217 = vpop.f32.mrb[0].mxu0
    %3218 = vmatprep.mubr.bf16.mxu0 0
    %3219 = vmatmul.mubr.bf16.gmra.mrb[0].mxu0 %v3063
    %v3220 = vpop.f32.mrb[0].mxu0
    %v3221 = vadd.f32 0.0, %v3220
    %v3222 = vpop.f32.mrb[0].mxu0
    %v3223 = vpop.f32.mrb[0].mxu0
    %v3224 = vadd.f32 0.0, %v3223
    %v3225 = vpop.f32.mrb[0].mxu0
    %3226 = vdwg.mxu0
    %v3227 = vadd.f32 %v3020, %v3149
    %v3228 = vadd.f32 %v3021, %v3152
    %v3229 = vadd.f32 %v3022, %v3157
    %v3230 = vadd.f32 %v3023, %v3160
    %v3231 = vadd.f32 %v3024, %v3165
    %v3232 = vadd.f32 %v3025, %v3168
    %v3233 = vadd.f32 %v3026, %v3173
    %v3234 = vadd.f32 %v3027, %v3176
    %v3235 = vadd.f32 %v3028, %v3181
    %v3236 = vadd.f32 %v3029, %v3184
    %v3237 = vadd.f32 %v3030, %v3189
    %v3238 = vadd.f32 %v3031, %v3192
    %v3239 = vadd.f32 %v3032, %v3197
    %v3240 = vadd.f32 %v3033, %v3200
    %v3241 = vadd.f32 %v3034, %v3205
    %v3242 = vadd.f32 %v3035, %v3208
    %v3243 = vadd.f32 %v3036, %v3213
    %v3244 = vadd.f32 %v3037, %v3216
    %v3245 = vadd.f32 %v3038, %v3221
    %v3246 = vadd.f32 %v3039, %v3224
    %v3247 = vld [vmem:[%s1027] sm:$0xf]
    %v3248 = vld [vmem:[%s1027 + $0x4] sm:$0xf]
    %v3249 = vld [vmem:[%s1027 + $0x8] sm:$0xf]
    %v3250 = vld [vmem:[%s1027 + $0xc] sm:$0xf]
    %v3251 = vld [vmem:[%s1027 + $0x10] sm:$0xf]
    %v3252 = vld [vmem:[%s1027 + $0x14] sm:$0xf]
    %v3253 = vld [vmem:[%s1027 + $0x18] sm:$0xf]
    %v3254 = vld [vmem:[%s1027 + $0x1c] sm:$0xf]
    %v3255 = vld [vmem:[%s1027 + $0x20] sm:$0xf]
    %v3256 = vld [vmem:[%s1027 + $0x24] sm:$0xf]
    %v3257 = vld [vmem:[%s1027 + $0x28] sm:$0xf]
    %v3258 = vld [vmem:[%s1027 + $0x2c] sm:$0xf]
    %v3259 = vld [vmem:[%s1027 + $0x30] sm:$0xf]
    %v3260 = vld [vmem:[%s1027 + $0x34] sm:$0xf]
    %v3261 = vld [vmem:[%s1027 + $0x38] sm:$0xf]
    %v3262 = vld [vmem:[%s1027 + $0x3c] sm:$0xf]
    %v3264 = vunpack.c.l.b16 %v2296
    %v3265 = vpack.c.b16 %v3264, %v3264
    %v3267 = vshll.u32 %v3062, 16
    %v3269 = vrot.slane %v3267, 1
    %v3270 = vsel %vm162, %v2464, %v3269
    %v3271 = vshrl.u32 %v3062, 16
    %v3273 = vor.u32 %v3271, %v3269
    %v3275 = vshll.u32 %v3063, 16
    %v3277 = vrot.slane %v3275, 1
    %v3278 = vsel %vm162, %v3273, %v3277
    %v3279 = vshrl.u32 %v3063, 16
    %v3281 = vor.u32 %v3279, %v3277
    %v3283 = vshll.u32 %v3265, 16
    %v3285 = vrot.slane %v3283, 1
    %v3286 = vsel %vm162, %v3281, %v3285
    %v3306 = vunpack.c.l.b16 %v3247
    %v3307 = vunpack.c.l.b16 %v3248
    %v3308 = vunpack.c.l.b16 %v3249
    %v3309 = vunpack.c.l.b16 %v3250
    %v3310 = vunpack.c.l.b16 %v3251
    %v3311 = vunpack.c.l.b16 %v3252
    %v3312 = vunpack.c.l.b16 %v3253
    %v3313 = vunpack.c.l.b16 %v3254
    %v3314 = vunpack.c.l.b16 %v3255
    %v3315 = vunpack.c.l.b16 %v3256
    %v3316 = vunpack.c.l.b16 %v3257
    %v3317 = vunpack.c.l.b16 %v3258
    %v3318 = vunpack.c.l.b16 %v3259
    %v3319 = vunpack.c.l.b16 %v3260
    %v3320 = vunpack.c.l.b16 %v3261
    %v3321 = vunpack.c.l.b16 %v3262
    %v3322 = vpack.c.b16 %v3307, %v3306
    %v3323 = vpack.c.b16 %v3309, %v3308
    %v3324 = vpack.c.b16 %v3311, %v3310
    %v3325 = vpack.c.b16 %v3313, %v3312
    %v3326 = vpack.c.b16 %v3315, %v3314
    %v3327 = vpack.c.b16 %v3317, %v3316
    %v3328 = vpack.c.b16 %v3319, %v3318
    %v3329 = vpack.c.b16 %v3321, %v3320
    %3338 = vmatprep.subr.bf16.mxu0 0
    %3339 = vmatpush1.bf16.msra.mxu0 %v3322
    %3340 = vmatprep.subr.bf16.mxu0 0
    %3341 = vmatpush1.bf16.msra.mxu0 %v3323
    %3342 = vmatprep.subr.bf16.mxu0 0
    %3343 = vmatpush1.bf16.msra.mxu0 %v3324
    %3344 = vmatprep.subr.bf16.mxu0 0
    %3345 = vmatpush1.bf16.msra.mxu0 %v3325
    %3346 = vmatprep.subr.bf16.mxu0 0
    %3347 = vmatpush1.bf16.msra.mxu0 %v3326
    %3348 = vmatprep.subr.bf16.mxu0 0
    %3349 = vmatpush1.bf16.msra.mxu0 %v3327
    %3350 = vmatprep.subr.bf16.mxu0 0
    %3351 = vmatpush1.bf16.msra.mxu0 %v3328
    %3352 = vmatprep.subr.bf16.mxu0 0
    %3353 = vmatpush1.bf16.msra.mxu0 %v3329
    %3354 = vmatprep.subr.bf16.mxu0 0
    %3355 = vmatpush1.bf16.msra.mxu0 0
    %3356 = vmatprep.subr.bf16.mxu0 0
    %3357 = vmatpush1.bf16.msra.mxu0 0
    %3358 = vmatprep.subr.bf16.mxu0 0
    %3359 = vmatpush1.bf16.msra.mxu0 0
    %3360 = vmatprep.subr.bf16.mxu0 0
    %3361 = vmatpush1.bf16.msra.mxu0 0
    %3362 = vmatprep.subr.bf16.mxu0 0
    %3363 = vmatpush1.bf16.msra.mxu0 0
    %3364 = vmatprep.subr.bf16.mxu0 0
    %3365 = vmatpush1.bf16.msra.mxu0 0
    %3366 = vmatprep.subr.bf16.mxu0 0
    %3367 = vmatpush1.bf16.msra.mxu0 0
    %3368 = vmatprep.subr.bf16.mxu0 0
    %3369 = vmatpush1.bf16.msra.mxu0 0
    %3370 = vmatprep.mubr.bf16.mxu0 0
    %3371 = vmatmul.mubr.bf16.gmra.mrb[0].mxu0 %v2413
    %v3372 = vpop.f32.mrb[0].mxu0
    %v3373 = vadd.f32 0.0, %v3372
    %v3374 = vpop.f32.mrb[0].mxu0
    %v3375 = vpop.f32.mrb[0].mxu0
    %v3376 = vadd.f32 0.0, %v3375
    %v3377 = vpop.f32.mrb[0].mxu0
    %3378 = vmatprep.mubr.bf16.mxu0 0
    %3379 = vmatmul.mubr.bf16.gmra.mrb[0].mxu0 %v2421
    %v3380 = vpop.f32.mrb[0].mxu0
    %v3381 = vadd.f32 0.0, %v3380
    %v3382 = vpop.f32.mrb[0].mxu0
    %v3383 = vpop.f32.mrb[0].mxu0
    %v3384 = vadd.f32 0.0, %v3383
    %v3385 = vpop.f32.mrb[0].mxu0
    %3386 = vmatprep.mubr.bf16.mxu0 0
    %3387 = vmatmul.mubr.bf16.gmra.mrb[0].mxu0 %v2429
    %v3388 = vpop.f32.mrb[0].mxu0
    %v3389 = vadd.f32 0.0, %v3388
    %v3390 = vpop.f32.mrb[0].mxu0
    %v3391 = vpop.f32.mrb[0].mxu0
    %v3392 = vadd.f32 0.0, %v3391
    %v3393 = vpop.f32.mrb[0].mxu0
    %3394 = vmatprep.mubr.bf16.mxu0 0
    %3395 = vmatmul.mubr.bf16.gmra.mrb[0].mxu0 %v2437
    %v3396 = vpop.f32.mrb[0].mxu0
    %v3397 = vadd.f32 0.0, %v3396
    %v3398 = vpop.f32.mrb[0].mxu0
    %v3399 = vpop.f32.mrb[0].mxu0
    %v3400 = vadd.f32 0.0, %v3399
    %v3401 = vpop.f32.mrb[0].mxu0
    %3402 = vmatprep.mubr.bf16.mxu0 0
    %3403 = vmatmul.mubr.bf16.gmra.mrb[0].mxu0 %v2445
    %v3404 = vpop.f32.mrb[0].mxu0
    %v3405 = vadd.f32 0.0, %v3404
    %v3406 = vpop.f32.mrb[0].mxu0
    %v3407 = vpop.f32.mrb[0].mxu0
    %v3408 = vadd.f32 0.0, %v3407
    %v3409 = vpop.f32.mrb[0].mxu0
    %3410 = vmatprep.mubr.bf16.mxu0 0
    %3411 = vmatmul.mubr.bf16.gmra.mrb[0].mxu0 %v2453
    %v3412 = vpop.f32.mrb[0].mxu0
    %v3413 = vadd.f32 0.0, %v3412
    %v3414 = vpop.f32.mrb[0].mxu0
    %v3415 = vpop.f32.mrb[0].mxu0
    %v3416 = vadd.f32 0.0, %v3415
    %v3417 = vpop.f32.mrb[0].mxu0
    %3418 = vmatprep.mubr.bf16.mxu0 0
    %3419 = vmatmul.mubr.bf16.gmra.mrb[0].mxu0 %v2461
    %v3420 = vpop.f32.mrb[0].mxu0
    %v3421 = vadd.f32 0.0, %v3420
    %v3422 = vpop.f32.mrb[0].mxu0
    %v3423 = vpop.f32.mrb[0].mxu0
    %v3424 = vadd.f32 0.0, %v3423
    %v3425 = vpop.f32.mrb[0].mxu0
    %3426 = vmatprep.mubr.bf16.mxu0 0
    %3427 = vmatmul.mubr.bf16.gmra.mrb[0].mxu0 %v3270
    %v3428 = vpop.f32.mrb[0].mxu0
    %v3429 = vadd.f32 0.0, %v3428
    %v3430 = vpop.f32.mrb[0].mxu0
    %v3431 = vpop.f32.mrb[0].mxu0
    %v3432 = vadd.f32 0.0, %v3431
    %v3433 = vpop.f32.mrb[0].mxu0
    %3434 = vmatprep.mubr.bf16.mxu0 0
    %3435 = vmatmul.mubr.bf16.gmra.mrb[0].mxu0 %v3278
    %v3436 = vpop.f32.mrb[0].mxu0
    %v3437 = vadd.f32 0.0, %v3436
    %v3438 = vpop.f32.mrb[0].mxu0
    %v3439 = vpop.f32.mrb[0].mxu0
    %v3440 = vadd.f32 0.0, %v3439
    %v3441 = vpop.f32.mrb[0].mxu0
    %3442 = vmatprep.mubr.bf16.mxu0 0
    %3443 = vmatmul.mubr.bf16.gmra.mrb[0].mxu0 %v3286
    %v3444 = vpop.f32.mrb[0].mxu0
    %v3445 = vadd.f32 0.0, %v3444
    %v3446 = vpop.f32.mrb[0].mxu0
    %v3447 = vpop.f32.mrb[0].mxu0
    %v3448 = vadd.f32 0.0, %v3447
    %v3449 = vpop.f32.mrb[0].mxu0
    %3450 = vdwg.mxu0
    %v3451 = vadd.f32 %v3227, %v3373
    %v3452 = vadd.f32 %v3228, %v3376
    %v3453 = vadd.f32 %v3229, %v3381
    %v3454 = vadd.f32 %v3230, %v3384
    %v3455 = vadd.f32 %v3231, %v3389
    %v3456 = vadd.f32 %v3232, %v3392
    %v3457 = vadd.f32 %v3233, %v3397
    %v3458 = vadd.f32 %v3234, %v3400
    %v3459 = vadd.f32 %v3235, %v3405
    %v3460 = vadd.f32 %v3236, %v3408
    %v3461 = vadd.f32 %v3237, %v3413
    %v3462 = vadd.f32 %v3238, %v3416
    %v3463 = vadd.f32 %v3239, %v3421
    %v3464 = vadd.f32 %v3240, %v3424
    %v3465 = vadd.f32 %v3241, %v3429
    %v3466 = vadd.f32 %v3242, %v3432
    %v3467 = vadd.f32 %v3243, %v3437
    %v3468 = vadd.f32 %v3244, %v3440
    %v3469 = vadd.f32 %v3245, %v3445
    %v3470 = vadd.f32 %v3246, %v3448
    %v3471 = vld [vmem:[%s1252] sm:$0xf]
    %v3472 = vld [vmem:[%s1252 + $0x4] sm:$0xf]
    %v3473 = vld [vmem:[%s1252 + $0x8] sm:$0xf]
    %v3474 = vld [vmem:[%s1252 + $0xc] sm:$0xf]
    %v3475 = vld [vmem:[%s1252 + $0x10] sm:$0xf]
    %v3476 = vld [vmem:[%s1252 + $0x14] sm:$0xf]
    %v3477 = vld [vmem:[%s1252 + $0x18] sm:$0xf]
    %v3478 = vld [vmem:[%s1252 + $0x1c] sm:$0xf]
    %v3479 = vld [vmem:[%s1252 + $0x20] sm:$0xf]
    %v3480 = vld [vmem:[%s1252 + $0x24] sm:$0xf]
    %v3481 = vld [vmem:[%s1252 + $0x28] sm:$0xf]
    %v3482 = vld [vmem:[%s1252 + $0x2c] sm:$0xf]
    %v3483 = vld [vmem:[%s1252 + $0x30] sm:$0xf]
    %v3484 = vld [vmem:[%s1252 + $0x34] sm:$0xf]
    %v3485 = vld [vmem:[%s1252 + $0x38] sm:$0xf]
    %v3486 = vld [vmem:[%s1252 + $0x3c] sm:$0xf]
    %v3487 = vrot.slane %v3062, 1
    %v3488 = vsel %vm606, %v2845, %v3487
    %v3489 = vrot.slane %v3063, 1
    %v3490 = vsel %vm606, %v3487, %v3489
    %v3491 = vrot.slane %v3265, 1
    %v3492 = vsel %vm606, %v3489, %v3491
    %v3512 = vunpack.c.l.b16 %v3471
    %v3513 = vunpack.c.l.b16 %v3472
    %v3514 = vunpack.c.l.b16 %v3473
    %v3515 = vunpack.c.l.b16 %v3474
    %v3516 = vunpack.c.l.b16 %v3475
    %v3517 = vunpack.c.l.b16 %v3476
    %v3518 = vunpack.c.l.b16 %v3477
    %v3519 = vunpack.c.l.b16 %v3478
    %v3520 = vunpack.c.l.b16 %v3479
    %v3521 = vunpack.c.l.b16 %v3480
    %v3522 = vunpack.c.l.b16 %v3481
    %v3523 = vunpack.c.l.b16 %v3482
    %v3524 = vunpack.c.l.b16 %v3483
    %v3525 = vunpack.c.l.b16 %v3484
    %v3526 = vunpack.c.l.b16 %v3485
    %v3527 = vunpack.c.l.b16 %v3486
    %v3528 = vpack.c.b16 %v3513, %v3512
    %v3529 = vpack.c.b16 %v3515, %v3514
    %v3530 = vpack.c.b16 %v3517, %v3516
    %v3531 = vpack.c.b16 %v3519, %v3518
    %v3532 = vpack.c.b16 %v3521, %v3520
    %v3533 = vpack.c.b16 %v3523, %v3522
    %v3534 = vpack.c.b16 %v3525, %v3524
    %v3535 = vpack.c.b16 %v3527, %v3526
    %3544 = vmatprep.subr.bf16.mxu0 0
    %3545 = vmatpush1.bf16.msra.mxu0 %v3528
    %3546 = vmatprep.subr.bf16.mxu0 0
    %3547 = vmatpush1.bf16.msra.mxu0 %v3529
    %3548 = vmatprep.subr.bf16.mxu0 0
    %3549 = vmatpush1.bf16.msra.mxu0 %v3530
    %3550 = vmatprep.subr.bf16.mxu0 0
    %3551 = vmatpush1.bf16.msra.mxu0 %v3531
    %3552 = vmatprep.subr.bf16.mxu0 0
    %3553 = vmatpush1.bf16.msra.mxu0 %v3532
    %3554 = vmatprep.subr.bf16.mxu0 0
    %3555 = vmatpush1.bf16.msra.mxu0 %v3533
    %3556 = vmatprep.subr.bf16.mxu0 0
    %3557 = vmatpush1.bf16.msra.mxu0 %v3534
    %3558 = vmatprep.subr.bf16.mxu0 0
    %3559 = vmatpush1.bf16.msra.mxu0 %v3535
    %3560 = vmatprep.subr.bf16.mxu0 0
    %3561 = vmatpush1.bf16.msra.mxu0 0
    %3562 = vmatprep.subr.bf16.mxu0 0
    %3563 = vmatpush1.bf16.msra.mxu0 0
    %3564 = vmatprep.subr.bf16.mxu0 0
    %3565 = vmatpush1.bf16.msra.mxu0 0
    %3566 = vmatprep.subr.bf16.mxu0 0
    %3567 = vmatpush1.bf16.msra.mxu0 0
    %3568 = vmatprep.subr.bf16.mxu0 0
    %3569 = vmatpush1.bf16.msra.mxu0 0
    %3570 = vmatprep.subr.bf16.mxu0 0
    %3571 = vmatpush1.bf16.msra.mxu0 0
    %3572 = vmatprep.subr.bf16.mxu0 0
    %3573 = vmatpush1.bf16.msra.mxu0 0
    %3574 = vmatprep.subr.bf16.mxu0 0
    %3575 = vmatpush1.bf16.msra.mxu0 0
    %3576 = vmatprep.mubr.bf16.mxu0 0
    %3577 = vmatmul.mubr.bf16.gmra.mrb[0].mxu0 %v2834
    %v3578 = vpop.f32.mrb[0].mxu0
    %v3579 = vadd.f32 0.0, %v3578
    %v3580 = vpop.f32.mrb[0].mxu0
    %v3581 = vpop.f32.mrb[0].mxu0
    %v3582 = vadd.f32 0.0, %v3581
    %v3583 = vpop.f32.mrb[0].mxu0
    %3584 = vmatprep.mubr.bf16.mxu0 0
    %3585 = vmatmul.mubr.bf16.gmra.mrb[0].mxu0 %v2836
    %v3586 = vpop.f32.mrb[0].mxu0
    %v3587 = vadd.f32 0.0, %v3586
    %v3588 = vpop.f32.mrb[0].mxu0
    %v3589 = vpop.f32.mrb[0].mxu0
    %v3590 = vadd.f32 0.0, %v3589
    %v3591 = vpop.f32.mrb[0].mxu0
    %3592 = vmatprep.mubr.bf16.mxu0 0
    %3593 = vmatmul.mubr.bf16.gmra.mrb[0].mxu0 %v2838
    %v3594 = vpop.f32.mrb[0].mxu0
    %v3595 = vadd.f32 0.0, %v3594
    %v3596 = vpop.f32.mrb[0].mxu0
    %v3597 = vpop.f32.mrb[0].mxu0
    %v3598 = vadd.f32 0.0, %v3597
    %v3599 = vpop.f32.mrb[0].mxu0
    %3600 = vmatprep.mubr.bf16.mxu0 0
    %3601 = vmatmul.mubr.bf16.gmra.mrb[0].mxu0 %v2840
    %v3602 = vpop.f32.mrb[0].mxu0
    %v3603 = vadd.f32 0.0, %v3602
    %v3604 = vpop.f32.mrb[0].mxu0
    %v3605 = vpop.f32.mrb[0].mxu0
    %v3606 = vadd.f32 0.0, %v3605
    %v3607 = vpop.f32.mrb[0].mxu0
    %3608 = vmatprep.mubr.bf16.mxu0 0
    %3609 = vmatmul.mubr.bf16.gmra.mrb[0].mxu0 %v2842
    %v3610 = vpop.f32.mrb[0].mxu0
    %v3611 = vadd.f32 0.0, %v3610
    %v3612 = vpop.f32.mrb[0].mxu0
    %v3613 = vpop.f32.mrb[0].mxu0
    %v3614 = vadd.f32 0.0, %v3613
    %v3615 = vpop.f32.mrb[0].mxu0
    %3616 = vmatprep.mubr.bf16.mxu0 0
    %3617 = vmatmul.mubr.bf16.gmra.mrb[0].mxu0 %v2844
    %v3618 = vpop.f32.mrb[0].mxu0
    %v3619 = vadd.f32 0.0, %v3618
    %v3620 = vpop.f32.mrb[0].mxu0
    %v3621 = vpop.f32.mrb[0].mxu0
    %v3622 = vadd.f32 0.0, %v3621
    %v3623 = vpop.f32.mrb[0].mxu0
    %3624 = vmatprep.mubr.bf16.mxu0 0
    %3625 = vmatmul.mubr.bf16.gmra.mrb[0].mxu0 %v2846
    %v3626 = vpop.f32.mrb[0].mxu0
    %v3627 = vadd.f32 0.0, %v3626
    %v3628 = vpop.f32.mrb[0].mxu0
    %v3629 = vpop.f32.mrb[0].mxu0
    %v3630 = vadd.f32 0.0, %v3629
    %v3631 = vpop.f32.mrb[0].mxu0
    %3632 = vmatprep.mubr.bf16.mxu0 0
    %3633 = vmatmul.mubr.bf16.gmra.mrb[0].mxu0 %v3488
    %v3634 = vpop.f32.mrb[0].mxu0
    %v3635 = vadd.f32 0.0, %v3634
    %v3636 = vpop.f32.mrb[0].mxu0
    %v3637 = vpop.f32.mrb[0].mxu0
    %v3638 = vadd.f32 0.0, %v3637
    %v3639 = vpop.f32.mrb[0].mxu0
    %3640 = vmatprep.mubr.bf16.mxu0 0
    %3641 = vmatmul.mubr.bf16.gmra.mrb[0].mxu0 %v3490
    %v3642 = vpop.f32.mrb[0].mxu0
    %v3643 = vadd.f32 0.0, %v3642
    %v3644 = vpop.f32.mrb[0].mxu0
    %v3645 = vpop.f32.mrb[0].mxu0
    %v3646 = vadd.f32 0.0, %v3645
    %v3647 = vpop.f32.mrb[0].mxu0
    %3648 = vmatprep.mubr.bf16.mxu0 0
    %3649 = vmatmul.mubr.bf16.gmra.mrb[0].mxu0 %v3492
    %v3650 = vpop.f32.mrb[0].mxu0
    %v3651 = vadd.f32 0.0, %v3650
    %v3652 = vpop.f32.mrb[0].mxu0
    %v3653 = vpop.f32.mrb[0].mxu0
    %v3654 = vadd.f32 0.0, %v3653
    %v3655 = vpop.f32.mrb[0].mxu0
    %3656 = vdwg.mxu0
    %v3657 = vadd.f32 %v3451, %v3579
    %v3658 = vadd.f32 %v3452, %v3582
    %v3659 = vadd.f32 %v3453, %v3587
    %v3660 = vadd.f32 %v3454, %v3590
    %v3661 = vadd.f32 %v3455, %v3595
    %v3662 = vadd.f32 %v3456, %v3598
    %v3663 = vadd.f32 %v3457, %v3603
    %v3664 = vadd.f32 %v3458, %v3606
    %v3665 = vadd.f32 %v3459, %v3611
    %v3666 = vadd.f32 %v3460, %v3614
    %v3667 = vadd.f32 %v3461, %v3619
    %v3668 = vadd.f32 %v3462, %v3622
    %v3669 = vadd.f32 %v3463, %v3627
    %v3670 = vadd.f32 %v3464, %v3630
    %v3671 = vadd.f32 %v3465, %v3635
    %v3672 = vadd.f32 %v3466, %v3638
    %v3673 = vadd.f32 %v3467, %v3643
    %v3674 = vadd.f32 %v3468, %v3646
    %v3675 = vadd.f32 %v3469, %v3651
    %v3676 = vadd.f32 %v3470, %v3654
    %v3677 = vld [vmem:[%s1459] sm:$0xf]
    %v3678 = vld [vmem:[%s1459 + $0x4] sm:$0xf]
    %v3679 = vld [vmem:[%s1459 + $0x8] sm:$0xf]
    %v3680 = vld [vmem:[%s1459 + $0xc] sm:$0xf]
    %v3681 = vld [vmem:[%s1459 + $0x10] sm:$0xf]
    %v3682 = vld [vmem:[%s1459 + $0x14] sm:$0xf]
    %v3683 = vld [vmem:[%s1459 + $0x18] sm:$0xf]
    %v3684 = vld [vmem:[%s1459 + $0x1c] sm:$0xf]
    %v3685 = vld [vmem:[%s1459 + $0x20] sm:$0xf]
    %v3686 = vld [vmem:[%s1459 + $0x24] sm:$0xf]
    %v3687 = vld [vmem:[%s1459 + $0x28] sm:$0xf]
    %v3688 = vld [vmem:[%s1459 + $0x2c] sm:$0xf]
    %v3689 = vld [vmem:[%s1459 + $0x30] sm:$0xf]
    %v3690 = vld [vmem:[%s1459 + $0x34] sm:$0xf]
    %v3691 = vld [vmem:[%s1459 + $0x38] sm:$0xf]
    %v3692 = vld [vmem:[%s1459 + $0x3c] sm:$0xf]
    %v3696 = vunpack.c.l.b16 %v2297
    %v3697 = vunpack.c.l.b16 %v2298
    %v3698 = vunpack.c.l.b16 %v2299
    %v3699 = vpack.c.b16 %v3696, %v3264
    %v3700 = vpack.c.b16 %v3698, %v3697
    %v3719 = vunpack.c.l.b16 %v3677
    %v3720 = vunpack.c.l.b16 %v3678
    %v3721 = vunpack.c.l.b16 %v3679
    %v3722 = vunpack.c.l.b16 %v3680
    %v3723 = vunpack.c.l.b16 %v3681
    %v3724 = vunpack.c.l.b16 %v3682
    %v3725 = vunpack.c.l.b16 %v3683
    %v3726 = vunpack.c.l.b16 %v3684
    %v3727 = vunpack.c.l.b16 %v3685
    %v3728 = vunpack.c.l.b16 %v3686
    %v3729 = vunpack.c.l.b16 %v3687
    %v3730 = vunpack.c.l.b16 %v3688
    %v3731 = vunpack.c.l.b16 %v3689
    %v3732 = vunpack.c.l.b16 %v3690
    %v3733 = vunpack.c.l.b16 %v3691
    %v3734 = vunpack.c.l.b16 %v3692
    %v3735 = vpack.c.b16 %v3720, %v3719
    %v3736 = vpack.c.b16 %v3722, %v3721
    %v3737 = vpack.c.b16 %v3724, %v3723
    %v3738 = vpack.c.b16 %v3726, %v3725
    %v3739 = vpack.c.b16 %v3728, %v3727
    %v3740 = vpack.c.b16 %v3730, %v3729
    %v3741 = vpack.c.b16 %v3732, %v3731
    %v3742 = vpack.c.b16 %v3734, %v3733
    %3751 = vmatprep.subr.bf16.mxu0 0
    %3752 = vmatpush1.bf16.msra.mxu0 %v3735
    %3753 = vmatprep.subr.bf16.mxu0 0
    %3754 = vmatpush1.bf16.msra.mxu0 %v3736
    %3755 = vmatprep.subr.bf16.mxu0 0
    %3756 = vmatpush1.bf16.msra.mxu0 %v3737
    %3757 = vmatprep.subr.bf16.mxu0 0
    %3758 = vmatpush1.bf16.msra.mxu0 %v3738
    %3759 = vmatprep.subr.bf16.mxu0 0
    %3760 = vmatpush1.bf16.msra.mxu0 %v3739
    %3761 = vmatprep.subr.bf16.mxu0 0
    %3762 = vmatpush1.bf16.msra.mxu0 %v3740
    %3763 = vmatprep.subr.bf16.mxu0 0
    %3764 = vmatpush1.bf16.msra.mxu0 %v3741
    %3765 = vmatprep.subr.bf16.mxu0 0
    %3766 = vmatpush1.bf16.msra.mxu0 %v3742
    %3767 = vmatprep.subr.bf16.mxu0 0
    %3768 = vmatpush1.bf16.msra.mxu0 0
    %3769 = vmatprep.subr.bf16.mxu0 0
    %3770 = vmatpush1.bf16.msra.mxu0 0
    %3771 = vmatprep.subr.bf16.mxu0 0
    %3772 = vmatpush1.bf16.msra.mxu0 0
    %3773 = vmatprep.subr.bf16.mxu0 0
    %3774 = vmatpush1.bf16.msra.mxu0 0
    %3775 = vmatprep.subr.bf16.mxu0 0
    %3776 = vmatpush1.bf16.msra.mxu0 0
    %3777 = vmatprep.subr.bf16.mxu0 0
    %3778 = vmatpush1.bf16.msra.mxu0 0
    %3779 = vmatprep.subr.bf16.mxu0 0
    %3780 = vmatpush1.bf16.msra.mxu0 0
    %3781 = vmatprep.subr.bf16.mxu0 0
    %3782 = vmatpush1.bf16.msra.mxu0 0
    %3783 = vmatprep.mubr.bf16.mxu0 0
    %3784 = vmatmul.mubr.bf16.gmra.mrb[0].mxu0 %v2379
    %v3785 = vpop.f32.mrb[0].mxu0
    %v3786 = vadd.f32 0.0, %v3785
    %v3787 = vpop.f32.mrb[0].mxu0
    %v3788 = vpop.f32.mrb[0].mxu0
    %v3789 = vadd.f32 0.0, %v3788
    %v3790 = vpop.f32.mrb[0].mxu0
    %3791 = vmatprep.mubr.bf16.mxu0 0
    %3792 = vmatmul.mubr.bf16.gmra.mrb[0].mxu0 %v2380
    %v3793 = vpop.f32.mrb[0].mxu0
    %v3794 = vadd.f32 0.0, %v3793
    %v3795 = vpop.f32.mrb[0].mxu0
    %v3796 = vpop.f32.mrb[0].mxu0
    %v3797 = vadd.f32 0.0, %v3796
    %v3798 = vpop.f32.mrb[0].mxu0
    %3799 = vmatprep.mubr.bf16.mxu0 0
    %3800 = vmatmul.mubr.bf16.gmra.mrb[0].mxu0 %v2381
    %v3801 = vpop.f32.mrb[0].mxu0
    %v3802 = vadd.f32 0.0, %v3801
    %v3803 = vpop.f32.mrb[0].mxu0
    %v3804 = vpop.f32.mrb[0].mxu0
    %v3805 = vadd.f32 0.0, %v3804
    %v3806 = vpop.f32.mrb[0].mxu0
    %3807 = vmatprep.mubr.bf16.mxu0 0
    %3808 = vmatmul.mubr.bf16.gmra.mrb[0].mxu0 %v2382
    %v3809 = vpop.f32.mrb[0].mxu0
    %v3810 = vadd.f32 0.0, %v3809
    %v3811 = vpop.f32.mrb[0].mxu0
    %v3812 = vpop.f32.mrb[0].mxu0
    %v3813 = vadd.f32 0.0, %v3812
    %v3814 = vpop.f32.mrb[0].mxu0
    %3815 = vmatprep.mubr.bf16.mxu0 0
    %3816 = vmatmul.mubr.bf16.gmra.mrb[0].mxu0 %v2383
    %v3817 = vpop.f32.mrb[0].mxu0
    %v3818 = vadd.f32 0.0, %v3817
    %v3819 = vpop.f32.mrb[0].mxu0
    %v3820 = vpop.f32.mrb[0].mxu0
    %v3821 = vadd.f32 0.0, %v3820
    %v3822 = vpop.f32.mrb[0].mxu0
    %3823 = vmatprep.mubr.bf16.mxu0 0
    %3824 = vmatmul.mubr.bf16.gmra.mrb[0].mxu0 %v2384
    %v3825 = vpop.f32.mrb[0].mxu0
    %v3826 = vadd.f32 0.0, %v3825
    %v3827 = vpop.f32.mrb[0].mxu0
    %v3828 = vpop.f32.mrb[0].mxu0
    %v3829 = vadd.f32 0.0, %v3828
    %v3830 = vpop.f32.mrb[0].mxu0
    %3831 = vmatprep.mubr.bf16.mxu0 0
    %3832 = vmatmul.mubr.bf16.gmra.mrb[0].mxu0 %v3062
    %v3833 = vpop.f32.mrb[0].mxu0
    %v3834 = vadd.f32 0.0, %v3833
    %v3835 = vpop.f32.mrb[0].mxu0
    %v3836 = vpop.f32.mrb[0].mxu0
    %v3837 = vadd.f32 0.0, %v3836
    %v3838 = vpop.f32.mrb[0].mxu0
    %3839 = vmatprep.mubr.bf16.mxu0 0
    %3840 = vmatmul.mubr.bf16.gmra.mrb[0].mxu0 %v3063
    %v3841 = vpop.f32.mrb[0].mxu0
    %v3842 = vadd.f32 0.0, %v3841
    %v3843 = vpop.f32.mrb[0].mxu0
    %v3844 = vpop.f32.mrb[0].mxu0
    %v3845 = vadd.f32 0.0, %v3844
    %v3846 = vpop.f32.mrb[0].mxu0
    %3847 = vmatprep.mubr.bf16.mxu0 0
    %3848 = vmatmul.mubr.bf16.gmra.mrb[0].mxu0 %v3699
    %v3849 = vpop.f32.mrb[0].mxu0
    %v3850 = vadd.f32 0.0, %v3849
    %v3851 = vpop.f32.mrb[0].mxu0
    %v3852 = vpop.f32.mrb[0].mxu0
    %v3853 = vadd.f32 0.0, %v3852
    %v3854 = vpop.f32.mrb[0].mxu0
    %3855 = vmatprep.mubr.bf16.mxu0 0
    %3856 = vmatmul.mubr.bf16.gmra.mrb[0].mxu0 %v3700
    %v3857 = vpop.f32.mrb[0].mxu0
    %v3858 = vadd.f32 0.0, %v3857
    %v3859 = vpop.f32.mrb[0].mxu0
    %v3860 = vpop.f32.mrb[0].mxu0
    %v3861 = vadd.f32 0.0, %v3860
    %v3862 = vpop.f32.mrb[0].mxu0
    %3863 = vdwg.mxu0
    %v3864 = vadd.f32 %v3657, %v3786
    %v3865 = vadd.f32 %v3658, %v3789
    %v3866 = vadd.f32 %v3659, %v3794
    %v3867 = vadd.f32 %v3660, %v3797
    %v3868 = vadd.f32 %v3661, %v3802
    %v3869 = vadd.f32 %v3662, %v3805
    %v3870 = vadd.f32 %v3663, %v3810
    %v3871 = vadd.f32 %v3664, %v3813
    %v3872 = vadd.f32 %v3665, %v3818
    %v3873 = vadd.f32 %v3666, %v3821
    %v3874 = vadd.f32 %v3667, %v3826
    %v3875 = vadd.f32 %v3668, %v3829
    %v3876 = vadd.f32 %v3669, %v3834
    %v3877 = vadd.f32 %v3670, %v3837
    %v3878 = vadd.f32 %v3671, %v3842
    %v3879 = vadd.f32 %v3672, %v3845
    %v3880 = vadd.f32 %v3673, %v3850
    %v3881 = vadd.f32 %v3674, %v3853
    %v3882 = vadd.f32 %v3675, %v3858
    %v3883 = vadd.f32 %v3676, %v3861
    %v3884 = vld [vmem:[%s1667] sm:$0xf]
    %v3885 = vld [vmem:[%s1667 + $0x4] sm:$0xf]
    %v3886 = vld [vmem:[%s1667 + $0x8] sm:$0xf]
    %v3887 = vld [vmem:[%s1667 + $0xc] sm:$0xf]
    %v3888 = vld [vmem:[%s1667 + $0x10] sm:$0xf]
    %v3889 = vld [vmem:[%s1667 + $0x14] sm:$0xf]
    %v3890 = vld [vmem:[%s1667 + $0x18] sm:$0xf]
    %v3891 = vld [vmem:[%s1667 + $0x1c] sm:$0xf]
    %v3892 = vld [vmem:[%s1667 + $0x20] sm:$0xf]
    %v3893 = vld [vmem:[%s1667 + $0x24] sm:$0xf]
    %v3894 = vld [vmem:[%s1667 + $0x28] sm:$0xf]
    %v3895 = vld [vmem:[%s1667 + $0x2c] sm:$0xf]
    %v3896 = vld [vmem:[%s1667 + $0x30] sm:$0xf]
    %v3897 = vld [vmem:[%s1667 + $0x34] sm:$0xf]
    %v3898 = vld [vmem:[%s1667 + $0x38] sm:$0xf]
    %v3899 = vld [vmem:[%s1667 + $0x3c] sm:$0xf]
    %v3901 = vunpack.c.l.b16 %v2300
    %v3902 = vpack.c.b16 %v3901, %v3901
    %v3904 = vshll.u32 %v3699, 16
    %v3906 = vrot.slane %v3904, 1
    %v3907 = vsel %vm162, %v3281, %v3906
    %v3908 = vshrl.u32 %v3699, 16
    %v3910 = vor.u32 %v3908, %v3906
    %v3912 = vshll.u32 %v3700, 16
    %v3914 = vrot.slane %v3912, 1
    %v3915 = vsel %vm162, %v3910, %v3914
    %v3916 = vshrl.u32 %v3700, 16
    %v3918 = vor.u32 %v3916, %v3914
    %v3920 = vshll.u32 %v3902, 16
    %v3922 = vrot.slane %v3920, 1
    %v3923 = vsel %vm162, %v3918, %v3922
    %v3943 = vunpack.c.l.b16 %v3884
    %v3944 = vunpack.c.l.b16 %v3885
    %v3945 = vunpack.c.l.b16 %v3886
    %v3946 = vunpack.c.l.b16 %v3887
    %v3947 = vunpack.c.l.b16 %v3888
    %v3948 = vunpack.c.l.b16 %v3889
    %v3949 = vunpack.c.l.b16 %v3890
    %v3950 = vunpack.c.l.b16 %v3891
    %v3951 = vunpack.c.l.b16 %v3892
    %v3952 = vunpack.c.l.b16 %v3893
    %v3953 = vunpack.c.l.b16 %v3894
    %v3954 = vunpack.c.l.b16 %v3895
    %v3955 = vunpack.c.l.b16 %v3896
    %v3956 = vunpack.c.l.b16 %v3897
    %v3957 = vunpack.c.l.b16 %v3898
    %v3958 = vunpack.c.l.b16 %v3899
    %v3959 = vpack.c.b16 %v3944, %v3943
    %v3960 = vpack.c.b16 %v3946, %v3945
    %v3961 = vpack.c.b16 %v3948, %v3947
    %v3962 = vpack.c.b16 %v3950, %v3949
    %v3963 = vpack.c.b16 %v3952, %v3951
    %v3964 = vpack.c.b16 %v3954, %v3953
    %v3965 = vpack.c.b16 %v3956, %v3955
    %v3966 = vpack.c.b16 %v3958, %v3957
    %3975 = vmatprep.subr.bf16.mxu0 0
    %3976 = vmatpush1.bf16.msra.mxu0 %v3959
    %3977 = vmatprep.subr.bf16.mxu0 0
    %3978 = vmatpush1.bf16.msra.mxu0 %v3960
    %3979 = vmatprep.subr.bf16.mxu0 0
    %3980 = vmatpush1.bf16.msra.mxu0 %v3961
    %3981 = vmatprep.subr.bf16.mxu0 0
    %3982 = vmatpush1.bf16.msra.mxu0 %v3962
    %3983 = vmatprep.subr.bf16.mxu0 0
    %3984 = vmatpush1.bf16.msra.mxu0 %v3963
    %3985 = vmatprep.subr.bf16.mxu0 0
    %3986 = vmatpush1.bf16.msra.mxu0 %v3964
    %3987 = vmatprep.subr.bf16.mxu0 0
    %3988 = vmatpush1.bf16.msra.mxu0 %v3965
    %3989 = vmatprep.subr.bf16.mxu0 0
    %3990 = vmatpush1.bf16.msra.mxu0 %v3966
    %3991 = vmatprep.subr.bf16.mxu0 0
    %3992 = vmatpush1.bf16.msra.mxu0 0
    %3993 = vmatprep.subr.bf16.mxu0 0
    %3994 = vmatpush1.bf16.msra.mxu0 0
    %3995 = vmatprep.subr.bf16.mxu0 0
    %3996 = vmatpush1.bf16.msra.mxu0 0
    %3997 = vmatprep.subr.bf16.mxu0 0
    %3998 = vmatpush1.bf16.msra.mxu0 0
    %3999 = vmatprep.subr.bf16.mxu0 0
    %4000 = vmatpush1.bf16.msra.mxu0 0
    %4001 = vmatprep.subr.bf16.mxu0 0
    %4002 = vmatpush1.bf16.msra.mxu0 0
    %4003 = vmatprep.subr.bf16.mxu0 0
    %4004 = vmatpush1.bf16.msra.mxu0 0
    %4005 = vmatprep.subr.bf16.mxu0 0
    %4006 = vmatpush1.bf16.msra.mxu0 0
    %4007 = vmatprep.mubr.bf16.mxu0 0
    %4008 = vmatmul.mubr.bf16.gmra.mrb[0].mxu0 %v2429
    %v4009 = vpop.f32.mrb[0].mxu0
    %v4010 = vadd.f32 0.0, %v4009
    %v4011 = vpop.f32.mrb[0].mxu0
    %v4012 = vpop.f32.mrb[0].mxu0
    %v4013 = vadd.f32 0.0, %v4012
    %v4014 = vpop.f32.mrb[0].mxu0
    %4015 = vmatprep.mubr.bf16.mxu0 0
    %4016 = vmatmul.mubr.bf16.gmra.mrb[0].mxu0 %v2437
    %v4017 = vpop.f32.mrb[0].mxu0
    %v4018 = vadd.f32 0.0, %v4017
    %v4019 = vpop.f32.mrb[0].mxu0
    %v4020 = vpop.f32.mrb[0].mxu0
    %v4021 = vadd.f32 0.0, %v4020
    %v4022 = vpop.f32.mrb[0].mxu0
    %4023 = vmatprep.mubr.bf16.mxu0 0
    %4024 = vmatmul.mubr.bf16.gmra.mrb[0].mxu0 %v2445
    %v4025 = vpop.f32.mrb[0].mxu0
    %v4026 = vadd.f32 0.0, %v4025
    %v4027 = vpop.f32.mrb[0].mxu0
    %v4028 = vpop.f32.mrb[0].mxu0
    %v4029 = vadd.f32 0.0, %v4028
    %v4030 = vpop.f32.mrb[0].mxu0
    %4031 = vmatprep.mubr.bf16.mxu0 0
    %4032 = vmatmul.mubr.bf16.gmra.mrb[0].mxu0 %v2453
    %v4033 = vpop.f32.mrb[0].mxu0
    %v4034 = vadd.f32 0.0, %v4033
    %v4035 = vpop.f32.mrb[0].mxu0
    %v4036 = vpop.f32.mrb[0].mxu0
    %v4037 = vadd.f32 0.0, %v4036
    %v4038 = vpop.f32.mrb[0].mxu0
    %4039 = vmatprep.mubr.bf16.mxu0 0
    %4040 = vmatmul.mubr.bf16.gmra.mrb[0].mxu0 %v2461
    %v4041 = vpop.f32.mrb[0].mxu0
    %v4042 = vadd.f32 0.0, %v4041
    %v4043 = vpop.f32.mrb[0].mxu0
    %v4044 = vpop.f32.mrb[0].mxu0
    %v4045 = vadd.f32 0.0, %v4044
    %v4046 = vpop.f32.mrb[0].mxu0
    %4047 = vmatprep.mubr.bf16.mxu0 0
    %4048 = vmatmul.mubr.bf16.gmra.mrb[0].mxu0 %v3270
    %v4049 = vpop.f32.mrb[0].mxu0
    %v4050 = vadd.f32 0.0, %v4049
    %v4051 = vpop.f32.mrb[0].mxu0
    %v4052 = vpop.f32.mrb[0].mxu0
    %v4053 = vadd.f32 0.0, %v4052
    %v4054 = vpop.f32.mrb[0].mxu0
    %4055 = vmatprep.mubr.bf16.mxu0 0
    %4056 = vmatmul.mubr.bf16.gmra.mrb[0].mxu0 %v3278
    %v4057 = vpop.f32.mrb[0].mxu0
    %v4058 = vadd.f32 0.0, %v4057
    %v4059 = vpop.f32.mrb[0].mxu0
    %v4060 = vpop.f32.mrb[0].mxu0
    %v4061 = vadd.f32 0.0, %v4060
    %v4062 = vpop.f32.mrb[0].mxu0
    %4063 = vmatprep.mubr.bf16.mxu0 0
    %4064 = vmatmul.mubr.bf16.gmra.mrb[0].mxu0 %v3907
    %v4065 = vpop.f32.mrb[0].mxu0
    %v4066 = vadd.f32 0.0, %v4065
    %v4067 = vpop.f32.mrb[0].mxu0
    %v4068 = vpop.f32.mrb[0].mxu0
    %v4069 = vadd.f32 0.0, %v4068
    %v4070 = vpop.f32.mrb[0].mxu0
    %4071 = vmatprep.mubr.bf16.mxu0 0
    %4072 = vmatmul.mubr.bf16.gmra.mrb[0].mxu0 %v3915
    %v4073 = vpop.f32.mrb[0].mxu0
    %v4074 = vadd.f32 0.0, %v4073
    %v4075 = vpop.f32.mrb[0].mxu0
    %v4076 = vpop.f32.mrb[0].mxu0
    %v4077 = vadd.f32 0.0, %v4076
    %v4078 = vpop.f32.mrb[0].mxu0
    %4079 = vmatprep.mubr.bf16.mxu0 0
    %4080 = vmatmul.mubr.bf16.gmra.mrb[0].mxu0 %v3923
    %v4081 = vpop.f32.mrb[0].mxu0
    %v4082 = vadd.f32 0.0, %v4081
    %v4083 = vpop.f32.mrb[0].mxu0
    %v4084 = vpop.f32.mrb[0].mxu0
    %v4085 = vadd.f32 0.0, %v4084
    %v4086 = vpop.f32.mrb[0].mxu0
    %4087 = vdwg.mxu0
    %v4088 = vadd.f32 %v3864, %v4010
    %v4089 = vadd.f32 %v3865, %v4013
    %v4090 = vadd.f32 %v3866, %v4018
    %v4091 = vadd.f32 %v3867, %v4021
    %v4092 = vadd.f32 %v3868, %v4026
    %v4093 = vadd.f32 %v3869, %v4029
    %v4094 = vadd.f32 %v3870, %v4034
    %v4095 = vadd.f32 %v3871, %v4037
    %v4096 = vadd.f32 %v3872, %v4042
    %v4097 = vadd.f32 %v3873, %v4045
    %v4098 = vadd.f32 %v3874, %v4050
    %v4099 = vadd.f32 %v3875, %v4053
    %v4100 = vadd.f32 %v3876, %v4058
    %v4101 = vadd.f32 %v3877, %v4061
    %v4102 = vadd.f32 %v3878, %v4066
    %v4103 = vadd.f32 %v3879, %v4069
    %v4104 = vadd.f32 %v3880, %v4074
    %v4105 = vadd.f32 %v3881, %v4077
    %v4106 = vadd.f32 %v3882, %v4082
    %v4107 = vadd.f32 %v3883, %v4085
    %v4108 = vld [vmem:[%s1892] sm:$0xf]
    %v4109 = vld [vmem:[%s1892 + $0x4] sm:$0xf]
    %v4110 = vld [vmem:[%s1892 + $0x8] sm:$0xf]
    %v4111 = vld [vmem:[%s1892 + $0xc] sm:$0xf]
    %v4112 = vld [vmem:[%s1892 + $0x10] sm:$0xf]
    %v4113 = vld [vmem:[%s1892 + $0x14] sm:$0xf]
    %v4114 = vld [vmem:[%s1892 + $0x18] sm:$0xf]
    %v4115 = vld [vmem:[%s1892 + $0x1c] sm:$0xf]
    %v4116 = vld [vmem:[%s1892 + $0x20] sm:$0xf]
    %v4117 = vld [vmem:[%s1892 + $0x24] sm:$0xf]
    %v4118 = vld [vmem:[%s1892 + $0x28] sm:$0xf]
    %v4119 = vld [vmem:[%s1892 + $0x2c] sm:$0xf]
    %v4120 = vld [vmem:[%s1892 + $0x30] sm:$0xf]
    %v4121 = vld [vmem:[%s1892 + $0x34] sm:$0xf]
    %v4122 = vld [vmem:[%s1892 + $0x38] sm:$0xf]
    %v4123 = vld [vmem:[%s1892 + $0x3c] sm:$0xf]
    %v4124 = vrot.slane %v3699, 1
    %v4125 = vsel %vm606, %v3489, %v4124
    %v4126 = vrot.slane %v3700, 1
    %v4127 = vsel %vm606, %v4124, %v4126
    %v4128 = vrot.slane %v3902, 1
    %v4129 = vsel %vm606, %v4126, %v4128
    %v4149 = vunpack.c.l.b16 %v4108
    %v4150 = vunpack.c.l.b16 %v4109
    %v4151 = vunpack.c.l.b16 %v4110
    %v4152 = vunpack.c.l.b16 %v4111
    %v4153 = vunpack.c.l.b16 %v4112
    %v4154 = vunpack.c.l.b16 %v4113
    %v4155 = vunpack.c.l.b16 %v4114
    %v4156 = vunpack.c.l.b16 %v4115
    %v4157 = vunpack.c.l.b16 %v4116
    %v4158 = vunpack.c.l.b16 %v4117
    %v4159 = vunpack.c.l.b16 %v4118
    %v4160 = vunpack.c.l.b16 %v4119
    %v4161 = vunpack.c.l.b16 %v4120
    %v4162 = vunpack.c.l.b16 %v4121
    %v4163 = vunpack.c.l.b16 %v4122
    %v4164 = vunpack.c.l.b16 %v4123
    %v4165 = vpack.c.b16 %v4150, %v4149
    %v4166 = vpack.c.b16 %v4152, %v4151
    %v4167 = vpack.c.b16 %v4154, %v4153
    %v4168 = vpack.c.b16 %v4156, %v4155
    %v4169 = vpack.c.b16 %v4158, %v4157
    %v4170 = vpack.c.b16 %v4160, %v4159
    %v4171 = vpack.c.b16 %v4162, %v4161
    %v4172 = vpack.c.b16 %v4164, %v4163
    %4181 = vmatprep.subr.bf16.mxu0 0
    %4182 = vmatpush1.bf16.msra.mxu0 %v4165
    %4183 = vmatprep.subr.bf16.mxu0 0
    %4184 = vmatpush1.bf16.msra.mxu0 %v4166
    %4185 = vmatprep.subr.bf16.mxu0 0
    %4186 = vmatpush1.bf16.msra.mxu0 %v4167
    %4187 = vmatprep.subr.bf16.mxu0 0
    %4188 = vmatpush1.bf16.msra.mxu0 %v4168
    %4189 = vmatprep.subr.bf16.mxu0 0
    %4190 = vmatpush1.bf16.msra.mxu0 %v4169
    %4191 = vmatprep.subr.bf16.mxu0 0
    %4192 = vmatpush1.bf16.msra.mxu0 %v4170
    %4193 = vmatprep.subr.bf16.mxu0 0
    %4194 = vmatpush1.bf16.msra.mxu0 %v4171
    %4195 = vmatprep.subr.bf16.mxu0 0
    %4196 = vmatpush1.bf16.msra.mxu0 %v4172
    %4197 = vmatprep.subr.bf16.mxu0 0
    %4198 = vmatpush1.bf16.msra.mxu0 0
    %4199 = vmatprep.subr.bf16.mxu0 0
    %4200 = vmatpush1.bf16.msra.mxu0 0
    %4201 = vmatprep.subr.bf16.mxu0 0
    %4202 = vmatpush1.bf16.msra.mxu0 0
    %4203 = vmatprep.subr.bf16.mxu0 0
    %4204 = vmatpush1.bf16.msra.mxu0 0
    %4205 = vmatprep.subr.bf16.mxu0 0
    %4206 = vmatpush1.bf16.msra.mxu0 0
    %4207 = vmatprep.subr.bf16.mxu0 0
    %4208 = vmatpush1.bf16.msra.mxu0 0
    %4209 = vmatprep.subr.bf16.mxu0 0
    %4210 = vmatpush1.bf16.msra.mxu0 0
    %4211 = vmatprep.subr.bf16.mxu0 0
    %4212 = vmatpush1.bf16.msra.mxu0 0
    %4213 = vmatprep.mubr.bf16.mxu0 0
    %4214 = vmatmul.mubr.bf16.gmra.mrb[0].mxu0 %v2838
    %v4215 = vpop.f32.mrb[0].mxu0
    %v4216 = vadd.f32 0.0, %v4215
    %v4217 = vpop.f32.mrb[0].mxu0
    %v4218 = vpop.f32.mrb[0].mxu0
    %v4219 = vadd.f32 0.0, %v4218
    %v4220 = vpop.f32.mrb[0].mxu0
    %4221 = vmatprep.mubr.bf16.mxu0 0
    %4222 = vmatmul.mubr.bf16.gmra.mrb[0].mxu0 %v2840
    %v4223 = vpop.f32.mrb[0].mxu0
    %v4224 = vadd.f32 0.0, %v4223
    %v4225 = vpop.f32.mrb[0].mxu0
    %v4226 = vpop.f32.mrb[0].mxu0
    %v4227 = vadd.f32 0.0, %v4226
    %v4228 = vpop.f32.mrb[0].mxu0
    %4229 = vmatprep.mubr.bf16.mxu0 0
    %4230 = vmatmul.mubr.bf16.gmra.mrb[0].mxu0 %v2842
    %v4231 = vpop.f32.mrb[0].mxu0
    %v4232 = vadd.f32 0.0, %v4231
    %v4233 = vpop.f32.mrb[0].mxu0
    %v4234 = vpop.f32.mrb[0].mxu0
    %v4235 = vadd.f32 0.0, %v4234
    %v4236 = vpop.f32.mrb[0].mxu0
    %4237 = vmatprep.mubr.bf16.mxu0 0
    %4238 = vmatmul.mubr.bf16.gmra.mrb[0].mxu0 %v2844
    %v4239 = vpop.f32.mrb[0].mxu0
    %v4240 = vadd.f32 0.0, %v4239
    %v4241 = vpop.f32.mrb[0].mxu0
    %v4242 = vpop.f32.mrb[0].mxu0
    %v4243 = vadd.f32 0.0, %v4242
    %v4244 = vpop.f32.mrb[0].mxu0
    %4245 = vmatprep.mubr.bf16.mxu0 0
    %4246 = vmatmul.mubr.bf16.gmra.mrb[0].mxu0 %v2846
    %v4247 = vpop.f32.mrb[0].mxu0
    %v4248 = vadd.f32 0.0, %v4247
    %v4249 = vpop.f32.mrb[0].mxu0
    %v4250 = vpop.f32.mrb[0].mxu0
    %v4251 = vadd.f32 0.0, %v4250
    %v4252 = vpop.f32.mrb[0].mxu0
    %4253 = vmatprep.mubr.bf16.mxu0 0
    %4254 = vmatmul.mubr.bf16.gmra.mrb[0].mxu0 %v3488
    %v4255 = vpop.f32.mrb[0].mxu0
    %v4256 = vadd.f32 0.0, %v4255
    %v4257 = vpop.f32.mrb[0].mxu0
    %v4258 = vpop.f32.mrb[0].mxu0
    %v4259 = vadd.f32 0.0, %v4258
    %v4260 = vpop.f32.mrb[0].mxu0
    %4261 = vmatprep.mubr.bf16.mxu0 0
    %4262 = vmatmul.mubr.bf16.gmra.mrb[0].mxu0 %v3490
    %v4263 = vpop.f32.mrb[0].mxu0
    %v4264 = vadd.f32 0.0, %v4263
    %v4265 = vpop.f32.mrb[0].mxu0
    %v4266 = vpop.f32.mrb[0].mxu0
    %v4267 = vadd.f32 0.0, %v4266
    %v4268 = vpop.f32.mrb[0].mxu0
    %4269 = vmatprep.mubr.bf16.mxu0 0
    %4270 = vmatmul.mubr.bf16.gmra.mrb[0].mxu0 %v4125
    %v4271 = vpop.f32.mrb[0].mxu0
    %v4272 = vadd.f32 0.0, %v4271
    %v4273 = vpop.f32.mrb[0].mxu0
    %v4274 = vpop.f32.mrb[0].mxu0
    %v4275 = vadd.f32 0.0, %v4274
    %v4276 = vpop.f32.mrb[0].mxu0
    %4277 = vmatprep.mubr.bf16.mxu0 0
    %4278 = vmatmul.mubr.bf16.gmra.mrb[0].mxu0 %v4127
    %v4279 = vpop.f32.mrb[0].mxu0
    %v4280 = vadd.f32 0.0, %v4279
    %v4281 = vpop.f32.mrb[0].mxu0
    %v4282 = vpop.f32.mrb[0].mxu0
    %v4283 = vadd.f32 0.0, %v4282
    %v4284 = vpop.f32.mrb[0].mxu0
    %4285 = vmatprep.mubr.bf16.mxu0 0
    %4286 = vmatmul.mubr.bf16.gmra.mrb[0].mxu0 %v4129
    %v4287 = vpop.f32.mrb[0].mxu0
    %v4288 = vadd.f32 0.0, %v4287
    %v4289 = vpop.f32.mrb[0].mxu0
    %v4290 = vpop.f32.mrb[0].mxu0
    %v4291 = vadd.f32 0.0, %v4290
    %v4292 = vpop.f32.mrb[0].mxu0
    %4293 = vdwg.mxu0
    %v4294 = vadd.f32 %v4088, %v4216
    %v4295 = vadd.f32 %v4089, %v4219
    %v4296 = vadd.f32 %v4090, %v4224
    %v4297 = vadd.f32 %v4091, %v4227
    %v4298 = vadd.f32 %v4092, %v4232
    %v4299 = vadd.f32 %v4093, %v4235
    %v4300 = vadd.f32 %v4094, %v4240
    %v4301 = vadd.f32 %v4095, %v4243
    %v4302 = vadd.f32 %v4096, %v4248
    %v4303 = vadd.f32 %v4097, %v4251
    %v4304 = vadd.f32 %v4098, %v4256
    %v4305 = vadd.f32 %v4099, %v4259
    %v4306 = vadd.f32 %v4100, %v4264
    %v4307 = vadd.f32 %v4101, %v4267
    %v4308 = vadd.f32 %v4102, %v4272
    %v4309 = vadd.f32 %v4103, %v4275
    %v4310 = vadd.f32 %v4104, %v4280
    %v4311 = vadd.f32 %v4105, %v4283
    %v4312 = vadd.f32 %v4106, %v4288
    %v4313 = vadd.f32 %v4107, %v4291
    %4314 = vst [vmem:[#allocation7 + $0xa0] sm:$0xff] %v4294
    %4315 = vst [vmem:[#allocation7 + $0xa8] sm:$0xff] %v4295
    %4316 = vst [vmem:[#allocation7 + $0xb0] sm:$0xff] %v4296
    %4317 = vst [vmem:[#allocation7 + $0xb8] sm:$0xff] %v4297
    %4318 = vst [vmem:[#allocation7 + $0xc0] sm:$0xff] %v4298
    %4319 = vst [vmem:[#allocation7 + $0xc8] sm:$0xff] %v4299
    %4320 = vst [vmem:[#allocation7 + $0xd0] sm:$0xff] %v4300
    %4321 = vst [vmem:[#allocation7 + $0xd8] sm:$0xff] %v4301
    %4322 = vst [vmem:[#allocation7 + $0xe0] sm:$0xff] %v4302
    %4323 = vst [vmem:[#allocation7 + $0xe8] sm:$0xff] %v4303
    %4324 = vst [vmem:[#allocation7 + $0xf0] sm:$0xff] %v4304
    %4325 = vst [vmem:[#allocation7 + $0xf8] sm:$0xff] %v4305
    %4326 = vst [vmem:[#allocation7 + $0x100] sm:$0xff] %v4306
    %4327 = vst [vmem:[#allocation7 + $0x108] sm:$0xff] %v4307
    %4328 = vst [vmem:[#allocation7 + $0x110] sm:$0xff] %v4308
    %4329 = vst [vmem:[#allocation7 + $0x118] sm:$0xff] %v4309
    %4330 = vst [vmem:[#allocation7 + $0x120] sm:$0xff] %v4310
    %4331 = vst [vmem:[#allocation7 + $0x128] sm:$0xff] %v4311
    %4332 = vst [vmem:[#allocation7 + $0x130] sm:$0xff] %v4312
    %4333 = vst [vmem:[#allocation7 + $0x138] sm:$0xff] %v4313
    %v4334 = vadd.s32 %v2120, 160
    %v4335 = vadd.s32 %v2121, 160
    %v4336 = vadd.s32 %v2122, 160
    %v4337 = vadd.s32 %v2123, 160
    %v4338 = vadd.s32 %v2124, 160
    %v4339 = vadd.s32 %v2125, 160
    %v4340 = vadd.s32 %v2126, 160
    %v4341 = vadd.s32 %v2127, 160
    %v4342 = vadd.s32 %v2128, 160
    %v4343 = vadd.s32 %v2129, 160
    %v4344 = vadd.s32 %v2130, 160
    %v4345 = vadd.s32 %v2131, 160
    %v4346 = vadd.s32 %v2132, 160
    %v4347 = vadd.s32 %v2133, 160
    %v4348 = vadd.s32 %v2134, 160
    %v4349 = vadd.s32 %v2135, 160
    %v4350 = vadd.s32 %v2136, 160
    %v4351 = vadd.s32 %v2137, 160
    %v4352 = vadd.s32 %v2138, 160
    %v4353 = vadd.s32 %v2139, 160
    %v4354 = vand.u32 %v4334, 31
    %v4355 = vand.u32 %v4335, 31
    %v4356 = vand.u32 %v4336, 31
    %v4357 = vand.u32 %v4337, 31
    %v4358 = vand.u32 %v4338, 31
    %v4359 = vand.u32 %v4339, 31
    %v4360 = vand.u32 %v4340, 31
    %v4361 = vand.u32 %v4341, 31
    %v4362 = vand.u32 %v4342, 31
    %v4363 = vand.u32 %v4343, 31
    %v4364 = vand.u32 %v4344, 31
    %v4365 = vand.u32 %v4345, 31
    %v4366 = vand.u32 %v4346, 31
    %v4367 = vand.u32 %v4347, 31
    %v4368 = vand.u32 %v4348, 31
    %v4369 = vand.u32 %v4349, 31
    %v4370 = vand.u32 %v4350, 31
    %v4371 = vand.u32 %v4351, 31
    %v4372 = vand.u32 %v4352, 31
    %v4373 = vand.u32 %v4353, 31
    %vm4374 = vcmp.lt.s32.totalorder %v4354, 25
    %vm4375 = vcmp.lt.s32.totalorder %v4355, 25
    %vm4376 = vcmp.lt.s32.totalorder %v4356, 25
    %vm4377 = vcmp.lt.s32.totalorder %v4357, 25
    %vm4378 = vcmp.lt.s32.totalorder %v4358, 25
    %vm4379 = vcmp.lt.s32.totalorder %v4359, 25
    %vm4380 = vcmp.lt.s32.totalorder %v4360, 25
    %vm4381 = vcmp.lt.s32.totalorder %v4361, 25
    %vm4382 = vcmp.lt.s32.totalorder %v4362, 25
    %vm4383 = vcmp.lt.s32.totalorder %v4363, 25
    %vm4384 = vcmp.lt.s32.totalorder %v4364, 25
    %vm4385 = vcmp.lt.s32.totalorder %v4365, 25
    %vm4386 = vcmp.lt.s32.totalorder %v4366, 25
    %vm4387 = vcmp.lt.s32.totalorder %v4367, 25
    %vm4388 = vcmp.lt.s32.totalorder %v4368, 25
    %vm4389 = vcmp.lt.s32.totalorder %v4369, 25
    %vm4390 = vcmp.lt.s32.totalorder %v4370, 25
    %vm4391 = vcmp.lt.s32.totalorder %v4371, 25
    %vm4392 = vcmp.lt.s32.totalorder %v4372, 25
    %vm4393 = vcmp.lt.s32.totalorder %v4373, 25
    %v4394 = vsel %vm4374, %v4294, 0.0
    %v4395 = vsel %vm4375, %v4295, 0.0
    %v4396 = vsel %vm4376, %v4296, 0.0
    %v4397 = vsel %vm4377, %v4297, 0.0
    %v4398 = vsel %vm4378, %v4298, 0.0
    %v4399 = vsel %vm4379, %v4299, 0.0
    %v4400 = vsel %vm4380, %v4300, 0.0
    %v4401 = vsel %vm4381, %v4301, 0.0
    %v4402 = vsel %vm4382, %v4302, 0.0
    %v4403 = vsel %vm4383, %v4303, 0.0
    %v4404 = vsel %vm4384, %v4304, 0.0
    %v4405 = vsel %vm4385, %v4305, 0.0
    %v4406 = vsel %vm4386, %v4306, 0.0
    %v4407 = vsel %vm4387, %v4307, 0.0
    %v4408 = vsel %vm4388, %v4308, 0.0
    %v4409 = vsel %vm4389, %v4309, 0.0
    %v4410 = vsel %vm4390, %v4310, 0.0
    %v4411 = vsel %vm4391, %v4311, 0.0
    %v4412 = vsel %vm4392, %v4312, 0.0
    %v4413 = vsel %vm4393, %v4313, 0.0
    %v4414 = vadd.f32 %v4394, %v4395
    %v4415 = vadd.f32 %v4414, %v4396
    %v4416 = vadd.f32 %v4415, %v4397
    %v4417 = vadd.f32 %v4416, %v4398
    %v4418 = vadd.f32 %v4417, %v4399
    %v4419 = vadd.f32 %v4418, %v4400
    %v4420 = vadd.f32 %v4419, %v4401
    %v4421 = vadd.f32 %v4420, %v4402
    %v4422 = vadd.f32 %v4421, %v4403
    %v4423 = vadd.f32 %v4422, %v4404
    %v4424 = vadd.f32 %v4423, %v4405
    %v4425 = vadd.f32 %v4424, %v4406
    %v4426 = vadd.f32 %v4425, %v4407
    %v4427 = vadd.f32 %v4426, %v4408
    %v4428 = vadd.f32 %v4427, %v4409
    %v4429 = vadd.f32 %v4428, %v4410
    %v4430 = vadd.f32 %v4429, %v4411
    %v4431 = vadd.f32 %v4430, %v4412
    %v4432 = vadd.f32 %v4431, %v4413
    %v4433 = vrot.slane %v4432, 4
    %v4434 = vadd.f32 %v4432, %v4433
    %v4435 = vrot.slane %v4434, 2
    %v4436 = vadd.f32 %v4434, %v4435
    %v4437 = vrot.slane %v4436, 1
    %v4438 = vadd.f32 %v4436, %v4437
    %v4439 = vadd.f32 %v2225, %v4438
    %v4440 = vmul.f32 %v4394, %v4394
    %v4441 = vmul.f32 %v4395, %v4395
    %v4442 = vmul.f32 %v4396, %v4396
    %v4443 = vmul.f32 %v4397, %v4397
    %v4444 = vmul.f32 %v4398, %v4398
    %v4445 = vmul.f32 %v4399, %v4399
    %v4446 = vmul.f32 %v4400, %v4400
    %v4447 = vmul.f32 %v4401, %v4401
    %v4448 = vmul.f32 %v4402, %v4402
    %v4449 = vmul.f32 %v4403, %v4403
    %v4450 = vmul.f32 %v4404, %v4404
    %v4451 = vmul.f32 %v4405, %v4405
    %v4452 = vmul.f32 %v4406, %v4406
    %v4453 = vmul.f32 %v4407, %v4407
    %v4454 = vmul.f32 %v4408, %v4408
    %v4455 = vmul.f32 %v4409, %v4409
    %v4456 = vmul.f32 %v4410, %v4410
    %v4457 = vmul.f32 %v4411, %v4411
    %v4458 = vmul.f32 %v4412, %v4412
    %v4459 = vmul.f32 %v4413, %v4413
    %v4460 = vadd.f32 %v4440, %v4441
    %v4461 = vadd.f32 %v4460, %v4442
    %v4462 = vadd.f32 %v4461, %v4443
    %v4463 = vadd.f32 %v4462, %v4444
    %v4464 = vadd.f32 %v4463, %v4445
    %v4465 = vadd.f32 %v4464, %v4446
    %v4466 = vadd.f32 %v4465, %v4447
    %v4467 = vadd.f32 %v4466, %v4448
    %v4468 = vadd.f32 %v4467, %v4449
    %v4469 = vadd.f32 %v4468, %v4450
    %v4470 = vadd.f32 %v4469, %v4451
    %v4471 = vadd.f32 %v4470, %v4452
    %v4472 = vadd.f32 %v4471, %v4453
    %v4473 = vadd.f32 %v4472, %v4454
    %v4474 = vadd.f32 %v4473, %v4455
    %v4475 = vadd.f32 %v4474, %v4456
    %v4476 = vadd.f32 %v4475, %v4457
    %v4477 = vadd.f32 %v4476, %v4458
    %v4478 = vadd.f32 %v4477, %v4459
    %v4479 = vrot.slane %v4478, 4
    %v4480 = vadd.f32 %v4478, %v4479
    %v4481 = vrot.slane %v4480, 2
    %v4482 = vadd.f32 %v4480, %v4481
    %v4483 = vrot.slane %v4482, 1
    %v4484 = vadd.f32 %v4482, %v4483
    %v4485 = vadd.f32 %v2271, %v4484
    %v4486 = vld [vmem:[#allocation2 + $0xa0] sm:$0xf]
    %v4487 = vld [vmem:[#allocation2 + $0xa4] sm:$0xf]
    %v4488 = vld [vmem:[#allocation2 + $0xa8] sm:$0xf]
    %v4489 = vld [vmem:[#allocation2 + $0xac] sm:$0xf]
    %v4490 = vld [vmem:[#allocation2 + $0xb0] sm:$0xf]
    %v4491 = vld [vmem:[#allocation2 + $0xb4] sm:$0xf]
    %v4492 = vld [vmem:[#allocation2 + $0xb8] sm:$0xf]
    %v4493 = vld [vmem:[#allocation2 + $0xbc] sm:$0xf]
    %v4494 = vld [vmem:[#allocation2 + $0xc0] sm:$0xf]
    %v4495 = vld [vmem:[#allocation2 + $0xc4] sm:$0xf]
    %v4496 = vld [vmem:[#allocation2 + $0xc8] sm:$0xf]
    %v4497 = vld [vmem:[#allocation2 + $0xcc] sm:$0xf]
    %v4498 = vld [vmem:[#allocation2 + $0xd0] sm:$0xf]
    %v4499 = vld [vmem:[#allocation2 + $0xd4] sm:$0xf]
    %v4500 = vld [vmem:[#allocation2 + $0xd8] sm:$0xf]
    %v4501 = vld [vmem:[#allocation2 + $0xdc] sm:$0xf]
    %v4502 = vld [vmem:[#allocation2 + $0xe0] sm:$0xf]
    %v4503 = vld [vmem:[#allocation2 + $0xe4] sm:$0xf]
    %v4504 = vld [vmem:[#allocation2 + $0xe8] sm:$0xf]
    %v4505 = vld [vmem:[#allocation2 + $0xec] sm:$0xf]
    %v4506 = vld [vmem:[#allocation2 + $0xf0] sm:$0xf]
    %v4507 = vld [vmem:[#allocation2 + $0xf4] sm:$0xf]
    %v4508 = vld [vmem:[#allocation2 + $0xf8] sm:$0xf]
    %v4509 = vld [vmem:[#allocation2 + $0xfc] sm:$0xf]
    %v4510 = vld [vmem:[#allocation2 + $0x100] sm:$0xf]
    %v4511 = vld [vmem:[#allocation2 + $0x104] sm:$0xf]
    %v4512 = vld [vmem:[#allocation2 + $0x108] sm:$0xf]
    %v4513 = vld [vmem:[#allocation2 + $0x10c] sm:$0xf]
    %v4514 = vld [vmem:[#allocation2 + $0x110] sm:$0x1]
    %v4515 = vld [vmem:[#allocation5] sm:$0xf]
    %v4516 = vld [vmem:[#allocation5 + $0x4] sm:$0xf]
    %v4517 = vld [vmem:[#allocation5 + $0x8] sm:$0xf]
    %v4518 = vld [vmem:[#allocation5 + $0xc] sm:$0xf]
    %v4519 = vld [vmem:[#allocation5 + $0x10] sm:$0xf]
    %v4520 = vld [vmem:[#allocation5 + $0x14] sm:$0xf]
    %v4521 = vld [vmem:[#allocation5 + $0x18] sm:$0xf]
    %v4522 = vld [vmem:[#allocation5 + $0x1c] sm:$0xf]
    %v4523 = vld [vmem:[#allocation5 + $0x20] sm:$0xf]
    %v4524 = vld [vmem:[#allocation5 + $0x24] sm:$0xf]
    %v4525 = vld [vmem:[#allocation5 + $0x28] sm:$0xf]
    %v4526 = vld [vmem:[#allocation5 + $0x2c] sm:$0xf]
    %v4527 = vld [vmem:[#allocation5 + $0x30] sm:$0xf]
    %v4528 = vld [vmem:[#allocation5 + $0x34] sm:$0xf]
    %v4529 = vld [vmem:[#allocation5 + $0x38] sm:$0xf]
    %v4530 = vld [vmem:[#allocation5 + $0x3c] sm:$0xf]
    %v4531 = vld [vmem:[%s92] sm:$0xf]
    %v4532 = vld [vmem:[%s92 + $0x4] sm:$0xf]
    %v4533 = vld [vmem:[%s92 + $0x8] sm:$0xf]
    %v4534 = vld [vmem:[%s92 + $0xc] sm:$0xf]
    %v4535 = vld [vmem:[%s92 + $0x10] sm:$0xf]
    %v4536 = vld [vmem:[%s92 + $0x14] sm:$0xf]
    %v4537 = vld [vmem:[%s92 + $0x18] sm:$0xf]
    %v4538 = vld [vmem:[%s92 + $0x1c] sm:$0xf]
    %v4539 = vld [vmem:[%s92 + $0x20] sm:$0xf]
    %v4540 = vld [vmem:[%s92 + $0x24] sm:$0xf]
    %v4541 = vld [vmem:[%s92 + $0x28] sm:$0xf]
    %v4542 = vld [vmem:[%s92 + $0x2c] sm:$0xf]
    %v4543 = vld [vmem:[%s92 + $0x30] sm:$0xf]
    %v4544 = vld [vmem:[%s92 + $0x34] sm:$0xf]
    %v4545 = vld [vmem:[%s92 + $0x38] sm:$0xf]
    %v4546 = vld [vmem:[%s92 + $0x3c] sm:$0xf]
    %v4568 = vunpack.c.l.b16 %v4486
    %v4569 = vunpack.c.l.b16 %v4487
    %v4570 = vunpack.c.l.b16 %v4488
    %v4571 = vunpack.c.l.b16 %v4489
    %v4572 = vunpack.c.l.b16 %v4490
    %v4573 = vunpack.c.l.b16 %v4491
    %v4574 = vunpack.c.l.b16 %v4492
    %v4575 = vunpack.c.l.b16 %v4493
    %v4576 = vunpack.c.l.b16 %v4494
    %v4577 = vunpack.c.l.b16 %v4495
    %v4578 = vunpack.c.l.b16 %v4496
    %v4579 = vunpack.c.l.b16 %v4497
    %v4580 = vunpack.c.l.b16 %v4498
    %v4581 = vunpack.c.l.b16 %v4499
    %v4582 = vunpack.c.l.b16 %v4500
    %v4583 = vunpack.c.l.b16 %v4501
    %v4584 = vunpack.c.l.b16 %v4502
    %v4585 = vunpack.c.l.b16 %v4503
    %v4586 = vunpack.c.l.b16 %v4504
    %v4587 = vunpack.c.l.b16 %v4505
    %v4588 = vunpack.c.l.b16 %v4506
    %v4589 = vpack.c.b16 %v4569, %v4568
    %v4590 = vpack.c.b16 %v4571, %v4570
    %v4591 = vpack.c.b16 %v4573, %v4572
    %v4592 = vpack.c.b16 %v4575, %v4574
    %v4593 = vpack.c.b16 %v4577, %v4576
    %v4594 = vpack.c.b16 %v4579, %v4578
    %v4595 = vpack.c.b16 %v4581, %v4580
    %v4596 = vpack.c.b16 %v4583, %v4582
    %v4597 = vpack.c.b16 %v4585, %v4584
    %v4598 = vpack.c.b16 %v4587, %v4586
    %v4599 = vpack.c.b16 %v4588, %v4588
    %v4601 = vshrl.u32 %v4589, 16
    %v4603 = vshll.u32 %v4589, 16
    %v4605 = vrot.slane %v4603, 1
    %v4606 = vor.u32 %v4601, %v4605
    %v4608 = vshll.u32 %v4590, 16
    %v4610 = vrot.slane %v4608, 1
    %v4611 = vsel %vm162, %v4606, %v4610
    %v4612 = vshrl.u32 %v4590, 16
    %v4614 = vor.u32 %v4612, %v4610
    %v4616 = vshll.u32 %v4591, 16
    %v4618 = vrot.slane %v4616, 1
    %v4619 = vsel %vm162, %v4614, %v4618
    %v4620 = vshrl.u32 %v4591, 16
    %v4622 = vor.u32 %v4620, %v4618
    %v4624 = vshll.u32 %v4592, 16
    %v4626 = vrot.slane %v4624, 1
    %v4627 = vsel %vm162, %v4622, %v4626
    %v4628 = vshrl.u32 %v4592, 16
    %v4630 = vor.u32 %v4628, %v4626
    %v4632 = vshll.u32 %v4593, 16
    %v4634 = vrot.slane %v4632, 1
    %v4635 = vsel %vm162, %v4630, %v4634
    %v4636 = vshrl.u32 %v4593, 16
    %v4638 = vor.u32 %v4636, %v4634
    %v4640 = vshll.u32 %v4594, 16
    %v4642 = vrot.slane %v4640, 1
    %v4643 = vsel %vm162, %v4638, %v4642
    %v4644 = vshrl.u32 %v4594, 16
    %v4646 = vor.u32 %v4644, %v4642
    %v4648 = vshll.u32 %v4595, 16
    %v4650 = vrot.slane %v4648, 1
    %v4651 = vsel %vm162, %v4646, %v4650
    %v4652 = vshrl.u32 %v4595, 16
    %v4654 = vor.u32 %v4652, %v4650
    %v4656 = vshll.u32 %v4596, 16
    %v4658 = vrot.slane %v4656, 1
    %v4659 = vsel %vm162, %v4654, %v4658
    %v4660 = vshrl.u32 %v4596, 16
    %v4662 = vor.u32 %v4660, %v4658
    %v4664 = vshll.u32 %v4597, 16
    %v4666 = vrot.slane %v4664, 1
    %v4667 = vsel %vm162, %v4662, %v4666
    %v4668 = vshrl.u32 %v4597, 16
    %v4670 = vor.u32 %v4668, %v4666
    %v4672 = vshll.u32 %v4598, 16
    %v4674 = vrot.slane %v4672, 1
    %v4675 = vsel %vm162, %v4670, %v4674
    %v4676 = vshrl.u32 %v4598, 16
    %v4678 = vor.u32 %v4676, %v4674
    %v4680 = vshll.u32 %v4599, 16
    %v4682 = vrot.slane %v4680, 1
    %v4683 = vsel %vm162, %v4678, %v4682
    %v4710 = vunpack.c.l.b16 %v4531
    %v4711 = vunpack.c.l.b16 %v4532
    %v4712 = vunpack.c.l.b16 %v4533
    %v4713 = vunpack.c.l.b16 %v4534
    %v4714 = vunpack.c.l.b16 %v4535
    %v4715 = vunpack.c.l.b16 %v4536
    %v4716 = vunpack.c.l.b16 %v4537
    %v4717 = vunpack.c.l.b16 %v4538
    %v4718 = vunpack.c.l.b16 %v4539
    %v4719 = vunpack.c.l.b16 %v4540
    %v4720 = vunpack.c.l.b16 %v4541
    %v4721 = vunpack.c.l.b16 %v4542
    %v4722 = vunpack.c.l.b16 %v4543
    %v4723 = vunpack.c.l.b16 %v4544
    %v4724 = vunpack.c.l.b16 %v4545
    %v4725 = vunpack.c.l.b16 %v4546
    %v4726 = vpack.c.b16 %v4711, %v4710
    %v4727 = vpack.c.b16 %v4713, %v4712
    %v4728 = vpack.c.b16 %v4715, %v4714
    %v4729 = vpack.c.b16 %v4717, %v4716
    %v4730 = vpack.c.b16 %v4719, %v4718
    %v4731 = vpack.c.b16 %v4721, %v4720
    %v4732 = vpack.c.b16 %v4723, %v4722
    %v4733 = vpack.c.b16 %v4725, %v4724
    %4742 = vmatprep.subr.bf16.mxu0 0
    %4743 = vmatpush1.bf16.msra.mxu0 %v4726
    %4744 = vmatprep.subr.bf16.mxu0 0
    %4745 = vmatpush1.bf16.msra.mxu0 %v4727
    %4746 = vmatprep.subr.bf16.mxu0 0
    %4747 = vmatpush1.bf16.msra.mxu0 %v4728
    %4748 = vmatprep.subr.bf16.mxu0 0
    %4749 = vmatpush1.bf16.msra.mxu0 %v4729
    %4750 = vmatprep.subr.bf16.mxu0 0
    %4751 = vmatpush1.bf16.msra.mxu0 %v4730
    %4752 = vmatprep.subr.bf16.mxu0 0
    %4753 = vmatpush1.bf16.msra.mxu0 %v4731
    %4754 = vmatprep.subr.bf16.mxu0 0
    %4755 = vmatpush1.bf16.msra.mxu0 %v4732
    %4756 = vmatprep.subr.bf16.mxu0 0
    %4757 = vmatpush1.bf16.msra.mxu0 %v4733
    %4758 = vmatprep.subr.bf16.mxu0 0
    %4759 = vmatpush1.bf16.msra.mxu0 0
    %4760 = vmatprep.subr.bf16.mxu0 0
    %4761 = vmatpush1.bf16.msra.mxu0 0
    %4762 = vmatprep.subr.bf16.mxu0 0
    %4763 = vmatpush1.bf16.msra.mxu0 0
    %4764 = vmatprep.subr.bf16.mxu0 0
    %4765 = vmatpush1.bf16.msra.mxu0 0
    %4766 = vmatprep.subr.bf16.mxu0 0
    %4767 = vmatpush1.bf16.msra.mxu0 0
    %4768 = vmatprep.subr.bf16.mxu0 0
    %4769 = vmatpush1.bf16.msra.mxu0 0
    %4770 = vmatprep.subr.bf16.mxu0 0
    %4771 = vmatpush1.bf16.msra.mxu0 0
    %4772 = vmatprep.subr.bf16.mxu0 0
    %4773 = vmatpush1.bf16.msra.mxu0 0
    %4774 = vmatprep.mubr.bf16.mxu0 0
    %4775 = vmatmul.mubr.bf16.gmra.mrb[0].mxu0 %v4611
    %v4776 = vpop.f32.mrb[0].mxu0
    %v4777 = vadd.f32 0.0, %v4776
    %v4778 = vpop.f32.mrb[0].mxu0
    %v4779 = vpop.f32.mrb[0].mxu0
    %v4780 = vadd.f32 0.0, %v4779
    %v4781 = vpop.f32.mrb[0].mxu0
    %4782 = vmatprep.mubr.bf16.mxu0 0
    %4783 = vmatmul.mubr.bf16.gmra.mrb[0].mxu0 %v4619
    %v4784 = vpop.f32.mrb[0].mxu0
    %v4785 = vadd.f32 0.0, %v4784
    %v4786 = vpop.f32.mrb[0].mxu0
    %v4787 = vpop.f32.mrb[0].mxu0
    %v4788 = vadd.f32 0.0, %v4787
    %v4789 = vpop.f32.mrb[0].mxu0
    %4790 = vmatprep.mubr.bf16.mxu0 0
    %4791 = vmatmul.mubr.bf16.gmra.mrb[0].mxu0 %v4627
    %v4792 = vpop.f32.mrb[0].mxu0
    %v4793 = vadd.f32 0.0, %v4792
    %v4794 = vpop.f32.mrb[0].mxu0
    %v4795 = vpop.f32.mrb[0].mxu0
    %v4796 = vadd.f32 0.0, %v4795
    %v4797 = vpop.f32.mrb[0].mxu0
    %4798 = vmatprep.mubr.bf16.mxu0 0
    %4799 = vmatmul.mubr.bf16.gmra.mrb[0].mxu0 %v4635
    %v4800 = vpop.f32.mrb[0].mxu0
    %v4801 = vadd.f32 0.0, %v4800
    %v4802 = vpop.f32.mrb[0].mxu0
    %v4803 = vpop.f32.mrb[0].mxu0
    %v4804 = vadd.f32 0.0, %v4803
    %v4805 = vpop.f32.mrb[0].mxu0
    %4806 = vmatprep.mubr.bf16.mxu0 0
    %4807 = vmatmul.mubr.bf16.gmra.mrb[0].mxu0 %v4643
    %v4808 = vpop.f32.mrb[0].mxu0
    %v4809 = vadd.f32 0.0, %v4808
    %v4810 = vpop.f32.mrb[0].mxu0
    %v4811 = vpop.f32.mrb[0].mxu0
    %v4812 = vadd.f32 0.0, %v4811
    %v4813 = vpop.f32.mrb[0].mxu0
    %4814 = vmatprep.mubr.bf16.mxu0 0
    %4815 = vmatmul.mubr.bf16.gmra.mrb[0].mxu0 %v4651
    %v4816 = vpop.f32.mrb[0].mxu0
    %v4817 = vadd.f32 0.0, %v4816
    %v4818 = vpop.f32.mrb[0].mxu0
    %v4819 = vpop.f32.mrb[0].mxu0
    %v4820 = vadd.f32 0.0, %v4819
    %v4821 = vpop.f32.mrb[0].mxu0
    %4822 = vmatprep.mubr.bf16.mxu0 0
    %4823 = vmatmul.mubr.bf16.gmra.mrb[0].mxu0 %v4659
    %v4824 = vpop.f32.mrb[0].mxu0
    %v4825 = vadd.f32 0.0, %v4824
    %v4826 = vpop.f32.mrb[0].mxu0
    %v4827 = vpop.f32.mrb[0].mxu0
    %v4828 = vadd.f32 0.0, %v4827
    %v4829 = vpop.f32.mrb[0].mxu0
    %4830 = vmatprep.mubr.bf16.mxu0 0
    %4831 = vmatmul.mubr.bf16.gmra.mrb[0].mxu0 %v4667
    %v4832 = vpop.f32.mrb[0].mxu0
    %v4833 = vadd.f32 0.0, %v4832
    %v4834 = vpop.f32.mrb[0].mxu0
    %v4835 = vpop.f32.mrb[0].mxu0
    %v4836 = vadd.f32 0.0, %v4835
    %v4837 = vpop.f32.mrb[0].mxu0
    %4838 = vmatprep.mubr.bf16.mxu0 0
    %4839 = vmatmul.mubr.bf16.gmra.mrb[0].mxu0 %v4675
    %v4840 = vpop.f32.mrb[0].mxu0
    %v4841 = vadd.f32 0.0, %v4840
    %v4842 = vpop.f32.mrb[0].mxu0
    %v4843 = vpop.f32.mrb[0].mxu0
    %v4844 = vadd.f32 0.0, %v4843
    %v4845 = vpop.f32.mrb[0].mxu0
    %4846 = vmatprep.mubr.bf16.mxu0 0
    %4847 = vmatmul.mubr.bf16.gmra.mrb[0].mxu0 %v4683
    %v4848 = vpop.f32.mrb[0].mxu0
    %v4849 = vadd.f32 0.0, %v4848
    %v4850 = vpop.f32.mrb[0].mxu0
    %v4851 = vpop.f32.mrb[0].mxu0
    %v4852 = vadd.f32 0.0, %v4851
    %v4853 = vpop.f32.mrb[0].mxu0
    %4854 = vdwg.mxu0
    %v4881 = vunpack.c.l.b16 %v4515
    %v4882 = vunpack.c.l.b16 %v4516
    %v4883 = vunpack.c.l.b16 %v4517
    %v4884 = vunpack.c.l.b16 %v4518
    %v4885 = vunpack.c.l.b16 %v4519
    %v4886 = vunpack.c.l.b16 %v4520
    %v4887 = vunpack.c.l.b16 %v4521
    %v4888 = vunpack.c.l.b16 %v4522
    %v4889 = vunpack.c.l.b16 %v4523
    %v4890 = vunpack.c.l.b16 %v4524
    %v4891 = vunpack.c.l.b16 %v4525
    %v4892 = vunpack.c.l.b16 %v4526
    %v4893 = vunpack.c.l.b16 %v4527
    %v4894 = vunpack.c.l.b16 %v4528
    %v4895 = vunpack.c.l.b16 %v4529
    %v4896 = vunpack.c.l.b16 %v4530
    %v4897 = vpack.c.b16 %v4882, %v4881
    %v4898 = vpack.c.b16 %v4884, %v4883
    %v4899 = vpack.c.b16 %v4886, %v4885
    %v4900 = vpack.c.b16 %v4888, %v4887
    %v4901 = vpack.c.b16 %v4890, %v4889
    %v4902 = vpack.c.b16 %v4892, %v4891
    %v4903 = vpack.c.b16 %v4894, %v4893
    %v4904 = vpack.c.b16 %v4896, %v4895
    %4913 = vmatprep.subr.bf16.mxu0 0
    %4914 = vmatpush1.bf16.msra.mxu0 %v4897
    %4915 = vmatprep.subr.bf16.mxu0 0
    %4916 = vmatpush1.bf16.msra.mxu0 %v4898
    %4917 = vmatprep.subr.bf16.mxu0 0
    %4918 = vmatpush1.bf16.msra.mxu0 %v4899
    %4919 = vmatprep.subr.bf16.mxu0 0
    %4920 = vmatpush1.bf16.msra.mxu0 %v4900
    %4921 = vmatprep.subr.bf16.mxu0 0
    %4922 = vmatpush1.bf16.msra.mxu0 %v4901
    %4923 = vmatprep.subr.bf16.mxu0 0
    %4924 = vmatpush1.bf16.msra.mxu0 %v4902
    %4925 = vmatprep.subr.bf16.mxu0 0
    %4926 = vmatpush1.bf16.msra.mxu0 %v4903
    %4927 = vmatprep.subr.bf16.mxu0 0
    %4928 = vmatpush1.bf16.msra.mxu0 %v4904
    %4929 = vmatprep.subr.bf16.mxu0 0
    %4930 = vmatpush1.bf16.msra.mxu0 0
    %4931 = vmatprep.subr.bf16.mxu0 0
    %4932 = vmatpush1.bf16.msra.mxu0 0
    %4933 = vmatprep.subr.bf16.mxu0 0
    %4934 = vmatpush1.bf16.msra.mxu0 0
    %4935 = vmatprep.subr.bf16.mxu0 0
    %4936 = vmatpush1.bf16.msra.mxu0 0
    %4937 = vmatprep.subr.bf16.mxu0 0
    %4938 = vmatpush1.bf16.msra.mxu0 0
    %4939 = vmatprep.subr.bf16.mxu0 0
    %4940 = vmatpush1.bf16.msra.mxu0 0
    %4941 = vmatprep.subr.bf16.mxu0 0
    %4942 = vmatpush1.bf16.msra.mxu0 0
    %4943 = vmatprep.subr.bf16.mxu0 0
    %4944 = vmatpush1.bf16.msra.mxu0 0
    %4945 = vmatprep.mubr.bf16.mxu0 0
    %4946 = vmatmul.mubr.bf16.gmra.mrb[0].mxu0 %v4589
    %v4947 = vpop.f32.mrb[0].mxu0
    %v4948 = vadd.f32 %v4777, %v4947
    %v4949 = vpop.f32.mrb[0].mxu0
    %v4950 = vpop.f32.mrb[0].mxu0
    %v4951 = vadd.f32 %v4780, %v4950
    %v4952 = vpop.f32.mrb[0].mxu0
    %4953 = vmatprep.mubr.bf16.mxu0 0
    %4954 = vmatmul.mubr.bf16.gmra.mrb[0].mxu0 %v4590
    %v4955 = vpop.f32.mrb[0].mxu0
    %v4956 = vadd.f32 %v4785, %v4955
    %v4957 = vpop.f32.mrb[0].mxu0
    %v4958 = vpop.f32.mrb[0].mxu0
    %v4959 = vadd.f32 %v4788, %v4958
    %v4960 = vpop.f32.mrb[0].mxu0
    %4961 = vmatprep.mubr.bf16.mxu0 0
    %4962 = vmatmul.mubr.bf16.gmra.mrb[0].mxu0 %v4591
    %v4963 = vpop.f32.mrb[0].mxu0
    %v4964 = vadd.f32 %v4793, %v4963
    %v4965 = vpop.f32.mrb[0].mxu0
    %v4966 = vpop.f32.mrb[0].mxu0
    %v4967 = vadd.f32 %v4796, %v4966
    %v4968 = vpop.f32.mrb[0].mxu0
    %4969 = vmatprep.mubr.bf16.mxu0 0
    %4970 = vmatmul.mubr.bf16.gmra.mrb[0].mxu0 %v4592
    %v4971 = vpop.f32.mrb[0].mxu0
    %v4972 = vadd.f32 %v4801, %v4971
    %v4973 = vpop.f32.mrb[0].mxu0
    %v4974 = vpop.f32.mrb[0].mxu0
    %v4975 = vadd.f32 %v4804, %v4974
    %v4976 = vpop.f32.mrb[0].mxu0
    %4977 = vmatprep.mubr.bf16.mxu0 0
    %4978 = vmatmul.mubr.bf16.gmra.mrb[0].mxu0 %v4593
    %v4979 = vpop.f32.mrb[0].mxu0
    %v4980 = vadd.f32 %v4809, %v4979
    %v4981 = vpop.f32.mrb[0].mxu0
    %v4982 = vpop.f32.mrb[0].mxu0
    %v4983 = vadd.f32 %v4812, %v4982
    %v4984 = vpop.f32.mrb[0].mxu0
    %4985 = vmatprep.mubr.bf16.mxu0 0
    %4986 = vmatmul.mubr.bf16.gmra.mrb[0].mxu0 %v4594
    %v4987 = vpop.f32.mrb[0].mxu0
    %v4988 = vadd.f32 %v4817, %v4987
    %v4989 = vpop.f32.mrb[0].mxu0
    %v4990 = vpop.f32.mrb[0].mxu0
    %v4991 = vadd.f32 %v4820, %v4990
    %v4992 = vpop.f32.mrb[0].mxu0
    %4993 = vmatprep.mubr.bf16.mxu0 0
    %4994 = vmatmul.mubr.bf16.gmra.mrb[0].mxu0 %v4595
    %v4995 = vpop.f32.mrb[0].mxu0
    %v4996 = vadd.f32 %v4825, %v4995
    %v4997 = vpop.f32.mrb[0].mxu0
    %v4998 = vpop.f32.mrb[0].mxu0
    %v4999 = vadd.f32 %v4828, %v4998
    %v5000 = vpop.f32.mrb[0].mxu0
    %5001 = vmatprep.mubr.bf16.mxu0 0
    %5002 = vmatmul.mubr.bf16.gmra.mrb[0].mxu0 %v4596
    %v5003 = vpop.f32.mrb[0].mxu0
    %v5004 = vadd.f32 %v4833, %v5003
    %v5005 = vpop.f32.mrb[0].mxu0
    %v5006 = vpop.f32.mrb[0].mxu0
    %v5007 = vadd.f32 %v4836, %v5006
    %v5008 = vpop.f32.mrb[0].mxu0
    %5009 = vmatprep.mubr.bf16.mxu0 0
    %5010 = vmatmul.mubr.bf16.gmra.mrb[0].mxu0 %v4597
    %v5011 = vpop.f32.mrb[0].mxu0
    %v5012 = vadd.f32 %v4841, %v5011
    %v5013 = vpop.f32.mrb[0].mxu0
    %v5014 = vpop.f32.mrb[0].mxu0
    %v5015 = vadd.f32 %v4844, %v5014
    %v5016 = vpop.f32.mrb[0].mxu0
    %5017 = vmatprep.mubr.bf16.mxu0 0
    %5018 = vmatmul.mubr.bf16.gmra.mrb[0].mxu0 %v4598
    %v5019 = vpop.f32.mrb[0].mxu0
    %v5020 = vadd.f32 %v4849, %v5019
    %v5021 = vpop.f32.mrb[0].mxu0
    %v5022 = vpop.f32.mrb[0].mxu0
    %v5023 = vadd.f32 %v4852, %v5022
    %v5024 = vpop.f32.mrb[0].mxu0
    %5025 = vdwg.mxu0
    %v5026 = vld [vmem:[%s589] sm:$0xf]
    %v5027 = vld [vmem:[%s589 + $0x4] sm:$0xf]
    %v5028 = vld [vmem:[%s589 + $0x8] sm:$0xf]
    %v5029 = vld [vmem:[%s589 + $0xc] sm:$0xf]
    %v5030 = vld [vmem:[%s589 + $0x10] sm:$0xf]
    %v5031 = vld [vmem:[%s589 + $0x14] sm:$0xf]
    %v5032 = vld [vmem:[%s589 + $0x18] sm:$0xf]
    %v5033 = vld [vmem:[%s589 + $0x1c] sm:$0xf]
    %v5034 = vld [vmem:[%s589 + $0x20] sm:$0xf]
    %v5035 = vld [vmem:[%s589 + $0x24] sm:$0xf]
    %v5036 = vld [vmem:[%s589 + $0x28] sm:$0xf]
    %v5037 = vld [vmem:[%s589 + $0x2c] sm:$0xf]
    %v5038 = vld [vmem:[%s589 + $0x30] sm:$0xf]
    %v5039 = vld [vmem:[%s589 + $0x34] sm:$0xf]
    %v5040 = vld [vmem:[%s589 + $0x38] sm:$0xf]
    %v5041 = vld [vmem:[%s589 + $0x3c] sm:$0xf]
    %v5042 = vrot.slane %v4589, 1
    %v5043 = vrot.slane %v4590, 1
    %v5044 = vsel %vm606, %v5042, %v5043
    %v5045 = vrot.slane %v4591, 1
    %v5046 = vsel %vm606, %v5043, %v5045
    %v5047 = vrot.slane %v4592, 1
    %v5048 = vsel %vm606, %v5045, %v5047
    %v5049 = vrot.slane %v4593, 1
    %v5050 = vsel %vm606, %v5047, %v5049
    %v5051 = vrot.slane %v4594, 1
    %v5052 = vsel %vm606, %v5049, %v5051
    %v5053 = vrot.slane %v4595, 1
    %v5054 = vsel %vm606, %v5051, %v5053
    %v5055 = vrot.slane %v4596, 1
    %v5056 = vsel %vm606, %v5053, %v5055
    %v5057 = vrot.slane %v4597, 1
    %v5058 = vsel %vm606, %v5055, %v5057
    %v5059 = vrot.slane %v4598, 1
    %v5060 = vsel %vm606, %v5057, %v5059
    %v5061 = vrot.slane %v4599, 1
    %v5062 = vsel %vm606, %v5059, %v5061
    %v5089 = vunpack.c.l.b16 %v5026
    %v5090 = vunpack.c.l.b16 %v5027
    %v5091 = vunpack.c.l.b16 %v5028
    %v5092 = vunpack.c.l.b16 %v5029
    %v5093 = vunpack.c.l.b16 %v5030
    %v5094 = vunpack.c.l.b16 %v5031
    %v5095 = vunpack.c.l.b16 %v5032
    %v5096 = vunpack.c.l.b16 %v5033
    %v5097 = vunpack.c.l.b16 %v5034
    %v5098 = vunpack.c.l.b16 %v5035
    %v5099 = vunpack.c.l.b16 %v5036
    %v5100 = vunpack.c.l.b16 %v5037
    %v5101 = vunpack.c.l.b16 %v5038
    %v5102 = vunpack.c.l.b16 %v5039
    %v5103 = vunpack.c.l.b16 %v5040
    %v5104 = vunpack.c.l.b16 %v5041
    %v5105 = vpack.c.b16 %v5090, %v5089
    %v5106 = vpack.c.b16 %v5092, %v5091
    %v5107 = vpack.c.b16 %v5094, %v5093
    %v5108 = vpack.c.b16 %v5096, %v5095
    %v5109 = vpack.c.b16 %v5098, %v5097
    %v5110 = vpack.c.b16 %v5100, %v5099
    %v5111 = vpack.c.b16 %v5102, %v5101
    %v5112 = vpack.c.b16 %v5104, %v5103
    %5121 = vmatprep.subr.bf16.mxu0 0
    %5122 = vmatpush1.bf16.msra.mxu0 %v5105
    %5123 = vmatprep.subr.bf16.mxu0 0
    %5124 = vmatpush1.bf16.msra.mxu0 %v5106
    %5125 = vmatprep.subr.bf16.mxu0 0
    %5126 = vmatpush1.bf16.msra.mxu0 %v5107
    %5127 = vmatprep.subr.bf16.mxu0 0
    %5128 = vmatpush1.bf16.msra.mxu0 %v5108
    %5129 = vmatprep.subr.bf16.mxu0 0
    %5130 = vmatpush1.bf16.msra.mxu0 %v5109
    %5131 = vmatprep.subr.bf16.mxu0 0
    %5132 = vmatpush1.bf16.msra.mxu0 %v5110
    %5133 = vmatprep.subr.bf16.mxu0 0
    %5134 = vmatpush1.bf16.msra.mxu0 %v5111
    %5135 = vmatprep.subr.bf16.mxu0 0
    %5136 = vmatpush1.bf16.msra.mxu0 %v5112
    %5137 = vmatprep.subr.bf16.mxu0 0
    %5138 = vmatpush1.bf16.msra.mxu0 0
    %5139 = vmatprep.subr.bf16.mxu0 0
    %5140 = vmatpush1.bf16.msra.mxu0 0
    %5141 = vmatprep.subr.bf16.mxu0 0
    %5142 = vmatpush1.bf16.msra.mxu0 0
    %5143 = vmatprep.subr.bf16.mxu0 0
    %5144 = vmatpush1.bf16.msra.mxu0 0
    %5145 = vmatprep.subr.bf16.mxu0 0
    %5146 = vmatpush1.bf16.msra.mxu0 0
    %5147 = vmatprep.subr.bf16.mxu0 0
    %5148 = vmatpush1.bf16.msra.mxu0 0
    %5149 = vmatprep.subr.bf16.mxu0 0
    %5150 = vmatpush1.bf16.msra.mxu0 0
    %5151 = vmatprep.subr.bf16.mxu0 0
    %5152 = vmatpush1.bf16.msra.mxu0 0
    %5153 = vmatprep.mubr.bf16.mxu0 0
    %5154 = vmatmul.mubr.bf16.gmra.mrb[0].mxu0 %v5044
    %v5155 = vpop.f32.mrb[0].mxu0
    %v5156 = vadd.f32 0.0, %v5155
    %v5157 = vpop.f32.mrb[0].mxu0
    %v5158 = vpop.f32.mrb[0].mxu0
    %v5159 = vadd.f32 0.0, %v5158
    %v5160 = vpop.f32.mrb[0].mxu0
    %5161 = vmatprep.mubr.bf16.mxu0 0
    %5162 = vmatmul.mubr.bf16.gmra.mrb[0].mxu0 %v5046
    %v5163 = vpop.f32.mrb[0].mxu0
    %v5164 = vadd.f32 0.0, %v5163
    %v5165 = vpop.f32.mrb[0].mxu0
    %v5166 = vpop.f32.mrb[0].mxu0
    %v5167 = vadd.f32 0.0, %v5166
    %v5168 = vpop.f32.mrb[0].mxu0
    %5169 = vmatprep.mubr.bf16.mxu0 0
    %5170 = vmatmul.mubr.bf16.gmra.mrb[0].mxu0 %v5048
    %v5171 = vpop.f32.mrb[0].mxu0
    %v5172 = vadd.f32 0.0, %v5171
    %v5173 = vpop.f32.mrb[0].mxu0
    %v5174 = vpop.f32.mrb[0].mxu0
    %v5175 = vadd.f32 0.0, %v5174
    %v5176 = vpop.f32.mrb[0].mxu0
    %5177 = vmatprep.mubr.bf16.mxu0 0
    %5178 = vmatmul.mubr.bf16.gmra.mrb[0].mxu0 %v5050
    %v5179 = vpop.f32.mrb[0].mxu0
    %v5180 = vadd.f32 0.0, %v5179
    %v5181 = vpop.f32.mrb[0].mxu0
    %v5182 = vpop.f32.mrb[0].mxu0
    %v5183 = vadd.f32 0.0, %v5182
    %v5184 = vpop.f32.mrb[0].mxu0
    %5185 = vmatprep.mubr.bf16.mxu0 0
    %5186 = vmatmul.mubr.bf16.gmra.mrb[0].mxu0 %v5052
    %v5187 = vpop.f32.mrb[0].mxu0
    %v5188 = vadd.f32 0.0, %v5187
    %v5189 = vpop.f32.mrb[0].mxu0
    %v5190 = vpop.f32.mrb[0].mxu0
    %v5191 = vadd.f32 0.0, %v5190
    %v5192 = vpop.f32.mrb[0].mxu0
    %5193 = vmatprep.mubr.bf16.mxu0 0
    %5194 = vmatmul.mubr.bf16.gmra.mrb[0].mxu0 %v5054
    %v5195 = vpop.f32.mrb[0].mxu0
    %v5196 = vadd.f32 0.0, %v5195
    %v5197 = vpop.f32.mrb[0].mxu0
    %v5198 = vpop.f32.mrb[0].mxu0
    %v5199 = vadd.f32 0.0, %v5198
    %v5200 = vpop.f32.mrb[0].mxu0
    %5201 = vmatprep.mubr.bf16.mxu0 0
    %5202 = vmatmul.mubr.bf16.gmra.mrb[0].mxu0 %v5056
    %v5203 = vpop.f32.mrb[0].mxu0
    %v5204 = vadd.f32 0.0, %v5203
    %v5205 = vpop.f32.mrb[0].mxu0
    %v5206 = vpop.f32.mrb[0].mxu0
    %v5207 = vadd.f32 0.0, %v5206
    %v5208 = vpop.f32.mrb[0].mxu0
    %5209 = vmatprep.mubr.bf16.mxu0 0
    %5210 = vmatmul.mubr.bf16.gmra.mrb[0].mxu0 %v5058
    %v5211 = vpop.f32.mrb[0].mxu0
    %v5212 = vadd.f32 0.0, %v5211
    %v5213 = vpop.f32.mrb[0].mxu0
    %v5214 = vpop.f32.mrb[0].mxu0
    %v5215 = vadd.f32 0.0, %v5214
    %v5216 = vpop.f32.mrb[0].mxu0
    %5217 = vmatprep.mubr.bf16.mxu0 0
    %5218 = vmatmul.mubr.bf16.gmra.mrb[0].mxu0 %v5060
    %v5219 = vpop.f32.mrb[0].mxu0
    %v5220 = vadd.f32 0.0, %v5219
    %v5221 = vpop.f32.mrb[0].mxu0
    %v5222 = vpop.f32.mrb[0].mxu0
    %v5223 = vadd.f32 0.0, %v5222
    %v5224 = vpop.f32.mrb[0].mxu0
    %5225 = vmatprep.mubr.bf16.mxu0 0
    %5226 = vmatmul.mubr.bf16.gmra.mrb[0].mxu0 %v5062
    %v5227 = vpop.f32.mrb[0].mxu0
    %v5228 = vadd.f32 0.0, %v5227
    %v5229 = vpop.f32.mrb[0].mxu0
    %v5230 = vpop.f32.mrb[0].mxu0
    %v5231 = vadd.f32 0.0, %v5230
    %v5232 = vpop.f32.mrb[0].mxu0
    %5233 = vdwg.mxu0
    %v5234 = vadd.f32 %v4948, %v5156
    %v5235 = vadd.f32 %v4951, %v5159
    %v5236 = vadd.f32 %v4956, %v5164
    %v5237 = vadd.f32 %v4959, %v5167
    %v5238 = vadd.f32 %v4964, %v5172
    %v5239 = vadd.f32 %v4967, %v5175
    %v5240 = vadd.f32 %v4972, %v5180
    %v5241 = vadd.f32 %v4975, %v5183
    %v5242 = vadd.f32 %v4980, %v5188
    %v5243 = vadd.f32 %v4983, %v5191
    %v5244 = vadd.f32 %v4988, %v5196
    %v5245 = vadd.f32 %v4991, %v5199
    %v5246 = vadd.f32 %v4996, %v5204
    %v5247 = vadd.f32 %v4999, %v5207
    %v5248 = vadd.f32 %v5004, %v5212
    %v5249 = vadd.f32 %v5007, %v5215
    %v5250 = vadd.f32 %v5012, %v5220
    %v5251 = vadd.f32 %v5015, %v5223
    %v5252 = vadd.f32 %v5020, %v5228
    %v5253 = vadd.f32 %v5023, %v5231
    %v5254 = vld [vmem:[%s819] sm:$0xf]
    %v5255 = vld [vmem:[%s819 + $0x4] sm:$0xf]
    %v5256 = vld [vmem:[%s819 + $0x8] sm:$0xf]
    %v5257 = vld [vmem:[%s819 + $0xc] sm:$0xf]
    %v5258 = vld [vmem:[%s819 + $0x10] sm:$0xf]
    %v5259 = vld [vmem:[%s819 + $0x14] sm:$0xf]
    %v5260 = vld [vmem:[%s819 + $0x18] sm:$0xf]
    %v5261 = vld [vmem:[%s819 + $0x1c] sm:$0xf]
    %v5262 = vld [vmem:[%s819 + $0x20] sm:$0xf]
    %v5263 = vld [vmem:[%s819 + $0x24] sm:$0xf]
    %v5264 = vld [vmem:[%s819 + $0x28] sm:$0xf]
    %v5265 = vld [vmem:[%s819 + $0x2c] sm:$0xf]
    %v5266 = vld [vmem:[%s819 + $0x30] sm:$0xf]
    %v5267 = vld [vmem:[%s819 + $0x34] sm:$0xf]
    %v5268 = vld [vmem:[%s819 + $0x38] sm:$0xf]
    %v5269 = vld [vmem:[%s819 + $0x3c] sm:$0xf]
    %v5273 = vunpack.c.l.b16 %v4507
    %v5274 = vunpack.c.l.b16 %v4508
    %v5275 = vunpack.c.l.b16 %v4509
    %v5276 = vpack.c.b16 %v5273, %v4588
    %v5277 = vpack.c.b16 %v5275, %v5274
    %v5296 = vunpack.c.l.b16 %v5254
    %v5297 = vunpack.c.l.b16 %v5255
    %v5298 = vunpack.c.l.b16 %v5256
    %v5299 = vunpack.c.l.b16 %v5257
    %v5300 = vunpack.c.l.b16 %v5258
    %v5301 = vunpack.c.l.b16 %v5259
    %v5302 = vunpack.c.l.b16 %v5260
    %v5303 = vunpack.c.l.b16 %v5261
    %v5304 = vunpack.c.l.b16 %v5262
    %v5305 = vunpack.c.l.b16 %v5263
    %v5306 = vunpack.c.l.b16 %v5264
    %v5307 = vunpack.c.l.b16 %v5265
    %v5308 = vunpack.c.l.b16 %v5266
    %v5309 = vunpack.c.l.b16 %v5267
    %v5310 = vunpack.c.l.b16 %v5268
    %v5311 = vunpack.c.l.b16 %v5269
    %v5312 = vpack.c.b16 %v5297, %v5296
    %v5313 = vpack.c.b16 %v5299, %v5298
    %v5314 = vpack.c.b16 %v5301, %v5300
    %v5315 = vpack.c.b16 %v5303, %v5302
    %v5316 = vpack.c.b16 %v5305, %v5304
    %v5317 = vpack.c.b16 %v5307, %v5306
    %v5318 = vpack.c.b16 %v5309, %v5308
    %v5319 = vpack.c.b16 %v5311, %v5310
    %5328 = vmatprep.subr.bf16.mxu0 0
    %5329 = vmatpush1.bf16.msra.mxu0 %v5312
    %5330 = vmatprep.subr.bf16.mxu0 0
    %5331 = vmatpush1.bf16.msra.mxu0 %v5313
    %5332 = vmatprep.subr.bf16.mxu0 0
    %5333 = vmatpush1.bf16.msra.mxu0 %v5314
    %5334 = vmatprep.subr.bf16.mxu0 0
    %5335 = vmatpush1.bf16.msra.mxu0 %v5315
    %5336 = vmatprep.subr.bf16.mxu0 0
    %5337 = vmatpush1.bf16.msra.mxu0 %v5316
    %5338 = vmatprep.subr.bf16.mxu0 0
    %5339 = vmatpush1.bf16.msra.mxu0 %v5317
    %5340 = vmatprep.subr.bf16.mxu0 0
    %5341 = vmatpush1.bf16.msra.mxu0 %v5318
    %5342 = vmatprep.subr.bf16.mxu0 0
    %5343 = vmatpush1.bf16.msra.mxu0 %v5319
    %5344 = vmatprep.subr.bf16.mxu0 0
    %5345 = vmatpush1.bf16.msra.mxu0 0
    %5346 = vmatprep.subr.bf16.mxu0 0
    %5347 = vmatpush1.bf16.msra.mxu0 0
    %5348 = vmatprep.subr.bf16.mxu0 0
    %5349 = vmatpush1.bf16.msra.mxu0 0
    %5350 = vmatprep.subr.bf16.mxu0 0
    %5351 = vmatpush1.bf16.msra.mxu0 0
    %5352 = vmatprep.subr.bf16.mxu0 0
    %5353 = vmatpush1.bf16.msra.mxu0 0
    %5354 = vmatprep.subr.bf16.mxu0 0
    %5355 = vmatpush1.bf16.msra.mxu0 0
    %5356 = vmatprep.subr.bf16.mxu0 0
    %5357 = vmatpush1.bf16.msra.mxu0 0
    %5358 = vmatprep.subr.bf16.mxu0 0
    %5359 = vmatpush1.bf16.msra.mxu0 0
    %5360 = vmatprep.mubr.bf16.mxu0 0
    %5361 = vmatmul.mubr.bf16.gmra.mrb[0].mxu0 %v4591
    %v5362 = vpop.f32.mrb[0].mxu0
    %v5363 = vadd.f32 0.0, %v5362
    %v5364 = vpop.f32.mrb[0].mxu0
    %v5365 = vpop.f32.mrb[0].mxu0
    %v5366 = vadd.f32 0.0, %v5365
    %v5367 = vpop.f32.mrb[0].mxu0
    %5368 = vmatprep.mubr.bf16.mxu0 0
    %5369 = vmatmul.mubr.bf16.gmra.mrb[0].mxu0 %v4592
    %v5370 = vpop.f32.mrb[0].mxu0
    %v5371 = vadd.f32 0.0, %v5370
    %v5372 = vpop.f32.mrb[0].mxu0
    %v5373 = vpop.f32.mrb[0].mxu0
    %v5374 = vadd.f32 0.0, %v5373
    %v5375 = vpop.f32.mrb[0].mxu0
    %5376 = vmatprep.mubr.bf16.mxu0 0
    %5377 = vmatmul.mubr.bf16.gmra.mrb[0].mxu0 %v4593
    %v5378 = vpop.f32.mrb[0].mxu0
    %v5379 = vadd.f32 0.0, %v5378
    %v5380 = vpop.f32.mrb[0].mxu0
    %v5381 = vpop.f32.mrb[0].mxu0
    %v5382 = vadd.f32 0.0, %v5381
    %v5383 = vpop.f32.mrb[0].mxu0
    %5384 = vmatprep.mubr.bf16.mxu0 0
    %5385 = vmatmul.mubr.bf16.gmra.mrb[0].mxu0 %v4594
    %v5386 = vpop.f32.mrb[0].mxu0
    %v5387 = vadd.f32 0.0, %v5386
    %v5388 = vpop.f32.mrb[0].mxu0
    %v5389 = vpop.f32.mrb[0].mxu0
    %v5390 = vadd.f32 0.0, %v5389
    %v5391 = vpop.f32.mrb[0].mxu0
    %5392 = vmatprep.mubr.bf16.mxu0 0
    %5393 = vmatmul.mubr.bf16.gmra.mrb[0].mxu0 %v4595
    %v5394 = vpop.f32.mrb[0].mxu0
    %v5395 = vadd.f32 0.0, %v5394
    %v5396 = vpop.f32.mrb[0].mxu0
    %v5397 = vpop.f32.mrb[0].mxu0
    %v5398 = vadd.f32 0.0, %v5397
    %v5399 = vpop.f32.mrb[0].mxu0
    %5400 = vmatprep.mubr.bf16.mxu0 0
    %5401 = vmatmul.mubr.bf16.gmra.mrb[0].mxu0 %v4596
    %v5402 = vpop.f32.mrb[0].mxu0
    %v5403 = vadd.f32 0.0, %v5402
    %v5404 = vpop.f32.mrb[0].mxu0
    %v5405 = vpop.f32.mrb[0].mxu0
    %v5406 = vadd.f32 0.0, %v5405
    %v5407 = vpop.f32.mrb[0].mxu0
    %5408 = vmatprep.mubr.bf16.mxu0 0
    %5409 = vmatmul.mubr.bf16.gmra.mrb[0].mxu0 %v4597
    %v5410 = vpop.f32.mrb[0].mxu0
    %v5411 = vadd.f32 0.0, %v5410
    %v5412 = vpop.f32.mrb[0].mxu0
    %v5413 = vpop.f32.mrb[0].mxu0
    %v5414 = vadd.f32 0.0, %v5413
    %v5415 = vpop.f32.mrb[0].mxu0
    %5416 = vmatprep.mubr.bf16.mxu0 0
    %5417 = vmatmul.mubr.bf16.gmra.mrb[0].mxu0 %v4598
    %v5418 = vpop.f32.mrb[0].mxu0
    %v5419 = vadd.f32 0.0, %v5418
    %v5420 = vpop.f32.mrb[0].mxu0
    %v5421 = vpop.f32.mrb[0].mxu0
    %v5422 = vadd.f32 0.0, %v5421
    %v5423 = vpop.f32.mrb[0].mxu0
    %5424 = vmatprep.mubr.bf16.mxu0 0
    %5425 = vmatmul.mubr.bf16.gmra.mrb[0].mxu0 %v5276
    %v5426 = vpop.f32.mrb[0].mxu0
    %v5427 = vadd.f32 0.0, %v5426
    %v5428 = vpop.f32.mrb[0].mxu0
    %v5429 = vpop.f32.mrb[0].mxu0
    %v5430 = vadd.f32 0.0, %v5429
    %v5431 = vpop.f32.mrb[0].mxu0
    %5432 = vmatprep.mubr.bf16.mxu0 0
    %5433 = vmatmul.mubr.bf16.gmra.mrb[0].mxu0 %v5277
    %v5434 = vpop.f32.mrb[0].mxu0
    %v5435 = vadd.f32 0.0, %v5434
    %v5436 = vpop.f32.mrb[0].mxu0
    %v5437 = vpop.f32.mrb[0].mxu0
    %v5438 = vadd.f32 0.0, %v5437
    %v5439 = vpop.f32.mrb[0].mxu0
    %5440 = vdwg.mxu0
    %v5441 = vadd.f32 %v5234, %v5363
    %v5442 = vadd.f32 %v5235, %v5366
    %v5443 = vadd.f32 %v5236, %v5371
    %v5444 = vadd.f32 %v5237, %v5374
    %v5445 = vadd.f32 %v5238, %v5379
    %v5446 = vadd.f32 %v5239, %v5382
    %v5447 = vadd.f32 %v5240, %v5387
    %v5448 = vadd.f32 %v5241, %v5390
    %v5449 = vadd.f32 %v5242, %v5395
    %v5450 = vadd.f32 %v5243, %v5398
    %v5451 = vadd.f32 %v5244, %v5403
    %v5452 = vadd.f32 %v5245, %v5406
    %v5453 = vadd.f32 %v5246, %v5411
    %v5454 = vadd.f32 %v5247, %v5414
    %v5455 = vadd.f32 %v5248, %v5419
    %v5456 = vadd.f32 %v5249, %v5422
    %v5457 = vadd.f32 %v5250, %v5427
    %v5458 = vadd.f32 %v5251, %v5430
    %v5459 = vadd.f32 %v5252, %v5435
    %v5460 = vadd.f32 %v5253, %v5438
    %v5461 = vld [vmem:[%s1027] sm:$0xf]
    %v5462 = vld [vmem:[%s1027 + $0x4] sm:$0xf]
    %v5463 = vld [vmem:[%s1027 + $0x8] sm:$0xf]
    %v5464 = vld [vmem:[%s1027 + $0xc] sm:$0xf]
    %v5465 = vld [vmem:[%s1027 + $0x10] sm:$0xf]
    %v5466 = vld [vmem:[%s1027 + $0x14] sm:$0xf]
    %v5467 = vld [vmem:[%s1027 + $0x18] sm:$0xf]
    %v5468 = vld [vmem:[%s1027 + $0x1c] sm:$0xf]
    %v5469 = vld [vmem:[%s1027 + $0x20] sm:$0xf]
    %v5470 = vld [vmem:[%s1027 + $0x24] sm:$0xf]
    %v5471 = vld [vmem:[%s1027 + $0x28] sm:$0xf]
    %v5472 = vld [vmem:[%s1027 + $0x2c] sm:$0xf]
    %v5473 = vld [vmem:[%s1027 + $0x30] sm:$0xf]
    %v5474 = vld [vmem:[%s1027 + $0x34] sm:$0xf]
    %v5475 = vld [vmem:[%s1027 + $0x38] sm:$0xf]
    %v5476 = vld [vmem:[%s1027 + $0x3c] sm:$0xf]
    %v5478 = vunpack.c.l.b16 %v4510
    %v5479 = vpack.c.b16 %v5478, %v5478
    %v5481 = vshll.u32 %v5276, 16
    %v5483 = vrot.slane %v5481, 1
    %v5484 = vsel %vm162, %v4678, %v5483
    %v5485 = vshrl.u32 %v5276, 16
    %v5487 = vor.u32 %v5485, %v5483
    %v5489 = vshll.u32 %v5277, 16
    %v5491 = vrot.slane %v5489, 1
    %v5492 = vsel %vm162, %v5487, %v5491
    %v5493 = vshrl.u32 %v5277, 16
    %v5495 = vor.u32 %v5493, %v5491
    %v5497 = vshll.u32 %v5479, 16
    %v5499 = vrot.slane %v5497, 1
    %v5500 = vsel %vm162, %v5495, %v5499
    %v5520 = vunpack.c.l.b16 %v5461
    %v5521 = vunpack.c.l.b16 %v5462
    %v5522 = vunpack.c.l.b16 %v5463
    %v5523 = vunpack.c.l.b16 %v5464
    %v5524 = vunpack.c.l.b16 %v5465
    %v5525 = vunpack.c.l.b16 %v5466
    %v5526 = vunpack.c.l.b16 %v5467
    %v5527 = vunpack.c.l.b16 %v5468
    %v5528 = vunpack.c.l.b16 %v5469
    %v5529 = vunpack.c.l.b16 %v5470
    %v5530 = vunpack.c.l.b16 %v5471
    %v5531 = vunpack.c.l.b16 %v5472
    %v5532 = vunpack.c.l.b16 %v5473
    %v5533 = vunpack.c.l.b16 %v5474
    %v5534 = vunpack.c.l.b16 %v5475
    %v5535 = vunpack.c.l.b16 %v5476
    %v5536 = vpack.c.b16 %v5521, %v5520
    %v5537 = vpack.c.b16 %v5523, %v5522
    %v5538 = vpack.c.b16 %v5525, %v5524
    %v5539 = vpack.c.b16 %v5527, %v5526
    %v5540 = vpack.c.b16 %v5529, %v5528
    %v5541 = vpack.c.b16 %v5531, %v5530
    %v5542 = vpack.c.b16 %v5533, %v5532
    %v5543 = vpack.c.b16 %v5535, %v5534
    %5552 = vmatprep.subr.bf16.mxu0 0
    %5553 = vmatpush1.bf16.msra.mxu0 %v5536
    %5554 = vmatprep.subr.bf16.mxu0 0
    %5555 = vmatpush1.bf16.msra.mxu0 %v5537
    %5556 = vmatprep.subr.bf16.mxu0 0
    %5557 = vmatpush1.bf16.msra.mxu0 %v5538
    %5558 = vmatprep.subr.bf16.mxu0 0
    %5559 = vmatpush1.bf16.msra.mxu0 %v5539
    %5560 = vmatprep.subr.bf16.mxu0 0
    %5561 = vmatpush1.bf16.msra.mxu0 %v5540
    %5562 = vmatprep.subr.bf16.mxu0 0
    %5563 = vmatpush1.bf16.msra.mxu0 %v5541
    %5564 = vmatprep.subr.bf16.mxu0 0
    %5565 = vmatpush1.bf16.msra.mxu0 %v5542
    %5566 = vmatprep.subr.bf16.mxu0 0
    %5567 = vmatpush1.bf16.msra.mxu0 %v5543
    %5568 = vmatprep.subr.bf16.mxu0 0
    %5569 = vmatpush1.bf16.msra.mxu0 0
    %5570 = vmatprep.subr.bf16.mxu0 0
    %5571 = vmatpush1.bf16.msra.mxu0 0
    %5572 = vmatprep.subr.bf16.mxu0 0
    %5573 = vmatpush1.bf16.msra.mxu0 0
    %5574 = vmatprep.subr.bf16.mxu0 0
    %5575 = vmatpush1.bf16.msra.mxu0 0
    %5576 = vmatprep.subr.bf16.mxu0 0
    %5577 = vmatpush1.bf16.msra.mxu0 0
    %5578 = vmatprep.subr.bf16.mxu0 0
    %5579 = vmatpush1.bf16.msra.mxu0 0
    %5580 = vmatprep.subr.bf16.mxu0 0
    %5581 = vmatpush1.bf16.msra.mxu0 0
    %5582 = vmatprep.subr.bf16.mxu0 0
    %5583 = vmatpush1.bf16.msra.mxu0 0
    %5584 = vmatprep.mubr.bf16.mxu0 0
    %5585 = vmatmul.mubr.bf16.gmra.mrb[0].mxu0 %v4627
    %v5586 = vpop.f32.mrb[0].mxu0
    %v5587 = vadd.f32 0.0, %v5586
    %v5588 = vpop.f32.mrb[0].mxu0
    %v5589 = vpop.f32.mrb[0].mxu0
    %v5590 = vadd.f32 0.0, %v5589
    %v5591 = vpop.f32.mrb[0].mxu0
    %5592 = vmatprep.mubr.bf16.mxu0 0
    %5593 = vmatmul.mubr.bf16.gmra.mrb[0].mxu0 %v4635
    %v5594 = vpop.f32.mrb[0].mxu0
    %v5595 = vadd.f32 0.0, %v5594
    %v5596 = vpop.f32.mrb[0].mxu0
    %v5597 = vpop.f32.mrb[0].mxu0
    %v5598 = vadd.f32 0.0, %v5597
    %v5599 = vpop.f32.mrb[0].mxu0
    %5600 = vmatprep.mubr.bf16.mxu0 0
    %5601 = vmatmul.mubr.bf16.gmra.mrb[0].mxu0 %v4643
    %v5602 = vpop.f32.mrb[0].mxu0
    %v5603 = vadd.f32 0.0, %v5602
    %v5604 = vpop.f32.mrb[0].mxu0
    %v5605 = vpop.f32.mrb[0].mxu0
    %v5606 = vadd.f32 0.0, %v5605
    %v5607 = vpop.f32.mrb[0].mxu0
    %5608 = vmatprep.mubr.bf16.mxu0 0
    %5609 = vmatmul.mubr.bf16.gmra.mrb[0].mxu0 %v4651
    %v5610 = vpop.f32.mrb[0].mxu0
    %v5611 = vadd.f32 0.0, %v5610
    %v5612 = vpop.f32.mrb[0].mxu0
    %v5613 = vpop.f32.mrb[0].mxu0
    %v5614 = vadd.f32 0.0, %v5613
    %v5615 = vpop.f32.mrb[0].mxu0
    %5616 = vmatprep.mubr.bf16.mxu0 0
    %5617 = vmatmul.mubr.bf16.gmra.mrb[0].mxu0 %v4659
    %v5618 = vpop.f32.mrb[0].mxu0
    %v5619 = vadd.f32 0.0, %v5618
    %v5620 = vpop.f32.mrb[0].mxu0
    %v5621 = vpop.f32.mrb[0].mxu0
    %v5622 = vadd.f32 0.0, %v5621
    %v5623 = vpop.f32.mrb[0].mxu0
    %5624 = vmatprep.mubr.bf16.mxu0 0
    %5625 = vmatmul.mubr.bf16.gmra.mrb[0].mxu0 %v4667
    %v5626 = vpop.f32.mrb[0].mxu0
    %v5627 = vadd.f32 0.0, %v5626
    %v5628 = vpop.f32.mrb[0].mxu0
    %v5629 = vpop.f32.mrb[0].mxu0
    %v5630 = vadd.f32 0.0, %v5629
    %v5631 = vpop.f32.mrb[0].mxu0
    %5632 = vmatprep.mubr.bf16.mxu0 0
    %5633 = vmatmul.mubr.bf16.gmra.mrb[0].mxu0 %v4675
    %v5634 = vpop.f32.mrb[0].mxu0
    %v5635 = vadd.f32 0.0, %v5634
    %v5636 = vpop.f32.mrb[0].mxu0
    %v5637 = vpop.f32.mrb[0].mxu0
    %v5638 = vadd.f32 0.0, %v5637
    %v5639 = vpop.f32.mrb[0].mxu0
    %5640 = vmatprep.mubr.bf16.mxu0 0
    %5641 = vmatmul.mubr.bf16.gmra.mrb[0].mxu0 %v5484
    %v5642 = vpop.f32.mrb[0].mxu0
    %v5643 = vadd.f32 0.0, %v5642
    %v5644 = vpop.f32.mrb[0].mxu0
    %v5645 = vpop.f32.mrb[0].mxu0
    %v5646 = vadd.f32 0.0, %v5645
    %v5647 = vpop.f32.mrb[0].mxu0
    %5648 = vmatprep.mubr.bf16.mxu0 0
    %5649 = vmatmul.mubr.bf16.gmra.mrb[0].mxu0 %v5492
    %v5650 = vpop.f32.mrb[0].mxu0
    %v5651 = vadd.f32 0.0, %v5650
    %v5652 = vpop.f32.mrb[0].mxu0
    %v5653 = vpop.f32.mrb[0].mxu0
    %v5654 = vadd.f32 0.0, %v5653
    %v5655 = vpop.f32.mrb[0].mxu0
    %5656 = vmatprep.mubr.bf16.mxu0 0
    %5657 = vmatmul.mubr.bf16.gmra.mrb[0].mxu0 %v5500
    %v5658 = vpop.f32.mrb[0].mxu0
    %v5659 = vadd.f32 0.0, %v5658
    %v5660 = vpop.f32.mrb[0].mxu0
    %v5661 = vpop.f32.mrb[0].mxu0
    %v5662 = vadd.f32 0.0, %v5661
    %v5663 = vpop.f32.mrb[0].mxu0
    %5664 = vdwg.mxu0
    %v5665 = vadd.f32 %v5441, %v5587
    %v5666 = vadd.f32 %v5442, %v5590
    %v5667 = vadd.f32 %v5443, %v5595
    %v5668 = vadd.f32 %v5444, %v5598
    %v5669 = vadd.f32 %v5445, %v5603
    %v5670 = vadd.f32 %v5446, %v5606
    %v5671 = vadd.f32 %v5447, %v5611
    %v5672 = vadd.f32 %v5448, %v5614
    %v5673 = vadd.f32 %v5449, %v5619
    %v5674 = vadd.f32 %v5450, %v5622
    %v5675 = vadd.f32 %v5451, %v5627
    %v5676 = vadd.f32 %v5452, %v5630
    %v5677 = vadd.f32 %v5453, %v5635
    %v5678 = vadd.f32 %v5454, %v5638
    %v5679 = vadd.f32 %v5455, %v5643
    %v5680 = vadd.f32 %v5456, %v5646
    %v5681 = vadd.f32 %v5457, %v5651
    %v5682 = vadd.f32 %v5458, %v5654
    %v5683 = vadd.f32 %v5459, %v5659
    %v5684 = vadd.f32 %v5460, %v5662
    %v5685 = vld [vmem:[%s1252] sm:$0xf]
    %v5686 = vld [vmem:[%s1252 + $0x4] sm:$0xf]
    %v5687 = vld [vmem:[%s1252 + $0x8] sm:$0xf]
    %v5688 = vld [vmem:[%s1252 + $0xc] sm:$0xf]
    %v5689 = vld [vmem:[%s1252 + $0x10] sm:$0xf]
    %v5690 = vld [vmem:[%s1252 + $0x14] sm:$0xf]
    %v5691 = vld [vmem:[%s1252 + $0x18] sm:$0xf]
    %v5692 = vld [vmem:[%s1252 + $0x1c] sm:$0xf]
    %v5693 = vld [vmem:[%s1252 + $0x20] sm:$0xf]
    %v5694 = vld [vmem:[%s1252 + $0x24] sm:$0xf]
    %v5695 = vld [vmem:[%s1252 + $0x28] sm:$0xf]
    %v5696 = vld [vmem:[%s1252 + $0x2c] sm:$0xf]
    %v5697 = vld [vmem:[%s1252 + $0x30] sm:$0xf]
    %v5698 = vld [vmem:[%s1252 + $0x34] sm:$0xf]
    %v5699 = vld [vmem:[%s1252 + $0x38] sm:$0xf]
    %v5700 = vld [vmem:[%s1252 + $0x3c] sm:$0xf]
    %v5701 = vrot.slane %v5276, 1
    %v5702 = vsel %vm606, %v5059, %v5701
    %v5703 = vrot.slane %v5277, 1
    %v5704 = vsel %vm606, %v5701, %v5703
    %v5705 = vrot.slane %v5479, 1
    %v5706 = vsel %vm606, %v5703, %v5705
    %v5726 = vunpack.c.l.b16 %v5685
    %v5727 = vunpack.c.l.b16 %v5686
    %v5728 = vunpack.c.l.b16 %v5687
    %v5729 = vunpack.c.l.b16 %v5688
    %v5730 = vunpack.c.l.b16 %v5689
    %v5731 = vunpack.c.l.b16 %v5690
    %v5732 = vunpack.c.l.b16 %v5691
    %v5733 = vunpack.c.l.b16 %v5692
    %v5734 = vunpack.c.l.b16 %v5693
    %v5735 = vunpack.c.l.b16 %v5694
    %v5736 = vunpack.c.l.b16 %v5695
    %v5737 = vunpack.c.l.b16 %v5696
    %v5738 = vunpack.c.l.b16 %v5697
    %v5739 = vunpack.c.l.b16 %v5698
    %v5740 = vunpack.c.l.b16 %v5699
    %v5741 = vunpack.c.l.b16 %v5700
    %v5742 = vpack.c.b16 %v5727, %v5726
    %v5743 = vpack.c.b16 %v5729, %v5728
    %v5744 = vpack.c.b16 %v5731, %v5730
    %v5745 = vpack.c.b16 %v5733, %v5732
    %v5746 = vpack.c.b16 %v5735, %v5734
    %v5747 = vpack.c.b16 %v5737, %v5736
    %v5748 = vpack.c.b16 %v5739, %v5738
    %v5749 = vpack.c.b16 %v5741, %v5740
    %5758 = vmatprep.subr.bf16.mxu0 0
    %5759 = vmatpush1.bf16.msra.mxu0 %v5742
    %5760 = vmatprep.subr.bf16.mxu0 0
    %5761 = vmatpush1.bf16.msra.mxu0 %v5743
    %5762 = vmatprep.subr.bf16.mxu0 0
    %5763 = vmatpush1.bf16.msra.mxu0 %v5744
    %5764 = vmatprep.subr.bf16.mxu0 0
    %5765 = vmatpush1.bf16.msra.mxu0 %v5745
    %5766 = vmatprep.subr.bf16.mxu0 0
    %5767 = vmatpush1.bf16.msra.mxu0 %v5746
    %5768 = vmatprep.subr.bf16.mxu0 0
    %5769 = vmatpush1.bf16.msra.mxu0 %v5747
    %5770 = vmatprep.subr.bf16.mxu0 0
    %5771 = vmatpush1.bf16.msra.mxu0 %v5748
    %5772 = vmatprep.subr.bf16.mxu0 0
    %5773 = vmatpush1.bf16.msra.mxu0 %v5749
    %5774 = vmatprep.subr.bf16.mxu0 0
    %5775 = vmatpush1.bf16.msra.mxu0 0
    %5776 = vmatprep.subr.bf16.mxu0 0
    %5777 = vmatpush1.bf16.msra.mxu0 0
    %5778 = vmatprep.subr.bf16.mxu0 0
    %5779 = vmatpush1.bf16.msra.mxu0 0
    %5780 = vmatprep.subr.bf16.mxu0 0
    %5781 = vmatpush1.bf16.msra.mxu0 0
    %5782 = vmatprep.subr.bf16.mxu0 0
    %5783 = vmatpush1.bf16.msra.mxu0 0
    %5784 = vmatprep.subr.bf16.mxu0 0
    %5785 = vmatpush1.bf16.msra.mxu0 0
    %5786 = vmatprep.subr.bf16.mxu0 0
    %5787 = vmatpush1.bf16.msra.mxu0 0
    %5788 = vmatprep.subr.bf16.mxu0 0
    %5789 = vmatpush1.bf16.msra.mxu0 0
    %5790 = vmatprep.mubr.bf16.mxu0 0
    %5791 = vmatmul.mubr.bf16.gmra.mrb[0].mxu0 %v5048
    %v5792 = vpop.f32.mrb[0].mxu0
    %v5793 = vadd.f32 0.0, %v5792
    %v5794 = vpop.f32.mrb[0].mxu0
    %v5795 = vpop.f32.mrb[0].mxu0
    %v5796 = vadd.f32 0.0, %v5795
    %v5797 = vpop.f32.mrb[0].mxu0
    %5798 = vmatprep.mubr.bf16.mxu0 0
    %5799 = vmatmul.mubr.bf16.gmra.mrb[0].mxu0 %v5050
    %v5800 = vpop.f32.mrb[0].mxu0
    %v5801 = vadd.f32 0.0, %v5800
    %v5802 = vpop.f32.mrb[0].mxu0
    %v5803 = vpop.f32.mrb[0].mxu0
    %v5804 = vadd.f32 0.0, %v5803
    %v5805 = vpop.f32.mrb[0].mxu0
    %5806 = vmatprep.mubr.bf16.mxu0 0
    %5807 = vmatmul.mubr.bf16.gmra.mrb[0].mxu0 %v5052
    %v5808 = vpop.f32.mrb[0].mxu0
    %v5809 = vadd.f32 0.0, %v5808
    %v5810 = vpop.f32.mrb[0].mxu0
    %v5811 = vpop.f32.mrb[0].mxu0
    %v5812 = vadd.f32 0.0, %v5811
    %v5813 = vpop.f32.mrb[0].mxu0
    %5814 = vmatprep.mubr.bf16.mxu0 0
    %5815 = vmatmul.mubr.bf16.gmra.mrb[0].mxu0 %v5054
    %v5816 = vpop.f32.mrb[0].mxu0
    %v5817 = vadd.f32 0.0, %v5816
    %v5818 = vpop.f32.mrb[0].mxu0
    %v5819 = vpop.f32.mrb[0].mxu0
    %v5820 = vadd.f32 0.0, %v5819
    %v5821 = vpop.f32.mrb[0].mxu0
    %5822 = vmatprep.mubr.bf16.mxu0 0
    %5823 = vmatmul.mubr.bf16.gmra.mrb[0].mxu0 %v5056
    %v5824 = vpop.f32.mrb[0].mxu0
    %v5825 = vadd.f32 0.0, %v5824
    %v5826 = vpop.f32.mrb[0].mxu0
    %v5827 = vpop.f32.mrb[0].mxu0
    %v5828 = vadd.f32 0.0, %v5827
    %v5829 = vpop.f32.mrb[0].mxu0
    %5830 = vmatprep.mubr.bf16.mxu0 0
    %5831 = vmatmul.mubr.bf16.gmra.mrb[0].mxu0 %v5058
    %v5832 = vpop.f32.mrb[0].mxu0
    %v5833 = vadd.f32 0.0, %v5832
    %v5834 = vpop.f32.mrb[0].mxu0
    %v5835 = vpop.f32.mrb[0].mxu0
    %v5836 = vadd.f32 0.0, %v5835
    %v5837 = vpop.f32.mrb[0].mxu0
    %5838 = vmatprep.mubr.bf16.mxu0 0
    %5839 = vmatmul.mubr.bf16.gmra.mrb[0].mxu0 %v5060
    %v5840 = vpop.f32.mrb[0].mxu0
    %v5841 = vadd.f32 0.0, %v5840
    %v5842 = vpop.f32.mrb[0].mxu0
    %v5843 = vpop.f32.mrb[0].mxu0
    %v5844 = vadd.f32 0.0, %v5843
    %v5845 = vpop.f32.mrb[0].mxu0
    %5846 = vmatprep.mubr.bf16.mxu0 0
    %5847 = vmatmul.mubr.bf16.gmra.mrb[0].mxu0 %v5702
    %v5848 = vpop.f32.mrb[0].mxu0
    %v5849 = vadd.f32 0.0, %v5848
    %v5850 = vpop.f32.mrb[0].mxu0
    %v5851 = vpop.f32.mrb[0].mxu0
    %v5852 = vadd.f32 0.0, %v5851
    %v5853 = vpop.f32.mrb[0].mxu0
    %5854 = vmatprep.mubr.bf16.mxu0 0
    %5855 = vmatmul.mubr.bf16.gmra.mrb[0].mxu0 %v5704
    %v5856 = vpop.f32.mrb[0].mxu0
    %v5857 = vadd.f32 0.0, %v5856
    %v5858 = vpop.f32.mrb[0].mxu0
    %v5859 = vpop.f32.mrb[0].mxu0
    %v5860 = vadd.f32 0.0, %v5859
    %v5861 = vpop.f32.mrb[0].mxu0
    %5862 = vmatprep.mubr.bf16.mxu0 0
    %5863 = vmatmul.mubr.bf16.gmra.mrb[0].mxu0 %v5706
    %v5864 = vpop.f32.mrb[0].mxu0
    %v5865 = vadd.f32 0.0, %v5864
    %v5866 = vpop.f32.mrb[0].mxu0
    %v5867 = vpop.f32.mrb[0].mxu0
    %v5868 = vadd.f32 0.0, %v5867
    %v5869 = vpop.f32.mrb[0].mxu0
    %5870 = vdwg.mxu0
    %v5871 = vadd.f32 %v5665, %v5793
    %v5872 = vadd.f32 %v5666, %v5796
    %v5873 = vadd.f32 %v5667, %v5801
    %v5874 = vadd.f32 %v5668, %v5804
    %v5875 = vadd.f32 %v5669, %v5809
    %v5876 = vadd.f32 %v5670, %v5812
    %v5877 = vadd.f32 %v5671, %v5817
    %v5878 = vadd.f32 %v5672, %v5820
    %v5879 = vadd.f32 %v5673, %v5825
    %v5880 = vadd.f32 %v5674, %v5828
    %v5881 = vadd.f32 %v5675, %v5833
    %v5882 = vadd.f32 %v5676, %v5836
    %v5883 = vadd.f32 %v5677, %v5841
    %v5884 = vadd.f32 %v5678, %v5844
    %v5885 = vadd.f32 %v5679, %v5849
    %v5886 = vadd.f32 %v5680, %v5852
    %v5887 = vadd.f32 %v5681, %v5857
    %v5888 = vadd.f32 %v5682, %v5860
    %v5889 = vadd.f32 %v5683, %v5865
    %v5890 = vadd.f32 %v5684, %v5868
    %v5891 = vld [vmem:[%s1459] sm:$0xf]
    %v5892 = vld [vmem:[%s1459 + $0x4] sm:$0xf]
    %v5893 = vld [vmem:[%s1459 + $0x8] sm:$0xf]
    %v5894 = vld [vmem:[%s1459 + $0xc] sm:$0xf]
    %v5895 = vld [vmem:[%s1459 + $0x10] sm:$0xf]
    %v5896 = vld [vmem:[%s1459 + $0x14] sm:$0xf]
    %v5897 = vld [vmem:[%s1459 + $0x18] sm:$0xf]
    %v5898 = vld [vmem:[%s1459 + $0x1c] sm:$0xf]
    %v5899 = vld [vmem:[%s1459 + $0x20] sm:$0xf]
    %v5900 = vld [vmem:[%s1459 + $0x24] sm:$0xf]
    %v5901 = vld [vmem:[%s1459 + $0x28] sm:$0xf]
    %v5902 = vld [vmem:[%s1459 + $0x2c] sm:$0xf]
    %v5903 = vld [vmem:[%s1459 + $0x30] sm:$0xf]
    %v5904 = vld [vmem:[%s1459 + $0x34] sm:$0xf]
    %v5905 = vld [vmem:[%s1459 + $0x38] sm:$0xf]
    %v5906 = vld [vmem:[%s1459 + $0x3c] sm:$0xf]
    %v5910 = vunpack.c.l.b16 %v4511
    %v5911 = vunpack.c.l.b16 %v4512
    %v5912 = vunpack.c.l.b16 %v4513
    %v5913 = vpack.c.b16 %v5910, %v5478
    %v5914 = vpack.c.b16 %v5912, %v5911
    %v5933 = vunpack.c.l.b16 %v5891
    %v5934 = vunpack.c.l.b16 %v5892
    %v5935 = vunpack.c.l.b16 %v5893
    %v5936 = vunpack.c.l.b16 %v5894
    %v5937 = vunpack.c.l.b16 %v5895
    %v5938 = vunpack.c.l.b16 %v5896
    %v5939 = vunpack.c.l.b16 %v5897
    %v5940 = vunpack.c.l.b16 %v5898
    %v5941 = vunpack.c.l.b16 %v5899
    %v5942 = vunpack.c.l.b16 %v5900
    %v5943 = vunpack.c.l.b16 %v5901
    %v5944 = vunpack.c.l.b16 %v5902
    %v5945 = vunpack.c.l.b16 %v5903
    %v5946 = vunpack.c.l.b16 %v5904
    %v5947 = vunpack.c.l.b16 %v5905
    %v5948 = vunpack.c.l.b16 %v5906
    %v5949 = vpack.c.b16 %v5934, %v5933
    %v5950 = vpack.c.b16 %v5936, %v5935
    %v5951 = vpack.c.b16 %v5938, %v5937
    %v5952 = vpack.c.b16 %v5940, %v5939
    %v5953 = vpack.c.b16 %v5942, %v5941
    %v5954 = vpack.c.b16 %v5944, %v5943
    %v5955 = vpack.c.b16 %v5946, %v5945
    %v5956 = vpack.c.b16 %v5948, %v5947
    %5965 = vmatprep.subr.bf16.mxu0 0
    %5966 = vmatpush1.bf16.msra.mxu0 %v5949
    %5967 = vmatprep.subr.bf16.mxu0 0
    %5968 = vmatpush1.bf16.msra.mxu0 %v5950
    %5969 = vmatprep.subr.bf16.mxu0 0
    %5970 = vmatpush1.bf16.msra.mxu0 %v5951
    %5971 = vmatprep.subr.bf16.mxu0 0
    %5972 = vmatpush1.bf16.msra.mxu0 %v5952
    %5973 = vmatprep.subr.bf16.mxu0 0
    %5974 = vmatpush1.bf16.msra.mxu0 %v5953
    %5975 = vmatprep.subr.bf16.mxu0 0
    %5976 = vmatpush1.bf16.msra.mxu0 %v5954
    %5977 = vmatprep.subr.bf16.mxu0 0
    %5978 = vmatpush1.bf16.msra.mxu0 %v5955
    %5979 = vmatprep.subr.bf16.mxu0 0
    %5980 = vmatpush1.bf16.msra.mxu0 %v5956
    %5981 = vmatprep.subr.bf16.mxu0 0
    %5982 = vmatpush1.bf16.msra.mxu0 0
    %5983 = vmatprep.subr.bf16.mxu0 0
    %5984 = vmatpush1.bf16.msra.mxu0 0
    %5985 = vmatprep.subr.bf16.mxu0 0
    %5986 = vmatpush1.bf16.msra.mxu0 0
    %5987 = vmatprep.subr.bf16.mxu0 0
    %5988 = vmatpush1.bf16.msra.mxu0 0
    %5989 = vmatprep.subr.bf16.mxu0 0
    %5990 = vmatpush1.bf16.msra.mxu0 0
    %5991 = vmatprep.subr.bf16.mxu0 0
    %5992 = vmatpush1.bf16.msra.mxu0 0
    %5993 = vmatprep.subr.bf16.mxu0 0
    %5994 = vmatpush1.bf16.msra.mxu0 0
    %5995 = vmatprep.subr.bf16.mxu0 0
    %5996 = vmatpush1.bf16.msra.mxu0 0
    %5997 = vmatprep.mubr.bf16.mxu0 0
    %5998 = vmatmul.mubr.bf16.gmra.mrb[0].mxu0 %v4593
    %v5999 = vpop.f32.mrb[0].mxu0
    %v6000 = vadd.f32 0.0, %v5999
    %v6001 = vpop.f32.mrb[0].mxu0
    %v6002 = vpop.f32.mrb[0].mxu0
    %v6003 = vadd.f32 0.0, %v6002
    %v6004 = vpop.f32.mrb[0].mxu0
    %6005 = vmatprep.mubr.bf16.mxu0 0
    %6006 = vmatmul.mubr.bf16.gmra.mrb[0].mxu0 %v4594
    %v6007 = vpop.f32.mrb[0].mxu0
    %v6008 = vadd.f32 0.0, %v6007
    %v6009 = vpop.f32.mrb[0].mxu0
    %v6010 = vpop.f32.mrb[0].mxu0
    %v6011 = vadd.f32 0.0, %v6010
    %v6012 = vpop.f32.mrb[0].mxu0
    %6013 = vmatprep.mubr.bf16.mxu0 0
    %6014 = vmatmul.mubr.bf16.gmra.mrb[0].mxu0 %v4595
    %v6015 = vpop.f32.mrb[0].mxu0
    %v6016 = vadd.f32 0.0, %v6015
    %v6017 = vpop.f32.mrb[0].mxu0
    %v6018 = vpop.f32.mrb[0].mxu0
    %v6019 = vadd.f32 0.0, %v6018
    %v6020 = vpop.f32.mrb[0].mxu0
    %6021 = vmatprep.mubr.bf16.mxu0 0
    %6022 = vmatmul.mubr.bf16.gmra.mrb[0].mxu0 %v4596
    %v6023 = vpop.f32.mrb[0].mxu0
    %v6024 = vadd.f32 0.0, %v6023
    %v6025 = vpop.f32.mrb[0].mxu0
    %v6026 = vpop.f32.mrb[0].mxu0
    %v6027 = vadd.f32 0.0, %v6026
    %v6028 = vpop.f32.mrb[0].mxu0
    %6029 = vmatprep.mubr.bf16.mxu0 0
    %6030 = vmatmul.mubr.bf16.gmra.mrb[0].mxu0 %v4597
    %v6031 = vpop.f32.mrb[0].mxu0
    %v6032 = vadd.f32 0.0, %v6031
    %v6033 = vpop.f32.mrb[0].mxu0
    %v6034 = vpop.f32.mrb[0].mxu0
    %v6035 = vadd.f32 0.0, %v6034
    %v6036 = vpop.f32.mrb[0].mxu0
    %6037 = vmatprep.mubr.bf16.mxu0 0
    %6038 = vmatmul.mubr.bf16.gmra.mrb[0].mxu0 %v4598
    %v6039 = vpop.f32.mrb[0].mxu0
    %v6040 = vadd.f32 0.0, %v6039
    %v6041 = vpop.f32.mrb[0].mxu0
    %v6042 = vpop.f32.mrb[0].mxu0
    %v6043 = vadd.f32 0.0, %v6042
    %v6044 = vpop.f32.mrb[0].mxu0
    %6045 = vmatprep.mubr.bf16.mxu0 0
    %6046 = vmatmul.mubr.bf16.gmra.mrb[0].mxu0 %v5276
    %v6047 = vpop.f32.mrb[0].mxu0
    %v6048 = vadd.f32 0.0, %v6047
    %v6049 = vpop.f32.mrb[0].mxu0
    %v6050 = vpop.f32.mrb[0].mxu0
    %v6051 = vadd.f32 0.0, %v6050
    %v6052 = vpop.f32.mrb[0].mxu0
    %6053 = vmatprep.mubr.bf16.mxu0 0
    %6054 = vmatmul.mubr.bf16.gmra.mrb[0].mxu0 %v5277
    %v6055 = vpop.f32.mrb[0].mxu0
    %v6056 = vadd.f32 0.0, %v6055
    %v6057 = vpop.f32.mrb[0].mxu0
    %v6058 = vpop.f32.mrb[0].mxu0
    %v6059 = vadd.f32 0.0, %v6058
    %v6060 = vpop.f32.mrb[0].mxu0
    %6061 = vmatprep.mubr.bf16.mxu0 0
    %6062 = vmatmul.mubr.bf16.gmra.mrb[0].mxu0 %v5913
    %v6063 = vpop.f32.mrb[0].mxu0
    %v6064 = vadd.f32 0.0, %v6063
    %v6065 = vpop.f32.mrb[0].mxu0
    %v6066 = vpop.f32.mrb[0].mxu0
    %v6067 = vadd.f32 0.0, %v6066
    %v6068 = vpop.f32.mrb[0].mxu0
    %6069 = vmatprep.mubr.bf16.mxu0 0
    %6070 = vmatmul.mubr.bf16.gmra.mrb[0].mxu0 %v5914
    %v6071 = vpop.f32.mrb[0].mxu0
    %v6072 = vadd.f32 0.0, %v6071
    %v6073 = vpop.f32.mrb[0].mxu0
    %v6074 = vpop.f32.mrb[0].mxu0
    %v6075 = vadd.f32 0.0, %v6074
    %v6076 = vpop.f32.mrb[0].mxu0
    %6077 = vdwg.mxu0
    %v6078 = vadd.f32 %v5871, %v6000
    %v6079 = vadd.f32 %v5872, %v6003
    %v6080 = vadd.f32 %v5873, %v6008
    %v6081 = vadd.f32 %v5874, %v6011
    %v6082 = vadd.f32 %v5875, %v6016
    %v6083 = vadd.f32 %v5876, %v6019
    %v6084 = vadd.f32 %v5877, %v6024
    %v6085 = vadd.f32 %v5878, %v6027
    %v6086 = vadd.f32 %v5879, %v6032
    %v6087 = vadd.f32 %v5880, %v6035
    %v6088 = vadd.f32 %v5881, %v6040
    %v6089 = vadd.f32 %v5882, %v6043
    %v6090 = vadd.f32 %v5883, %v6048
    %v6091 = vadd.f32 %v5884, %v6051
    %v6092 = vadd.f32 %v5885, %v6056
    %v6093 = vadd.f32 %v5886, %v6059
    %v6094 = vadd.f32 %v5887, %v6064
    %v6095 = vadd.f32 %v5888, %v6067
    %v6096 = vadd.f32 %v5889, %v6072
    %v6097 = vadd.f32 %v5890, %v6075
    %v6098 = vld [vmem:[%s1667] sm:$0xf]
    %v6099 = vld [vmem:[%s1667 + $0x4] sm:$0xf]
    %v6100 = vld [vmem:[%s1667 + $0x8] sm:$0xf]
    %v6101 = vld [vmem:[%s1667 + $0xc] sm:$0xf]
    %v6102 = vld [vmem:[%s1667 + $0x10] sm:$0xf]
    %v6103 = vld [vmem:[%s1667 + $0x14] sm:$0xf]
    %v6104 = vld [vmem:[%s1667 + $0x18] sm:$0xf]
    %v6105 = vld [vmem:[%s1667 + $0x1c] sm:$0xf]
    %v6106 = vld [vmem:[%s1667 + $0x20] sm:$0xf]
    %v6107 = vld [vmem:[%s1667 + $0x24] sm:$0xf]
    %v6108 = vld [vmem:[%s1667 + $0x28] sm:$0xf]
    %v6109 = vld [vmem:[%s1667 + $0x2c] sm:$0xf]
    %v6110 = vld [vmem:[%s1667 + $0x30] sm:$0xf]
    %v6111 = vld [vmem:[%s1667 + $0x34] sm:$0xf]
    %v6112 = vld [vmem:[%s1667 + $0x38] sm:$0xf]
    %v6113 = vld [vmem:[%s1667 + $0x3c] sm:$0xf]
    %v6115 = vunpack.c.l.b16 %v4514
    %v6116 = vpack.c.b16 %v6115, %v6115
    %v6118 = vshll.u32 %v5913, 16
    %v6120 = vrot.slane %v6118, 1
    %v6121 = vsel %vm162, %v5495, %v6120
    %v6122 = vshrl.u32 %v5913, 16
    %v6124 = vor.u32 %v6122, %v6120
    %v6126 = vshll.u32 %v5914, 16
    %v6128 = vrot.slane %v6126, 1
    %v6129 = vsel %vm162, %v6124, %v6128
    %v6130 = vshrl.u32 %v5914, 16
    %v6132 = vor.u32 %v6130, %v6128
    %v6134 = vshll.u32 %v6116, 16
    %v6136 = vrot.slane %v6134, 1
    %v6137 = vsel %vm162, %v6132, %v6136
    %v6157 = vunpack.c.l.b16 %v6098
    %v6158 = vunpack.c.l.b16 %v6099
    %v6159 = vunpack.c.l.b16 %v6100
    %v6160 = vunpack.c.l.b16 %v6101
    %v6161 = vunpack.c.l.b16 %v6102
    %v6162 = vunpack.c.l.b16 %v6103
    %v6163 = vunpack.c.l.b16 %v6104
    %v6164 = vunpack.c.l.b16 %v6105
    %v6165 = vunpack.c.l.b16 %v6106
    %v6166 = vunpack.c.l.b16 %v6107
    %v6167 = vunpack.c.l.b16 %v6108
    %v6168 = vunpack.c.l.b16 %v6109
    %v6169 = vunpack.c.l.b16 %v6110
    %v6170 = vunpack.c.l.b16 %v6111
    %v6171 = vunpack.c.l.b16 %v6112
    %v6172 = vunpack.c.l.b16 %v6113
    %v6173 = vpack.c.b16 %v6158, %v6157
    %v6174 = vpack.c.b16 %v6160, %v6159
    %v6175 = vpack.c.b16 %v6162, %v6161
    %v6176 = vpack.c.b16 %v6164, %v6163
    %v6177 = vpack.c.b16 %v6166, %v6165
    %v6178 = vpack.c.b16 %v6168, %v6167
    %v6179 = vpack.c.b16 %v6170, %v6169
    %v6180 = vpack.c.b16 %v6172, %v6171
    %6189 = vmatprep.subr.bf16.mxu0 0
    %6190 = vmatpush1.bf16.msra.mxu0 %v6173
    %6191 = vmatprep.subr.bf16.mxu0 0
    %6192 = vmatpush1.bf16.msra.mxu0 %v6174
    %6193 = vmatprep.subr.bf16.mxu0 0
    %6194 = vmatpush1.bf16.msra.mxu0 %v6175
    %6195 = vmatprep.subr.bf16.mxu0 0
    %6196 = vmatpush1.bf16.msra.mxu0 %v6176
    %6197 = vmatprep.subr.bf16.mxu0 0
    %6198 = vmatpush1.bf16.msra.mxu0 %v6177
    %6199 = vmatprep.subr.bf16.mxu0 0
    %6200 = vmatpush1.bf16.msra.mxu0 %v6178
    %6201 = vmatprep.subr.bf16.mxu0 0
    %6202 = vmatpush1.bf16.msra.mxu0 %v6179
    %6203 = vmatprep.subr.bf16.mxu0 0
    %6204 = vmatpush1.bf16.msra.mxu0 %v6180
    %6205 = vmatprep.subr.bf16.mxu0 0
    %6206 = vmatpush1.bf16.msra.mxu0 0
    %6207 = vmatprep.subr.bf16.mxu0 0
    %6208 = vmatpush1.bf16.msra.mxu0 0
    %6209 = vmatprep.subr.bf16.mxu0 0
    %6210 = vmatpush1.bf16.msra.mxu0 0
    %6211 = vmatprep.subr.bf16.mxu0 0
    %6212 = vmatpush1.bf16.msra.mxu0 0
    %6213 = vmatprep.subr.bf16.mxu0 0
    %6214 = vmatpush1.bf16.msra.mxu0 0
    %6215 = vmatprep.subr.bf16.mxu0 0
    %6216 = vmatpush1.bf16.msra.mxu0 0
    %6217 = vmatprep.subr.bf16.mxu0 0
    %6218 = vmatpush1.bf16.msra.mxu0 0
    %6219 = vmatprep.subr.bf16.mxu0 0
    %6220 = vmatpush1.bf16.msra.mxu0 0
    %6221 = vmatprep.mubr.bf16.mxu0 0
    %6222 = vmatmul.mubr.bf16.gmra.mrb[0].mxu0 %v4643
    %v6223 = vpop.f32.mrb[0].mxu0
    %v6224 = vadd.f32 0.0, %v6223
    %v6225 = vpop.f32.mrb[0].mxu0
    %v6226 = vpop.f32.mrb[0].mxu0
    %v6227 = vadd.f32 0.0, %v6226
    %v6228 = vpop.f32.mrb[0].mxu0
    %6229 = vmatprep.mubr.bf16.mxu0 0
    %6230 = vmatmul.mubr.bf16.gmra.mrb[0].mxu0 %v4651
    %v6231 = vpop.f32.mrb[0].mxu0
    %v6232 = vadd.f32 0.0, %v6231
    %v6233 = vpop.f32.mrb[0].mxu0
    %v6234 = vpop.f32.mrb[0].mxu0
    %v6235 = vadd.f32 0.0, %v6234
    %v6236 = vpop.f32.mrb[0].mxu0
    %6237 = vmatprep.mubr.bf16.mxu0 0
    %6238 = vmatmul.mubr.bf16.gmra.mrb[0].mxu0 %v4659
    %v6239 = vpop.f32.mrb[0].mxu0
    %v6240 = vadd.f32 0.0, %v6239
    %v6241 = vpop.f32.mrb[0].mxu0
    %v6242 = vpop.f32.mrb[0].mxu0
    %v6243 = vadd.f32 0.0, %v6242
    %v6244 = vpop.f32.mrb[0].mxu0
    %6245 = vmatprep.mubr.bf16.mxu0 0
    %6246 = vmatmul.mubr.bf16.gmra.mrb[0].mxu0 %v4667
    %v6247 = vpop.f32.mrb[0].mxu0
    %v6248 = vadd.f32 0.0, %v6247
    %v6249 = vpop.f32.mrb[0].mxu0
    %v6250 = vpop.f32.mrb[0].mxu0
    %v6251 = vadd.f32 0.0, %v6250
    %v6252 = vpop.f32.mrb[0].mxu0
    %6253 = vmatprep.mubr.bf16.mxu0 0
    %6254 = vmatmul.mubr.bf16.gmra.mrb[0].mxu0 %v4675
    %v6255 = vpop.f32.mrb[0].mxu0
    %v6256 = vadd.f32 0.0, %v6255
    %v6257 = vpop.f32.mrb[0].mxu0
    %v6258 = vpop.f32.mrb[0].mxu0
    %v6259 = vadd.f32 0.0, %v6258
    %v6260 = vpop.f32.mrb[0].mxu0
    %6261 = vmatprep.mubr.bf16.mxu0 0
    %6262 = vmatmul.mubr.bf16.gmra.mrb[0].mxu0 %v5484
    %v6263 = vpop.f32.mrb[0].mxu0
    %v6264 = vadd.f32 0.0, %v6263
    %v6265 = vpop.f32.mrb[0].mxu0
    %v6266 = vpop.f32.mrb[0].mxu0
    %v6267 = vadd.f32 0.0, %v6266
    %v6268 = vpop.f32.mrb[0].mxu0
    %6269 = vmatprep.mubr.bf16.mxu0 0
    %6270 = vmatmul.mubr.bf16.gmra.mrb[0].mxu0 %v5492
    %v6271 = vpop.f32.mrb[0].mxu0
    %v6272 = vadd.f32 0.0, %v6271
    %v6273 = vpop.f32.mrb[0].mxu0
    %v6274 = vpop.f32.mrb[0].mxu0
    %v6275 = vadd.f32 0.0, %v6274
    %v6276 = vpop.f32.mrb[0].mxu0
    %6277 = vmatprep.mubr.bf16.mxu0 0
    %6278 = vmatmul.mubr.bf16.gmra.mrb[0].mxu0 %v6121
    %v6279 = vpop.f32.mrb[0].mxu0
    %v6280 = vadd.f32 0.0, %v6279
    %v6281 = vpop.f32.mrb[0].mxu0
    %v6282 = vpop.f32.mrb[0].mxu0
    %v6283 = vadd.f32 0.0, %v6282
    %v6284 = vpop.f32.mrb[0].mxu0
    %6285 = vmatprep.mubr.bf16.mxu0 0
    %6286 = vmatmul.mubr.bf16.gmra.mrb[0].mxu0 %v6129
    %v6287 = vpop.f32.mrb[0].mxu0
    %v6288 = vadd.f32 0.0, %v6287
    %v6289 = vpop.f32.mrb[0].mxu0
    %v6290 = vpop.f32.mrb[0].mxu0
    %v6291 = vadd.f32 0.0, %v6290
    %v6292 = vpop.f32.mrb[0].mxu0
    %6293 = vmatprep.mubr.bf16.mxu0 0
    %6294 = vmatmul.mubr.bf16.gmra.mrb[0].mxu0 %v6137
    %v6295 = vpop.f32.mrb[0].mxu0
    %v6296 = vadd.f32 0.0, %v6295
    %v6297 = vpop.f32.mrb[0].mxu0
    %v6298 = vpop.f32.mrb[0].mxu0
    %v6299 = vadd.f32 0.0, %v6298
    %v6300 = vpop.f32.mrb[0].mxu0
    %6301 = vdwg.mxu0
    %v6302 = vadd.f32 %v6078, %v6224
    %v6303 = vadd.f32 %v6079, %v6227
    %v6304 = vadd.f32 %v6080, %v6232
    %v6305 = vadd.f32 %v6081, %v6235
    %v6306 = vadd.f32 %v6082, %v6240
    %v6307 = vadd.f32 %v6083, %v6243
    %v6308 = vadd.f32 %v6084, %v6248
    %v6309 = vadd.f32 %v6085, %v6251
    %v6310 = vadd.f32 %v6086, %v6256
    %v6311 = vadd.f32 %v6087, %v6259
    %v6312 = vadd.f32 %v6088, %v6264
    %v6313 = vadd.f32 %v6089, %v6267
    %v6314 = vadd.f32 %v6090, %v6272
    %v6315 = vadd.f32 %v6091, %v6275
    %v6316 = vadd.f32 %v6092, %v6280
    %v6317 = vadd.f32 %v6093, %v6283
    %v6318 = vadd.f32 %v6094, %v6288
    %v6319 = vadd.f32 %v6095, %v6291
    %v6320 = vadd.f32 %v6096, %v6296
    %v6321 = vadd.f32 %v6097, %v6299
    %v6322 = vld [vmem:[%s1892] sm:$0xf]
    %v6323 = vld [vmem:[%s1892 + $0x4] sm:$0xf]
    %v6324 = vld [vmem:[%s1892 + $0x8] sm:$0xf]
    %v6325 = vld [vmem:[%s1892 + $0xc] sm:$0xf]
    %v6326 = vld [vmem:[%s1892 + $0x10] sm:$0xf]
    %v6327 = vld [vmem:[%s1892 + $0x14] sm:$0xf]
    %v6328 = vld [vmem:[%s1892 + $0x18] sm:$0xf]
    %v6329 = vld [vmem:[%s1892 + $0x1c] sm:$0xf]
    %v6330 = vld [vmem:[%s1892 + $0x20] sm:$0xf]
    %v6331 = vld [vmem:[%s1892 + $0x24] sm:$0xf]
    %v6332 = vld [vmem:[%s1892 + $0x28] sm:$0xf]
    %v6333 = vld [vmem:[%s1892 + $0x2c] sm:$0xf]
    %v6334 = vld [vmem:[%s1892 + $0x30] sm:$0xf]
    %v6335 = vld [vmem:[%s1892 + $0x34] sm:$0xf]
    %v6336 = vld [vmem:[%s1892 + $0x38] sm:$0xf]
    %v6337 = vld [vmem:[%s1892 + $0x3c] sm:$0xf]
    %v6338 = vrot.slane %v5913, 1
    %v6339 = vsel %vm606, %v5703, %v6338
    %v6340 = vrot.slane %v5914, 1
    %v6341 = vsel %vm606, %v6338, %v6340
    %v6342 = vrot.slane %v6116, 1
    %v6343 = vsel %vm606, %v6340, %v6342
    %v6363 = vunpack.c.l.b16 %v6322
    %v6364 = vunpack.c.l.b16 %v6323
    %v6365 = vunpack.c.l.b16 %v6324
    %v6366 = vunpack.c.l.b16 %v6325
    %v6367 = vunpack.c.l.b16 %v6326
    %v6368 = vunpack.c.l.b16 %v6327
    %v6369 = vunpack.c.l.b16 %v6328
    %v6370 = vunpack.c.l.b16 %v6329
    %v6371 = vunpack.c.l.b16 %v6330
    %v6372 = vunpack.c.l.b16 %v6331
    %v6373 = vunpack.c.l.b16 %v6332
    %v6374 = vunpack.c.l.b16 %v6333
    %v6375 = vunpack.c.l.b16 %v6334
    %v6376 = vunpack.c.l.b16 %v6335
    %v6377 = vunpack.c.l.b16 %v6336
    %v6378 = vunpack.c.l.b16 %v6337
    %v6379 = vpack.c.b16 %v6364, %v6363
    %v6380 = vpack.c.b16 %v6366, %v6365
    %v6381 = vpack.c.b16 %v6368, %v6367
    %v6382 = vpack.c.b16 %v6370, %v6369
    %v6383 = vpack.c.b16 %v6372, %v6371
    %v6384 = vpack.c.b16 %v6374, %v6373
    %v6385 = vpack.c.b16 %v6376, %v6375
    %v6386 = vpack.c.b16 %v6378, %v6377
    %6395 = vmatprep.subr.bf16.mxu0 0
    %6396 = vmatpush1.bf16.msra.mxu0 %v6379
    %6397 = vmatprep.subr.bf16.mxu0 0
    %6398 = vmatpush1.bf16.msra.mxu0 %v6380
    %6399 = vmatprep.subr.bf16.mxu0 0
    %6400 = vmatpush1.bf16.msra.mxu0 %v6381
    %6401 = vmatprep.subr.bf16.mxu0 0
    %6402 = vmatpush1.bf16.msra.mxu0 %v6382
    %6403 = vmatprep.subr.bf16.mxu0 0
    %6404 = vmatpush1.bf16.msra.mxu0 %v6383
    %6405 = vmatprep.subr.bf16.mxu0 0
    %6406 = vmatpush1.bf16.msra.mxu0 %v6384
    %6407 = vmatprep.subr.bf16.mxu0 0
    %6408 = vmatpush1.bf16.msra.mxu0 %v6385
    %6409 = vmatprep.subr.bf16.mxu0 0
    %6410 = vmatpush1.bf16.msra.mxu0 %v6386
    %6411 = vmatprep.subr.bf16.mxu0 0
    %6412 = vmatpush1.bf16.msra.mxu0 0
    %6413 = vmatprep.subr.bf16.mxu0 0
    %6414 = vmatpush1.bf16.msra.mxu0 0
    %6415 = vmatprep.subr.bf16.mxu0 0
    %6416 = vmatpush1.bf16.msra.mxu0 0
    %6417 = vmatprep.subr.bf16.mxu0 0
    %6418 = vmatpush1.bf16.msra.mxu0 0
    %6419 = vmatprep.subr.bf16.mxu0 0
    %6420 = vmatpush1.bf16.msra.mxu0 0
    %6421 = vmatprep.subr.bf16.mxu0 0
    %6422 = vmatpush1.bf16.msra.mxu0 0
    %6423 = vmatprep.subr.bf16.mxu0 0
    %6424 = vmatpush1.bf16.msra.mxu0 0
    %6425 = vmatprep.subr.bf16.mxu0 0
    %6426 = vmatpush1.bf16.msra.mxu0 0
    %6427 = vmatprep.mubr.bf16.mxu0 0
    %6428 = vmatmul.mubr.bf16.gmra.mrb[0].mxu0 %v5052
    %v6429 = vpop.f32.mrb[0].mxu0
    %v6430 = vadd.f32 0.0, %v6429
    %v6431 = vpop.f32.mrb[0].mxu0
    %v6432 = vpop.f32.mrb[0].mxu0
    %v6433 = vadd.f32 0.0, %v6432
    %v6434 = vpop.f32.mrb[0].mxu0
    %6435 = vmatprep.mubr.bf16.mxu0 0
    %6436 = vmatmul.mubr.bf16.gmra.mrb[0].mxu0 %v5054
    %v6437 = vpop.f32.mrb[0].mxu0
    %v6438 = vadd.f32 0.0, %v6437
    %v6439 = vpop.f32.mrb[0].mxu0
    %v6440 = vpop.f32.mrb[0].mxu0
    %v6441 = vadd.f32 0.0, %v6440
    %v6442 = vpop.f32.mrb[0].mxu0
    %6443 = vmatprep.mubr.bf16.mxu0 0
    %6444 = vmatmul.mubr.bf16.gmra.mrb[0].mxu0 %v5056
    %v6445 = vpop.f32.mrb[0].mxu0
    %v6446 = vadd.f32 0.0, %v6445
    %v6447 = vpop.f32.mrb[0].mxu0
    %v6448 = vpop.f32.mrb[0].mxu0
    %v6449 = vadd.f32 0.0, %v6448
    %v6450 = vpop.f32.mrb[0].mxu0
    %6451 = vmatprep.mubr.bf16.mxu0 0
    %6452 = vmatmul.mubr.bf16.gmra.mrb[0].mxu0 %v5058
    %v6453 = vpop.f32.mrb[0].mxu0
    %v6454 = vadd.f32 0.0, %v6453
    %v6455 = vpop.f32.mrb[0].mxu0
    %v6456 = vpop.f32.mrb[0].mxu0
    %v6457 = vadd.f32 0.0, %v6456
    %v6458 = vpop.f32.mrb[0].mxu0
    %6459 = vmatprep.mubr.bf16.mxu0 0
    %6460 = vmatmul.mubr.bf16.gmra.mrb[0].mxu0 %v5060
    %v6461 = vpop.f32.mrb[0].mxu0
    %v6462 = vadd.f32 0.0, %v6461
    %v6463 = vpop.f32.mrb[0].mxu0
    %v6464 = vpop.f32.mrb[0].mxu0
    %v6465 = vadd.f32 0.0, %v6464
    %v6466 = vpop.f32.mrb[0].mxu0
    %6467 = vmatprep.mubr.bf16.mxu0 0
    %6468 = vmatmul.mubr.bf16.gmra.mrb[0].mxu0 %v5702
    %v6469 = vpop.f32.mrb[0].mxu0
    %v6470 = vadd.f32 0.0, %v6469
    %v6471 = vpop.f32.mrb[0].mxu0
    %v6472 = vpop.f32.mrb[0].mxu0
    %v6473 = vadd.f32 0.0, %v6472
    %v6474 = vpop.f32.mrb[0].mxu0
    %6475 = vmatprep.mubr.bf16.mxu0 0
    %6476 = vmatmul.mubr.bf16.gmra.mrb[0].mxu0 %v5704
    %v6477 = vpop.f32.mrb[0].mxu0
    %v6478 = vadd.f32 0.0, %v6477
    %v6479 = vpop.f32.mrb[0].mxu0
    %v6480 = vpop.f32.mrb[0].mxu0
    %v6481 = vadd.f32 0.0, %v6480
    %v6482 = vpop.f32.mrb[0].mxu0
    %6483 = vmatprep.mubr.bf16.mxu0 0
    %6484 = vmatmul.mubr.bf16.gmra.mrb[0].mxu0 %v6339
    %v6485 = vpop.f32.mrb[0].mxu0
    %v6486 = vadd.f32 0.0, %v6485
    %v6487 = vpop.f32.mrb[0].mxu0
    %v6488 = vpop.f32.mrb[0].mxu0
    %v6489 = vadd.f32 0.0, %v6488
    %v6490 = vpop.f32.mrb[0].mxu0
    %6491 = vmatprep.mubr.bf16.mxu0 0
    %6492 = vmatmul.mubr.bf16.gmra.mrb[0].mxu0 %v6341
    %v6493 = vpop.f32.mrb[0].mxu0
    %v6494 = vadd.f32 0.0, %v6493
    %v6495 = vpop.f32.mrb[0].mxu0
    %v6496 = vpop.f32.mrb[0].mxu0
    %v6497 = vadd.f32 0.0, %v6496
    %v6498 = vpop.f32.mrb[0].mxu0
    %6499 = vmatprep.mubr.bf16.mxu0 0
    %6500 = vmatmul.mubr.bf16.gmra.mrb[0].mxu0 %v6343
    %v6501 = vpop.f32.mrb[0].mxu0
    %v6502 = vadd.f32 0.0, %v6501
    %v6503 = vpop.f32.mrb[0].mxu0
    %v6504 = vpop.f32.mrb[0].mxu0
    %v6505 = vadd.f32 0.0, %v6504
    %v6506 = vpop.f32.mrb[0].mxu0
    %6507 = vdwg.mxu0
    %v6508 = vadd.f32 %v6302, %v6430
    %v6509 = vadd.f32 %v6303, %v6433
    %v6510 = vadd.f32 %v6304, %v6438
    %v6511 = vadd.f32 %v6305, %v6441
    %v6512 = vadd.f32 %v6306, %v6446
    %v6513 = vadd.f32 %v6307, %v6449
    %v6514 = vadd.f32 %v6308, %v6454
    %v6515 = vadd.f32 %v6309, %v6457
    %v6516 = vadd.f32 %v6310, %v6462
    %v6517 = vadd.f32 %v6311, %v6465
    %v6518 = vadd.f32 %v6312, %v6470
    %v6519 = vadd.f32 %v6313, %v6473
    %v6520 = vadd.f32 %v6314, %v6478
    %v6521 = vadd.f32 %v6315, %v6481
    %v6522 = vadd.f32 %v6316, %v6486
    %v6523 = vadd.f32 %v6317, %v6489
    %v6524 = vadd.f32 %v6318, %v6494
    %v6525 = vadd.f32 %v6319, %v6497
    %v6526 = vadd.f32 %v6320, %v6502
    %v6527 = vadd.f32 %v6321, %v6505
    %6528 = vst [vmem:[#allocation7 + $0x140] sm:$0xff] %v6508
    %6529 = vst [vmem:[#allocation7 + $0x148] sm:$0xff] %v6509
    %6530 = vst [vmem:[#allocation7 + $0x150] sm:$0xff] %v6510
    %6531 = vst [vmem:[#allocation7 + $0x158] sm:$0xff] %v6511
    %6532 = vst [vmem:[#allocation7 + $0x160] sm:$0xff] %v6512
    %6533 = vst [vmem:[#allocation7 + $0x168] sm:$0xff] %v6513
    %6534 = vst [vmem:[#allocation7 + $0x170] sm:$0xff] %v6514
    %6535 = vst [vmem:[#allocation7 + $0x178] sm:$0xff] %v6515
    %6536 = vst [vmem:[#allocation7 + $0x180] sm:$0xff] %v6516
    %6537 = vst [vmem:[#allocation7 + $0x188] sm:$0xff] %v6517
    %6538 = vst [vmem:[#allocation7 + $0x190] sm:$0xff] %v6518
    %6539 = vst [vmem:[#allocation7 + $0x198] sm:$0xff] %v6519
    %6540 = vst [vmem:[#allocation7 + $0x1a0] sm:$0xff] %v6520
    %6541 = vst [vmem:[#allocation7 + $0x1a8] sm:$0xff] %v6521
    %6542 = vst [vmem:[#allocation7 + $0x1b0] sm:$0xff] %v6522
    %6543 = vst [vmem:[#allocation7 + $0x1b8] sm:$0xff] %v6523
    %6544 = vst [vmem:[#allocation7 + $0x1c0] sm:$0xff] %v6524
    %6545 = vst [vmem:[#allocation7 + $0x1c8] sm:$0xff] %v6525
    %6546 = vst [vmem:[#allocation7 + $0x1d0] sm:$0xff] %v6526
    %6547 = vst [vmem:[#allocation7 + $0x1d8] sm:$0xff] %v6527
    %v6548 = vadd.s32 %v2120, 320
    %v6549 = vadd.s32 %v2121, 320
    %v6550 = vadd.s32 %v2122, 320
    %v6551 = vadd.s32 %v2123, 320
    %v6552 = vadd.s32 %v2124, 320
    %v6553 = vadd.s32 %v2125, 320
    %v6554 = vadd.s32 %v2126, 320
    %v6555 = vadd.s32 %v2127, 320
    %v6556 = vadd.s32 %v2128, 320
    %v6557 = vadd.s32 %v2129, 320
    %v6558 = vadd.s32 %v2130, 320
    %v6559 = vadd.s32 %v2131, 320
    %v6560 = vadd.s32 %v2132, 320
    %v6561 = vadd.s32 %v2133, 320
    %v6562 = vadd.s32 %v2134, 320
    %v6563 = vadd.s32 %v2135, 320
    %v6564 = vadd.s32 %v2136, 320
    %v6565 = vadd.s32 %v2137, 320
    %v6566 = vadd.s32 %v2138, 320
    %v6567 = vadd.s32 %v2139, 320
    %v6568 = vand.u32 %v6548, 31
    %v6569 = vand.u32 %v6549, 31
    %v6570 = vand.u32 %v6550, 31
    %v6571 = vand.u32 %v6551, 31
    %v6572 = vand.u32 %v6552, 31
    %v6573 = vand.u32 %v6553, 31
    %v6574 = vand.u32 %v6554, 31
    %v6575 = vand.u32 %v6555, 31
    %v6576 = vand.u32 %v6556, 31
    %v6577 = vand.u32 %v6557, 31
    %v6578 = vand.u32 %v6558, 31
    %v6579 = vand.u32 %v6559, 31
    %v6580 = vand.u32 %v6560, 31
    %v6581 = vand.u32 %v6561, 31
    %v6582 = vand.u32 %v6562, 31
    %v6583 = vand.u32 %v6563, 31
    %v6584 = vand.u32 %v6564, 31
    %v6585 = vand.u32 %v6565, 31
    %v6586 = vand.u32 %v6566, 31
    %v6587 = vand.u32 %v6567, 31
    %vm6588 = vcmp.lt.s32.totalorder %v6568, 25
    %vm6589 = vcmp.lt.s32.totalorder %v6569, 25
    %vm6590 = vcmp.lt.s32.totalorder %v6570, 25
    %vm6591 = vcmp.lt.s32.totalorder %v6571, 25
    %vm6592 = vcmp.lt.s32.totalorder %v6572, 25
    %vm6593 = vcmp.lt.s32.totalorder %v6573, 25
    %vm6594 = vcmp.lt.s32.totalorder %v6574, 25
    %vm6595 = vcmp.lt.s32.totalorder %v6575, 25
    %vm6596 = vcmp.lt.s32.totalorder %v6576, 25
    %vm6597 = vcmp.lt.s32.totalorder %v6577, 25
    %vm6598 = vcmp.lt.s32.totalorder %v6578, 25
    %vm6599 = vcmp.lt.s32.totalorder %v6579, 25
    %vm6600 = vcmp.lt.s32.totalorder %v6580, 25
    %vm6601 = vcmp.lt.s32.totalorder %v6581, 25
    %vm6602 = vcmp.lt.s32.totalorder %v6582, 25
    %vm6603 = vcmp.lt.s32.totalorder %v6583, 25
    %vm6604 = vcmp.lt.s32.totalorder %v6584, 25
    %vm6605 = vcmp.lt.s32.totalorder %v6585, 25
    %vm6606 = vcmp.lt.s32.totalorder %v6586, 25
    %vm6607 = vcmp.lt.s32.totalorder %v6587, 25
    %v6608 = vsel %vm6588, %v6508, 0.0
    %v6609 = vsel %vm6589, %v6509, 0.0
    %v6610 = vsel %vm6590, %v6510, 0.0
    %v6611 = vsel %vm6591, %v6511, 0.0
    %v6612 = vsel %vm6592, %v6512, 0.0
    %v6613 = vsel %vm6593, %v6513, 0.0
    %v6614 = vsel %vm6594, %v6514, 0.0
    %v6615 = vsel %vm6595, %v6515, 0.0
    %v6616 = vsel %vm6596, %v6516, 0.0
    %v6617 = vsel %vm6597, %v6517, 0.0
    %v6618 = vsel %vm6598, %v6518, 0.0
    %v6619 = vsel %vm6599, %v6519, 0.0
    %v6620 = vsel %vm6600, %v6520, 0.0
    %v6621 = vsel %vm6601, %v6521, 0.0
    %v6622 = vsel %vm6602, %v6522, 0.0
    %v6623 = vsel %vm6603, %v6523, 0.0
    %v6624 = vsel %vm6604, %v6524, 0.0
    %v6625 = vsel %vm6605, %v6525, 0.0
    %v6626 = vsel %vm6606, %v6526, 0.0
    %v6627 = vsel %vm6607, %v6527, 0.0
    %v6628 = vadd.f32 %v6608, %v6609
    %v6629 = vadd.f32 %v6628, %v6610
    %v6630 = vadd.f32 %v6629, %v6611
    %v6631 = vadd.f32 %v6630, %v6612
    %v6632 = vadd.f32 %v6631, %v6613
    %v6633 = vadd.f32 %v6632, %v6614
    %v6634 = vadd.f32 %v6633, %v6615
    %v6635 = vadd.f32 %v6634, %v6616
    %v6636 = vadd.f32 %v6635, %v6617
    %v6637 = vadd.f32 %v6636, %v6618
    %v6638 = vadd.f32 %v6637, %v6619
    %v6639 = vadd.f32 %v6638, %v6620
    %v6640 = vadd.f32 %v6639, %v6621
    %v6641 = vadd.f32 %v6640, %v6622
    %v6642 = vadd.f32 %v6641, %v6623
    %v6643 = vadd.f32 %v6642, %v6624
    %v6644 = vadd.f32 %v6643, %v6625
    %v6645 = vadd.f32 %v6644, %v6626
    %v6646 = vadd.f32 %v6645, %v6627
    %v6647 = vrot.slane %v6646, 4
    %v6648 = vadd.f32 %v6646, %v6647
    %v6649 = vrot.slane %v6648, 2
    %v6650 = vadd.f32 %v6648, %v6649
    %v6651 = vrot.slane %v6650, 1
    %v6652 = vadd.f32 %v6650, %v6651
    %v6653 = vadd.f32 %v4439, %v6652
    %v6654 = vmul.f32 %v6608, %v6608
    %v6655 = vmul.f32 %v6609, %v6609
    %v6656 = vmul.f32 %v6610, %v6610
    %v6657 = vmul.f32 %v6611, %v6611
    %v6658 = vmul.f32 %v6612, %v6612
    %v6659 = vmul.f32 %v6613, %v6613
    %v6660 = vmul.f32 %v6614, %v6614
    %v6661 = vmul.f32 %v6615, %v6615
    %v6662 = vmul.f32 %v6616, %v6616
    %v6663 = vmul.f32 %v6617, %v6617
    %v6664 = vmul.f32 %v6618, %v6618
    %v6665 = vmul.f32 %v6619, %v6619
    %v6666 = vmul.f32 %v6620, %v6620
    %v6667 = vmul.f32 %v6621, %v6621
    %v6668 = vmul.f32 %v6622, %v6622
    %v6669 = vmul.f32 %v6623, %v6623
    %v6670 = vmul.f32 %v6624, %v6624
    %v6671 = vmul.f32 %v6625, %v6625
    %v6672 = vmul.f32 %v6626, %v6626
    %v6673 = vmul.f32 %v6627, %v6627
    %v6674 = vadd.f32 %v6654, %v6655
    %v6675 = vadd.f32 %v6674, %v6656
    %v6676 = vadd.f32 %v6675, %v6657
    %v6677 = vadd.f32 %v6676, %v6658
    %v6678 = vadd.f32 %v6677, %v6659
    %v6679 = vadd.f32 %v6678, %v6660
    %v6680 = vadd.f32 %v6679, %v6661
    %v6681 = vadd.f32 %v6680, %v6662
    %v6682 = vadd.f32 %v6681, %v6663
    %v6683 = vadd.f32 %v6682, %v6664
    %v6684 = vadd.f32 %v6683, %v6665
    %v6685 = vadd.f32 %v6684, %v6666
    %v6686 = vadd.f32 %v6685, %v6667
    %v6687 = vadd.f32 %v6686, %v6668
    %v6688 = vadd.f32 %v6687, %v6669
    %v6689 = vadd.f32 %v6688, %v6670
    %v6690 = vadd.f32 %v6689, %v6671
    %v6691 = vadd.f32 %v6690, %v6672
    %v6692 = vadd.f32 %v6691, %v6673
    %v6693 = vrot.slane %v6692, 4
    %v6694 = vadd.f32 %v6692, %v6693
    %v6695 = vrot.slane %v6694, 2
    %v6696 = vadd.f32 %v6694, %v6695
    %v6697 = vrot.slane %v6696, 1
    %v6698 = vadd.f32 %v6696, %v6697
    %v6699 = vadd.f32 %v4485, %v6698
    %v6700 = vld [vmem:[#allocation2 + $0xf0] sm:$0xf]
    %v6701 = vld [vmem:[#allocation2 + $0xf4] sm:$0xf]
    %v6702 = vld [vmem:[#allocation2 + $0xf8] sm:$0xf]
    %v6703 = vld [vmem:[#allocation2 + $0xfc] sm:$0xf]
    %v6704 = vld [vmem:[#allocation2 + $0x100] sm:$0xf]
    %v6705 = vld [vmem:[#allocation2 + $0x104] sm:$0xf]
    %v6706 = vld [vmem:[#allocation2 + $0x108] sm:$0xf]
    %v6707 = vld [vmem:[#allocation2 + $0x10c] sm:$0xf]
    %v6708 = vld [vmem:[#allocation2 + $0x110] sm:$0xf]
    %v6709 = vld [vmem:[#allocation2 + $0x114] sm:$0xf]
    %v6710 = vld [vmem:[#allocation2 + $0x118] sm:$0xf]
    %v6711 = vld [vmem:[#allocation2 + $0x11c] sm:$0xf]
    %v6712 = vld [vmem:[#allocation2 + $0x120] sm:$0xf]
    %v6713 = vld [vmem:[#allocation2 + $0x124] sm:$0xf]
    %v6714 = vld [vmem:[#allocation2 + $0x128] sm:$0xf]
    %v6715 = vld [vmem:[#allocation2 + $0x12c] sm:$0xf]
    %v6716 = vld [vmem:[#allocation2 + $0x130] sm:$0xf]
    %v6717 = vld [vmem:[#allocation2 + $0x134] sm:$0xf]
    %v6718 = vld [vmem:[#allocation2 + $0x138] sm:$0xf]
    %v6719 = vld [vmem:[#allocation2 + $0x13c] sm:$0xf]
    %v6720 = vld [vmem:[#allocation2 + $0x140] sm:$0xf]
    %v6721 = vld [vmem:[#allocation2 + $0x144] sm:$0xf]
    %v6722 = vld [vmem:[#allocation2 + $0x148] sm:$0xf]
    %v6723 = vld [vmem:[#allocation2 + $0x14c] sm:$0xf]
    %v6724 = vld [vmem:[#allocation2 + $0x150] sm:$0xf]
    %v6725 = vld [vmem:[#allocation2 + $0x154] sm:$0xf]
    %v6726 = vld [vmem:[#allocation2 + $0x158] sm:$0xf]
    %v6727 = vld [vmem:[#allocation2 + $0x15c] sm:$0xf]
    %v6728 = vld [vmem:[#allocation2 + $0x160] sm:$0x1]
    %v6729 = vld [vmem:[#allocation5] sm:$0xf]
    %v6730 = vld [vmem:[#allocation5 + $0x4] sm:$0xf]
    %v6731 = vld [vmem:[#allocation5 + $0x8] sm:$0xf]
    %v6732 = vld [vmem:[#allocation5 + $0xc] sm:$0xf]
    %v6733 = vld [vmem:[#allocation5 + $0x10] sm:$0xf]
    %v6734 = vld [vmem:[#allocation5 + $0x14] sm:$0xf]
    %v6735 = vld [vmem:[#allocation5 + $0x18] sm:$0xf]
    %v6736 = vld [vmem:[#allocation5 + $0x1c] sm:$0xf]
    %v6737 = vld [vmem:[#allocation5 + $0x20] sm:$0xf]
    %v6738 = vld [vmem:[#allocation5 + $0x24] sm:$0xf]
    %v6739 = vld [vmem:[#allocation5 + $0x28] sm:$0xf]
    %v6740 = vld [vmem:[#allocation5 + $0x2c] sm:$0xf]
    %v6741 = vld [vmem:[#allocation5 + $0x30] sm:$0xf]
    %v6742 = vld [vmem:[#allocation5 + $0x34] sm:$0xf]
    %v6743 = vld [vmem:[#allocation5 + $0x38] sm:$0xf]
    %v6744 = vld [vmem:[#allocation5 + $0x3c] sm:$0xf]
    %v6745 = vld [vmem:[%s92] sm:$0xf]
    %v6746 = vld [vmem:[%s92 + $0x4] sm:$0xf]
    %v6747 = vld [vmem:[%s92 + $0x8] sm:$0xf]
    %v6748 = vld [vmem:[%s92 + $0xc] sm:$0xf]
    %v6749 = vld [vmem:[%s92 + $0x10] sm:$0xf]
    %v6750 = vld [vmem:[%s92 + $0x14] sm:$0xf]
    %v6751 = vld [vmem:[%s92 + $0x18] sm:$0xf]
    %v6752 = vld [vmem:[%s92 + $0x1c] sm:$0xf]
    %v6753 = vld [vmem:[%s92 + $0x20] sm:$0xf]
    %v6754 = vld [vmem:[%s92 + $0x24] sm:$0xf]
    %v6755 = vld [vmem:[%s92 + $0x28] sm:$0xf]
    %v6756 = vld [vmem:[%s92 + $0x2c] sm:$0xf]
    %v6757 = vld [vmem:[%s92 + $0x30] sm:$0xf]
    %v6758 = vld [vmem:[%s92 + $0x34] sm:$0xf]
    %v6759 = vld [vmem:[%s92 + $0x38] sm:$0xf]
    %v6760 = vld [vmem:[%s92 + $0x3c] sm:$0xf]
    %v6782 = vunpack.c.l.b16 %v6700
    %v6783 = vunpack.c.l.b16 %v6701
    %v6784 = vunpack.c.l.b16 %v6702
    %v6785 = vunpack.c.l.b16 %v6703
    %v6786 = vunpack.c.l.b16 %v6704
    %v6787 = vunpack.c.l.b16 %v6705
    %v6788 = vunpack.c.l.b16 %v6706
    %v6789 = vunpack.c.l.b16 %v6707
    %v6790 = vunpack.c.l.b16 %v6708
    %v6791 = vunpack.c.l.b16 %v6709
    %v6792 = vunpack.c.l.b16 %v6710
    %v6793 = vunpack.c.l.b16 %v6711
    %v6794 = vunpack.c.l.b16 %v6712
    %v6795 = vunpack.c.l.b16 %v6713
    %v6796 = vunpack.c.l.b16 %v6714
    %v6797 = vunpack.c.l.b16 %v6715
    %v6798 = vunpack.c.l.b16 %v6716
    %v6799 = vunpack.c.l.b16 %v6717
    %v6800 = vunpack.c.l.b16 %v6718
    %v6801 = vunpack.c.l.b16 %v6719
    %v6802 = vunpack.c.l.b16 %v6720
    %v6803 = vpack.c.b16 %v6783, %v6782
    %v6804 = vpack.c.b16 %v6785, %v6784
    %v6805 = vpack.c.b16 %v6787, %v6786
    %v6806 = vpack.c.b16 %v6789, %v6788
    %v6807 = vpack.c.b16 %v6791, %v6790
    %v6808 = vpack.c.b16 %v6793, %v6792
    %v6809 = vpack.c.b16 %v6795, %v6794
    %v6810 = vpack.c.b16 %v6797, %v6796
    %v6811 = vpack.c.b16 %v6799, %v6798
    %v6812 = vpack.c.b16 %v6801, %v6800
    %v6813 = vpack.c.b16 %v6802, %v6802
    %v6815 = vshrl.u32 %v6803, 16
    %v6817 = vshll.u32 %v6803, 16
    %v6819 = vrot.slane %v6817, 1
    %v6820 = vor.u32 %v6815, %v6819
    %v6822 = vshll.u32 %v6804, 16
    %v6824 = vrot.slane %v6822, 1
    %v6825 = vsel %vm162, %v6820, %v6824
    %v6826 = vshrl.u32 %v6804, 16
    %v6828 = vor.u32 %v6826, %v6824
    %v6830 = vshll.u32 %v6805, 16
    %v6832 = vrot.slane %v6830, 1
    %v6833 = vsel %vm162, %v6828, %v6832
    %v6834 = vshrl.u32 %v6805, 16
    %v6836 = vor.u32 %v6834, %v6832
    %v6838 = vshll.u32 %v6806, 16
    %v6840 = vrot.slane %v6838, 1
    %v6841 = vsel %vm162, %v6836, %v6840
    %v6842 = vshrl.u32 %v6806, 16
    %v6844 = vor.u32 %v6842, %v6840
    %v6846 = vshll.u32 %v6807, 16
    %v6848 = vrot.slane %v6846, 1
    %v6849 = vsel %vm162, %v6844, %v6848
    %v6850 = vshrl.u32 %v6807, 16
    %v6852 = vor.u32 %v6850, %v6848
    %v6854 = vshll.u32 %v6808, 16
    %v6856 = vrot.slane %v6854, 1
    %v6857 = vsel %vm162, %v6852, %v6856
    %v6858 = vshrl.u32 %v6808, 16
    %v6860 = vor.u32 %v6858, %v6856
    %v6862 = vshll.u32 %v6809, 16
    %v6864 = vrot.slane %v6862, 1
    %v6865 = vsel %vm162, %v6860, %v6864
    %v6866 = vshrl.u32 %v6809, 16
    %v6868 = vor.u32 %v6866, %v6864
    %v6870 = vshll.u32 %v6810, 16
    %v6872 = vrot.slane %v6870, 1
    %v6873 = vsel %vm162, %v6868, %v6872
    %v6874 = vshrl.u32 %v6810, 16
    %v6876 = vor.u32 %v6874, %v6872
    %v6878 = vshll.u32 %v6811, 16
    %v6880 = vrot.slane %v6878, 1
    %v6881 = vsel %vm162, %v6876, %v6880
    %v6882 = vshrl.u32 %v6811, 16
    %v6884 = vor.u32 %v6882, %v6880
    %v6886 = vshll.u32 %v6812, 16
    %v6888 = vrot.slane %v6886, 1
    %v6889 = vsel %vm162, %v6884, %v6888
    %v6890 = vshrl.u32 %v6812, 16
    %v6892 = vor.u32 %v6890, %v6888
    %v6894 = vshll.u32 %v6813, 16
    %v6896 = vrot.slane %v6894, 1
    %v6897 = vsel %vm162, %v6892, %v6896
    %v6924 = vunpack.c.l.b16 %v6745
    %v6925 = vunpack.c.l.b16 %v6746
    %v6926 = vunpack.c.l.b16 %v6747
    %v6927 = vunpack.c.l.b16 %v6748
    %v6928 = vunpack.c.l.b16 %v6749
    %v6929 = vunpack.c.l.b16 %v6750
    %v6930 = vunpack.c.l.b16 %v6751
    %v6931 = vunpack.c.l.b16 %v6752
    %v6932 = vunpack.c.l.b16 %v6753
    %v6933 = vunpack.c.l.b16 %v6754
    %v6934 = vunpack.c.l.b16 %v6755
    %v6935 = vunpack.c.l.b16 %v6756
    %v6936 = vunpack.c.l.b16 %v6757
    %v6937 = vunpack.c.l.b16 %v6758
    %v6938 = vunpack.c.l.b16 %v6759
    %v6939 = vunpack.c.l.b16 %v6760
    %v6940 = vpack.c.b16 %v6925, %v6924
    %v6941 = vpack.c.b16 %v6927, %v6926
    %v6942 = vpack.c.b16 %v6929, %v6928
    %v6943 = vpack.c.b16 %v6931, %v6930
    %v6944 = vpack.c.b16 %v6933, %v6932
    %v6945 = vpack.c.b16 %v6935, %v6934
    %v6946 = vpack.c.b16 %v6937, %v6936
    %v6947 = vpack.c.b16 %v6939, %v6938
    %6956 = vmatprep.subr.bf16.mxu0 0
    %6957 = vmatpush1.bf16.msra.mxu0 %v6940
    %6958 = vmatprep.subr.bf16.mxu0 0
    %6959 = vmatpush1.bf16.msra.mxu0 %v6941
    %6960 = vmatprep.subr.bf16.mxu0 0
    %6961 = vmatpush1.bf16.msra.mxu0 %v6942
    %6962 = vmatprep.subr.bf16.mxu0 0
    %6963 = vmatpush1.bf16.msra.mxu0 %v6943
    %6964 = vmatprep.subr.bf16.mxu0 0
    %6965 = vmatpush1.bf16.msra.mxu0 %v6944
    %6966 = vmatprep.subr.bf16.mxu0 0
    %6967 = vmatpush1.bf16.msra.mxu0 %v6945
    %6968 = vmatprep.subr.bf16.mxu0 0
    %6969 = vmatpush1.bf16.msra.mxu0 %v6946
    %6970 = vmatprep.subr.bf16.mxu0 0
    %6971 = vmatpush1.bf16.msra.mxu0 %v6947
    %6972 = vmatprep.subr.bf16.mxu0 0
    %6973 = vmatpush1.bf16.msra.mxu0 0
    %6974 = vmatprep.subr.bf16.mxu0 0
    %6975 = vmatpush1.bf16.msra.mxu0 0
    %6976 = vmatprep.subr.bf16.mxu0 0
    %6977 = vmatpush1.bf16.msra.mxu0 0
    %6978 = vmatprep.subr.bf16.mxu0 0
    %6979 = vmatpush1.bf16.msra.mxu0 0
    %6980 = vmatprep.subr.bf16.mxu0 0
    %6981 = vmatpush1.bf16.msra.mxu0 0
    %6982 = vmatprep.subr.bf16.mxu0 0
    %6983 = vmatpush1.bf16.msra.mxu0 0
    %6984 = vmatprep.subr.bf16.mxu0 0
    %6985 = vmatpush1.bf16.msra.mxu0 0
    %6986 = vmatprep.subr.bf16.mxu0 0
    %6987 = vmatpush1.bf16.msra.mxu0 0
    %6988 = vmatprep.mubr.bf16.mxu0 0
    %6989 = vmatmul.mubr.bf16.gmra.mrb[0].mxu0 %v6825
    %v6990 = vpop.f32.mrb[0].mxu0
    %v6991 = vadd.f32 0.0, %v6990
    %v6992 = vpop.f32.mrb[0].mxu0
    %v6993 = vpop.f32.mrb[0].mxu0
    %v6994 = vadd.f32 0.0, %v6993
    %v6995 = vpop.f32.mrb[0].mxu0
    %6996 = vmatprep.mubr.bf16.mxu0 0
    %6997 = vmatmul.mubr.bf16.gmra.mrb[0].mxu0 %v6833
    %v6998 = vpop.f32.mrb[0].mxu0
    %v6999 = vadd.f32 0.0, %v6998
    %v7000 = vpop.f32.mrb[0].mxu0
    %v7001 = vpop.f32.mrb[0].mxu0
    %v7002 = vadd.f32 0.0, %v7001
    %v7003 = vpop.f32.mrb[0].mxu0
    %7004 = vmatprep.mubr.bf16.mxu0 0
    %7005 = vmatmul.mubr.bf16.gmra.mrb[0].mxu0 %v6841
    %v7006 = vpop.f32.mrb[0].mxu0
    %v7007 = vadd.f32 0.0, %v7006
    %v7008 = vpop.f32.mrb[0].mxu0
    %v7009 = vpop.f32.mrb[0].mxu0
    %v7010 = vadd.f32 0.0, %v7009
    %v7011 = vpop.f32.mrb[0].mxu0
    %7012 = vmatprep.mubr.bf16.mxu0 0
    %7013 = vmatmul.mubr.bf16.gmra.mrb[0].mxu0 %v6849
    %v7014 = vpop.f32.mrb[0].mxu0
    %v7015 = vadd.f32 0.0, %v7014
    %v7016 = vpop.f32.mrb[0].mxu0
    %v7017 = vpop.f32.mrb[0].mxu0
    %v7018 = vadd.f32 0.0, %v7017
    %v7019 = vpop.f32.mrb[0].mxu0
    %7020 = vmatprep.mubr.bf16.mxu0 0
    %7021 = vmatmul.mubr.bf16.gmra.mrb[0].mxu0 %v6857
    %v7022 = vpop.f32.mrb[0].mxu0
    %v7023 = vadd.f32 0.0, %v7022
    %v7024 = vpop.f32.mrb[0].mxu0
    %v7025 = vpop.f32.mrb[0].mxu0
    %v7026 = vadd.f32 0.0, %v7025
    %v7027 = vpop.f32.mrb[0].mxu0
    %7028 = vmatprep.mubr.bf16.mxu0 0
    %7029 = vmatmul.mubr.bf16.gmra.mrb[0].mxu0 %v6865
    %v7030 = vpop.f32.mrb[0].mxu0
    %v7031 = vadd.f32 0.0, %v7030
    %v7032 = vpop.f32.mrb[0].mxu0
    %v7033 = vpop.f32.mrb[0].mxu0
    %v7034 = vadd.f32 0.0, %v7033
    %v7035 = vpop.f32.mrb[0].mxu0
    %7036 = vmatprep.mubr.bf16.mxu0 0
    %7037 = vmatmul.mubr.bf16.gmra.mrb[0].mxu0 %v6873
    %v7038 = vpop.f32.mrb[0].mxu0
    %v7039 = vadd.f32 0.0, %v7038
    %v7040 = vpop.f32.mrb[0].mxu0
    %v7041 = vpop.f32.mrb[0].mxu0
    %v7042 = vadd.f32 0.0, %v7041
    %v7043 = vpop.f32.mrb[0].mxu0
    %7044 = vmatprep.mubr.bf16.mxu0 0
    %7045 = vmatmul.mubr.bf16.gmra.mrb[0].mxu0 %v6881
    %v7046 = vpop.f32.mrb[0].mxu0
    %v7047 = vadd.f32 0.0, %v7046
    %v7048 = vpop.f32.mrb[0].mxu0
    %v7049 = vpop.f32.mrb[0].mxu0
    %v7050 = vadd.f32 0.0, %v7049
    %v7051 = vpop.f32.mrb[0].mxu0
    %7052 = vmatprep.mubr.bf16.mxu0 0
    %7053 = vmatmul.mubr.bf16.gmra.mrb[0].mxu0 %v6889
    %v7054 = vpop.f32.mrb[0].mxu0
    %v7055 = vadd.f32 0.0, %v7054
    %v7056 = vpop.f32.mrb[0].mxu0
    %v7057 = vpop.f32.mrb[0].mxu0
    %v7058 = vadd.f32 0.0, %v7057
    %v7059 = vpop.f32.mrb[0].mxu0
    %7060 = vmatprep.mubr.bf16.mxu0 0
    %7061 = vmatmul.mubr.bf16.gmra.mrb[0].mxu0 %v6897
    %v7062 = vpop.f32.mrb[0].mxu0
    %v7063 = vadd.f32 0.0, %v7062
    %v7064 = vpop.f32.mrb[0].mxu0
    %v7065 = vpop.f32.mrb[0].mxu0
    %v7066 = vadd.f32 0.0, %v7065
    %v7067 = vpop.f32.mrb[0].mxu0
    %7068 = vdwg.mxu0
    %v7095 = vunpack.c.l.b16 %v6729
    %v7096 = vunpack.c.l.b16 %v6730
    %v7097 = vunpack.c.l.b16 %v6731
    %v7098 = vunpack.c.l.b16 %v6732
    %v7099 = vunpack.c.l.b16 %v6733
    %v7100 = vunpack.c.l.b16 %v6734
    %v7101 = vunpack.c.l.b16 %v6735
    %v7102 = vunpack.c.l.b16 %v6736
    %v7103 = vunpack.c.l.b16 %v6737
    %v7104 = vunpack.c.l.b16 %v6738
    %v7105 = vunpack.c.l.b16 %v6739
    %v7106 = vunpack.c.l.b16 %v6740
    %v7107 = vunpack.c.l.b16 %v6741
    %v7108 = vunpack.c.l.b16 %v6742
    %v7109 = vunpack.c.l.b16 %v6743
    %v7110 = vunpack.c.l.b16 %v6744
    %v7111 = vpack.c.b16 %v7096, %v7095
    %v7112 = vpack.c.b16 %v7098, %v7097
    %v7113 = vpack.c.b16 %v7100, %v7099
    %v7114 = vpack.c.b16 %v7102, %v7101
    %v7115 = vpack.c.b16 %v7104, %v7103
    %v7116 = vpack.c.b16 %v7106, %v7105
    %v7117 = vpack.c.b16 %v7108, %v7107
    %v7118 = vpack.c.b16 %v7110, %v7109
    %7127 = vmatprep.subr.bf16.mxu0 0
    %7128 = vmatpush1.bf16.msra.mxu0 %v7111
    %7129 = vmatprep.subr.bf16.mxu0 0
    %7130 = vmatpush1.bf16.msra.mxu0 %v7112
    %7131 = vmatprep.subr.bf16.mxu0 0
    %7132 = vmatpush1.bf16.msra.mxu0 %v7113
    %7133 = vmatprep.subr.bf16.mxu0 0
    %7134 = vmatpush1.bf16.msra.mxu0 %v7114
    %7135 = vmatprep.subr.bf16.mxu0 0
    %7136 = vmatpush1.bf16.msra.mxu0 %v7115
    %7137 = vmatprep.subr.bf16.mxu0 0
    %7138 = vmatpush1.bf16.msra.mxu0 %v7116
    %7139 = vmatprep.subr.bf16.mxu0 0
    %7140 = vmatpush1.bf16.msra.mxu0 %v7117
    %7141 = vmatprep.subr.bf16.mxu0 0
    %7142 = vmatpush1.bf16.msra.mxu0 %v7118
    %7143 = vmatprep.subr.bf16.mxu0 0
    %7144 = vmatpush1.bf16.msra.mxu0 0
    %7145 = vmatprep.subr.bf16.mxu0 0
    %7146 = vmatpush1.bf16.msra.mxu0 0
    %7147 = vmatprep.subr.bf16.mxu0 0
    %7148 = vmatpush1.bf16.msra.mxu0 0
    %7149 = vmatprep.subr.bf16.mxu0 0
    %7150 = vmatpush1.bf16.msra.mxu0 0
    %7151 = vmatprep.subr.bf16.mxu0 0
    %7152 = vmatpush1.bf16.msra.mxu0 0
    %7153 = vmatprep.subr.bf16.mxu0 0
    %7154 = vmatpush1.bf16.msra.mxu0 0
    %7155 = vmatprep.subr.bf16.mxu0 0
    %7156 = vmatpush1.bf16.msra.mxu0 0
    %7157 = vmatprep.subr.bf16.mxu0 0
    %7158 = vmatpush1.bf16.msra.mxu0 0
    %7159 = vmatprep.mubr.bf16.mxu0 0
    %7160 = vmatmul.mubr.bf16.gmra.mrb[0].mxu0 %v6803
    %v7161 = vpop.f32.mrb[0].mxu0
    %v7162 = vadd.f32 %v6991, %v7161
    %v7163 = vpop.f32.mrb[0].mxu0
    %v7164 = vpop.f32.mrb[0].mxu0
    %v7165 = vadd.f32 %v6994, %v7164
    %v7166 = vpop.f32.mrb[0].mxu0
    %7167 = vmatprep.mubr.bf16.mxu0 0
    %7168 = vmatmul.mubr.bf16.gmra.mrb[0].mxu0 %v6804
    %v7169 = vpop.f32.mrb[0].mxu0
    %v7170 = vadd.f32 %v6999, %v7169
    %v7171 = vpop.f32.mrb[0].mxu0
    %v7172 = vpop.f32.mrb[0].mxu0
    %v7173 = vadd.f32 %v7002, %v7172
    %v7174 = vpop.f32.mrb[0].mxu0
    %7175 = vmatprep.mubr.bf16.mxu0 0
    %7176 = vmatmul.mubr.bf16.gmra.mrb[0].mxu0 %v6805
    %v7177 = vpop.f32.mrb[0].mxu0
    %v7178 = vadd.f32 %v7007, %v7177
    %v7179 = vpop.f32.mrb[0].mxu0
    %v7180 = vpop.f32.mrb[0].mxu0
    %v7181 = vadd.f32 %v7010, %v7180
    %v7182 = vpop.f32.mrb[0].mxu0
    %7183 = vmatprep.mubr.bf16.mxu0 0
    %7184 = vmatmul.mubr.bf16.gmra.mrb[0].mxu0 %v6806
    %v7185 = vpop.f32.mrb[0].mxu0
    %v7186 = vadd.f32 %v7015, %v7185
    %v7187 = vpop.f32.mrb[0].mxu0
    %v7188 = vpop.f32.mrb[0].mxu0
    %v7189 = vadd.f32 %v7018, %v7188
    %v7190 = vpop.f32.mrb[0].mxu0
    %7191 = vmatprep.mubr.bf16.mxu0 0
    %7192 = vmatmul.mubr.bf16.gmra.mrb[0].mxu0 %v6807
    %v7193 = vpop.f32.mrb[0].mxu0
    %v7194 = vadd.f32 %v7023, %v7193
    %v7195 = vpop.f32.mrb[0].mxu0
    %v7196 = vpop.f32.mrb[0].mxu0
    %v7197 = vadd.f32 %v7026, %v7196
    %v7198 = vpop.f32.mrb[0].mxu0
    %7199 = vmatprep.mubr.bf16.mxu0 0
    %7200 = vmatmul.mubr.bf16.gmra.mrb[0].mxu0 %v6808
    %v7201 = vpop.f32.mrb[0].mxu0
    %v7202 = vadd.f32 %v7031, %v7201
    %v7203 = vpop.f32.mrb[0].mxu0
    %v7204 = vpop.f32.mrb[0].mxu0
    %v7205 = vadd.f32 %v7034, %v7204
    %v7206 = vpop.f32.mrb[0].mxu0
    %7207 = vmatprep.mubr.bf16.mxu0 0
    %7208 = vmatmul.mubr.bf16.gmra.mrb[0].mxu0 %v6809
    %v7209 = vpop.f32.mrb[0].mxu0
    %v7210 = vadd.f32 %v7039, %v7209
    %v7211 = vpop.f32.mrb[0].mxu0
    %v7212 = vpop.f32.mrb[0].mxu0
    %v7213 = vadd.f32 %v7042, %v7212
    %v7214 = vpop.f32.mrb[0].mxu0
    %7215 = vmatprep.mubr.bf16.mxu0 0
    %7216 = vmatmul.mubr.bf16.gmra.mrb[0].mxu0 %v6810
    %v7217 = vpop.f32.mrb[0].mxu0
    %v7218 = vadd.f32 %v7047, %v7217
    %v7219 = vpop.f32.mrb[0].mxu0
    %v7220 = vpop.f32.mrb[0].mxu0
    %v7221 = vadd.f32 %v7050, %v7220
    %v7222 = vpop.f32.mrb[0].mxu0
    %7223 = vmatprep.mubr.bf16.mxu0 0
    %7224 = vmatmul.mubr.bf16.gmra.mrb[0].mxu0 %v6811
    %v7225 = vpop.f32.mrb[0].mxu0
    %v7226 = vadd.f32 %v7055, %v7225
    %v7227 = vpop.f32.mrb[0].mxu0
    %v7228 = vpop.f32.mrb[0].mxu0
    %v7229 = vadd.f32 %v7058, %v7228
    %v7230 = vpop.f32.mrb[0].mxu0
    %7231 = vmatprep.mubr.bf16.mxu0 0
    %7232 = vmatmul.mubr.bf16.gmra.mrb[0].mxu0 %v6812
    %v7233 = vpop.f32.mrb[0].mxu0
    %v7234 = vadd.f32 %v7063, %v7233
    %v7235 = vpop.f32.mrb[0].mxu0
    %v7236 = vpop.f32.mrb[0].mxu0
    %v7237 = vadd.f32 %v7066, %v7236
    %v7238 = vpop.f32.mrb[0].mxu0
    %7239 = vdwg.mxu0
    %v7240 = vld [vmem:[%s589] sm:$0xf]
    %v7241 = vld [vmem:[%s589 + $0x4] sm:$0xf]
    %v7242 = vld [vmem:[%s589 + $0x8] sm:$0xf]
    %v7243 = vld [vmem:[%s589 + $0xc] sm:$0xf]
    %v7244 = vld [vmem:[%s589 + $0x10] sm:$0xf]
    %v7245 = vld [vmem:[%s589 + $0x14] sm:$0xf]
    %v7246 = vld [vmem:[%s589 + $0x18] sm:$0xf]
    %v7247 = vld [vmem:[%s589 + $0x1c] sm:$0xf]
    %v7248 = vld [vmem:[%s589 + $0x20] sm:$0xf]
    %v7249 = vld [vmem:[%s589 + $0x24] sm:$0xf]
    %v7250 = vld [vmem:[%s589 + $0x28] sm:$0xf]
    %v7251 = vld [vmem:[%s589 + $0x2c] sm:$0xf]
    %v7252 = vld [vmem:[%s589 + $0x30] sm:$0xf]
    %v7253 = vld [vmem:[%s589 + $0x34] sm:$0xf]
    %v7254 = vld [vmem:[%s589 + $0x38] sm:$0xf]
    %v7255 = vld [vmem:[%s589 + $0x3c] sm:$0xf]
    %v7256 = vrot.slane %v6803, 1
    %v7257 = vrot.slane %v6804, 1
    %v7258 = vsel %vm606, %v7256, %v7257
    %v7259 = vrot.slane %v6805, 1
    %v7260 = vsel %vm606, %v7257, %v7259
    %v7261 = vrot.slane %v6806, 1
    %v7262 = vsel %vm606, %v7259, %v7261
    %v7263 = vrot.slane %v6807, 1
    %v7264 = vsel %vm606, %v7261, %v7263
    %v7265 = vrot.slane %v6808, 1
    %v7266 = vsel %vm606, %v7263, %v7265
    %v7267 = vrot.slane %v6809, 1
    %v7268 = vsel %vm606, %v7265, %v7267
    %v7269 = vrot.slane %v6810, 1
    %v7270 = vsel %vm606, %v7267, %v7269
    %v7271 = vrot.slane %v6811, 1
    %v7272 = vsel %vm606, %v7269, %v7271
    %v7273 = vrot.slane %v6812, 1
    %v7274 = vsel %vm606, %v7271, %v7273
    %v7275 = vrot.slane %v6813, 1
    %v7276 = vsel %vm606, %v7273, %v7275
    %v7303 = vunpack.c.l.b16 %v7240
    %v7304 = vunpack.c.l.b16 %v7241
    %v7305 = vunpack.c.l.b16 %v7242
    %v7306 = vunpack.c.l.b16 %v7243
    %v7307 = vunpack.c.l.b16 %v7244
    %v7308 = vunpack.c.l.b16 %v7245
    %v7309 = vunpack.c.l.b16 %v7246
    %v7310 = vunpack.c.l.b16 %v7247
    %v7311 = vunpack.c.l.b16 %v7248
    %v7312 = vunpack.c.l.b16 %v7249
    %v7313 = vunpack.c.l.b16 %v7250
    %v7314 = vunpack.c.l.b16 %v7251
    %v7315 = vunpack.c.l.b16 %v7252
    %v7316 = vunpack.c.l.b16 %v7253
    %v7317 = vunpack.c.l.b16 %v7254
    %v7318 = vunpack.c.l.b16 %v7255
    %v7319 = vpack.c.b16 %v7304, %v7303
    %v7320 = vpack.c.b16 %v7306, %v7305
    %v7321 = vpack.c.b16 %v7308, %v7307
    %v7322 = vpack.c.b16 %v7310, %v7309
    %v7323 = vpack.c.b16 %v7312, %v7311
    %v7324 = vpack.c.b16 %v7314, %v7313
    %v7325 = vpack.c.b16 %v7316, %v7315
    %v7326 = vpack.c.b16 %v7318, %v7317
    %7335 = vmatprep.subr.bf16.mxu0 0
    %7336 = vmatpush1.bf16.msra.mxu0 %v7319
    %7337 = vmatprep.subr.bf16.mxu0 0
    %7338 = vmatpush1.bf16.msra.mxu0 %v7320
    %7339 = vmatprep.subr.bf16.mxu0 0
    %7340 = vmatpush1.bf16.msra.mxu0 %v7321
    %7341 = vmatprep.subr.bf16.mxu0 0
    %7342 = vmatpush1.bf16.msra.mxu0 %v7322
    %7343 = vmatprep.subr.bf16.mxu0 0
    %7344 = vmatpush1.bf16.msra.mxu0 %v7323
    %7345 = vmatprep.subr.bf16.mxu0 0
    %7346 = vmatpush1.bf16.msra.mxu0 %v7324
    %7347 = vmatprep.subr.bf16.mxu0 0
    %7348 = vmatpush1.bf16.msra.mxu0 %v7325
    %7349 = vmatprep.subr.bf16.mxu0 0
    %7350 = vmatpush1.bf16.msra.mxu0 %v7326
    %7351 = vmatprep.subr.bf16.mxu0 0
    %7352 = vmatpush1.bf16.msra.mxu0 0
    %7353 = vmatprep.subr.bf16.mxu0 0
    %7354 = vmatpush1.bf16.msra.mxu0 0
    %7355 = vmatprep.subr.bf16.mxu0 0
    %7356 = vmatpush1.bf16.msra.mxu0 0
    %7357 = vmatprep.subr.bf16.mxu0 0
    %7358 = vmatpush1.bf16.msra.mxu0 0
    %7359 = vmatprep.subr.bf16.mxu0 0
    %7360 = vmatpush1.bf16.msra.mxu0 0
    %7361 = vmatprep.subr.bf16.mxu0 0
    %7362 = vmatpush1.bf16.msra.mxu0 0
    %7363 = vmatprep.subr.bf16.mxu0 0
    %7364 = vmatpush1.bf16.msra.mxu0 0
    %7365 = vmatprep.subr.bf16.mxu0 0
    %7366 = vmatpush1.bf16.msra.mxu0 0
    %7367 = vmatprep.mubr.bf16.mxu0 0
    %7368 = vmatmul.mubr.bf16.gmra.mrb[0].mxu0 %v7258
    %v7369 = vpop.f32.mrb[0].mxu0
    %v7370 = vadd.f32 0.0, %v7369
    %v7371 = vpop.f32.mrb[0].mxu0
    %v7372 = vpop.f32.mrb[0].mxu0
    %v7373 = vadd.f32 0.0, %v7372
    %v7374 = vpop.f32.mrb[0].mxu0
    %7375 = vmatprep.mubr.bf16.mxu0 0
    %7376 = vmatmul.mubr.bf16.gmra.mrb[0].mxu0 %v7260
    %v7377 = vpop.f32.mrb[0].mxu0
    %v7378 = vadd.f32 0.0, %v7377
    %v7379 = vpop.f32.mrb[0].mxu0
    %v7380 = vpop.f32.mrb[0].mxu0
    %v7381 = vadd.f32 0.0, %v7380
    %v7382 = vpop.f32.mrb[0].mxu0
    %7383 = vmatprep.mubr.bf16.mxu0 0
    %7384 = vmatmul.mubr.bf16.gmra.mrb[0].mxu0 %v7262
    %v7385 = vpop.f32.mrb[0].mxu0
    %v7386 = vadd.f32 0.0, %v7385
    %v7387 = vpop.f32.mrb[0].mxu0
    %v7388 = vpop.f32.mrb[0].mxu0
    %v7389 = vadd.f32 0.0, %v7388
    %v7390 = vpop.f32.mrb[0].mxu0
    %7391 = vmatprep.mubr.bf16.mxu0 0
    %7392 = vmatmul.mubr.bf16.gmra.mrb[0].mxu0 %v7264
    %v7393 = vpop.f32.mrb[0].mxu0
    %v7394 = vadd.f32 0.0, %v7393
    %v7395 = vpop.f32.mrb[0].mxu0
    %v7396 = vpop.f32.mrb[0].mxu0
    %v7397 = vadd.f32 0.0, %v7396
    %v7398 = vpop.f32.mrb[0].mxu0
    %7399 = vmatprep.mubr.bf16.mxu0 0
    %7400 = vmatmul.mubr.bf16.gmra.mrb[0].mxu0 %v7266
    %v7401 = vpop.f32.mrb[0].mxu0
    %v7402 = vadd.f32 0.0, %v7401
    %v7403 = vpop.f32.mrb[0].mxu0
    %v7404 = vpop.f32.mrb[0].mxu0
    %v7405 = vadd.f32 0.0, %v7404
    %v7406 = vpop.f32.mrb[0].mxu0
    %7407 = vmatprep.mubr.bf16.mxu0 0
    %7408 = vmatmul.mubr.bf16.gmra.mrb[0].mxu0 %v7268
    %v7409 = vpop.f32.mrb[0].mxu0
    %v7410 = vadd.f32 0.0, %v7409
    %v7411 = vpop.f32.mrb[0].mxu0
    %v7412 = vpop.f32.mrb[0].mxu0
    %v7413 = vadd.f32 0.0, %v7412
    %v7414 = vpop.f32.mrb[0].mxu0
    %7415 = vmatprep.mubr.bf16.mxu0 0
    %7416 = vmatmul.mubr.bf16.gmra.mrb[0].mxu0 %v7270
    %v7417 = vpop.f32.mrb[0].mxu0
    %v7418 = vadd.f32 0.0, %v7417
    %v7419 = vpop.f32.mrb[0].mxu0
    %v7420 = vpop.f32.mrb[0].mxu0
    %v7421 = vadd.f32 0.0, %v7420
    %v7422 = vpop.f32.mrb[0].mxu0
    %7423 = vmatprep.mubr.bf16.mxu0 0
    %7424 = vmatmul.mubr.bf16.gmra.mrb[0].mxu0 %v7272
    %v7425 = vpop.f32.mrb[0].mxu0
    %v7426 = vadd.f32 0.0, %v7425
    %v7427 = vpop.f32.mrb[0].mxu0
    %v7428 = vpop.f32.mrb[0].mxu0
    %v7429 = vadd.f32 0.0, %v7428
    %v7430 = vpop.f32.mrb[0].mxu0
    %7431 = vmatprep.mubr.bf16.mxu0 0
    %7432 = vmatmul.mubr.bf16.gmra.mrb[0].mxu0 %v7274
    %v7433 = vpop.f32.mrb[0].mxu0
    %v7434 = vadd.f32 0.0, %v7433
    %v7435 = vpop.f32.mrb[0].mxu0
    %v7436 = vpop.f32.mrb[0].mxu0
    %v7437 = vadd.f32 0.0, %v7436
    %v7438 = vpop.f32.mrb[0].mxu0
    %7439 = vmatprep.mubr.bf16.mxu0 0
    %7440 = vmatmul.mubr.bf16.gmra.mrb[0].mxu0 %v7276
    %v7441 = vpop.f32.mrb[0].mxu0
    %v7442 = vadd.f32 0.0, %v7441
    %v7443 = vpop.f32.mrb[0].mxu0
    %v7444 = vpop.f32.mrb[0].mxu0
    %v7445 = vadd.f32 0.0, %v7444
    %v7446 = vpop.f32.mrb[0].mxu0
    %7447 = vdwg.mxu0
    %v7448 = vadd.f32 %v7162, %v7370
    %v7449 = vadd.f32 %v7165, %v7373
    %v7450 = vadd.f32 %v7170, %v7378
    %v7451 = vadd.f32 %v7173, %v7381
    %v7452 = vadd.f32 %v7178, %v7386
    %v7453 = vadd.f32 %v7181, %v7389
    %v7454 = vadd.f32 %v7186, %v7394
    %v7455 = vadd.f32 %v7189, %v7397
    %v7456 = vadd.f32 %v7194, %v7402
    %v7457 = vadd.f32 %v7197, %v7405
    %v7458 = vadd.f32 %v7202, %v7410
    %v7459 = vadd.f32 %v7205, %v7413
    %v7460 = vadd.f32 %v7210, %v7418
    %v7461 = vadd.f32 %v7213, %v7421
    %v7462 = vadd.f32 %v7218, %v7426
    %v7463 = vadd.f32 %v7221, %v7429
    %v7464 = vadd.f32 %v7226, %v7434
    %v7465 = vadd.f32 %v7229, %v7437
    %v7466 = vadd.f32 %v7234, %v7442
    %v7467 = vadd.f32 %v7237, %v7445
    %v7468 = vld [vmem:[%s819] sm:$0xf]
    %v7469 = vld [vmem:[%s819 + $0x4] sm:$0xf]
    %v7470 = vld [vmem:[%s819 + $0x8] sm:$0xf]
    %v7471 = vld [vmem:[%s819 + $0xc] sm:$0xf]
    %v7472 = vld [vmem:[%s819 + $0x10] sm:$0xf]
    %v7473 = vld [vmem:[%s819 + $0x14] sm:$0xf]
    %v7474 = vld [vmem:[%s819 + $0x18] sm:$0xf]
    %v7475 = vld [vmem:[%s819 + $0x1c] sm:$0xf]
    %v7476 = vld [vmem:[%s819 + $0x20] sm:$0xf]
    %v7477 = vld [vmem:[%s819 + $0x24] sm:$0xf]
    %v7478 = vld [vmem:[%s819 + $0x28] sm:$0xf]
    %v7479 = vld [vmem:[%s819 + $0x2c] sm:$0xf]
    %v7480 = vld [vmem:[%s819 + $0x30] sm:$0xf]
    %v7481 = vld [vmem:[%s819 + $0x34] sm:$0xf]
    %v7482 = vld [vmem:[%s819 + $0x38] sm:$0xf]
    %v7483 = vld [vmem:[%s819 + $0x3c] sm:$0xf]
    %v7487 = vunpack.c.l.b16 %v6721
    %v7488 = vunpack.c.l.b16 %v6722
    %v7489 = vunpack.c.l.b16 %v6723
    %v7490 = vpack.c.b16 %v7487, %v6802
    %v7491 = vpack.c.b16 %v7489, %v7488
    %v7510 = vunpack.c.l.b16 %v7468
    %v7511 = vunpack.c.l.b16 %v7469
    %v7512 = vunpack.c.l.b16 %v7470
    %v7513 = vunpack.c.l.b16 %v7471
    %v7514 = vunpack.c.l.b16 %v7472
    %v7515 = vunpack.c.l.b16 %v7473
    %v7516 = vunpack.c.l.b16 %v7474
    %v7517 = vunpack.c.l.b16 %v7475
    %v7518 = vunpack.c.l.b16 %v7476
    %v7519 = vunpack.c.l.b16 %v7477
    %v7520 = vunpack.c.l.b16 %v7478
    %v7521 = vunpack.c.l.b16 %v7479
    %v7522 = vunpack.c.l.b16 %v7480
    %v7523 = vunpack.c.l.b16 %v7481
    %v7524 = vunpack.c.l.b16 %v7482
    %v7525 = vunpack.c.l.b16 %v7483
    %v7526 = vpack.c.b16 %v7511, %v7510
    %v7527 = vpack.c.b16 %v7513, %v7512
    %v7528 = vpack.c.b16 %v7515, %v7514
    %v7529 = vpack.c.b16 %v7517, %v7516
    %v7530 = vpack.c.b16 %v7519, %v7518
    %v7531 = vpack.c.b16 %v7521, %v7520
    %v7532 = vpack.c.b16 %v7523, %v7522
    %v7533 = vpack.c.b16 %v7525, %v7524
    %7542 = vmatprep.subr.bf16.mxu0 0
    %7543 = vmatpush1.bf16.msra.mxu0 %v7526
    %7544 = vmatprep.subr.bf16.mxu0 0
    %7545 = vmatpush1.bf16.msra.mxu0 %v7527
    %7546 = vmatprep.subr.bf16.mxu0 0
    %7547 = vmatpush1.bf16.msra.mxu0 %v7528
    %7548 = vmatprep.subr.bf16.mxu0 0
    %7549 = vmatpush1.bf16.msra.mxu0 %v7529
    %7550 = vmatprep.subr.bf16.mxu0 0
    %7551 = vmatpush1.bf16.msra.mxu0 %v7530
    %7552 = vmatprep.subr.bf16.mxu0 0
    %7553 = vmatpush1.bf16.msra.mxu0 %v7531
    %7554 = vmatprep.subr.bf16.mxu0 0
    %7555 = vmatpush1.bf16.msra.mxu0 %v7532
    %7556 = vmatprep.subr.bf16.mxu0 0
    %7557 = vmatpush1.bf16.msra.mxu0 %v7533
    %7558 = vmatprep.subr.bf16.mxu0 0
    %7559 = vmatpush1.bf16.msra.mxu0 0
    %7560 = vmatprep.subr.bf16.mxu0 0
    %7561 = vmatpush1.bf16.msra.mxu0 0
    %7562 = vmatprep.subr.bf16.mxu0 0
    %7563 = vmatpush1.bf16.msra.mxu0 0
    %7564 = vmatprep.subr.bf16.mxu0 0
    %7565 = vmatpush1.bf16.msra.mxu0 0
    %7566 = vmatprep.subr.bf16.mxu0 0
    %7567 = vmatpush1.bf16.msra.mxu0 0
    %7568 = vmatprep.subr.bf16.mxu0 0
    %7569 = vmatpush1.bf16.msra.mxu0 0
    %7570 = vmatprep.subr.bf16.mxu0 0
    %7571 = vmatpush1.bf16.msra.mxu0 0
    %7572 = vmatprep.subr.bf16.mxu0 0
    %7573 = vmatpush1.bf16.msra.mxu0 0
    %7574 = vmatprep.mubr.bf16.mxu0 0
    %7575 = vmatmul.mubr.bf16.gmra.mrb[0].mxu0 %v6805
    %v7576 = vpop.f32.mrb[0].mxu0
    %v7577 = vadd.f32 0.0, %v7576
    %v7578 = vpop.f32.mrb[0].mxu0
    %v7579 = vpop.f32.mrb[0].mxu0
    %v7580 = vadd.f32 0.0, %v7579
    %v7581 = vpop.f32.mrb[0].mxu0
    %7582 = vmatprep.mubr.bf16.mxu0 0
    %7583 = vmatmul.mubr.bf16.gmra.mrb[0].mxu0 %v6806
    %v7584 = vpop.f32.mrb[0].mxu0
    %v7585 = vadd.f32 0.0, %v7584
    %v7586 = vpop.f32.mrb[0].mxu0
    %v7587 = vpop.f32.mrb[0].mxu0
    %v7588 = vadd.f32 0.0, %v7587
    %v7589 = vpop.f32.mrb[0].mxu0
    %7590 = vmatprep.mubr.bf16.mxu0 0
    %7591 = vmatmul.mubr.bf16.gmra.mrb[0].mxu0 %v6807
    %v7592 = vpop.f32.mrb[0].mxu0
    %v7593 = vadd.f32 0.0, %v7592
    %v7594 = vpop.f32.mrb[0].mxu0
    %v7595 = vpop.f32.mrb[0].mxu0
    %v7596 = vadd.f32 0.0, %v7595
    %v7597 = vpop.f32.mrb[0].mxu0
    %7598 = vmatprep.mubr.bf16.mxu0 0
    %7599 = vmatmul.mubr.bf16.gmra.mrb[0].mxu0 %v6808
    %v7600 = vpop.f32.mrb[0].mxu0
    %v7601 = vadd.f32 0.0, %v7600
    %v7602 = vpop.f32.mrb[0].mxu0
    %v7603 = vpop.f32.mrb[0].mxu0
    %v7604 = vadd.f32 0.0, %v7603
    %v7605 = vpop.f32.mrb[0].mxu0
    %7606 = vmatprep.mubr.bf16.mxu0 0
    %7607 = vmatmul.mubr.bf16.gmra.mrb[0].mxu0 %v6809
    %v7608 = vpop.f32.mrb[0].mxu0
    %v7609 = vadd.f32 0.0, %v7608
    %v7610 = vpop.f32.mrb[0].mxu0
    %v7611 = vpop.f32.mrb[0].mxu0
    %v7612 = vadd.f32 0.0, %v7611
    %v7613 = vpop.f32.mrb[0].mxu0
    %7614 = vmatprep.mubr.bf16.mxu0 0
    %7615 = vmatmul.mubr.bf16.gmra.mrb[0].mxu0 %v6810
    %v7616 = vpop.f32.mrb[0].mxu0
    %v7617 = vadd.f32 0.0, %v7616
    %v7618 = vpop.f32.mrb[0].mxu0
    %v7619 = vpop.f32.mrb[0].mxu0
    %v7620 = vadd.f32 0.0, %v7619
    %v7621 = vpop.f32.mrb[0].mxu0
    %7622 = vmatprep.mubr.bf16.mxu0 0
    %7623 = vmatmul.mubr.bf16.gmra.mrb[0].mxu0 %v6811
    %v7624 = vpop.f32.mrb[0].mxu0
    %v7625 = vadd.f32 0.0, %v7624
    %v7626 = vpop.f32.mrb[0].mxu0
    %v7627 = vpop.f32.mrb[0].mxu0
    %v7628 = vadd.f32 0.0, %v7627
    %v7629 = vpop.f32.mrb[0].mxu0
    %7630 = vmatprep.mubr.bf16.mxu0 0
    %7631 = vmatmul.mubr.bf16.gmra.mrb[0].mxu0 %v6812
    %v7632 = vpop.f32.mrb[0].mxu0
    %v7633 = vadd.f32 0.0, %v7632
    %v7634 = vpop.f32.mrb[0].mxu0
    %v7635 = vpop.f32.mrb[0].mxu0
    %v7636 = vadd.f32 0.0, %v7635
    %v7637 = vpop.f32.mrb[0].mxu0
    %7638 = vmatprep.mubr.bf16.mxu0 0
    %7639 = vmatmul.mubr.bf16.gmra.mrb[0].mxu0 %v7490
    %v7640 = vpop.f32.mrb[0].mxu0
    %v7641 = vadd.f32 0.0, %v7640
    %v7642 = vpop.f32.mrb[0].mxu0
    %v7643 = vpop.f32.mrb[0].mxu0
    %v7644 = vadd.f32 0.0, %v7643
    %v7645 = vpop.f32.mrb[0].mxu0
    %7646 = vmatprep.mubr.bf16.mxu0 0
    %7647 = vmatmul.mubr.bf16.gmra.mrb[0].mxu0 %v7491
    %v7648 = vpop.f32.mrb[0].mxu0
    %v7649 = vadd.f32 0.0, %v7648
    %v7650 = vpop.f32.mrb[0].mxu0
    %v7651 = vpop.f32.mrb[0].mxu0
    %v7652 = vadd.f32 0.0, %v7651
    %v7653 = vpop.f32.mrb[0].mxu0
    %7654 = vdwg.mxu0
    %v7655 = vadd.f32 %v7448, %v7577
    %v7656 = vadd.f32 %v7449, %v7580
    %v7657 = vadd.f32 %v7450, %v7585
    %v7658 = vadd.f32 %v7451, %v7588
    %v7659 = vadd.f32 %v7452, %v7593
    %v7660 = vadd.f32 %v7453, %v7596
    %v7661 = vadd.f32 %v7454, %v7601
    %v7662 = vadd.f32 %v7455, %v7604
    %v7663 = vadd.f32 %v7456, %v7609
    %v7664 = vadd.f32 %v7457, %v7612
    %v7665 = vadd.f32 %v7458, %v7617
    %v7666 = vadd.f32 %v7459, %v7620
    %v7667 = vadd.f32 %v7460, %v7625
    %v7668 = vadd.f32 %v7461, %v7628
    %v7669 = vadd.f32 %v7462, %v7633
    %v7670 = vadd.f32 %v7463, %v7636
    %v7671 = vadd.f32 %v7464, %v7641
    %v7672 = vadd.f32 %v7465, %v7644
    %v7673 = vadd.f32 %v7466, %v7649
    %v7674 = vadd.f32 %v7467, %v7652
    %v7675 = vld [vmem:[%s1027] sm:$0xf]
    %v7676 = vld [vmem:[%s1027 + $0x4] sm:$0xf]
    %v7677 = vld [vmem:[%s1027 + $0x8] sm:$0xf]
    %v7678 = vld [vmem:[%s1027 + $0xc] sm:$0xf]
    %v7679 = vld [vmem:[%s1027 + $0x10] sm:$0xf]
    %v7680 = vld [vmem:[%s1027 + $0x14] sm:$0xf]
    %v7681 = vld [vmem:[%s1027 + $0x18] sm:$0xf]
    %v7682 = vld [vmem:[%s1027 + $0x1c] sm:$0xf]
    %v7683 = vld [vmem:[%s1027 + $0x20] sm:$0xf]
    %v7684 = vld [vmem:[%s1027 + $0x24] sm:$0xf]
    %v7685 = vld [vmem:[%s1027 + $0x28] sm:$0xf]
    %v7686 = vld [vmem:[%s1027 + $0x2c] sm:$0xf]
    %v7687 = vld [vmem:[%s1027 + $0x30] sm:$0xf]
    %v7688 = vld [vmem:[%s1027 + $0x34] sm:$0xf]
    %v7689 = vld [vmem:[%s1027 + $0x38] sm:$0xf]
    %v7690 = vld [vmem:[%s1027 + $0x3c] sm:$0xf]
    %v7692 = vunpack.c.l.b16 %v6724
    %v7693 = vpack.c.b16 %v7692, %v7692
    %v7695 = vshll.u32 %v7490, 16
    %v7697 = vrot.slane %v7695, 1
    %v7698 = vsel %vm162, %v6892, %v7697
    %v7699 = vshrl.u32 %v7490, 16
    %v7701 = vor.u32 %v7699, %v7697
    %v7703 = vshll.u32 %v7491, 16
    %v7705 = vrot.slane %v7703, 1
    %v7706 = vsel %vm162, %v7701, %v7705
    %v7707 = vshrl.u32 %v7491, 16
    %v7709 = vor.u32 %v7707, %v7705
    %v7711 = vshll.u32 %v7693, 16
    %v7713 = vrot.slane %v7711, 1
    %v7714 = vsel %vm162, %v7709, %v7713
    %v7734 = vunpack.c.l.b16 %v7675
    %v7735 = vunpack.c.l.b16 %v7676
    %v7736 = vunpack.c.l.b16 %v7677
    %v7737 = vunpack.c.l.b16 %v7678
    %v7738 = vunpack.c.l.b16 %v7679
    %v7739 = vunpack.c.l.b16 %v7680
    %v7740 = vunpack.c.l.b16 %v7681
    %v7741 = vunpack.c.l.b16 %v7682
    %v7742 = vunpack.c.l.b16 %v7683
    %v7743 = vunpack.c.l.b16 %v7684
    %v7744 = vunpack.c.l.b16 %v7685
    %v7745 = vunpack.c.l.b16 %v7686
    %v7746 = vunpack.c.l.b16 %v7687
    %v7747 = vunpack.c.l.b16 %v7688
    %v7748 = vunpack.c.l.b16 %v7689
    %v7749 = vunpack.c.l.b16 %v7690
    %v7750 = vpack.c.b16 %v7735, %v7734
    %v7751 = vpack.c.b16 %v7737, %v7736
    %v7752 = vpack.c.b16 %v7739, %v7738
    %v7753 = vpack.c.b16 %v7741, %v7740
    %v7754 = vpack.c.b16 %v7743, %v7742
    %v7755 = vpack.c.b16 %v7745, %v7744
    %v7756 = vpack.c.b16 %v7747, %v7746
    %v7757 = vpack.c.b16 %v7749, %v7748
    %7766 = vmatprep.subr.bf16.mxu0 0
    %7767 = vmatpush1.bf16.msra.mxu0 %v7750
    %7768 = vmatprep.subr.bf16.mxu0 0
    %7769 = vmatpush1.bf16.msra.mxu0 %v7751
    %7770 = vmatprep.subr.bf16.mxu0 0
    %7771 = vmatpush1.bf16.msra.mxu0 %v7752
    %7772 = vmatprep.subr.bf16.mxu0 0
    %7773 = vmatpush1.bf16.msra.mxu0 %v7753
    %7774 = vmatprep.subr.bf16.mxu0 0
    %7775 = vmatpush1.bf16.msra.mxu0 %v7754
    %7776 = vmatprep.subr.bf16.mxu0 0
    %7777 = vmatpush1.bf16.msra.mxu0 %v7755
    %7778 = vmatprep.subr.bf16.mxu0 0
    %7779 = vmatpush1.bf16.msra.mxu0 %v7756
    %7780 = vmatprep.subr.bf16.mxu0 0
    %7781 = vmatpush1.bf16.msra.mxu0 %v7757
    %7782 = vmatprep.subr.bf16.mxu0 0
    %7783 = vmatpush1.bf16.msra.mxu0 0
    %7784 = vmatprep.subr.bf16.mxu0 0
    %7785 = vmatpush1.bf16.msra.mxu0 0
    %7786 = vmatprep.subr.bf16.mxu0 0
    %7787 = vmatpush1.bf16.msra.mxu0 0
    %7788 = vmatprep.subr.bf16.mxu0 0
    %7789 = vmatpush1.bf16.msra.mxu0 0
    %7790 = vmatprep.subr.bf16.mxu0 0
    %7791 = vmatpush1.bf16.msra.mxu0 0
    %7792 = vmatprep.subr.bf16.mxu0 0
    %7793 = vmatpush1.bf16.msra.mxu0 0
    %7794 = vmatprep.subr.bf16.mxu0 0
    %7795 = vmatpush1.bf16.msra.mxu0 0
    %7796 = vmatprep.subr.bf16.mxu0 0
    %7797 = vmatpush1.bf16.msra.mxu0 0
    %7798 = vmatprep.mubr.bf16.mxu0 0
    %7799 = vmatmul.mubr.bf16.gmra.mrb[0].mxu0 %v6841
    %v7800 = vpop.f32.mrb[0].mxu0
    %v7801 = vadd.f32 0.0, %v7800
    %v7802 = vpop.f32.mrb[0].mxu0
    %v7803 = vpop.f32.mrb[0].mxu0
    %v7804 = vadd.f32 0.0, %v7803
    %v7805 = vpop.f32.mrb[0].mxu0
    %7806 = vmatprep.mubr.bf16.mxu0 0
    %7807 = vmatmul.mubr.bf16.gmra.mrb[0].mxu0 %v6849
    %v7808 = vpop.f32.mrb[0].mxu0
    %v7809 = vadd.f32 0.0, %v7808
    %v7810 = vpop.f32.mrb[0].mxu0
    %v7811 = vpop.f32.mrb[0].mxu0
    %v7812 = vadd.f32 0.0, %v7811
    %v7813 = vpop.f32.mrb[0].mxu0
    %7814 = vmatprep.mubr.bf16.mxu0 0
    %7815 = vmatmul.mubr.bf16.gmra.mrb[0].mxu0 %v6857
    %v7816 = vpop.f32.mrb[0].mxu0
    %v7817 = vadd.f32 0.0, %v7816
    %v7818 = vpop.f32.mrb[0].mxu0
    %v7819 = vpop.f32.mrb[0].mxu0
    %v7820 = vadd.f32 0.0, %v7819
    %v7821 = vpop.f32.mrb[0].mxu0
    %7822 = vmatprep.mubr.bf16.mxu0 0
    %7823 = vmatmul.mubr.bf16.gmra.mrb[0].mxu0 %v6865
    %v7824 = vpop.f32.mrb[0].mxu0
    %v7825 = vadd.f32 0.0, %v7824
    %v7826 = vpop.f32.mrb[0].mxu0
    %v7827 = vpop.f32.mrb[0].mxu0
    %v7828 = vadd.f32 0.0, %v7827
    %v7829 = vpop.f32.mrb[0].mxu0
    %7830 = vmatprep.mubr.bf16.mxu0 0
    %7831 = vmatmul.mubr.bf16.gmra.mrb[0].mxu0 %v6873
    %v7832 = vpop.f32.mrb[0].mxu0
    %v7833 = vadd.f32 0.0, %v7832
    %v7834 = vpop.f32.mrb[0].mxu0
    %v7835 = vpop.f32.mrb[0].mxu0
    %v7836 = vadd.f32 0.0, %v7835
    %v7837 = vpop.f32.mrb[0].mxu0
    %7838 = vmatprep.mubr.bf16.mxu0 0
    %7839 = vmatmul.mubr.bf16.gmra.mrb[0].mxu0 %v6881
    %v7840 = vpop.f32.mrb[0].mxu0
    %v7841 = vadd.f32 0.0, %v7840
    %v7842 = vpop.f32.mrb[0].mxu0
    %v7843 = vpop.f32.mrb[0].mxu0
    %v7844 = vadd.f32 0.0, %v7843
    %v7845 = vpop.f32.mrb[0].mxu0
    %7846 = vmatprep.mubr.bf16.mxu0 0
    %7847 = vmatmul.mubr.bf16.gmra.mrb[0].mxu0 %v6889
    %v7848 = vpop.f32.mrb[0].mxu0
    %v7849 = vadd.f32 0.0, %v7848
    %v7850 = vpop.f32.mrb[0].mxu0
    %v7851 = vpop.f32.mrb[0].mxu0
    %v7852 = vadd.f32 0.0, %v7851
    %v7853 = vpop.f32.mrb[0].mxu0
    %7854 = vmatprep.mubr.bf16.mxu0 0
    %7855 = vmatmul.mubr.bf16.gmra.mrb[0].mxu0 %v7698
    %v7856 = vpop.f32.mrb[0].mxu0
    %v7857 = vadd.f32 0.0, %v7856
    %v7858 = vpop.f32.mrb[0].mxu0
    %v7859 = vpop.f32.mrb[0].mxu0
    %v7860 = vadd.f32 0.0, %v7859
    %v7861 = vpop.f32.mrb[0].mxu0
    %7862 = vmatprep.mubr.bf16.mxu0 0
    %7863 = vmatmul.mubr.bf16.gmra.mrb[0].mxu0 %v7706
    %v7864 = vpop.f32.mrb[0].mxu0
    %v7865 = vadd.f32 0.0, %v7864
    %v7866 = vpop.f32.mrb[0].mxu0
    %v7867 = vpop.f32.mrb[0].mxu0
    %v7868 = vadd.f32 0.0, %v7867
    %v7869 = vpop.f32.mrb[0].mxu0
    %7870 = vmatprep.mubr.bf16.mxu0 0
    %7871 = vmatmul.mubr.bf16.gmra.mrb[0].mxu0 %v7714
    %v7872 = vpop.f32.mrb[0].mxu0
    %v7873 = vadd.f32 0.0, %v7872
    %v7874 = vpop.f32.mrb[0].mxu0
    %v7875 = vpop.f32.mrb[0].mxu0
    %v7876 = vadd.f32 0.0, %v7875
    %v7877 = vpop.f32.mrb[0].mxu0
    %7878 = vdwg.mxu0
    %v7879 = vadd.f32 %v7655, %v7801
    %v7880 = vadd.f32 %v7656, %v7804
    %v7881 = vadd.f32 %v7657, %v7809
    %v7882 = vadd.f32 %v7658, %v7812
    %v7883 = vadd.f32 %v7659, %v7817
    %v7884 = vadd.f32 %v7660, %v7820
    %v7885 = vadd.f32 %v7661, %v7825
    %v7886 = vadd.f32 %v7662, %v7828
    %v7887 = vadd.f32 %v7663, %v7833
    %v7888 = vadd.f32 %v7664, %v7836
    %v7889 = vadd.f32 %v7665, %v7841
    %v7890 = vadd.f32 %v7666, %v7844
    %v7891 = vadd.f32 %v7667, %v7849
    %v7892 = vadd.f32 %v7668, %v7852
    %v7893 = vadd.f32 %v7669, %v7857
    %v7894 = vadd.f32 %v7670, %v7860
    %v7895 = vadd.f32 %v7671, %v7865
    %v7896 = vadd.f32 %v7672, %v7868
    %v7897 = vadd.f32 %v7673, %v7873
    %v7898 = vadd.f32 %v7674, %v7876
    %v7899 = vld [vmem:[%s1252] sm:$0xf]
    %v7900 = vld [vmem:[%s1252 + $0x4] sm:$0xf]
    %v7901 = vld [vmem:[%s1252 + $0x8] sm:$0xf]
    %v7902 = vld [vmem:[%s1252 + $0xc] sm:$0xf]
    %v7903 = vld [vmem:[%s1252 + $0x10] sm:$0xf]
    %v7904 = vld [vmem:[%s1252 + $0x14] sm:$0xf]
    %v7905 = vld [vmem:[%s1252 + $0x18] sm:$0xf]
    %v7906 = vld [vmem:[%s1252 + $0x1c] sm:$0xf]
    %v7907 = vld [vmem:[%s1252 + $0x20] sm:$0xf]
    %v7908 = vld [vmem:[%s1252 + $0x24] sm:$0xf]
    %v7909 = vld [vmem:[%s1252 + $0x28] sm:$0xf]
    %v7910 = vld [vmem:[%s1252 + $0x2c] sm:$0xf]
    %v7911 = vld [vmem:[%s1252 + $0x30] sm:$0xf]
    %v7912 = vld [vmem:[%s1252 + $0x34] sm:$0xf]
    %v7913 = vld [vmem:[%s1252 + $0x38] sm:$0xf]
    %v7914 = vld [vmem:[%s1252 + $0x3c] sm:$0xf]
    %v7915 = vrot.slane %v7490, 1
    %v7916 = vsel %vm606, %v7273, %v7915
    %v7917 = vrot.slane %v7491, 1
    %v7918 = vsel %vm606, %v7915, %v7917
    %v7919 = vrot.slane %v7693, 1
    %v7920 = vsel %vm606, %v7917, %v7919
    %v7940 = vunpack.c.l.b16 %v7899
    %v7941 = vunpack.c.l.b16 %v7900
    %v7942 = vunpack.c.l.b16 %v7901
    %v7943 = vunpack.c.l.b16 %v7902
    %v7944 = vunpack.c.l.b16 %v7903
    %v7945 = vunpack.c.l.b16 %v7904
    %v7946 = vunpack.c.l.b16 %v7905
    %v7947 = vunpack.c.l.b16 %v7906
    %v7948 = vunpack.c.l.b16 %v7907
    %v7949 = vunpack.c.l.b16 %v7908
    %v7950 = vunpack.c.l.b16 %v7909
    %v7951 = vunpack.c.l.b16 %v7910
    %v7952 = vunpack.c.l.b16 %v7911
    %v7953 = vunpack.c.l.b16 %v7912
    %v7954 = vunpack.c.l.b16 %v7913
    %v7955 = vunpack.c.l.b16 %v7914
    %v7956 = vpack.c.b16 %v7941, %v7940
    %v7957 = vpack.c.b16 %v7943, %v7942
    %v7958 = vpack.c.b16 %v7945, %v7944
    %v7959 = vpack.c.b16 %v7947, %v7946
    %v7960 = vpack.c.b16 %v7949, %v7948
    %v7961 = vpack.c.b16 %v7951, %v7950
    %v7962 = vpack.c.b16 %v7953, %v7952
    %v7963 = vpack.c.b16 %v7955, %v7954
    %7972 = vmatprep.subr.bf16.mxu0 0
    %7973 = vmatpush1.bf16.msra.mxu0 %v7956
    %7974 = vmatprep.subr.bf16.mxu0 0
    %7975 = vmatpush1.bf16.msra.mxu0 %v7957
    %7976 = vmatprep.subr.bf16.mxu0 0
    %7977 = vmatpush1.bf16.msra.mxu0 %v7958
    %7978 = vmatprep.subr.bf16.mxu0 0
    %7979 = vmatpush1.bf16.msra.mxu0 %v7959
    %7980 = vmatprep.subr.bf16.mxu0 0
    %7981 = vmatpush1.bf16.msra.mxu0 %v7960
    %7982 = vmatprep.subr.bf16.mxu0 0
    %7983 = vmatpush1.bf16.msra.mxu0 %v7961
    %7984 = vmatprep.subr.bf16.mxu0 0
    %7985 = vmatpush1.bf16.msra.mxu0 %v7962
    %7986 = vmatprep.subr.bf16.mxu0 0
    %7987 = vmatpush1.bf16.msra.mxu0 %v7963
    %7988 = vmatprep.subr.bf16.mxu0 0
    %7989 = vmatpush1.bf16.msra.mxu0 0
    %7990 = vmatprep.subr.bf16.mxu0 0
    %7991 = vmatpush1.bf16.msra.mxu0 0
    %7992 = vmatprep.subr.bf16.mxu0 0
    %7993 = vmatpush1.bf16.msra.mxu0 0
    %7994 = vmatprep.subr.bf16.mxu0 0
    %7995 = vmatpush1.bf16.msra.mxu0 0
    %7996 = vmatprep.subr.bf16.mxu0 0
    %7997 = vmatpush1.bf16.msra.mxu0 0
    %7998 = vmatprep.subr.bf16.mxu0 0
    %7999 = vmatpush1.bf16.msra.mxu0 0
    %8000 = vmatprep.subr.bf16.mxu0 0
    %8001 = vmatpush1.bf16.msra.mxu0 0
    %8002 = vmatprep.subr.bf16.mxu0 0
    %8003 = vmatpush1.bf16.msra.mxu0 0
    %8004 = vmatprep.mubr.bf16.mxu0 0
    %8005 = vmatmul.mubr.bf16.gmra.mrb[0].mxu0 %v7262
    %v8006 = vpop.f32.mrb[0].mxu0
    %v8007 = vadd.f32 0.0, %v8006
    %v8008 = vpop.f32.mrb[0].mxu0
    %v8009 = vpop.f32.mrb[0].mxu0
    %v8010 = vadd.f32 0.0, %v8009
    %v8011 = vpop.f32.mrb[0].mxu0
    %8012 = vmatprep.mubr.bf16.mxu0 0
    %8013 = vmatmul.mubr.bf16.gmra.mrb[0].mxu0 %v7264
    %v8014 = vpop.f32.mrb[0].mxu0
    %v8015 = vadd.f32 0.0, %v8014
    %v8016 = vpop.f32.mrb[0].mxu0
    %v8017 = vpop.f32.mrb[0].mxu0
    %v8018 = vadd.f32 0.0, %v8017
    %v8019 = vpop.f32.mrb[0].mxu0
    %8020 = vmatprep.mubr.bf16.mxu0 0
    %8021 = vmatmul.mubr.bf16.gmra.mrb[0].mxu0 %v7266
    %v8022 = vpop.f32.mrb[0].mxu0
    %v8023 = vadd.f32 0.0, %v8022
    %v8024 = vpop.f32.mrb[0].mxu0
    %v8025 = vpop.f32.mrb[0].mxu0
    %v8026 = vadd.f32 0.0, %v8025
    %v8027 = vpop.f32.mrb[0].mxu0
    %8028 = vmatprep.mubr.bf16.mxu0 0
    %8029 = vmatmul.mubr.bf16.gmra.mrb[0].mxu0 %v7268
    %v8030 = vpop.f32.mrb[0].mxu0
    %v8031 = vadd.f32 0.0, %v8030
    %v8032 = vpop.f32.mrb[0].mxu0
    %v8033 = vpop.f32.mrb[0].mxu0
    %v8034 = vadd.f32 0.0, %v8033
    %v8035 = vpop.f32.mrb[0].mxu0
    %8036 = vmatprep.mubr.bf16.mxu0 0
    %8037 = vmatmul.mubr.bf16.gmra.mrb[0].mxu0 %v7270
    %v8038 = vpop.f32.mrb[0].mxu0
    %v8039 = vadd.f32 0.0, %v8038
    %v8040 = vpop.f32.mrb[0].mxu0
    %v8041 = vpop.f32.mrb[0].mxu0
    %v8042 = vadd.f32 0.0, %v8041
    %v8043 = vpop.f32.mrb[0].mxu0
    %8044 = vmatprep.mubr.bf16.mxu0 0
    %8045 = vmatmul.mubr.bf16.gmra.mrb[0].mxu0 %v7272
    %v8046 = vpop.f32.mrb[0].mxu0
    %v8047 = vadd.f32 0.0, %v8046
    %v8048 = vpop.f32.mrb[0].mxu0
    %v8049 = vpop.f32.mrb[0].mxu0
    %v8050 = vadd.f32 0.0, %v8049
    %v8051 = vpop.f32.mrb[0].mxu0
    %8052 = vmatprep.mubr.bf16.mxu0 0
    %8053 = vmatmul.mubr.bf16.gmra.mrb[0].mxu0 %v7274
    %v8054 = vpop.f32.mrb[0].mxu0
    %v8055 = vadd.f32 0.0, %v8054
    %v8056 = vpop.f32.mrb[0].mxu0
    %v8057 = vpop.f32.mrb[0].mxu0
    %v8058 = vadd.f32 0.0, %v8057
    %v8059 = vpop.f32.mrb[0].mxu0
    %8060 = vmatprep.mubr.bf16.mxu0 0
    %8061 = vmatmul.mubr.bf16.gmra.mrb[0].mxu0 %v7916
    %v8062 = vpop.f32.mrb[0].mxu0
    %v8063 = vadd.f32 0.0, %v8062
    %v8064 = vpop.f32.mrb[0].mxu0
    %v8065 = vpop.f32.mrb[0].mxu0
    %v8066 = vadd.f32 0.0, %v8065
    %v8067 = vpop.f32.mrb[0].mxu0
    %8068 = vmatprep.mubr.bf16.mxu0 0
    %8069 = vmatmul.mubr.bf16.gmra.mrb[0].mxu0 %v7918
    %v8070 = vpop.f32.mrb[0].mxu0
    %v8071 = vadd.f32 0.0, %v8070
    %v8072 = vpop.f32.mrb[0].mxu0
    %v8073 = vpop.f32.mrb[0].mxu0
    %v8074 = vadd.f32 0.0, %v8073
    %v8075 = vpop.f32.mrb[0].mxu0
    %8076 = vmatprep.mubr.bf16.mxu0 0
    %8077 = vmatmul.mubr.bf16.gmra.mrb[0].mxu0 %v7920
    %v8078 = vpop.f32.mrb[0].mxu0
    %v8079 = vadd.f32 0.0, %v8078
    %v8080 = vpop.f32.mrb[0].mxu0
    %v8081 = vpop.f32.mrb[0].mxu0
    %v8082 = vadd.f32 0.0, %v8081
    %v8083 = vpop.f32.mrb[0].mxu0
    %8084 = vdwg.mxu0
    %v8085 = vadd.f32 %v7879, %v8007
    %v8086 = vadd.f32 %v7880, %v8010
    %v8087 = vadd.f32 %v7881, %v8015
    %v8088 = vadd.f32 %v7882, %v8018
    %v8089 = vadd.f32 %v7883, %v8023
    %v8090 = vadd.f32 %v7884, %v8026
    %v8091 = vadd.f32 %v7885, %v8031
    %v8092 = vadd.f32 %v7886, %v8034
    %v8093 = vadd.f32 %v7887, %v8039
    %v8094 = vadd.f32 %v7888, %v8042
    %v8095 = vadd.f32 %v7889, %v8047
    %v8096 = vadd.f32 %v7890, %v8050
    %v8097 = vadd.f32 %v7891, %v8055
    %v8098 = vadd.f32 %v7892, %v8058
    %v8099 = vadd.f32 %v7893, %v8063
    %v8100 = vadd.f32 %v7894, %v8066
    %v8101 = vadd.f32 %v7895, %v8071
    %v8102 = vadd.f32 %v7896, %v8074
    %v8103 = vadd.f32 %v7897, %v8079
    %v8104 = vadd.f32 %v7898, %v8082
    %v8105 = vld [vmem:[%s1459] sm:$0xf]
    %v8106 = vld [vmem:[%s1459 + $0x4] sm:$0xf]
    %v8107 = vld [vmem:[%s1459 + $0x8] sm:$0xf]
    %v8108 = vld [vmem:[%s1459 + $0xc] sm:$0xf]
    %v8109 = vld [vmem:[%s1459 + $0x10] sm:$0xf]
    %v8110 = vld [vmem:[%s1459 + $0x14] sm:$0xf]
    %v8111 = vld [vmem:[%s1459 + $0x18] sm:$0xf]
    %v8112 = vld [vmem:[%s1459 + $0x1c] sm:$0xf]
    %v8113 = vld [vmem:[%s1459 + $0x20] sm:$0xf]
    %v8114 = vld [vmem:[%s1459 + $0x24] sm:$0xf]
    %v8115 = vld [vmem:[%s1459 + $0x28] sm:$0xf]
    %v8116 = vld [vmem:[%s1459 + $0x2c] sm:$0xf]
    %v8117 = vld [vmem:[%s1459 + $0x30] sm:$0xf]
    %v8118 = vld [vmem:[%s1459 + $0x34] sm:$0xf]
    %v8119 = vld [vmem:[%s1459 + $0x38] sm:$0xf]
    %v8120 = vld [vmem:[%s1459 + $0x3c] sm:$0xf]
    %v8124 = vunpack.c.l.b16 %v6725
    %v8125 = vunpack.c.l.b16 %v6726
    %v8126 = vunpack.c.l.b16 %v6727
    %v8127 = vpack.c.b16 %v8124, %v7692
    %v8128 = vpack.c.b16 %v8126, %v8125
    %v8147 = vunpack.c.l.b16 %v8105
    %v8148 = vunpack.c.l.b16 %v8106
    %v8149 = vunpack.c.l.b16 %v8107
    %v8150 = vunpack.c.l.b16 %v8108
    %v8151 = vunpack.c.l.b16 %v8109
    %v8152 = vunpack.c.l.b16 %v8110
    %v8153 = vunpack.c.l.b16 %v8111
    %v8154 = vunpack.c.l.b16 %v8112
    %v8155 = vunpack.c.l.b16 %v8113
    %v8156 = vunpack.c.l.b16 %v8114
    %v8157 = vunpack.c.l.b16 %v8115
    %v8158 = vunpack.c.l.b16 %v8116
    %v8159 = vunpack.c.l.b16 %v8117
    %v8160 = vunpack.c.l.b16 %v8118
    %v8161 = vunpack.c.l.b16 %v8119
    %v8162 = vunpack.c.l.b16 %v8120
    %v8163 = vpack.c.b16 %v8148, %v8147
    %v8164 = vpack.c.b16 %v8150, %v8149
    %v8165 = vpack.c.b16 %v8152, %v8151
    %v8166 = vpack.c.b16 %v8154, %v8153
    %v8167 = vpack.c.b16 %v8156, %v8155
    %v8168 = vpack.c.b16 %v8158, %v8157
    %v8169 = vpack.c.b16 %v8160, %v8159
    %v8170 = vpack.c.b16 %v8162, %v8161
    %8179 = vmatprep.subr.bf16.mxu0 0
    %8180 = vmatpush1.bf16.msra.mxu0 %v8163
    %8181 = vmatprep.subr.bf16.mxu0 0
    %8182 = vmatpush1.bf16.msra.mxu0 %v8164
    %8183 = vmatprep.subr.bf16.mxu0 0
    %8184 = vmatpush1.bf16.msra.mxu0 %v8165
    %8185 = vmatprep.subr.bf16.mxu0 0
    %8186 = vmatpush1.bf16.msra.mxu0 %v8166
    %8187 = vmatprep.subr.bf16.mxu0 0
    %8188 = vmatpush1.bf16.msra.mxu0 %v8167
    %8189 = vmatprep.subr.bf16.mxu0 0
    %8190 = vmatpush1.bf16.msra.mxu0 %v8168
    %8191 = vmatprep.subr.bf16.mxu0 0
    %8192 = vmatpush1.bf16.msra.mxu0 %v8169
    %8193 = vmatprep.subr.bf16.mxu0 0
    %8194 = vmatpush1.bf16.msra.mxu0 %v8170
    %8195 = vmatprep.subr.bf16.mxu0 0
    %8196 = vmatpush1.bf16.msra.mxu0 0
    %8197 = vmatprep.subr.bf16.mxu0 0
    %8198 = vmatpush1.bf16.msra.mxu0 0
    %8199 = vmatprep.subr.bf16.mxu0 0
    %8200 = vmatpush1.bf16.msra.mxu0 0
    %8201 = vmatprep.subr.bf16.mxu0 0
    %8202 = vmatpush1.bf16.msra.mxu0 0
    %8203 = vmatprep.subr.bf16.mxu0 0
    %8204 = vmatpush1.bf16.msra.mxu0 0
    %8205 = vmatprep.subr.bf16.mxu0 0
    %8206 = vmatpush1.bf16.msra.mxu0 0
    %8207 = vmatprep.subr.bf16.mxu0 0
    %8208 = vmatpush1.bf16.msra.mxu0 0
    %8209 = vmatprep.subr.bf16.mxu0 0
    %8210 = vmatpush1.bf16.msra.mxu0 0
    %8211 = vmatprep.mubr.bf16.mxu0 0
    %8212 = vmatmul.mubr.bf16.gmra.mrb[0].mxu0 %v6807
    %v8213 = vpop.f32.mrb[0].mxu0
    %v8214 = vadd.f32 0.0, %v8213
    %v8215 = vpop.f32.mrb[0].mxu0
    %v8216 = vpop.f32.mrb[0].mxu0
    %v8217 = vadd.f32 0.0, %v8216
    %v8218 = vpop.f32.mrb[0].mxu0
    %8219 = vmatprep.mubr.bf16.mxu0 0
    %8220 = vmatmul.mubr.bf16.gmra.mrb[0].mxu0 %v6808
    %v8221 = vpop.f32.mrb[0].mxu0
    %v8222 = vadd.f32 0.0, %v8221
    %v8223 = vpop.f32.mrb[0].mxu0
    %v8224 = vpop.f32.mrb[0].mxu0
    %v8225 = vadd.f32 0.0, %v8224
    %v8226 = vpop.f32.mrb[0].mxu0
    %8227 = vmatprep.mubr.bf16.mxu0 0
    %8228 = vmatmul.mubr.bf16.gmra.mrb[0].mxu0 %v6809
    %v8229 = vpop.f32.mrb[0].mxu0
    %v8230 = vadd.f32 0.0, %v8229
    %v8231 = vpop.f32.mrb[0].mxu0
    %v8232 = vpop.f32.mrb[0].mxu0
    %v8233 = vadd.f32 0.0, %v8232
    %v8234 = vpop.f32.mrb[0].mxu0
    %8235 = vmatprep.mubr.bf16.mxu0 0
    %8236 = vmatmul.mubr.bf16.gmra.mrb[0].mxu0 %v6810
    %v8237 = vpop.f32.mrb[0].mxu0
    %v8238 = vadd.f32 0.0, %v8237
    %v8239 = vpop.f32.mrb[0].mxu0
    %v8240 = vpop.f32.mrb[0].mxu0
    %v8241 = vadd.f32 0.0, %v8240
    %v8242 = vpop.f32.mrb[0].mxu0
    %8243 = vmatprep.mubr.bf16.mxu0 0
    %8244 = vmatmul.mubr.bf16.gmra.mrb[0].mxu0 %v6811
    %v8245 = vpop.f32.mrb[0].mxu0
    %v8246 = vadd.f32 0.0, %v8245
    %v8247 = vpop.f32.mrb[0].mxu0
    %v8248 = vpop.f32.mrb[0].mxu0
    %v8249 = vadd.f32 0.0, %v8248
    %v8250 = vpop.f32.mrb[0].mxu0
    %8251 = vmatprep.mubr.bf16.mxu0 0
    %8252 = vmatmul.mubr.bf16.gmra.mrb[0].mxu0 %v6812
    %v8253 = vpop.f32.mrb[0].mxu0
    %v8254 = vadd.f32 0.0, %v8253
    %v8255 = vpop.f32.mrb[0].mxu0
    %v8256 = vpop.f32.mrb[0].mxu0
    %v8257 = vadd.f32 0.0, %v8256
    %v8258 = vpop.f32.mrb[0].mxu0
    %8259 = vmatprep.mubr.bf16.mxu0 0
    %8260 = vmatmul.mubr.bf16.gmra.mrb[0].mxu0 %v7490
    %v8261 = vpop.f32.mrb[0].mxu0
    %v8262 = vadd.f32 0.0, %v8261
    %v8263 = vpop.f32.mrb[0].mxu0
    %v8264 = vpop.f32.mrb[0].mxu0
    %v8265 = vadd.f32 0.0, %v8264
    %v8266 = vpop.f32.mrb[0].mxu0
    %8267 = vmatprep.mubr.bf16.mxu0 0
    %8268 = vmatmul.mubr.bf16.gmra.mrb[0].mxu0 %v7491
    %v8269 = vpop.f32.mrb[0].mxu0
    %v8270 = vadd.f32 0.0, %v8269
    %v8271 = vpop.f32.mrb[0].mxu0
    %v8272 = vpop.f32.mrb[0].mxu0
    %v8273 = vadd.f32 0.0, %v8272
    %v8274 = vpop.f32.mrb[0].mxu0
    %8275 = vmatprep.mubr.bf16.mxu0 0
    %8276 = vmatmul.mubr.bf16.gmra.mrb[0].mxu0 %v8127
    %v8277 = vpop.f32.mrb[0].mxu0
    %v8278 = vadd.f32 0.0, %v8277
    %v8279 = vpop.f32.mrb[0].mxu0
    %v8280 = vpop.f32.mrb[0].mxu0
    %v8281 = vadd.f32 0.0, %v8280
    %v8282 = vpop.f32.mrb[0].mxu0
    %8283 = vmatprep.mubr.bf16.mxu0 0
    %8284 = vmatmul.mubr.bf16.gmra.mrb[0].mxu0 %v8128
    %v8285 = vpop.f32.mrb[0].mxu0
    %v8286 = vadd.f32 0.0, %v8285
    %v8287 = vpop.f32.mrb[0].mxu0
    %v8288 = vpop.f32.mrb[0].mxu0
    %v8289 = vadd.f32 0.0, %v8288
    %v8290 = vpop.f32.mrb[0].mxu0
    %8291 = vdwg.mxu0
    %v8292 = vadd.f32 %v8085, %v8214
    %v8293 = vadd.f32 %v8086, %v8217
    %v8294 = vadd.f32 %v8087, %v8222
    %v8295 = vadd.f32 %v8088, %v8225
    %v8296 = vadd.f32 %v8089, %v8230
    %v8297 = vadd.f32 %v8090, %v8233
    %v8298 = vadd.f32 %v8091, %v8238
    %v8299 = vadd.f32 %v8092, %v8241
    %v8300 = vadd.f32 %v8093, %v8246
    %v8301 = vadd.f32 %v8094, %v8249
    %v8302 = vadd.f32 %v8095, %v8254
    %v8303 = vadd.f32 %v8096, %v8257
    %v8304 = vadd.f32 %v8097, %v8262
    %v8305 = vadd.f32 %v8098, %v8265
    %v8306 = vadd.f32 %v8099, %v8270
    %v8307 = vadd.f32 %v8100, %v8273
    %v8308 = vadd.f32 %v8101, %v8278
    %v8309 = vadd.f32 %v8102, %v8281
    %v8310 = vadd.f32 %v8103, %v8286
    %v8311 = vadd.f32 %v8104, %v8289
    %v8312 = vld [vmem:[%s1667] sm:$0xf]
    %v8313 = vld [vmem:[%s1667 + $0x4] sm:$0xf]
    %v8314 = vld [vmem:[%s1667 + $0x8] sm:$0xf]
    %v8315 = vld [vmem:[%s1667 + $0xc] sm:$0xf]
    %v8316 = vld [vmem:[%s1667 + $0x10] sm:$0xf]
    %v8317 = vld [vmem:[%s1667 + $0x14] sm:$0xf]
    %v8318 = vld [vmem:[%s1667 + $0x18] sm:$0xf]
    %v8319 = vld [vmem:[%s1667 + $0x1c] sm:$0xf]
    %v8320 = vld [vmem:[%s1667 + $0x20] sm:$0xf]
    %v8321 = vld [vmem:[%s1667 + $0x24] sm:$0xf]
    %v8322 = vld [vmem:[%s1667 + $0x28] sm:$0xf]
    %v8323 = vld [vmem:[%s1667 + $0x2c] sm:$0xf]
    %v8324 = vld [vmem:[%s1667 + $0x30] sm:$0xf]
    %v8325 = vld [vmem:[%s1667 + $0x34] sm:$0xf]
    %v8326 = vld [vmem:[%s1667 + $0x38] sm:$0xf]
    %v8327 = vld [vmem:[%s1667 + $0x3c] sm:$0xf]
    %v8329 = vunpack.c.l.b16 %v6728
    %v8330 = vpack.c.b16 %v8329, %v8329
    %v8332 = vshll.u32 %v8127, 16
    %v8334 = vrot.slane %v8332, 1
    %v8335 = vsel %vm162, %v7709, %v8334
    %v8336 = vshrl.u32 %v8127, 16
    %v8338 = vor.u32 %v8336, %v8334
    %v8340 = vshll.u32 %v8128, 16
    %v8342 = vrot.slane %v8340, 1
    %v8343 = vsel %vm162, %v8338, %v8342
    %v8344 = vshrl.u32 %v8128, 16
    %v8346 = vor.u32 %v8344, %v8342
    %v8348 = vshll.u32 %v8330, 16
    %v8350 = vrot.slane %v8348, 1
    %v8351 = vsel %vm162, %v8346, %v8350
    %v8371 = vunpack.c.l.b16 %v8312
    %v8372 = vunpack.c.l.b16 %v8313
    %v8373 = vunpack.c.l.b16 %v8314
    %v8374 = vunpack.c.l.b16 %v8315
    %v8375 = vunpack.c.l.b16 %v8316
    %v8376 = vunpack.c.l.b16 %v8317
    %v8377 = vunpack.c.l.b16 %v8318
    %v8378 = vunpack.c.l.b16 %v8319
    %v8379 = vunpack.c.l.b16 %v8320
    %v8380 = vunpack.c.l.b16 %v8321
    %v8381 = vunpack.c.l.b16 %v8322
    %v8382 = vunpack.c.l.b16 %v8323
    %v8383 = vunpack.c.l.b16 %v8324
    %v8384 = vunpack.c.l.b16 %v8325
    %v8385 = vunpack.c.l.b16 %v8326
    %v8386 = vunpack.c.l.b16 %v8327
    %v8387 = vpack.c.b16 %v8372, %v8371
    %v8388 = vpack.c.b16 %v8374, %v8373
    %v8389 = vpack.c.b16 %v8376, %v8375
    %v8390 = vpack.c.b16 %v8378, %v8377
    %v8391 = vpack.c.b16 %v8380, %v8379
    %v8392 = vpack.c.b16 %v8382, %v8381
    %v8393 = vpack.c.b16 %v8384, %v8383
    %v8394 = vpack.c.b16 %v8386, %v8385
    %8403 = vmatprep.subr.bf16.mxu0 0
    %8404 = vmatpush1.bf16.msra.mxu0 %v8387
    %8405 = vmatprep.subr.bf16.mxu0 0
    %8406 = vmatpush1.bf16.msra.mxu0 %v8388
    %8407 = vmatprep.subr.bf16.mxu0 0
    %8408 = vmatpush1.bf16.msra.mxu0 %v8389
    %8409 = vmatprep.subr.bf16.mxu0 0
    %8410 = vmatpush1.bf16.msra.mxu0 %v8390
    %8411 = vmatprep.subr.bf16.mxu0 0
    %8412 = vmatpush1.bf16.msra.mxu0 %v8391
    %8413 = vmatprep.subr.bf16.mxu0 0
    %8414 = vmatpush1.bf16.msra.mxu0 %v8392
    %8415 = vmatprep.subr.bf16.mxu0 0
    %8416 = vmatpush1.bf16.msra.mxu0 %v8393
    %8417 = vmatprep.subr.bf16.mxu0 0
    %8418 = vmatpush1.bf16.msra.mxu0 %v8394
    %8419 = vmatprep.subr.bf16.mxu0 0
    %8420 = vmatpush1.bf16.msra.mxu0 0
    %8421 = vmatprep.subr.bf16.mxu0 0
    %8422 = vmatpush1.bf16.msra.mxu0 0
    %8423 = vmatprep.subr.bf16.mxu0 0
    %8424 = vmatpush1.bf16.msra.mxu0 0
    %8425 = vmatprep.subr.bf16.mxu0 0
    %8426 = vmatpush1.bf16.msra.mxu0 0
    %8427 = vmatprep.subr.bf16.mxu0 0
    %8428 = vmatpush1.bf16.msra.mxu0 0
    %8429 = vmatprep.subr.bf16.mxu0 0
    %8430 = vmatpush1.bf16.msra.mxu0 0
    %8431 = vmatprep.subr.bf16.mxu0 0
    %8432 = vmatpush1.bf16.msra.mxu0 0
    %8433 = vmatprep.subr.bf16.mxu0 0
    %8434 = vmatpush1.bf16.msra.mxu0 0
    %8435 = vmatprep.mubr.bf16.mxu0 0
    %8436 = vmatmul.mubr.bf16.gmra.mrb[0].mxu0 %v6857
    %v8437 = vpop.f32.mrb[0].mxu0
    %v8438 = vadd.f32 0.0, %v8437
    %v8439 = vpop.f32.mrb[0].mxu0
    %v8440 = vpop.f32.mrb[0].mxu0
    %v8441 = vadd.f32 0.0, %v8440
    %v8442 = vpop.f32.mrb[0].mxu0
    %8443 = vmatprep.mubr.bf16.mxu0 0
    %8444 = vmatmul.mubr.bf16.gmra.mrb[0].mxu0 %v6865
    %v8445 = vpop.f32.mrb[0].mxu0
    %v8446 = vadd.f32 0.0, %v8445
    %v8447 = vpop.f32.mrb[0].mxu0
    %v8448 = vpop.f32.mrb[0].mxu0
    %v8449 = vadd.f32 0.0, %v8448
    %v8450 = vpop.f32.mrb[0].mxu0
    %8451 = vmatprep.mubr.bf16.mxu0 0
    %8452 = vmatmul.mubr.bf16.gmra.mrb[0].mxu0 %v6873
    %v8453 = vpop.f32.mrb[0].mxu0
    %v8454 = vadd.f32 0.0, %v8453
    %v8455 = vpop.f32.mrb[0].mxu0
    %v8456 = vpop.f32.mrb[0].mxu0
    %v8457 = vadd.f32 0.0, %v8456
    %v8458 = vpop.f32.mrb[0].mxu0
    %8459 = vmatprep.mubr.bf16.mxu0 0
    %8460 = vmatmul.mubr.bf16.gmra.mrb[0].mxu0 %v6881
    %v8461 = vpop.f32.mrb[0].mxu0
    %v8462 = vadd.f32 0.0, %v8461
    %v8463 = vpop.f32.mrb[0].mxu0
    %v8464 = vpop.f32.mrb[0].mxu0
    %v8465 = vadd.f32 0.0, %v8464
    %v8466 = vpop.f32.mrb[0].mxu0
    %8467 = vmatprep.mubr.bf16.mxu0 0
    %8468 = vmatmul.mubr.bf16.gmra.mrb[0].mxu0 %v6889
    %v8469 = vpop.f32.mrb[0].mxu0
    %v8470 = vadd.f32 0.0, %v8469
    %v8471 = vpop.f32.mrb[0].mxu0
    %v8472 = vpop.f32.mrb[0].mxu0
    %v8473 = vadd.f32 0.0, %v8472
    %v8474 = vpop.f32.mrb[0].mxu0
    %8475 = vmatprep.mubr.bf16.mxu0 0
    %8476 = vmatmul.mubr.bf16.gmra.mrb[0].mxu0 %v7698
    %v8477 = vpop.f32.mrb[0].mxu0
    %v8478 = vadd.f32 0.0, %v8477
    %v8479 = vpop.f32.mrb[0].mxu0
    %v8480 = vpop.f32.mrb[0].mxu0
    %v8481 = vadd.f32 0.0, %v8480
    %v8482 = vpop.f32.mrb[0].mxu0
    %8483 = vmatprep.mubr.bf16.mxu0 0
    %8484 = vmatmul.mubr.bf16.gmra.mrb[0].mxu0 %v7706
    %v8485 = vpop.f32.mrb[0].mxu0
    %v8486 = vadd.f32 0.0, %v8485
    %v8487 = vpop.f32.mrb[0].mxu0
    %v8488 = vpop.f32.mrb[0].mxu0
    %v8489 = vadd.f32 0.0, %v8488
    %v8490 = vpop.f32.mrb[0].mxu0
    %8491 = vmatprep.mubr.bf16.mxu0 0
    %8492 = vmatmul.mubr.bf16.gmra.mrb[0].mxu0 %v8335
    %v8493 = vpop.f32.mrb[0].mxu0
    %v8494 = vadd.f32 0.0, %v8493
    %v8495 = vpop.f32.mrb[0].mxu0
    %v8496 = vpop.f32.mrb[0].mxu0
    %v8497 = vadd.f32 0.0, %v8496
    %v8498 = vpop.f32.mrb[0].mxu0
    %8499 = vmatprep.mubr.bf16.mxu0 0
    %8500 = vmatmul.mubr.bf16.gmra.mrb[0].mxu0 %v8343
    %v8501 = vpop.f32.mrb[0].mxu0
    %v8502 = vadd.f32 0.0, %v8501
    %v8503 = vpop.f32.mrb[0].mxu0
    %v8504 = vpop.f32.mrb[0].mxu0
    %v8505 = vadd.f32 0.0, %v8504
    %v8506 = vpop.f32.mrb[0].mxu0
    %8507 = vmatprep.mubr.bf16.mxu0 0
    %8508 = vmatmul.mubr.bf16.gmra.mrb[0].mxu0 %v8351
    %v8509 = vpop.f32.mrb[0].mxu0
    %v8510 = vadd.f32 0.0, %v8509
    %v8511 = vpop.f32.mrb[0].mxu0
    %v8512 = vpop.f32.mrb[0].mxu0
    %v8513 = vadd.f32 0.0, %v8512
    %v8514 = vpop.f32.mrb[0].mxu0
    %8515 = vdwg.mxu0
    %v8516 = vadd.f32 %v8292, %v8438
    %v8517 = vadd.f32 %v8293, %v8441
    %v8518 = vadd.f32 %v8294, %v8446
    %v8519 = vadd.f32 %v8295, %v8449
    %v8520 = vadd.f32 %v8296, %v8454
    %v8521 = vadd.f32 %v8297, %v8457
    %v8522 = vadd.f32 %v8298, %v8462
    %v8523 = vadd.f32 %v8299, %v8465
    %v8524 = vadd.f32 %v8300, %v8470
    %v8525 = vadd.f32 %v8301, %v8473
    %v8526 = vadd.f32 %v8302, %v8478
    %v8527 = vadd.f32 %v8303, %v8481
    %v8528 = vadd.f32 %v8304, %v8486
    %v8529 = vadd.f32 %v8305, %v8489
    %v8530 = vadd.f32 %v8306, %v8494
    %v8531 = vadd.f32 %v8307, %v8497
    %v8532 = vadd.f32 %v8308, %v8502
    %v8533 = vadd.f32 %v8309, %v8505
    %v8534 = vadd.f32 %v8310, %v8510
    %v8535 = vadd.f32 %v8311, %v8513
    %v8536 = vld [vmem:[%s1892] sm:$0xf]
    %v8537 = vld [vmem:[%s1892 + $0x4] sm:$0xf]
    %v8538 = vld [vmem:[%s1892 + $0x8] sm:$0xf]
    %v8539 = vld [vmem:[%s1892 + $0xc] sm:$0xf]
    %v8540 = vld [vmem:[%s1892 + $0x10] sm:$0xf]
    %v8541 = vld [vmem:[%s1892 + $0x14] sm:$0xf]
    %v8542 = vld [vmem:[%s1892 + $0x18] sm:$0xf]
    %v8543 = vld [vmem:[%s1892 + $0x1c] sm:$0xf]
    %v8544 = vld [vmem:[%s1892 + $0x20] sm:$0xf]
    %v8545 = vld [vmem:[%s1892 + $0x24] sm:$0xf]
    %v8546 = vld [vmem:[%s1892 + $0x28] sm:$0xf]
    %v8547 = vld [vmem:[%s1892 + $0x2c] sm:$0xf]
    %v8548 = vld [vmem:[%s1892 + $0x30] sm:$0xf]
    %v8549 = vld [vmem:[%s1892 + $0x34] sm:$0xf]
    %v8550 = vld [vmem:[%s1892 + $0x38] sm:$0xf]
    %v8551 = vld [vmem:[%s1892 + $0x3c] sm:$0xf]
    %v8552 = vrot.slane %v8127, 1
    %v8553 = vsel %vm606, %v7917, %v8552
    %v8554 = vrot.slane %v8128, 1
    %v8555 = vsel %vm606, %v8552, %v8554
    %v8556 = vrot.slane %v8330, 1
    %v8557 = vsel %vm606, %v8554, %v8556
    %v8577 = vunpack.c.l.b16 %v8536
    %v8578 = vunpack.c.l.b16 %v8537
    %v8579 = vunpack.c.l.b16 %v8538
    %v8580 = vunpack.c.l.b16 %v8539
    %v8581 = vunpack.c.l.b16 %v8540
    %v8582 = vunpack.c.l.b16 %v8541
    %v8583 = vunpack.c.l.b16 %v8542
    %v8584 = vunpack.c.l.b16 %v8543
    %v8585 = vunpack.c.l.b16 %v8544
    %v8586 = vunpack.c.l.b16 %v8545
    %v8587 = vunpack.c.l.b16 %v8546
    %v8588 = vunpack.c.l.b16 %v8547
    %v8589 = vunpack.c.l.b16 %v8548
    %v8590 = vunpack.c.l.b16 %v8549
    %v8591 = vunpack.c.l.b16 %v8550
    %v8592 = vunpack.c.l.b16 %v8551
    %v8593 = vpack.c.b16 %v8578, %v8577
    %v8594 = vpack.c.b16 %v8580, %v8579
    %v8595 = vpack.c.b16 %v8582, %v8581
    %v8596 = vpack.c.b16 %v8584, %v8583
    %v8597 = vpack.c.b16 %v8586, %v8585
    %v8598 = vpack.c.b16 %v8588, %v8587
    %v8599 = vpack.c.b16 %v8590, %v8589
    %v8600 = vpack.c.b16 %v8592, %v8591
    %8609 = vmatprep.subr.bf16.mxu0 0
    %8610 = vmatpush1.bf16.msra.mxu0 %v8593
    %8611 = vmatprep.subr.bf16.mxu0 0
    %8612 = vmatpush1.bf16.msra.mxu0 %v8594
    %8613 = vmatprep.subr.bf16.mxu0 0
    %8614 = vmatpush1.bf16.msra.mxu0 %v8595
    %8615 = vmatprep.subr.bf16.mxu0 0
    %8616 = vmatpush1.bf16.msra.mxu0 %v8596
    %8617 = vmatprep.subr.bf16.mxu0 0
    %8618 = vmatpush1.bf16.msra.mxu0 %v8597
    %8619 = vmatprep.subr.bf16.mxu0 0
    %8620 = vmatpush1.bf16.msra.mxu0 %v8598
    %8621 = vmatprep.subr.bf16.mxu0 0
    %8622 = vmatpush1.bf16.msra.mxu0 %v8599
    %8623 = vmatprep.subr.bf16.mxu0 0
    %8624 = vmatpush1.bf16.msra.mxu0 %v8600
    %8625 = vmatprep.subr.bf16.mxu0 0
    %8626 = vmatpush1.bf16.msra.mxu0 0
    %8627 = vmatprep.subr.bf16.mxu0 0
    %8628 = vmatpush1.bf16.msra.mxu0 0
    %8629 = vmatprep.subr.bf16.mxu0 0
    %8630 = vmatpush1.bf16.msra.mxu0 0
    %8631 = vmatprep.subr.bf16.mxu0 0
    %8632 = vmatpush1.bf16.msra.mxu0 0
    %8633 = vmatprep.subr.bf16.mxu0 0
    %8634 = vmatpush1.bf16.msra.mxu0 0
    %8635 = vmatprep.subr.bf16.mxu0 0
    %8636 = vmatpush1.bf16.msra.mxu0 0
    %8637 = vmatprep.subr.bf16.mxu0 0
    %8638 = vmatpush1.bf16.msra.mxu0 0
    %8639 = vmatprep.subr.bf16.mxu0 0
    %8640 = vmatpush1.bf16.msra.mxu0 0
    %8641 = vmatprep.mubr.bf16.mxu0 0
    %8642 = vmatmul.mubr.bf16.gmra.mrb[0].mxu0 %v7266
    %v8643 = vpop.f32.mrb[0].mxu0
    %v8644 = vadd.f32 0.0, %v8643
    %v8645 = vpop.f32.mrb[0].mxu0
    %v8646 = vpop.f32.mrb[0].mxu0
    %v8647 = vadd.f32 0.0, %v8646
    %v8648 = vpop.f32.mrb[0].mxu0
    %8649 = vmatprep.mubr.bf16.mxu0 0
    %8650 = vmatmul.mubr.bf16.gmra.mrb[0].mxu0 %v7268
    %v8651 = vpop.f32.mrb[0].mxu0
    %v8652 = vadd.f32 0.0, %v8651
    %v8653 = vpop.f32.mrb[0].mxu0
    %v8654 = vpop.f32.mrb[0].mxu0
    %v8655 = vadd.f32 0.0, %v8654
    %v8656 = vpop.f32.mrb[0].mxu0
    %8657 = vmatprep.mubr.bf16.mxu0 0
    %8658 = vmatmul.mubr.bf16.gmra.mrb[0].mxu0 %v7270
    %v8659 = vpop.f32.mrb[0].mxu0
    %v8660 = vadd.f32 0.0, %v8659
    %v8661 = vpop.f32.mrb[0].mxu0
    %v8662 = vpop.f32.mrb[0].mxu0
    %v8663 = vadd.f32 0.0, %v8662
    %v8664 = vpop.f32.mrb[0].mxu0
    %8665 = vmatprep.mubr.bf16.mxu0 0
    %8666 = vmatmul.mubr.bf16.gmra.mrb[0].mxu0 %v7272
    %v8667 = vpop.f32.mrb[0].mxu0
    %v8668 = vadd.f32 0.0, %v8667
    %v8669 = vpop.f32.mrb[0].mxu0
    %v8670 = vpop.f32.mrb[0].mxu0
    %v8671 = vadd.f32 0.0, %v8670
    %v8672 = vpop.f32.mrb[0].mxu0
    %8673 = vmatprep.mubr.bf16.mxu0 0
    %8674 = vmatmul.mubr.bf16.gmra.mrb[0].mxu0 %v7274
    %v8675 = vpop.f32.mrb[0].mxu0
    %v8676 = vadd.f32 0.0, %v8675
    %v8677 = vpop.f32.mrb[0].mxu0
    %v8678 = vpop.f32.mrb[0].mxu0
    %v8679 = vadd.f32 0.0, %v8678
    %v8680 = vpop.f32.mrb[0].mxu0
    %8681 = vmatprep.mubr.bf16.mxu0 0
    %8682 = vmatmul.mubr.bf16.gmra.mrb[0].mxu0 %v7916
    %v8683 = vpop.f32.mrb[0].mxu0
    %v8684 = vadd.f32 0.0, %v8683
    %v8685 = vpop.f32.mrb[0].mxu0
    %v8686 = vpop.f32.mrb[0].mxu0
    %v8687 = vadd.f32 0.0, %v8686
    %v8688 = vpop.f32.mrb[0].mxu0
    %8689 = vmatprep.mubr.bf16.mxu0 0
    %8690 = vmatmul.mubr.bf16.gmra.mrb[0].mxu0 %v7918
    %v8691 = vpop.f32.mrb[0].mxu0
    %v8692 = vadd.f32 0.0, %v8691
    %v8693 = vpop.f32.mrb[0].mxu0
    %v8694 = vpop.f32.mrb[0].mxu0
    %v8695 = vadd.f32 0.0, %v8694
    %v8696 = vpop.f32.mrb[0].mxu0
    %8697 = vmatprep.mubr.bf16.mxu0 0
    %8698 = vmatmul.mubr.bf16.gmra.mrb[0].mxu0 %v8553
    %v8699 = vpop.f32.mrb[0].mxu0
    %v8700 = vadd.f32 0.0, %v8699
    %v8701 = vpop.f32.mrb[0].mxu0
    %v8702 = vpop.f32.mrb[0].mxu0
    %v8703 = vadd.f32 0.0, %v8702
    %v8704 = vpop.f32.mrb[0].mxu0
    %8705 = vmatprep.mubr.bf16.mxu0 0
    %8706 = vmatmul.mubr.bf16.gmra.mrb[0].mxu0 %v8555
    %v8707 = vpop.f32.mrb[0].mxu0
    %v8708 = vadd.f32 0.0, %v8707
    %v8709 = vpop.f32.mrb[0].mxu0
    %v8710 = vpop.f32.mrb[0].mxu0
    %v8711 = vadd.f32 0.0, %v8710
    %v8712 = vpop.f32.mrb[0].mxu0
    %8713 = vmatprep.mubr.bf16.mxu0 0
    %8714 = vmatmul.mubr.bf16.gmra.mrb[0].mxu0 %v8557
    %v8715 = vpop.f32.mrb[0].mxu0
    %v8716 = vadd.f32 0.0, %v8715
    %v8717 = vpop.f32.mrb[0].mxu0
    %v8718 = vpop.f32.mrb[0].mxu0
    %v8719 = vadd.f32 0.0, %v8718
    %v8720 = vpop.f32.mrb[0].mxu0
    %8721 = vdwg.mxu0
    %v8722 = vadd.f32 %v8516, %v8644
    %v8723 = vadd.f32 %v8517, %v8647
    %v8724 = vadd.f32 %v8518, %v8652
    %v8725 = vadd.f32 %v8519, %v8655
    %v8726 = vadd.f32 %v8520, %v8660
    %v8727 = vadd.f32 %v8521, %v8663
    %v8728 = vadd.f32 %v8522, %v8668
    %v8729 = vadd.f32 %v8523, %v8671
    %v8730 = vadd.f32 %v8524, %v8676
    %v8731 = vadd.f32 %v8525, %v8679
    %v8732 = vadd.f32 %v8526, %v8684
    %v8733 = vadd.f32 %v8527, %v8687
    %v8734 = vadd.f32 %v8528, %v8692
    %v8735 = vadd.f32 %v8529, %v8695
    %v8736 = vadd.f32 %v8530, %v8700
    %v8737 = vadd.f32 %v8531, %v8703
    %v8738 = vadd.f32 %v8532, %v8708
    %v8739 = vadd.f32 %v8533, %v8711
    %v8740 = vadd.f32 %v8534, %v8716
    %v8741 = vadd.f32 %v8535, %v8719
    %8742 = vst [vmem:[#allocation7 + $0x1e0] sm:$0xff] %v8722
    %8743 = vst [vmem:[#allocation7 + $0x1e8] sm:$0xff] %v8723
    %8744 = vst [vmem:[#allocation7 + $0x1f0] sm:$0xff] %v8724
    %8745 = vst [vmem:[#allocation7 + $0x1f8] sm:$0xff] %v8725
    %8746 = vst [vmem:[#allocation7 + $0x200] sm:$0xff] %v8726
    %8747 = vst [vmem:[#allocation7 + $0x208] sm:$0xff] %v8727
    %8748 = vst [vmem:[#allocation7 + $0x210] sm:$0xff] %v8728
    %8749 = vst [vmem:[#allocation7 + $0x218] sm:$0xff] %v8729
    %8750 = vst [vmem:[#allocation7 + $0x220] sm:$0xff] %v8730
    %8751 = vst [vmem:[#allocation7 + $0x228] sm:$0xff] %v8731
    %8752 = vst [vmem:[#allocation7 + $0x230] sm:$0xff] %v8732
    %8753 = vst [vmem:[#allocation7 + $0x238] sm:$0xff] %v8733
    %8754 = vst [vmem:[#allocation7 + $0x240] sm:$0xff] %v8734
    %8755 = vst [vmem:[#allocation7 + $0x248] sm:$0xff] %v8735
    %8756 = vst [vmem:[#allocation7 + $0x250] sm:$0xff] %v8736
    %8757 = vst [vmem:[#allocation7 + $0x258] sm:$0xff] %v8737
    %8758 = vst [vmem:[#allocation7 + $0x260] sm:$0xff] %v8738
    %8759 = vst [vmem:[#allocation7 + $0x268] sm:$0xff] %v8739
    %8760 = vst [vmem:[#allocation7 + $0x270] sm:$0xff] %v8740
    %8761 = vst [vmem:[#allocation7 + $0x278] sm:$0xff] %v8741
    %v8762 = vadd.s32 %v2120, 480
    %v8763 = vadd.s32 %v2121, 480
    %v8764 = vadd.s32 %v2122, 480
    %v8765 = vadd.s32 %v2123, 480
    %v8766 = vadd.s32 %v2124, 480
    %v8767 = vadd.s32 %v2125, 480
    %v8768 = vadd.s32 %v2126, 480
    %v8769 = vadd.s32 %v2127, 480
    %v8770 = vadd.s32 %v2128, 480
    %v8771 = vadd.s32 %v2129, 480
    %v8772 = vadd.s32 %v2130, 480
    %v8773 = vadd.s32 %v2131, 480
    %v8774 = vadd.s32 %v2132, 480
    %v8775 = vadd.s32 %v2133, 480
    %v8776 = vadd.s32 %v2134, 480
    %v8777 = vadd.s32 %v2135, 480
    %v8778 = vadd.s32 %v2136, 480
    %v8779 = vadd.s32 %v2137, 480
    %v8780 = vadd.s32 %v2138, 480
    %v8781 = vadd.s32 %v2139, 480
    %v8782 = vand.u32 %v8762, 31
    %v8783 = vand.u32 %v8763, 31
    %v8784 = vand.u32 %v8764, 31
    %v8785 = vand.u32 %v8765, 31
    %v8786 = vand.u32 %v8766, 31
    %v8787 = vand.u32 %v8767, 31
    %v8788 = vand.u32 %v8768, 31
    %v8789 = vand.u32 %v8769, 31
    %v8790 = vand.u32 %v8770, 31
    %v8791 = vand.u32 %v8771, 31
    %v8792 = vand.u32 %v8772, 31
    %v8793 = vand.u32 %v8773, 31
    %v8794 = vand.u32 %v8774, 31
    %v8795 = vand.u32 %v8775, 31
    %v8796 = vand.u32 %v8776, 31
    %v8797 = vand.u32 %v8777, 31
    %v8798 = vand.u32 %v8778, 31
    %v8799 = vand.u32 %v8779, 31
    %v8800 = vand.u32 %v8780, 31
    %v8801 = vand.u32 %v8781, 31
    %vm8802 = vcmp.lt.s32.totalorder %v8782, 25
    %vm8803 = vcmp.lt.s32.totalorder %v8783, 25
    %vm8804 = vcmp.lt.s32.totalorder %v8784, 25
    %vm8805 = vcmp.lt.s32.totalorder %v8785, 25
    %vm8806 = vcmp.lt.s32.totalorder %v8786, 25
    %vm8807 = vcmp.lt.s32.totalorder %v8787, 25
    %vm8808 = vcmp.lt.s32.totalorder %v8788, 25
    %vm8809 = vcmp.lt.s32.totalorder %v8789, 25
    %vm8810 = vcmp.lt.s32.totalorder %v8790, 25
    %vm8811 = vcmp.lt.s32.totalorder %v8791, 25
    %vm8812 = vcmp.lt.s32.totalorder %v8792, 25
    %vm8813 = vcmp.lt.s32.totalorder %v8793, 25
    %vm8814 = vcmp.lt.s32.totalorder %v8794, 25
    %vm8815 = vcmp.lt.s32.totalorder %v8795, 25
    %vm8816 = vcmp.lt.s32.totalorder %v8796, 25
    %vm8817 = vcmp.lt.s32.totalorder %v8797, 25
    %vm8818 = vcmp.lt.s32.totalorder %v8798, 25
    %vm8819 = vcmp.lt.s32.totalorder %v8799, 25
    %vm8820 = vcmp.lt.s32.totalorder %v8800, 25
    %vm8821 = vcmp.lt.s32.totalorder %v8801, 25
    %v8822 = vsel %vm8802, %v8722, 0.0
    %v8823 = vsel %vm8803, %v8723, 0.0
    %v8824 = vsel %vm8804, %v8724, 0.0
    %v8825 = vsel %vm8805, %v8725, 0.0
    %v8826 = vsel %vm8806, %v8726, 0.0
    %v8827 = vsel %vm8807, %v8727, 0.0
    %v8828 = vsel %vm8808, %v8728, 0.0
    %v8829 = vsel %vm8809, %v8729, 0.0
    %v8830 = vsel %vm8810, %v8730, 0.0
    %v8831 = vsel %vm8811, %v8731, 0.0
    %v8832 = vsel %vm8812, %v8732, 0.0
    %v8833 = vsel %vm8813, %v8733, 0.0
    %v8834 = vsel %vm8814, %v8734, 0.0
    %v8835 = vsel %vm8815, %v8735, 0.0
    %v8836 = vsel %vm8816, %v8736, 0.0
    %v8837 = vsel %vm8817, %v8737, 0.0
    %v8838 = vsel %vm8818, %v8738, 0.0
    %v8839 = vsel %vm8819, %v8739, 0.0
    %v8840 = vsel %vm8820, %v8740, 0.0
    %v8841 = vsel %vm8821, %v8741, 0.0
    %v8842 = vadd.f32 %v8822, %v8823
    %v8843 = vadd.f32 %v8842, %v8824
    %v8844 = vadd.f32 %v8843, %v8825
    %v8845 = vadd.f32 %v8844, %v8826
    %v8846 = vadd.f32 %v8845, %v8827
    %v8847 = vadd.f32 %v8846, %v8828
    %v8848 = vadd.f32 %v8847, %v8829
    %v8849 = vadd.f32 %v8848, %v8830
    %v8850 = vadd.f32 %v8849, %v8831
    %v8851 = vadd.f32 %v8850, %v8832
    %v8852 = vadd.f32 %v8851, %v8833
    %v8853 = vadd.f32 %v8852, %v8834
    %v8854 = vadd.f32 %v8853, %v8835
    %v8855 = vadd.f32 %v8854, %v8836
    %v8856 = vadd.f32 %v8855, %v8837
    %v8857 = vadd.f32 %v8856, %v8838
    %v8858 = vadd.f32 %v8857, %v8839
    %v8859 = vadd.f32 %v8858, %v8840
    %v8860 = vadd.f32 %v8859, %v8841
    %v8861 = vrot.slane %v8860, 4
    %v8862 = vadd.f32 %v8860, %v8861
    %v8863 = vrot.slane %v8862, 2
    %v8864 = vadd.f32 %v8862, %v8863
    %v8865 = vrot.slane %v8864, 1
    %v8866 = vadd.f32 %v8864, %v8865
    %v8867 = vadd.f32 %v6653, %v8866
    %v8868 = vmul.f32 %v8822, %v8822
    %v8869 = vmul.f32 %v8823, %v8823
    %v8870 = vmul.f32 %v8824, %v8824
    %v8871 = vmul.f32 %v8825, %v8825
    %v8872 = vmul.f32 %v8826, %v8826
    %v8873 = vmul.f32 %v8827, %v8827
    %v8874 = vmul.f32 %v8828, %v8828
    %v8875 = vmul.f32 %v8829, %v8829
    %v8876 = vmul.f32 %v8830, %v8830
    %v8877 = vmul.f32 %v8831, %v8831
    %v8878 = vmul.f32 %v8832, %v8832
    %v8879 = vmul.f32 %v8833, %v8833
    %v8880 = vmul.f32 %v8834, %v8834
    %v8881 = vmul.f32 %v8835, %v8835
    %v8882 = vmul.f32 %v8836, %v8836
    %v8883 = vmul.f32 %v8837, %v8837
    %v8884 = vmul.f32 %v8838, %v8838
    %v8885 = vmul.f32 %v8839, %v8839
    %v8886 = vmul.f32 %v8840, %v8840
    %v8887 = vmul.f32 %v8841, %v8841
    %v8888 = vadd.f32 %v8868, %v8869
    %v8889 = vadd.f32 %v8888, %v8870
    %v8890 = vadd.f32 %v8889, %v8871
    %v8891 = vadd.f32 %v8890, %v8872
    %v8892 = vadd.f32 %v8891, %v8873
    %v8893 = vadd.f32 %v8892, %v8874
    %v8894 = vadd.f32 %v8893, %v8875
    %v8895 = vadd.f32 %v8894, %v8876
    %v8896 = vadd.f32 %v8895, %v8877
    %v8897 = vadd.f32 %v8896, %v8878
    %v8898 = vadd.f32 %v8897, %v8879
    %v8899 = vadd.f32 %v8898, %v8880
    %v8900 = vadd.f32 %v8899, %v8881
    %v8901 = vadd.f32 %v8900, %v8882
    %v8902 = vadd.f32 %v8901, %v8883
    %v8903 = vadd.f32 %v8902, %v8884
    %v8904 = vadd.f32 %v8903, %v8885
    %v8905 = vadd.f32 %v8904, %v8886
    %v8906 = vadd.f32 %v8905, %v8887
    %v8907 = vrot.slane %v8906, 4
    %v8908 = vadd.f32 %v8906, %v8907
    %v8909 = vrot.slane %v8908, 2
    %v8910 = vadd.f32 %v8908, %v8909
    %v8911 = vrot.slane %v8910, 1
    %v8912 = vadd.f32 %v8910, %v8911
    %v8913 = vadd.f32 %v6699, %v8912
    %v8914 = vld [vmem:[#allocation2 + $0x140] sm:$0xf]
    %v8915 = vld [vmem:[#allocation2 + $0x144] sm:$0xf]
    %v8916 = vld [vmem:[#allocation2 + $0x148] sm:$0xf]
    %v8917 = vld [vmem:[#allocation2 + $0x14c] sm:$0xf]
    %v8918 = vld [vmem:[#allocation2 + $0x150] sm:$0xf]
    %v8919 = vld [vmem:[#allocation2 + $0x154] sm:$0xf]
    %v8920 = vld [vmem:[#allocation2 + $0x158] sm:$0xf]
    %v8921 = vld [vmem:[#allocation2 + $0x15c] sm:$0xf]
    %v8922 = vld [vmem:[#allocation2 + $0x160] sm:$0xf]
    %v8923 = vld [vmem:[#allocation2 + $0x164] sm:$0xf]
    %v8924 = vld [vmem:[#allocation2 + $0x168] sm:$0xf]
    %v8925 = vld [vmem:[#allocation2 + $0x16c] sm:$0xf]
    %v8926 = vld [vmem:[#allocation2 + $0x170] sm:$0xf]
    %v8927 = vld [vmem:[#allocation2 + $0x174] sm:$0xf]
    %v8928 = vld [vmem:[#allocation2 + $0x178] sm:$0xf]
    %v8929 = vld [vmem:[#allocation2 + $0x17c] sm:$0xf]
    %v8930 = vld [vmem:[#allocation2 + $0x180] sm:$0xf]
    %v8931 = vld [vmem:[#allocation2 + $0x184] sm:$0xf]
    %v8932 = vld [vmem:[#allocation2 + $0x188] sm:$0xf]
    %v8933 = vld [vmem:[#allocation2 + $0x18c] sm:$0xf]
    %v8934 = vld [vmem:[#allocation2 + $0x190] sm:$0xf]
    %v8935 = vld [vmem:[#allocation2 + $0x194] sm:$0xf]
    %v8936 = vld [vmem:[#allocation2 + $0x198] sm:$0xf]
    %v8937 = vld [vmem:[#allocation2 + $0x19c] sm:$0xf]
    %v8938 = vld [vmem:[#allocation2 + $0x1a0] sm:$0xf]
    %v8939 = vld [vmem:[#allocation2 + $0x1a4] sm:$0xf]
    %v8940 = vld [vmem:[#allocation2 + $0x1a8] sm:$0xf]
    %v8941 = vld [vmem:[#allocation2 + $0x1ac] sm:$0xf]
    %v8942 = vld [vmem:[#allocation2 + $0x1b0] sm:$0x1]
    %v8943 = vld [vmem:[#allocation5] sm:$0xf]
    %v8944 = vld [vmem:[#allocation5 + $0x4] sm:$0xf]
    %v8945 = vld [vmem:[#allocation5 + $0x8] sm:$0xf]
    %v8946 = vld [vmem:[#allocation5 + $0xc] sm:$0xf]
    %v8947 = vld [vmem:[#allocation5 + $0x10] sm:$0xf]
    %v8948 = vld [vmem:[#allocation5 + $0x14] sm:$0xf]
    %v8949 = vld [vmem:[#allocation5 + $0x18] sm:$0xf]
    %v8950 = vld [vmem:[#allocation5 + $0x1c] sm:$0xf]
    %v8951 = vld [vmem:[#allocation5 + $0x20] sm:$0xf]
    %v8952 = vld [vmem:[#allocation5 + $0x24] sm:$0xf]
    %v8953 = vld [vmem:[#allocation5 + $0x28] sm:$0xf]
    %v8954 = vld [vmem:[#allocation5 + $0x2c] sm:$0xf]
    %v8955 = vld [vmem:[#allocation5 + $0x30] sm:$0xf]
    %v8956 = vld [vmem:[#allocation5 + $0x34] sm:$0xf]
    %v8957 = vld [vmem:[#allocation5 + $0x38] sm:$0xf]
    %v8958 = vld [vmem:[#allocation5 + $0x3c] sm:$0xf]
    %v8959 = vld [vmem:[%s92] sm:$0xf]
    %v8960 = vld [vmem:[%s92 + $0x4] sm:$0xf]
    %v8961 = vld [vmem:[%s92 + $0x8] sm:$0xf]
    %v8962 = vld [vmem:[%s92 + $0xc] sm:$0xf]
    %v8963 = vld [vmem:[%s92 + $0x10] sm:$0xf]
    %v8964 = vld [vmem:[%s92 + $0x14] sm:$0xf]
    %v8965 = vld [vmem:[%s92 + $0x18] sm:$0xf]
    %v8966 = vld [vmem:[%s92 + $0x1c] sm:$0xf]
    %v8967 = vld [vmem:[%s92 + $0x20] sm:$0xf]
    %v8968 = vld [vmem:[%s92 + $0x24] sm:$0xf]
    %v8969 = vld [vmem:[%s92 + $0x28] sm:$0xf]
    %v8970 = vld [vmem:[%s92 + $0x2c] sm:$0xf]
    %v8971 = vld [vmem:[%s92 + $0x30] sm:$0xf]
    %v8972 = vld [vmem:[%s92 + $0x34] sm:$0xf]
    %v8973 = vld [vmem:[%s92 + $0x38] sm:$0xf]
    %v8974 = vld [vmem:[%s92 + $0x3c] sm:$0xf]
    %v8996 = vunpack.c.l.b16 %v8914
    %v8997 = vunpack.c.l.b16 %v8915
    %v8998 = vunpack.c.l.b16 %v8916
    %v8999 = vunpack.c.l.b16 %v8917
    %v9000 = vunpack.c.l.b16 %v8918
    %v9001 = vunpack.c.l.b16 %v8919
    %v9002 = vunpack.c.l.b16 %v8920
    %v9003 = vunpack.c.l.b16 %v8921
    %v9004 = vunpack.c.l.b16 %v8922
    %v9005 = vunpack.c.l.b16 %v8923
    %v9006 = vunpack.c.l.b16 %v8924
    %v9007 = vunpack.c.l.b16 %v8925
    %v9008 = vunpack.c.l.b16 %v8926
    %v9009 = vunpack.c.l.b16 %v8927
    %v9010 = vunpack.c.l.b16 %v8928
    %v9011 = vunpack.c.l.b16 %v8929
    %v9012 = vunpack.c.l.b16 %v8930
    %v9013 = vunpack.c.l.b16 %v8931
    %v9014 = vunpack.c.l.b16 %v8932
    %v9015 = vunpack.c.l.b16 %v8933
    %v9016 = vunpack.c.l.b16 %v8934
    %v9017 = vpack.c.b16 %v8997, %v8996
    %v9018 = vpack.c.b16 %v8999, %v8998
    %v9019 = vpack.c.b16 %v9001, %v9000
    %v9020 = vpack.c.b16 %v9003, %v9002
    %v9021 = vpack.c.b16 %v9005, %v9004
    %v9022 = vpack.c.b16 %v9007, %v9006
    %v9023 = vpack.c.b16 %v9009, %v9008
    %v9024 = vpack.c.b16 %v9011, %v9010
    %v9025 = vpack.c.b16 %v9013, %v9012
    %v9026 = vpack.c.b16 %v9015, %v9014
    %v9027 = vpack.c.b16 %v9016, %v9016
    %v9029 = vshrl.u32 %v9017, 16
    %v9031 = vshll.u32 %v9017, 16
    %v9033 = vrot.slane %v9031, 1
    %v9034 = vor.u32 %v9029, %v9033
    %v9036 = vshll.u32 %v9018, 16
    %v9038 = vrot.slane %v9036, 1
    %v9039 = vsel %vm162, %v9034, %v9038
    %v9040 = vshrl.u32 %v9018, 16
    %v9042 = vor.u32 %v9040, %v9038
    %v9044 = vshll.u32 %v9019, 16
    %v9046 = vrot.slane %v9044, 1
    %v9047 = vsel %vm162, %v9042, %v9046
    %v9048 = vshrl.u32 %v9019, 16
    %v9050 = vor.u32 %v9048, %v9046
    %v9052 = vshll.u32 %v9020, 16
    %v9054 = vrot.slane %v9052, 1
    %v9055 = vsel %vm162, %v9050, %v9054
    %v9056 = vshrl.u32 %v9020, 16
    %v9058 = vor.u32 %v9056, %v9054
    %v9060 = vshll.u32 %v9021, 16
    %v9062 = vrot.slane %v9060, 1
    %v9063 = vsel %vm162, %v9058, %v9062
    %v9064 = vshrl.u32 %v9021, 16
    %v9066 = vor.u32 %v9064, %v9062
    %v9068 = vshll.u32 %v9022, 16
    %v9070 = vrot.slane %v9068, 1
    %v9071 = vsel %vm162, %v9066, %v9070
    %v9072 = vshrl.u32 %v9022, 16
    %v9074 = vor.u32 %v9072, %v9070
    %v9076 = vshll.u32 %v9023, 16
    %v9078 = vrot.slane %v9076, 1
    %v9079 = vsel %vm162, %v9074, %v9078
    %v9080 = vshrl.u32 %v9023, 16
    %v9082 = vor.u32 %v9080, %v9078
    %v9084 = vshll.u32 %v9024, 16
    %v9086 = vrot.slane %v9084, 1
    %v9087 = vsel %vm162, %v9082, %v9086
    %v9088 = vshrl.u32 %v9024, 16
    %v9090 = vor.u32 %v9088, %v9086
    %v9092 = vshll.u32 %v9025, 16
    %v9094 = vrot.slane %v9092, 1
    %v9095 = vsel %vm162, %v9090, %v9094
    %v9096 = vshrl.u32 %v9025, 16
    %v9098 = vor.u32 %v9096, %v9094
    %v9100 = vshll.u32 %v9026, 16
    %v9102 = vrot.slane %v9100, 1
    %v9103 = vsel %vm162, %v9098, %v9102
    %v9104 = vshrl.u32 %v9026, 16
    %v9106 = vor.u32 %v9104, %v9102
    %v9108 = vshll.u32 %v9027, 16
    %v9110 = vrot.slane %v9108, 1
    %v9111 = vsel %vm162, %v9106, %v9110
    %v9138 = vunpack.c.l.b16 %v8959
    %v9139 = vunpack.c.l.b16 %v8960
    %v9140 = vunpack.c.l.b16 %v8961
    %v9141 = vunpack.c.l.b16 %v8962
    %v9142 = vunpack.c.l.b16 %v8963
    %v9143 = vunpack.c.l.b16 %v8964
    %v9144 = vunpack.c.l.b16 %v8965
    %v9145 = vunpack.c.l.b16 %v8966
    %v9146 = vunpack.c.l.b16 %v8967
    %v9147 = vunpack.c.l.b16 %v8968
    %v9148 = vunpack.c.l.b16 %v8969
    %v9149 = vunpack.c.l.b16 %v8970
    %v9150 = vunpack.c.l.b16 %v8971
    %v9151 = vunpack.c.l.b16 %v8972
    %v9152 = vunpack.c.l.b16 %v8973
    %v9153 = vunpack.c.l.b16 %v8974
    %v9154 = vpack.c.b16 %v9139, %v9138
    %v9155 = vpack.c.b16 %v9141, %v9140
    %v9156 = vpack.c.b16 %v9143, %v9142
    %v9157 = vpack.c.b16 %v9145, %v9144
    %v9158 = vpack.c.b16 %v9147, %v9146
    %v9159 = vpack.c.b16 %v9149, %v9148
    %v9160 = vpack.c.b16 %v9151, %v9150
    %v9161 = vpack.c.b16 %v9153, %v9152
    %9170 = vmatprep.subr.bf16.mxu0 0
    %9171 = vmatpush1.bf16.msra.mxu0 %v9154
    %9172 = vmatprep.subr.bf16.mxu0 0
    %9173 = vmatpush1.bf16.msra.mxu0 %v9155
    %9174 = vmatprep.subr.bf16.mxu0 0
    %9175 = vmatpush1.bf16.msra.mxu0 %v9156
    %9176 = vmatprep.subr.bf16.mxu0 0
    %9177 = vmatpush1.bf16.msra.mxu0 %v9157
    %9178 = vmatprep.subr.bf16.mxu0 0
    %9179 = vmatpush1.bf16.msra.mxu0 %v9158
    %9180 = vmatprep.subr.bf16.mxu0 0
    %9181 = vmatpush1.bf16.msra.mxu0 %v9159
    %9182 = vmatprep.subr.bf16.mxu0 0
    %9183 = vmatpush1.bf16.msra.mxu0 %v9160
    %9184 = vmatprep.subr.bf16.mxu0 0
    %9185 = vmatpush1.bf16.msra.mxu0 %v9161
    %9186 = vmatprep.subr.bf16.mxu0 0
    %9187 = vmatpush1.bf16.msra.mxu0 0
    %9188 = vmatprep.subr.bf16.mxu0 0
    %9189 = vmatpush1.bf16.msra.mxu0 0
    %9190 = vmatprep.subr.bf16.mxu0 0
    %9191 = vmatpush1.bf16.msra.mxu0 0
    %9192 = vmatprep.subr.bf16.mxu0 0
    %9193 = vmatpush1.bf16.msra.mxu0 0
    %9194 = vmatprep.subr.bf16.mxu0 0
    %9195 = vmatpush1.bf16.msra.mxu0 0
    %9196 = vmatprep.subr.bf16.mxu0 0
    %9197 = vmatpush1.bf16.msra.mxu0 0
    %9198 = vmatprep.subr.bf16.mxu0 0
    %9199 = vmatpush1.bf16.msra.mxu0 0
    %9200 = vmatprep.subr.bf16.mxu0 0
    %9201 = vmatpush1.bf16.msra.mxu0 0
    %9202 = vmatprep.mubr.bf16.mxu0 0
    %9203 = vmatmul.mubr.bf16.gmra.mrb[0].mxu0 %v9039
    %v9204 = vpop.f32.mrb[0].mxu0
    %v9205 = vadd.f32 0.0, %v9204
    %v9206 = vpop.f32.mrb[0].mxu0
    %v9207 = vpop.f32.mrb[0].mxu0
    %v9208 = vadd.f32 0.0, %v9207
    %v9209 = vpop.f32.mrb[0].mxu0
    %9210 = vmatprep.mubr.bf16.mxu0 0
    %9211 = vmatmul.mubr.bf16.gmra.mrb[0].mxu0 %v9047
    %v9212 = vpop.f32.mrb[0].mxu0
    %v9213 = vadd.f32 0.0, %v9212
    %v9214 = vpop.f32.mrb[0].mxu0
    %v9215 = vpop.f32.mrb[0].mxu0
    %v9216 = vadd.f32 0.0, %v9215
    %v9217 = vpop.f32.mrb[0].mxu0
    %9218 = vmatprep.mubr.bf16.mxu0 0
    %9219 = vmatmul.mubr.bf16.gmra.mrb[0].mxu0 %v9055
    %v9220 = vpop.f32.mrb[0].mxu0
    %v9221 = vadd.f32 0.0, %v9220
    %v9222 = vpop.f32.mrb[0].mxu0
    %v9223 = vpop.f32.mrb[0].mxu0
    %v9224 = vadd.f32 0.0, %v9223
    %v9225 = vpop.f32.mrb[0].mxu0
    %9226 = vmatprep.mubr.bf16.mxu0 0
    %9227 = vmatmul.mubr.bf16.gmra.mrb[0].mxu0 %v9063
    %v9228 = vpop.f32.mrb[0].mxu0
    %v9229 = vadd.f32 0.0, %v9228
    %v9230 = vpop.f32.mrb[0].mxu0
    %v9231 = vpop.f32.mrb[0].mxu0
    %v9232 = vadd.f32 0.0, %v9231
    %v9233 = vpop.f32.mrb[0].mxu0
    %9234 = vmatprep.mubr.bf16.mxu0 0
    %9235 = vmatmul.mubr.bf16.gmra.mrb[0].mxu0 %v9071
    %v9236 = vpop.f32.mrb[0].mxu0
    %v9237 = vadd.f32 0.0, %v9236
    %v9238 = vpop.f32.mrb[0].mxu0
    %v9239 = vpop.f32.mrb[0].mxu0
    %v9240 = vadd.f32 0.0, %v9239
    %v9241 = vpop.f32.mrb[0].mxu0
    %9242 = vmatprep.mubr.bf16.mxu0 0
    %9243 = vmatmul.mubr.bf16.gmra.mrb[0].mxu0 %v9079
    %v9244 = vpop.f32.mrb[0].mxu0
    %v9245 = vadd.f32 0.0, %v9244
    %v9246 = vpop.f32.mrb[0].mxu0
    %v9247 = vpop.f32.mrb[0].mxu0
    %v9248 = vadd.f32 0.0, %v9247
    %v9249 = vpop.f32.mrb[0].mxu0
    %9250 = vmatprep.mubr.bf16.mxu0 0
    %9251 = vmatmul.mubr.bf16.gmra.mrb[0].mxu0 %v9087
    %v9252 = vpop.f32.mrb[0].mxu0
    %v9253 = vadd.f32 0.0, %v9252
    %v9254 = vpop.f32.mrb[0].mxu0
    %v9255 = vpop.f32.mrb[0].mxu0
    %v9256 = vadd.f32 0.0, %v9255
    %v9257 = vpop.f32.mrb[0].mxu0
    %9258 = vmatprep.mubr.bf16.mxu0 0
    %9259 = vmatmul.mubr.bf16.gmra.mrb[0].mxu0 %v9095
    %v9260 = vpop.f32.mrb[0].mxu0
    %v9261 = vadd.f32 0.0, %v9260
    %v9262 = vpop.f32.mrb[0].mxu0
    %v9263 = vpop.f32.mrb[0].mxu0
    %v9264 = vadd.f32 0.0, %v9263
    %v9265 = vpop.f32.mrb[0].mxu0
    %9266 = vmatprep.mubr.bf16.mxu0 0
    %9267 = vmatmul.mubr.bf16.gmra.mrb[0].mxu0 %v9103
    %v9268 = vpop.f32.mrb[0].mxu0
    %v9269 = vadd.f32 0.0, %v9268
    %v9270 = vpop.f32.mrb[0].mxu0
    %v9271 = vpop.f32.mrb[0].mxu0
    %v9272 = vadd.f32 0.0, %v9271
    %v9273 = vpop.f32.mrb[0].mxu0
    %9274 = vmatprep.mubr.bf16.mxu0 0
    %9275 = vmatmul.mubr.bf16.gmra.mrb[0].mxu0 %v9111
    %v9276 = vpop.f32.mrb[0].mxu0
    %v9277 = vadd.f32 0.0, %v9276
    %v9278 = vpop.f32.mrb[0].mxu0
    %v9279 = vpop.f32.mrb[0].mxu0
    %v9280 = vadd.f32 0.0, %v9279
    %v9281 = vpop.f32.mrb[0].mxu0
    %9282 = vdwg.mxu0
    %v9309 = vunpack.c.l.b16 %v8943
    %v9310 = vunpack.c.l.b16 %v8944
    %v9311 = vunpack.c.l.b16 %v8945
    %v9312 = vunpack.c.l.b16 %v8946
    %v9313 = vunpack.c.l.b16 %v8947
    %v9314 = vunpack.c.l.b16 %v8948
    %v9315 = vunpack.c.l.b16 %v8949
    %v9316 = vunpack.c.l.b16 %v8950
    %v9317 = vunpack.c.l.b16 %v8951
    %v9318 = vunpack.c.l.b16 %v8952
    %v9319 = vunpack.c.l.b16 %v8953
    %v9320 = vunpack.c.l.b16 %v8954
    %v9321 = vunpack.c.l.b16 %v8955
    %v9322 = vunpack.c.l.b16 %v8956
    %v9323 = vunpack.c.l.b16 %v8957
    %v9324 = vunpack.c.l.b16 %v8958
    %v9325 = vpack.c.b16 %v9310, %v9309
    %v9326 = vpack.c.b16 %v9312, %v9311
    %v9327 = vpack.c.b16 %v9314, %v9313
    %v9328 = vpack.c.b16 %v9316, %v9315
    %v9329 = vpack.c.b16 %v9318, %v9317
    %v9330 = vpack.c.b16 %v9320, %v9319
    %v9331 = vpack.c.b16 %v9322, %v9321
    %v9332 = vpack.c.b16 %v9324, %v9323
    %9341 = vmatprep.subr.bf16.mxu0 0
    %9342 = vmatpush1.bf16.msra.mxu0 %v9325
    %9343 = vmatprep.subr.bf16.mxu0 0
    %9344 = vmatpush1.bf16.msra.mxu0 %v9326
    %9345 = vmatprep.subr.bf16.mxu0 0
    %9346 = vmatpush1.bf16.msra.mxu0 %v9327
    %9347 = vmatprep.subr.bf16.mxu0 0
    %9348 = vmatpush1.bf16.msra.mxu0 %v9328
    %9349 = vmatprep.subr.bf16.mxu0 0
    %9350 = vmatpush1.bf16.msra.mxu0 %v9329
    %9351 = vmatprep.subr.bf16.mxu0 0
    %9352 = vmatpush1.bf16.msra.mxu0 %v9330
    %9353 = vmatprep.subr.bf16.mxu0 0
    %9354 = vmatpush1.bf16.msra.mxu0 %v9331
    %9355 = vmatprep.subr.bf16.mxu0 0
    %9356 = vmatpush1.bf16.msra.mxu0 %v9332
    %9357 = vmatprep.subr.bf16.mxu0 0
    %9358 = vmatpush1.bf16.msra.mxu0 0
    %9359 = vmatprep.subr.bf16.mxu0 0
    %9360 = vmatpush1.bf16.msra.mxu0 0
    %9361 = vmatprep.subr.bf16.mxu0 0
    %9362 = vmatpush1.bf16.msra.mxu0 0
    %9363 = vmatprep.subr.bf16.mxu0 0
    %9364 = vmatpush1.bf16.msra.mxu0 0
    %9365 = vmatprep.subr.bf16.mxu0 0
    %9366 = vmatpush1.bf16.msra.mxu0 0
    %9367 = vmatprep.subr.bf16.mxu0 0
    %9368 = vmatpush1.bf16.msra.mxu0 0
    %9369 = vmatprep.subr.bf16.mxu0 0
    %9370 = vmatpush1.bf16.msra.mxu0 0
    %9371 = vmatprep.subr.bf16.mxu0 0
    %9372 = vmatpush1.bf16.msra.mxu0 0
    %9373 = vmatprep.mubr.bf16.mxu0 0
    %9374 = vmatmul.mubr.bf16.gmra.mrb[0].mxu0 %v9017
    %v9375 = vpop.f32.mrb[0].mxu0
    %v9376 = vadd.f32 %v9205, %v9375
    %v9377 = vpop.f32.mrb[0].mxu0
    %v9378 = vpop.f32.mrb[0].mxu0
    %v9379 = vadd.f32 %v9208, %v9378
    %v9380 = vpop.f32.mrb[0].mxu0
    %9381 = vmatprep.mubr.bf16.mxu0 0
    %9382 = vmatmul.mubr.bf16.gmra.mrb[0].mxu0 %v9018
    %v9383 = vpop.f32.mrb[0].mxu0
    %v9384 = vadd.f32 %v9213, %v9383
    %v9385 = vpop.f32.mrb[0].mxu0
    %v9386 = vpop.f32.mrb[0].mxu0
    %v9387 = vadd.f32 %v9216, %v9386
    %v9388 = vpop.f32.mrb[0].mxu0
    %9389 = vmatprep.mubr.bf16.mxu0 0
    %9390 = vmatmul.mubr.bf16.gmra.mrb[0].mxu0 %v9019
    %v9391 = vpop.f32.mrb[0].mxu0
    %v9392 = vadd.f32 %v9221, %v9391
    %v9393 = vpop.f32.mrb[0].mxu0
    %v9394 = vpop.f32.mrb[0].mxu0
    %v9395 = vadd.f32 %v9224, %v9394
    %v9396 = vpop.f32.mrb[0].mxu0
    %9397 = vmatprep.mubr.bf16.mxu0 0
    %9398 = vmatmul.mubr.bf16.gmra.mrb[0].mxu0 %v9020
    %v9399 = vpop.f32.mrb[0].mxu0
    %v9400 = vadd.f32 %v9229, %v9399
    %v9401 = vpop.f32.mrb[0].mxu0
    %v9402 = vpop.f32.mrb[0].mxu0
    %v9403 = vadd.f32 %v9232, %v9402
    %v9404 = vpop.f32.mrb[0].mxu0
    %9405 = vmatprep.mubr.bf16.mxu0 0
    %9406 = vmatmul.mubr.bf16.gmra.mrb[0].mxu0 %v9021
    %v9407 = vpop.f32.mrb[0].mxu0
    %v9408 = vadd.f32 %v9237, %v9407
    %v9409 = vpop.f32.mrb[0].mxu0
    %v9410 = vpop.f32.mrb[0].mxu0
    %v9411 = vadd.f32 %v9240, %v9410
    %v9412 = vpop.f32.mrb[0].mxu0
    %9413 = vmatprep.mubr.bf16.mxu0 0
    %9414 = vmatmul.mubr.bf16.gmra.mrb[0].mxu0 %v9022
    %v9415 = vpop.f32.mrb[0].mxu0
    %v9416 = vadd.f32 %v9245, %v9415
    %v9417 = vpop.f32.mrb[0].mxu0
    %v9418 = vpop.f32.mrb[0].mxu0
    %v9419 = vadd.f32 %v9248, %v9418
    %v9420 = vpop.f32.mrb[0].mxu0
    %9421 = vmatprep.mubr.bf16.mxu0 0
    %9422 = vmatmul.mubr.bf16.gmra.mrb[0].mxu0 %v9023
    %v9423 = vpop.f32.mrb[0].mxu0
    %v9424 = vadd.f32 %v9253, %v9423
    %v9425 = vpop.f32.mrb[0].mxu0
    %v9426 = vpop.f32.mrb[0].mxu0
    %v9427 = vadd.f32 %v9256, %v9426
    %v9428 = vpop.f32.mrb[0].mxu0
    %9429 = vmatprep.mubr.bf16.mxu0 0
    %9430 = vmatmul.mubr.bf16.gmra.mrb[0].mxu0 %v9024
    %v9431 = vpop.f32.mrb[0].mxu0
    %v9432 = vadd.f32 %v9261, %v9431
    %v9433 = vpop.f32.mrb[0].mxu0
    %v9434 = vpop.f32.mrb[0].mxu0
    %v9435 = vadd.f32 %v9264, %v9434
    %v9436 = vpop.f32.mrb[0].mxu0
    %9437 = vmatprep.mubr.bf16.mxu0 0
    %9438 = vmatmul.mubr.bf16.gmra.mrb[0].mxu0 %v9025
    %v9439 = vpop.f32.mrb[0].mxu0
    %v9440 = vadd.f32 %v9269, %v9439
    %v9441 = vpop.f32.mrb[0].mxu0
    %v9442 = vpop.f32.mrb[0].mxu0
    %v9443 = vadd.f32 %v9272, %v9442
    %v9444 = vpop.f32.mrb[0].mxu0
    %9445 = vmatprep.mubr.bf16.mxu0 0
    %9446 = vmatmul.mubr.bf16.gmra.mrb[0].mxu0 %v9026
    %v9447 = vpop.f32.mrb[0].mxu0
    %v9448 = vadd.f32 %v9277, %v9447
    %v9449 = vpop.f32.mrb[0].mxu0
    %v9450 = vpop.f32.mrb[0].mxu0
    %v9451 = vadd.f32 %v9280, %v9450
    %v9452 = vpop.f32.mrb[0].mxu0
    %9453 = vdwg.mxu0
    %v9454 = vld [vmem:[%s589] sm:$0xf]
    %v9455 = vld [vmem:[%s589 + $0x4] sm:$0xf]
    %v9456 = vld [vmem:[%s589 + $0x8] sm:$0xf]
    %v9457 = vld [vmem:[%s589 + $0xc] sm:$0xf]
    %v9458 = vld [vmem:[%s589 + $0x10] sm:$0xf]
    %v9459 = vld [vmem:[%s589 + $0x14] sm:$0xf]
    %v9460 = vld [vmem:[%s589 + $0x18] sm:$0xf]
    %v9461 = vld [vmem:[%s589 + $0x1c] sm:$0xf]
    %v9462 = vld [vmem:[%s589 + $0x20] sm:$0xf]
    %v9463 = vld [vmem:[%s589 + $0x24] sm:$0xf]
    %v9464 = vld [vmem:[%s589 + $0x28] sm:$0xf]
    %v9465 = vld [vmem:[%s589 + $0x2c] sm:$0xf]
    %v9466 = vld [vmem:[%s589 + $0x30] sm:$0xf]
    %v9467 = vld [vmem:[%s589 + $0x34] sm:$0xf]
    %v9468 = vld [vmem:[%s589 + $0x38] sm:$0xf]
    %v9469 = vld [vmem:[%s589 + $0x3c] sm:$0xf]
    %v9470 = vrot.slane %v9017, 1
    %v9471 = vrot.slane %v9018, 1
    %v9472 = vsel %vm606, %v9470, %v9471
    %v9473 = vrot.slane %v9019, 1
    %v9474 = vsel %vm606, %v9471, %v9473
    %v9475 = vrot.slane %v9020, 1
    %v9476 = vsel %vm606, %v9473, %v9475
    %v9477 = vrot.slane %v9021, 1
    %v9478 = vsel %vm606, %v9475, %v9477
    %v9479 = vrot.slane %v9022, 1
    %v9480 = vsel %vm606, %v9477, %v9479
    %v9481 = vrot.slane %v9023, 1
    %v9482 = vsel %vm606, %v9479, %v9481
    %v9483 = vrot.slane %v9024, 1
    %v9484 = vsel %vm606, %v9481, %v9483
    %v9485 = vrot.slane %v9025, 1
    %v9486 = vsel %vm606, %v9483, %v9485
    %v9487 = vrot.slane %v9026, 1
    %v9488 = vsel %vm606, %v9485, %v9487
    %v9489 = vrot.slane %v9027, 1
    %v9490 = vsel %vm606, %v9487, %v9489
    %v9517 = vunpack.c.l.b16 %v9454
    %v9518 = vunpack.c.l.b16 %v9455
    %v9519 = vunpack.c.l.b16 %v9456
    %v9520 = vunpack.c.l.b16 %v9457
    %v9521 = vunpack.c.l.b16 %v9458
    %v9522 = vunpack.c.l.b16 %v9459
    %v9523 = vunpack.c.l.b16 %v9460
    %v9524 = vunpack.c.l.b16 %v9461
    %v9525 = vunpack.c.l.b16 %v9462
    %v9526 = vunpack.c.l.b16 %v9463
    %v9527 = vunpack.c.l.b16 %v9464
    %v9528 = vunpack.c.l.b16 %v9465
    %v9529 = vunpack.c.l.b16 %v9466
    %v9530 = vunpack.c.l.b16 %v9467
    %v9531 = vunpack.c.l.b16 %v9468
    %v9532 = vunpack.c.l.b16 %v9469
    %v9533 = vpack.c.b16 %v9518, %v9517
    %v9534 = vpack.c.b16 %v9520, %v9519
    %v9535 = vpack.c.b16 %v9522, %v9521
    %v9536 = vpack.c.b16 %v9524, %v9523
    %v9537 = vpack.c.b16 %v9526, %v9525
    %v9538 = vpack.c.b16 %v9528, %v9527
    %v9539 = vpack.c.b16 %v9530, %v9529
    %v9540 = vpack.c.b16 %v9532, %v9531
    %9549 = vmatprep.subr.bf16.mxu0 0
    %9550 = vmatpush1.bf16.msra.mxu0 %v9533
    %9551 = vmatprep.subr.bf16.mxu0 0
    %9552 = vmatpush1.bf16.msra.mxu0 %v9534
    %9553 = vmatprep.subr.bf16.mxu0 0
    %9554 = vmatpush1.bf16.msra.mxu0 %v9535
    %9555 = vmatprep.subr.bf16.mxu0 0
    %9556 = vmatpush1.bf16.msra.mxu0 %v9536
    %9557 = vmatprep.subr.bf16.mxu0 0
    %9558 = vmatpush1.bf16.msra.mxu0 %v9537
    %9559 = vmatprep.subr.bf16.mxu0 0
    %9560 = vmatpush1.bf16.msra.mxu0 %v9538
    %9561 = vmatprep.subr.bf16.mxu0 0
    %9562 = vmatpush1.bf16.msra.mxu0 %v9539
    %9563 = vmatprep.subr.bf16.mxu0 0
    %9564 = vmatpush1.bf16.msra.mxu0 %v9540
    %9565 = vmatprep.subr.bf16.mxu0 0
    %9566 = vmatpush1.bf16.msra.mxu0 0
    %9567 = vmatprep.subr.bf16.mxu0 0
    %9568 = vmatpush1.bf16.msra.mxu0 0
    %9569 = vmatprep.subr.bf16.mxu0 0
    %9570 = vmatpush1.bf16.msra.mxu0 0
    %9571 = vmatprep.subr.bf16.mxu0 0
    %9572 = vmatpush1.bf16.msra.mxu0 0
    %9573 = vmatprep.subr.bf16.mxu0 0
    %9574 = vmatpush1.bf16.msra.mxu0 0
    %9575 = vmatprep.subr.bf16.mxu0 0
    %9576 = vmatpush1.bf16.msra.mxu0 0
    %9577 = vmatprep.subr.bf16.mxu0 0
    %9578 = vmatpush1.bf16.msra.mxu0 0
    %9579 = vmatprep.subr.bf16.mxu0 0
    %9580 = vmatpush1.bf16.msra.mxu0 0
    %9581 = vmatprep.mubr.bf16.mxu0 0
    %9582 = vmatmul.mubr.bf16.gmra.mrb[0].mxu0 %v9472
    %v9583 = vpop.f32.mrb[0].mxu0
    %v9584 = vadd.f32 0.0, %v9583
    %v9585 = vpop.f32.mrb[0].mxu0
    %v9586 = vpop.f32.mrb[0].mxu0
    %v9587 = vadd.f32 0.0, %v9586
    %v9588 = vpop.f32.mrb[0].mxu0
    %9589 = vmatprep.mubr.bf16.mxu0 0
    %9590 = vmatmul.mubr.bf16.gmra.mrb[0].mxu0 %v9474
    %v9591 = vpop.f32.mrb[0].mxu0
    %v9592 = vadd.f32 0.0, %v9591
    %v9593 = vpop.f32.mrb[0].mxu0
    %v9594 = vpop.f32.mrb[0].mxu0
    %v9595 = vadd.f32 0.0, %v9594
    %v9596 = vpop.f32.mrb[0].mxu0
    %9597 = vmatprep.mubr.bf16.mxu0 0
    %9598 = vmatmul.mubr.bf16.gmra.mrb[0].mxu0 %v9476
    %v9599 = vpop.f32.mrb[0].mxu0
    %v9600 = vadd.f32 0.0, %v9599
    %v9601 = vpop.f32.mrb[0].mxu0
    %v9602 = vpop.f32.mrb[0].mxu0
    %v9603 = vadd.f32 0.0, %v9602
    %v9604 = vpop.f32.mrb[0].mxu0
    %9605 = vmatprep.mubr.bf16.mxu0 0
    %9606 = vmatmul.mubr.bf16.gmra.mrb[0].mxu0 %v9478
    %v9607 = vpop.f32.mrb[0].mxu0
    %v9608 = vadd.f32 0.0, %v9607
    %v9609 = vpop.f32.mrb[0].mxu0
    %v9610 = vpop.f32.mrb[0].mxu0
    %v9611 = vadd.f32 0.0, %v9610
    %v9612 = vpop.f32.mrb[0].mxu0
    %9613 = vmatprep.mubr.bf16.mxu0 0
    %9614 = vmatmul.mubr.bf16.gmra.mrb[0].mxu0 %v9480
    %v9615 = vpop.f32.mrb[0].mxu0
    %v9616 = vadd.f32 0.0, %v9615
    %v9617 = vpop.f32.mrb[0].mxu0
    %v9618 = vpop.f32.mrb[0].mxu0
    %v9619 = vadd.f32 0.0, %v9618
    %v9620 = vpop.f32.mrb[0].mxu0
    %9621 = vmatprep.mubr.bf16.mxu0 0
    %9622 = vmatmul.mubr.bf16.gmra.mrb[0].mxu0 %v9482
    %v9623 = vpop.f32.mrb[0].mxu0
    %v9624 = vadd.f32 0.0, %v9623
    %v9625 = vpop.f32.mrb[0].mxu0
    %v9626 = vpop.f32.mrb[0].mxu0
    %v9627 = vadd.f32 0.0, %v9626
    %v9628 = vpop.f32.mrb[0].mxu0
    %9629 = vmatprep.mubr.bf16.mxu0 0
    %9630 = vmatmul.mubr.bf16.gmra.mrb[0].mxu0 %v9484
    %v9631 = vpop.f32.mrb[0].mxu0
    %v9632 = vadd.f32 0.0, %v9631
    %v9633 = vpop.f32.mrb[0].mxu0
    %v9634 = vpop.f32.mrb[0].mxu0
    %v9635 = vadd.f32 0.0, %v9634
    %v9636 = vpop.f32.mrb[0].mxu0
    %9637 = vmatprep.mubr.bf16.mxu0 0
    %9638 = vmatmul.mubr.bf16.gmra.mrb[0].mxu0 %v9486
    %v9639 = vpop.f32.mrb[0].mxu0
    %v9640 = vadd.f32 0.0, %v9639
    %v9641 = vpop.f32.mrb[0].mxu0
    %v9642 = vpop.f32.mrb[0].mxu0
    %v9643 = vadd.f32 0.0, %v9642
    %v9644 = vpop.f32.mrb[0].mxu0
    %9645 = vmatprep.mubr.bf16.mxu0 0
    %9646 = vmatmul.mubr.bf16.gmra.mrb[0].mxu0 %v9488
    %v9647 = vpop.f32.mrb[0].mxu0
    %v9648 = vadd.f32 0.0, %v9647
    %v9649 = vpop.f32.mrb[0].mxu0
    %v9650 = vpop.f32.mrb[0].mxu0
    %v9651 = vadd.f32 0.0, %v9650
    %v9652 = vpop.f32.mrb[0].mxu0
    %9653 = vmatprep.mubr.bf16.mxu0 0
    %9654 = vmatmul.mubr.bf16.gmra.mrb[0].mxu0 %v9490
    %v9655 = vpop.f32.mrb[0].mxu0
    %v9656 = vadd.f32 0.0, %v9655
    %v9657 = vpop.f32.mrb[0].mxu0
    %v9658 = vpop.f32.mrb[0].mxu0
    %v9659 = vadd.f32 0.0, %v9658
    %v9660 = vpop.f32.mrb[0].mxu0
    %9661 = vdwg.mxu0
    %v9662 = vadd.f32 %v9376, %v9584
    %v9663 = vadd.f32 %v9379, %v9587
    %v9664 = vadd.f32 %v9384, %v9592
    %v9665 = vadd.f32 %v9387, %v9595
    %v9666 = vadd.f32 %v9392, %v9600
    %v9667 = vadd.f32 %v9395, %v9603
    %v9668 = vadd.f32 %v9400, %v9608
    %v9669 = vadd.f32 %v9403, %v9611
    %v9670 = vadd.f32 %v9408, %v9616
    %v9671 = vadd.f32 %v9411, %v9619
    %v9672 = vadd.f32 %v9416, %v9624
    %v9673 = vadd.f32 %v9419, %v9627
    %v9674 = vadd.f32 %v9424, %v9632
    %v9675 = vadd.f32 %v9427, %v9635
    %v9676 = vadd.f32 %v9432, %v9640
    %v9677 = vadd.f32 %v9435, %v9643
    %v9678 = vadd.f32 %v9440, %v9648
    %v9679 = vadd.f32 %v9443, %v9651
    %v9680 = vadd.f32 %v9448, %v9656
    %v9681 = vadd.f32 %v9451, %v9659
    %v9682 = vld [vmem:[%s819] sm:$0xf]
    %v9683 = vld [vmem:[%s819 + $0x4] sm:$0xf]
    %v9684 = vld [vmem:[%s819 + $0x8] sm:$0xf]
    %v9685 = vld [vmem:[%s819 + $0xc] sm:$0xf]
    %v9686 = vld [vmem:[%s819 + $0x10] sm:$0xf]
    %v9687 = vld [vmem:[%s819 + $0x14] sm:$0xf]
    %v9688 = vld [vmem:[%s819 + $0x18] sm:$0xf]
    %v9689 = vld [vmem:[%s819 + $0x1c] sm:$0xf]
    %v9690 = vld [vmem:[%s819 + $0x20] sm:$0xf]
    %v9691 = vld [vmem:[%s819 + $0x24] sm:$0xf]
    %v9692 = vld [vmem:[%s819 + $0x28] sm:$0xf]
    %v9693 = vld [vmem:[%s819 + $0x2c] sm:$0xf]
    %v9694 = vld [vmem:[%s819 + $0x30] sm:$0xf]
    %v9695 = vld [vmem:[%s819 + $0x34] sm:$0xf]
    %v9696 = vld [vmem:[%s819 + $0x38] sm:$0xf]
    %v9697 = vld [vmem:[%s819 + $0x3c] sm:$0xf]
    %v9701 = vunpack.c.l.b16 %v8935
    %v9702 = vunpack.c.l.b16 %v8936
    %v9703 = vunpack.c.l.b16 %v8937
    %v9704 = vpack.c.b16 %v9701, %v9016
    %v9705 = vpack.c.b16 %v9703, %v9702
    %v9724 = vunpack.c.l.b16 %v9682
    %v9725 = vunpack.c.l.b16 %v9683
    %v9726 = vunpack.c.l.b16 %v9684
    %v9727 = vunpack.c.l.b16 %v9685
    %v9728 = vunpack.c.l.b16 %v9686
    %v9729 = vunpack.c.l.b16 %v9687
    %v9730 = vunpack.c.l.b16 %v9688
    %v9731 = vunpack.c.l.b16 %v9689
    %v9732 = vunpack.c.l.b16 %v9690
    %v9733 = vunpack.c.l.b16 %v9691
    %v9734 = vunpack.c.l.b16 %v9692
    %v9735 = vunpack.c.l.b16 %v9693
    %v9736 = vunpack.c.l.b16 %v9694
    %v9737 = vunpack.c.l.b16 %v9695
    %v9738 = vunpack.c.l.b16 %v9696
    %v9739 = vunpack.c.l.b16 %v9697
    %v9740 = vpack.c.b16 %v9725, %v9724
    %v9741 = vpack.c.b16 %v9727, %v9726
    %v9742 = vpack.c.b16 %v9729, %v9728
    %v9743 = vpack.c.b16 %v9731, %v9730
    %v9744 = vpack.c.b16 %v9733, %v9732
    %v9745 = vpack.c.b16 %v9735, %v9734
    %v9746 = vpack.c.b16 %v9737, %v9736
    %v9747 = vpack.c.b16 %v9739, %v9738
    %9756 = vmatprep.subr.bf16.mxu0 0
    %9757 = vmatpush1.bf16.msra.mxu0 %v9740
    %9758 = vmatprep.subr.bf16.mxu0 0
    %9759 = vmatpush1.bf16.msra.mxu0 %v9741
    %9760 = vmatprep.subr.bf16.mxu0 0
    %9761 = vmatpush1.bf16.msra.mxu0 %v9742
    %9762 = vmatprep.subr.bf16.mxu0 0
    %9763 = vmatpush1.bf16.msra.mxu0 %v9743
    %9764 = vmatprep.subr.bf16.mxu0 0
    %9765 = vmatpush1.bf16.msra.mxu0 %v9744
    %9766 = vmatprep.subr.bf16.mxu0 0
    %9767 = vmatpush1.bf16.msra.mxu0 %v9745
    %9768 = vmatprep.subr.bf16.mxu0 0
    %9769 = vmatpush1.bf16.msra.mxu0 %v9746
    %9770 = vmatprep.subr.bf16.mxu0 0
    %9771 = vmatpush1.bf16.msra.mxu0 %v9747
    %9772 = vmatprep.subr.bf16.mxu0 0
    %9773 = vmatpush1.bf16.msra.mxu0 0
    %9774 = vmatprep.subr.bf16.mxu0 0
    %9775 = vmatpush1.bf16.msra.mxu0 0
    %9776 = vmatprep.subr.bf16.mxu0 0
    %9777 = vmatpush1.bf16.msra.mxu0 0
    %9778 = vmatprep.subr.bf16.mxu0 0
    %9779 = vmatpush1.bf16.msra.mxu0 0
    %9780 = vmatprep.subr.bf16.mxu0 0
    %9781 = vmatpush1.bf16.msra.mxu0 0
    %9782 = vmatprep.subr.bf16.mxu0 0
    %9783 = vmatpush1.bf16.msra.mxu0 0
    %9784 = vmatprep.subr.bf16.mxu0 0
    %9785 = vmatpush1.bf16.msra.mxu0 0
    %9786 = vmatprep.subr.bf16.mxu0 0
    %9787 = vmatpush1.bf16.msra.mxu0 0
    %9788 = vmatprep.mubr.bf16.mxu0 0
    %9789 = vmatmul.mubr.bf16.gmra.mrb[0].mxu0 %v9019
    %v9790 = vpop.f32.mrb[0].mxu0
    %v9791 = vadd.f32 0.0, %v9790
    %v9792 = vpop.f32.mrb[0].mxu0
    %v9793 = vpop.f32.mrb[0].mxu0
    %v9794 = vadd.f32 0.0, %v9793
    %v9795 = vpop.f32.mrb[0].mxu0
    %9796 = vmatprep.mubr.bf16.mxu0 0
    %9797 = vmatmul.mubr.bf16.gmra.mrb[0].mxu0 %v9020
    %v9798 = vpop.f32.mrb[0].mxu0
    %v9799 = vadd.f32 0.0, %v9798
    %v9800 = vpop.f32.mrb[0].mxu0
    %v9801 = vpop.f32.mrb[0].mxu0
    %v9802 = vadd.f32 0.0, %v9801
    %v9803 = vpop.f32.mrb[0].mxu0
    %9804 = vmatprep.mubr.bf16.mxu0 0
    %9805 = vmatmul.mubr.bf16.gmra.mrb[0].mxu0 %v9021
    %v9806 = vpop.f32.mrb[0].mxu0
    %v9807 = vadd.f32 0.0, %v9806
    %v9808 = vpop.f32.mrb[0].mxu0
    %v9809 = vpop.f32.mrb[0].mxu0
    %v9810 = vadd.f32 0.0, %v9809
    %v9811 = vpop.f32.mrb[0].mxu0
    %9812 = vmatprep.mubr.bf16.mxu0 0
    %9813 = vmatmul.mubr.bf16.gmra.mrb[0].mxu0 %v9022
    %v9814 = vpop.f32.mrb[0].mxu0
    %v9815 = vadd.f32 0.0, %v9814
    %v9816 = vpop.f32.mrb[0].mxu0
    %v9817 = vpop.f32.mrb[0].mxu0
    %v9818 = vadd.f32 0.0, %v9817
    %v9819 = vpop.f32.mrb[0].mxu0
    %9820 = vmatprep.mubr.bf16.mxu0 0
    %9821 = vmatmul.mubr.bf16.gmra.mrb[0].mxu0 %v9023
    %v9822 = vpop.f32.mrb[0].mxu0
    %v9823 = vadd.f32 0.0, %v9822
    %v9824 = vpop.f32.mrb[0].mxu0
    %v9825 = vpop.f32.mrb[0].mxu0
    %v9826 = vadd.f32 0.0, %v9825
    %v9827 = vpop.f32.mrb[0].mxu0
    %9828 = vmatprep.mubr.bf16.mxu0 0
    %9829 = vmatmul.mubr.bf16.gmra.mrb[0].mxu0 %v9024
    %v9830 = vpop.f32.mrb[0].mxu0
    %v9831 = vadd.f32 0.0, %v9830
    %v9832 = vpop.f32.mrb[0].mxu0
    %v9833 = vpop.f32.mrb[0].mxu0
    %v9834 = vadd.f32 0.0, %v9833
    %v9835 = vpop.f32.mrb[0].mxu0
    %9836 = vmatprep.mubr.bf16.mxu0 0
    %9837 = vmatmul.mubr.bf16.gmra.mrb[0].mxu0 %v9025
    %v9838 = vpop.f32.mrb[0].mxu0
    %v9839 = vadd.f32 0.0, %v9838
    %v9840 = vpop.f32.mrb[0].mxu0
    %v9841 = vpop.f32.mrb[0].mxu0
    %v9842 = vadd.f32 0.0, %v9841
    %v9843 = vpop.f32.mrb[0].mxu0
    %9844 = vmatprep.mubr.bf16.mxu0 0
    %9845 = vmatmul.mubr.bf16.gmra.mrb[0].mxu0 %v9026
    %v9846 = vpop.f32.mrb[0].mxu0
    %v9847 = vadd.f32 0.0, %v9846
    %v9848 = vpop.f32.mrb[0].mxu0
    %v9849 = vpop.f32.mrb[0].mxu0
    %v9850 = vadd.f32 0.0, %v9849
    %v9851 = vpop.f32.mrb[0].mxu0
    %9852 = vmatprep.mubr.bf16.mxu0 0
    %9853 = vmatmul.mubr.bf16.gmra.mrb[0].mxu0 %v9704
    %v9854 = vpop.f32.mrb[0].mxu0
    %v9855 = vadd.f32 0.0, %v9854
    %v9856 = vpop.f32.mrb[0].mxu0
    %v9857 = vpop.f32.mrb[0].mxu0
    %v9858 = vadd.f32 0.0, %v9857
    %v9859 = vpop.f32.mrb[0].mxu0
    %9860 = vmatprep.mubr.bf16.mxu0 0
    %9861 = vmatmul.mubr.bf16.gmra.mrb[0].mxu0 %v9705
    %v9862 = vpop.f32.mrb[0].mxu0
    %v9863 = vadd.f32 0.0, %v9862
    %v9864 = vpop.f32.mrb[0].mxu0
    %v9865 = vpop.f32.mrb[0].mxu0
    %v9866 = vadd.f32 0.0, %v9865
    %v9867 = vpop.f32.mrb[0].mxu0
    %9868 = vdwg.mxu0
    %v9869 = vadd.f32 %v9662, %v9791
    %v9870 = vadd.f32 %v9663, %v9794
    %v9871 = vadd.f32 %v9664, %v9799
    %v9872 = vadd.f32 %v9665, %v9802
    %v9873 = vadd.f32 %v9666, %v9807
    %v9874 = vadd.f32 %v9667, %v9810
    %v9875 = vadd.f32 %v9668, %v9815
    %v9876 = vadd.f32 %v9669, %v9818
    %v9877 = vadd.f32 %v9670, %v9823
    %v9878 = vadd.f32 %v9671, %v9826
    %v9879 = vadd.f32 %v9672, %v9831
    %v9880 = vadd.f32 %v9673, %v9834
    %v9881 = vadd.f32 %v9674, %v9839
    %v9882 = vadd.f32 %v9675, %v9842
    %v9883 = vadd.f32 %v9676, %v9847
    %v9884 = vadd.f32 %v9677, %v9850
    %v9885 = vadd.f32 %v9678, %v9855
    %v9886 = vadd.f32 %v9679, %v9858
    %v9887 = vadd.f32 %v9680, %v9863
    %v9888 = vadd.f32 %v9681, %v9866
    %v9889 = vld [vmem:[%s1027] sm:$0xf]
    %v9890 = vld [vmem:[%s1027 + $0x4] sm:$0xf]
    %v9891 = vld [vmem:[%s1027 + $0x8] sm:$0xf]
    %v9892 = vld [vmem:[%s1027 + $0xc] sm:$0xf]
    %v9893 = vld [vmem:[%s1027 + $0x10] sm:$0xf]
    %v9894 = vld [vmem:[%s1027 + $0x14] sm:$0xf]
    %v9895 = vld [vmem:[%s1027 + $0x18] sm:$0xf]
    %v9896 = vld [vmem:[%s1027 + $0x1c] sm:$0xf]
    %v9897 = vld [vmem:[%s1027 + $0x20] sm:$0xf]
    %v9898 = vld [vmem:[%s1027 + $0x24] sm:$0xf]
    %v9899 = vld [vmem:[%s1027 + $0x28] sm:$0xf]
    %v9900 = vld [vmem:[%s1027 + $0x2c] sm:$0xf]
    %v9901 = vld [vmem:[%s1027 + $0x30] sm:$0xf]
    %v9902 = vld [vmem:[%s1027 + $0x34] sm:$0xf]
    %v9903 = vld [vmem:[%s1027 + $0x38] sm:$0xf]
    %v9904 = vld [vmem:[%s1027 + $0x3c] sm:$0xf]
    %v9906 = vunpack.c.l.b16 %v8938
    %v9907 = vpack.c.b16 %v9906, %v9906
    %v9909 = vshll.u32 %v9704, 16
    %v9911 = vrot.slane %v9909, 1
    %v9912 = vsel %vm162, %v9106, %v9911
    %v9913 = vshrl.u32 %v9704, 16
    %v9915 = vor.u32 %v9913, %v9911
    %v9917 = vshll.u32 %v9705, 16
    %v9919 = vrot.slane %v9917, 1
    %v9920 = vsel %vm162, %v9915, %v9919
    %v9921 = vshrl.u32 %v9705, 16
    %v9923 = vor.u32 %v9921, %v9919
    %v9925 = vshll.u32 %v9907, 16
    %v9927 = vrot.slane %v9925, 1
    %v9928 = vsel %vm162, %v9923, %v9927
    %v9948 = vunpack.c.l.b16 %v9889
    %v9949 = vunpack.c.l.b16 %v9890
    %v9950 = vunpack.c.l.b16 %v9891
    %v9951 = vunpack.c.l.b16 %v9892
    %v9952 = vunpack.c.l.b16 %v9893
    %v9953 = vunpack.c.l.b16 %v9894
    %v9954 = vunpack.c.l.b16 %v9895
    %v9955 = vunpack.c.l.b16 %v9896
    %v9956 = vunpack.c.l.b16 %v9897
    %v9957 = vunpack.c.l.b16 %v9898
    %v9958 = vunpack.c.l.b16 %v9899
    %v9959 = vunpack.c.l.b16 %v9900
    %v9960 = vunpack.c.l.b16 %v9901
    %v9961 = vunpack.c.l.b16 %v9902
    %v9962 = vunpack.c.l.b16 %v9903
    %v9963 = vunpack.c.l.b16 %v9904
    %v9964 = vpack.c.b16 %v9949, %v9948
    %v9965 = vpack.c.b16 %v9951, %v9950
    %v9966 = vpack.c.b16 %v9953, %v9952
    %v9967 = vpack.c.b16 %v9955, %v9954
    %v9968 = vpack.c.b16 %v9957, %v9956
    %v9969 = vpack.c.b16 %v9959, %v9958
    %v9970 = vpack.c.b16 %v9961, %v9960
    %v9971 = vpack.c.b16 %v9963, %v9962
    %9980 = vmatprep.subr.bf16.mxu0 0
    %9981 = vmatpush1.bf16.msra.mxu0 %v9964
    %9982 = vmatprep.subr.bf16.mxu0 0
    %9983 = vmatpush1.bf16.msra.mxu0 %v9965
    %9984 = vmatprep.subr.bf16.mxu0 0
    %9985 = vmatpush1.bf16.msra.mxu0 %v9966
    %9986 = vmatprep.subr.bf16.mxu0 0
    %9987 = vmatpush1.bf16.msra.mxu0 %v9967
    %9988 = vmatprep.subr.bf16.mxu0 0
    %9989 = vmatpush1.bf16.msra.mxu0 %v9968
    %9990 = vmatprep.subr.bf16.mxu0 0
    %9991 = vmatpush1.bf16.msra.mxu0 %v9969
    %9992 = vmatprep.subr.bf16.mxu0 0
    %9993 = vmatpush1.bf16.msra.mxu0 %v9970
    %9994 = vmatprep.subr.bf16.mxu0 0
    %9995 = vmatpush1.bf16.msra.mxu0 %v9971
    %9996 = vmatprep.subr.bf16.mxu0 0
    %9997 = vmatpush1.bf16.msra.mxu0 0
    %9998 = vmatprep.subr.bf16.mxu0 0
    %9999 = vmatpush1.bf16.msra.mxu0 0
    %10000 = vmatprep.subr.bf16.mxu0 0
    %10001 = vmatpush1.bf16.msra.mxu0 0
    %10002 = vmatprep.subr.bf16.mxu0 0
    %10003 = vmatpush1.bf16.msra.mxu0 0
    %10004 = vmatprep.subr.bf16.mxu0 0
    %10005 = vmatpush1.bf16.msra.mxu0 0
    %10006 = vmatprep.subr.bf16.mxu0 0
    %10007 = vmatpush1.bf16.msra.mxu0 0
    %10008 = vmatprep.subr.bf16.mxu0 0
    %10009 = vmatpush1.bf16.msra.mxu0 0
    %10010 = vmatprep.subr.bf16.mxu0 0
    %10011 = vmatpush1.bf16.msra.mxu0 0
    %10012 = vmatprep.mubr.bf16.mxu0 0
    %10013 = vmatmul.mubr.bf16.gmra.mrb[0].mxu0 %v9055
    %v10014 = vpop.f32.mrb[0].mxu0
    %v10015 = vadd.f32 0.0, %v10014
    %v10016 = vpop.f32.mrb[0].mxu0
    %v10017 = vpop.f32.mrb[0].mxu0
    %v10018 = vadd.f32 0.0, %v10017
    %v10019 = vpop.f32.mrb[0].mxu0
    %10020 = vmatprep.mubr.bf16.mxu0 0
    %10021 = vmatmul.mubr.bf16.gmra.mrb[0].mxu0 %v9063
    %v10022 = vpop.f32.mrb[0].mxu0
    %v10023 = vadd.f32 0.0, %v10022
    %v10024 = vpop.f32.mrb[0].mxu0
    %v10025 = vpop.f32.mrb[0].mxu0
    %v10026 = vadd.f32 0.0, %v10025
    %v10027 = vpop.f32.mrb[0].mxu0
    %10028 = vmatprep.mubr.bf16.mxu0 0
    %10029 = vmatmul.mubr.bf16.gmra.mrb[0].mxu0 %v9071
    %v10030 = vpop.f32.mrb[0].mxu0
    %v10031 = vadd.f32 0.0, %v10030
    %v10032 = vpop.f32.mrb[0].mxu0
    %v10033 = vpop.f32.mrb[0].mxu0
    %v10034 = vadd.f32 0.0, %v10033
    %v10035 = vpop.f32.mrb[0].mxu0
    %10036 = vmatprep.mubr.bf16.mxu0 0
    %10037 = vmatmul.mubr.bf16.gmra.mrb[0].mxu0 %v9079
    %v10038 = vpop.f32.mrb[0].mxu0
    %v10039 = vadd.f32 0.0, %v10038
    %v10040 = vpop.f32.mrb[0].mxu0
    %v10041 = vpop.f32.mrb[0].mxu0
    %v10042 = vadd.f32 0.0, %v10041
    %v10043 = vpop.f32.mrb[0].mxu0
    %10044 = vmatprep.mubr.bf16.mxu0 0
    %10045 = vmatmul.mubr.bf16.gmra.mrb[0].mxu0 %v9087
    %v10046 = vpop.f32.mrb[0].mxu0
    %v10047 = vadd.f32 0.0, %v10046
    %v10048 = vpop.f32.mrb[0].mxu0
    %v10049 = vpop.f32.mrb[0].mxu0
    %v10050 = vadd.f32 0.0, %v10049
    %v10051 = vpop.f32.mrb[0].mxu0
    %10052 = vmatprep.mubr.bf16.mxu0 0
    %10053 = vmatmul.mubr.bf16.gmra.mrb[0].mxu0 %v9095
    %v10054 = vpop.f32.mrb[0].mxu0
    %v10055 = vadd.f32 0.0, %v10054
    %v10056 = vpop.f32.mrb[0].mxu0
    %v10057 = vpop.f32.mrb[0].mxu0
    %v10058 = vadd.f32 0.0, %v10057
    %v10059 = vpop.f32.mrb[0].mxu0
    %10060 = vmatprep.mubr.bf16.mxu0 0
    %10061 = vmatmul.mubr.bf16.gmra.mrb[0].mxu0 %v9103
    %v10062 = vpop.f32.mrb[0].mxu0
    %v10063 = vadd.f32 0.0, %v10062
    %v10064 = vpop.f32.mrb[0].mxu0
    %v10065 = vpop.f32.mrb[0].mxu0
    %v10066 = vadd.f32 0.0, %v10065
    %v10067 = vpop.f32.mrb[0].mxu0
    %10068 = vmatprep.mubr.bf16.mxu0 0
    %10069 = vmatmul.mubr.bf16.gmra.mrb[0].mxu0 %v9912
    %v10070 = vpop.f32.mrb[0].mxu0
    %v10071 = vadd.f32 0.0, %v10070
    %v10072 = vpop.f32.mrb[0].mxu0
    %v10073 = vpop.f32.mrb[0].mxu0
    %v10074 = vadd.f32 0.0, %v10073
    %v10075 = vpop.f32.mrb[0].mxu0
    %10076 = vmatprep.mubr.bf16.mxu0 0
    %10077 = vmatmul.mubr.bf16.gmra.mrb[0].mxu0 %v9920
    %v10078 = vpop.f32.mrb[0].mxu0
    %v10079 = vadd.f32 0.0, %v10078
    %v10080 = vpop.f32.mrb[0].mxu0
    %v10081 = vpop.f32.mrb[0].mxu0
    %v10082 = vadd.f32 0.0, %v10081
    %v10083 = vpop.f32.mrb[0].mxu0
    %10084 = vmatprep.mubr.bf16.mxu0 0
    %10085 = vmatmul.mubr.bf16.gmra.mrb[0].mxu0 %v9928
    %v10086 = vpop.f32.mrb[0].mxu0
    %v10087 = vadd.f32 0.0, %v10086
    %v10088 = vpop.f32.mrb[0].mxu0
    %v10089 = vpop.f32.mrb[0].mxu0
    %v10090 = vadd.f32 0.0, %v10089
    %v10091 = vpop.f32.mrb[0].mxu0
    %10092 = vdwg.mxu0
    %v10093 = vadd.f32 %v9869, %v10015
    %v10094 = vadd.f32 %v9870, %v10018
    %v10095 = vadd.f32 %v9871, %v10023
    %v10096 = vadd.f32 %v9872, %v10026
    %v10097 = vadd.f32 %v9873, %v10031
    %v10098 = vadd.f32 %v9874, %v10034
    %v10099 = vadd.f32 %v9875, %v10039
    %v10100 = vadd.f32 %v9876, %v10042
    %v10101 = vadd.f32 %v9877, %v10047
    %v10102 = vadd.f32 %v9878, %v10050
    %v10103 = vadd.f32 %v9879, %v10055
    %v10104 = vadd.f32 %v9880, %v10058
    %v10105 = vadd.f32 %v9881, %v10063
    %v10106 = vadd.f32 %v9882, %v10066
    %v10107 = vadd.f32 %v9883, %v10071
    %v10108 = vadd.f32 %v9884, %v10074
    %v10109 = vadd.f32 %v9885, %v10079
    %v10110 = vadd.f32 %v9886, %v10082
    %v10111 = vadd.f32 %v9887, %v10087
    %v10112 = vadd.f32 %v9888, %v10090
    %v10113 = vld [vmem:[%s1252] sm:$0xf]
    %v10114 = vld [vmem:[%s1252 + $0x4] sm:$0xf]
    %v10115 = vld [vmem:[%s1252 + $0x8] sm:$0xf]
    %v10116 = vld [vmem:[%s1252 + $0xc] sm:$0xf]
    %v10117 = vld [vmem:[%s1252 + $0x10] sm:$0xf]
    %v10118 = vld [vmem:[%s1252 + $0x14] sm:$0xf]
    %v10119 = vld [vmem:[%s1252 + $0x18] sm:$0xf]
    %v10120 = vld [vmem:[%s1252 + $0x1c] sm:$0xf]
    %v10121 = vld [vmem:[%s1252 + $0x20] sm:$0xf]
    %v10122 = vld [vmem:[%s1252 + $0x24] sm:$0xf]
    %v10123 = vld [vmem:[%s1252 + $0x28] sm:$0xf]
    %v10124 = vld [vmem:[%s1252 + $0x2c] sm:$0xf]
    %v10125 = vld [vmem:[%s1252 + $0x30] sm:$0xf]
    %v10126 = vld [vmem:[%s1252 + $0x34] sm:$0xf]
    %v10127 = vld [vmem:[%s1252 + $0x38] sm:$0xf]
    %v10128 = vld [vmem:[%s1252 + $0x3c] sm:$0xf]
    %v10129 = vrot.slane %v9704, 1
    %v10130 = vsel %vm606, %v9487, %v10129
    %v10131 = vrot.slane %v9705, 1
    %v10132 = vsel %vm606, %v10129, %v10131
    %v10133 = vrot.slane %v9907, 1
    %v10134 = vsel %vm606, %v10131, %v10133
    %v10154 = vunpack.c.l.b16 %v10113
    %v10155 = vunpack.c.l.b16 %v10114
    %v10156 = vunpack.c.l.b16 %v10115
    %v10157 = vunpack.c.l.b16 %v10116
    %v10158 = vunpack.c.l.b16 %v10117
    %v10159 = vunpack.c.l.b16 %v10118
    %v10160 = vunpack.c.l.b16 %v10119
    %v10161 = vunpack.c.l.b16 %v10120
    %v10162 = vunpack.c.l.b16 %v10121
    %v10163 = vunpack.c.l.b16 %v10122
    %v10164 = vunpack.c.l.b16 %v10123
    %v10165 = vunpack.c.l.b16 %v10124
    %v10166 = vunpack.c.l.b16 %v10125
    %v10167 = vunpack.c.l.b16 %v10126
    %v10168 = vunpack.c.l.b16 %v10127
    %v10169 = vunpack.c.l.b16 %v10128
    %v10170 = vpack.c.b16 %v10155, %v10154
    %v10171 = vpack.c.b16 %v10157, %v10156
    %v10172 = vpack.c.b16 %v10159, %v10158
    %v10173 = vpack.c.b16 %v10161, %v10160
    %v10174 = vpack.c.b16 %v10163, %v10162
    %v10175 = vpack.c.b16 %v10165, %v10164
    %v10176 = vpack.c.b16 %v10167, %v10166
    %v10177 = vpack.c.b16 %v10169, %v10168
    %10186 = vmatprep.subr.bf16.mxu0 0
    %10187 = vmatpush1.bf16.msra.mxu0 %v10170
    %10188 = vmatprep.subr.bf16.mxu0 0
    %10189 = vmatpush1.bf16.msra.mxu0 %v10171
    %10190 = vmatprep.subr.bf16.mxu0 0
    %10191 = vmatpush1.bf16.msra.mxu0 %v10172
    %10192 = vmatprep.subr.bf16.mxu0 0
    %10193 = vmatpush1.bf16.msra.mxu0 %v10173
    %10194 = vmatprep.subr.bf16.mxu0 0
    %10195 = vmatpush1.bf16.msra.mxu0 %v10174
    %10196 = vmatprep.subr.bf16.mxu0 0
    %10197 = vmatpush1.bf16.msra.mxu0 %v10175
    %10198 = vmatprep.subr.bf16.mxu0 0
    %10199 = vmatpush1.bf16.msra.mxu0 %v10176
    %10200 = vmatprep.subr.bf16.mxu0 0
    %10201 = vmatpush1.bf16.msra.mxu0 %v10177
    %10202 = vmatprep.subr.bf16.mxu0 0
    %10203 = vmatpush1.bf16.msra.mxu0 0
    %10204 = vmatprep.subr.bf16.mxu0 0
    %10205 = vmatpush1.bf16.msra.mxu0 0
    %10206 = vmatprep.subr.bf16.mxu0 0
    %10207 = vmatpush1.bf16.msra.mxu0 0
    %10208 = vmatprep.subr.bf16.mxu0 0
    %10209 = vmatpush1.bf16.msra.mxu0 0
    %10210 = vmatprep.subr.bf16.mxu0 0
    %10211 = vmatpush1.bf16.msra.mxu0 0
    %10212 = vmatprep.subr.bf16.mxu0 0
    %10213 = vmatpush1.bf16.msra.mxu0 0
    %10214 = vmatprep.subr.bf16.mxu0 0
    %10215 = vmatpush1.bf16.msra.mxu0 0
    %10216 = vmatprep.subr.bf16.mxu0 0
    %10217 = vmatpush1.bf16.msra.mxu0 0
    %10218 = vmatprep.mubr.bf16.mxu0 0
    %10219 = vmatmul.mubr.bf16.gmra.mrb[0].mxu0 %v9476
    %v10220 = vpop.f32.mrb[0].mxu0
    %v10221 = vadd.f32 0.0, %v10220
    %v10222 = vpop.f32.mrb[0].mxu0
    %v10223 = vpop.f32.mrb[0].mxu0
    %v10224 = vadd.f32 0.0, %v10223
    %v10225 = vpop.f32.mrb[0].mxu0
    %10226 = vmatprep.mubr.bf16.mxu0 0
    %10227 = vmatmul.mubr.bf16.gmra.mrb[0].mxu0 %v9478
    %v10228 = vpop.f32.mrb[0].mxu0
    %v10229 = vadd.f32 0.0, %v10228
    %v10230 = vpop.f32.mrb[0].mxu0
    %v10231 = vpop.f32.mrb[0].mxu0
    %v10232 = vadd.f32 0.0, %v10231
    %v10233 = vpop.f32.mrb[0].mxu0
    %10234 = vmatprep.mubr.bf16.mxu0 0
    %10235 = vmatmul.mubr.bf16.gmra.mrb[0].mxu0 %v9480
    %v10236 = vpop.f32.mrb[0].mxu0
    %v10237 = vadd.f32 0.0, %v10236
    %v10238 = vpop.f32.mrb[0].mxu0
    %v10239 = vpop.f32.mrb[0].mxu0
    %v10240 = vadd.f32 0.0, %v10239
    %v10241 = vpop.f32.mrb[0].mxu0
    %10242 = vmatprep.mubr.bf16.mxu0 0
    %10243 = vmatmul.mubr.bf16.gmra.mrb[0].mxu0 %v9482
    %v10244 = vpop.f32.mrb[0].mxu0
    %v10245 = vadd.f32 0.0, %v10244
    %v10246 = vpop.f32.mrb[0].mxu0
    %v10247 = vpop.f32.mrb[0].mxu0
    %v10248 = vadd.f32 0.0, %v10247
    %v10249 = vpop.f32.mrb[0].mxu0
    %10250 = vmatprep.mubr.bf16.mxu0 0
    %10251 = vmatmul.mubr.bf16.gmra.mrb[0].mxu0 %v9484
    %v10252 = vpop.f32.mrb[0].mxu0
    %v10253 = vadd.f32 0.0, %v10252
    %v10254 = vpop.f32.mrb[0].mxu0
    %v10255 = vpop.f32.mrb[0].mxu0
    %v10256 = vadd.f32 0.0, %v10255
    %v10257 = vpop.f32.mrb[0].mxu0
    %10258 = vmatprep.mubr.bf16.mxu0 0
    %10259 = vmatmul.mubr.bf16.gmra.mrb[0].mxu0 %v9486
    %v10260 = vpop.f32.mrb[0].mxu0
    %v10261 = vadd.f32 0.0, %v10260
    %v10262 = vpop.f32.mrb[0].mxu0
    %v10263 = vpop.f32.mrb[0].mxu0
    %v10264 = vadd.f32 0.0, %v10263
    %v10265 = vpop.f32.mrb[0].mxu0
    %10266 = vmatprep.mubr.bf16.mxu0 0
    %10267 = vmatmul.mubr.bf16.gmra.mrb[0].mxu0 %v9488
    %v10268 = vpop.f32.mrb[0].mxu0
    %v10269 = vadd.f32 0.0, %v10268
    %v10270 = vpop.f32.mrb[0].mxu0
    %v10271 = vpop.f32.mrb[0].mxu0
    %v10272 = vadd.f32 0.0, %v10271
    %v10273 = vpop.f32.mrb[0].mxu0
    %10274 = vmatprep.mubr.bf16.mxu0 0
    %10275 = vmatmul.mubr.bf16.gmra.mrb[0].mxu0 %v10130
    %v10276 = vpop.f32.mrb[0].mxu0
    %v10277 = vadd.f32 0.0, %v10276
    %v10278 = vpop.f32.mrb[0].mxu0
    %v10279 = vpop.f32.mrb[0].mxu0
    %v10280 = vadd.f32 0.0, %v10279
    %v10281 = vpop.f32.mrb[0].mxu0
    %10282 = vmatprep.mubr.bf16.mxu0 0
    %10283 = vmatmul.mubr.bf16.gmra.mrb[0].mxu0 %v10132
    %v10284 = vpop.f32.mrb[0].mxu0
    %v10285 = vadd.f32 0.0, %v10284
    %v10286 = vpop.f32.mrb[0].mxu0
    %v10287 = vpop.f32.mrb[0].mxu0
    %v10288 = vadd.f32 0.0, %v10287
    %v10289 = vpop.f32.mrb[0].mxu0
    %10290 = vmatprep.mubr.bf16.mxu0 0
    %10291 = vmatmul.mubr.bf16.gmra.mrb[0].mxu0 %v10134
    %v10292 = vpop.f32.mrb[0].mxu0
    %v10293 = vadd.f32 0.0, %v10292
    %v10294 = vpop.f32.mrb[0].mxu0
    %v10295 = vpop.f32.mrb[0].mxu0
    %v10296 = vadd.f32 0.0, %v10295
    %v10297 = vpop.f32.mrb[0].mxu0
    %10298 = vdwg.mxu0
    %v10299 = vadd.f32 %v10093, %v10221
    %v10300 = vadd.f32 %v10094, %v10224
    %v10301 = vadd.f32 %v10095, %v10229
    %v10302 = vadd.f32 %v10096, %v10232
    %v10303 = vadd.f32 %v10097, %v10237
    %v10304 = vadd.f32 %v10098, %v10240
    %v10305 = vadd.f32 %v10099, %v10245
    %v10306 = vadd.f32 %v10100, %v10248
    %v10307 = vadd.f32 %v10101, %v10253
    %v10308 = vadd.f32 %v10102, %v10256
    %v10309 = vadd.f32 %v10103, %v10261
    %v10310 = vadd.f32 %v10104, %v10264
    %v10311 = vadd.f32 %v10105, %v10269
    %v10312 = vadd.f32 %v10106, %v10272
    %v10313 = vadd.f32 %v10107, %v10277
    %v10314 = vadd.f32 %v10108, %v10280
    %v10315 = vadd.f32 %v10109, %v10285
    %v10316 = vadd.f32 %v10110, %v10288
    %v10317 = vadd.f32 %v10111, %v10293
    %v10318 = vadd.f32 %v10112, %v10296
    %v10319 = vld [vmem:[%s1459] sm:$0xf]
    %v10320 = vld [vmem:[%s1459 + $0x4] sm:$0xf]
    %v10321 = vld [vmem:[%s1459 + $0x8] sm:$0xf]
    %v10322 = vld [vmem:[%s1459 + $0xc] sm:$0xf]
    %v10323 = vld [vmem:[%s1459 + $0x10] sm:$0xf]
    %v10324 = vld [vmem:[%s1459 + $0x14] sm:$0xf]
    %v10325 = vld [vmem:[%s1459 + $0x18] sm:$0xf]
    %v10326 = vld [vmem:[%s1459 + $0x1c] sm:$0xf]
    %v10327 = vld [vmem:[%s1459 + $0x20] sm:$0xf]
    %v10328 = vld [vmem:[%s1459 + $0x24] sm:$0xf]
    %v10329 = vld [vmem:[%s1459 + $0x28] sm:$0xf]
    %v10330 = vld [vmem:[%s1459 + $0x2c] sm:$0xf]
    %v10331 = vld [vmem:[%s1459 + $0x30] sm:$0xf]
    %v10332 = vld [vmem:[%s1459 + $0x34] sm:$0xf]
    %v10333 = vld [vmem:[%s1459 + $0x38] sm:$0xf]
    %v10334 = vld [vmem:[%s1459 + $0x3c] sm:$0xf]
    %v10338 = vunpack.c.l.b16 %v8939
    %v10339 = vunpack.c.l.b16 %v8940
    %v10340 = vunpack.c.l.b16 %v8941
    %v10341 = vpack.c.b16 %v10338, %v9906
    %v10342 = vpack.c.b16 %v10340, %v10339
    %v10361 = vunpack.c.l.b16 %v10319
    %v10362 = vunpack.c.l.b16 %v10320
    %v10363 = vunpack.c.l.b16 %v10321
    %v10364 = vunpack.c.l.b16 %v10322
    %v10365 = vunpack.c.l.b16 %v10323
    %v10366 = vunpack.c.l.b16 %v10324
    %v10367 = vunpack.c.l.b16 %v10325
    %v10368 = vunpack.c.l.b16 %v10326
    %v10369 = vunpack.c.l.b16 %v10327
    %v10370 = vunpack.c.l.b16 %v10328
    %v10371 = vunpack.c.l.b16 %v10329
    %v10372 = vunpack.c.l.b16 %v10330
    %v10373 = vunpack.c.l.b16 %v10331
    %v10374 = vunpack.c.l.b16 %v10332
    %v10375 = vunpack.c.l.b16 %v10333
    %v10376 = vunpack.c.l.b16 %v10334
    %v10377 = vpack.c.b16 %v10362, %v10361
    %v10378 = vpack.c.b16 %v10364, %v10363
    %v10379 = vpack.c.b16 %v10366, %v10365
    %v10380 = vpack.c.b16 %v10368, %v10367
    %v10381 = vpack.c.b16 %v10370, %v10369
    %v10382 = vpack.c.b16 %v10372, %v10371
    %v10383 = vpack.c.b16 %v10374, %v10373
    %v10384 = vpack.c.b16 %v10376, %v10375
    %10393 = vmatprep.subr.bf16.mxu0 0
    %10394 = vmatpush1.bf16.msra.mxu0 %v10377
    %10395 = vmatprep.subr.bf16.mxu0 0
    %10396 = vmatpush1.bf16.msra.mxu0 %v10378
    %10397 = vmatprep.subr.bf16.mxu0 0
    %10398 = vmatpush1.bf16.msra.mxu0 %v10379
    %10399 = vmatprep.subr.bf16.mxu0 0
    %10400 = vmatpush1.bf16.msra.mxu0 %v10380
    %10401 = vmatprep.subr.bf16.mxu0 0
    %10402 = vmatpush1.bf16.msra.mxu0 %v10381
    %10403 = vmatprep.subr.bf16.mxu0 0
    %10404 = vmatpush1.bf16.msra.mxu0 %v10382
    %10405 = vmatprep.subr.bf16.mxu0 0
    %10406 = vmatpush1.bf16.msra.mxu0 %v10383
    %10407 = vmatprep.subr.bf16.mxu0 0
    %10408 = vmatpush1.bf16.msra.mxu0 %v10384
    %10409 = vmatprep.subr.bf16.mxu0 0
    %10410 = vmatpush1.bf16.msra.mxu0 0
    %10411 = vmatprep.subr.bf16.mxu0 0
    %10412 = vmatpush1.bf16.msra.mxu0 0
    %10413 = vmatprep.subr.bf16.mxu0 0
    %10414 = vmatpush1.bf16.msra.mxu0 0
    %10415 = vmatprep.subr.bf16.mxu0 0
    %10416 = vmatpush1.bf16.msra.mxu0 0
    %10417 = vmatprep.subr.bf16.mxu0 0
    %10418 = vmatpush1.bf16.msra.mxu0 0
    %10419 = vmatprep.subr.bf16.mxu0 0
    %10420 = vmatpush1.bf16.msra.mxu0 0
    %10421 = vmatprep.subr.bf16.mxu0 0
    %10422 = vmatpush1.bf16.msra.mxu0 0
    %10423 = vmatprep.subr.bf16.mxu0 0
    %10424 = vmatpush1.bf16.msra.mxu0 0
    %10425 = vmatprep.mubr.bf16.mxu0 0
    %10426 = vmatmul.mubr.bf16.gmra.mrb[0].mxu0 %v9021
    %v10427 = vpop.f32.mrb[0].mxu0
    %v10428 = vadd.f32 0.0, %v10427
    %v10429 = vpop.f32.mrb[0].mxu0
    %v10430 = vpop.f32.mrb[0].mxu0
    %v10431 = vadd.f32 0.0, %v10430
    %v10432 = vpop.f32.mrb[0].mxu0
    %10433 = vmatprep.mubr.bf16.mxu0 0
    %10434 = vmatmul.mubr.bf16.gmra.mrb[0].mxu0 %v9022
    %v10435 = vpop.f32.mrb[0].mxu0
    %v10436 = vadd.f32 0.0, %v10435
    %v10437 = vpop.f32.mrb[0].mxu0
    %v10438 = vpop.f32.mrb[0].mxu0
    %v10439 = vadd.f32 0.0, %v10438
    %v10440 = vpop.f32.mrb[0].mxu0
    %10441 = vmatprep.mubr.bf16.mxu0 0
    %10442 = vmatmul.mubr.bf16.gmra.mrb[0].mxu0 %v9023
    %v10443 = vpop.f32.mrb[0].mxu0
    %v10444 = vadd.f32 0.0, %v10443
    %v10445 = vpop.f32.mrb[0].mxu0
    %v10446 = vpop.f32.mrb[0].mxu0
    %v10447 = vadd.f32 0.0, %v10446
    %v10448 = vpop.f32.mrb[0].mxu0
    %10449 = vmatprep.mubr.bf16.mxu0 0
    %10450 = vmatmul.mubr.bf16.gmra.mrb[0].mxu0 %v9024
    %v10451 = vpop.f32.mrb[0].mxu0
    %v10452 = vadd.f32 0.0, %v10451
    %v10453 = vpop.f32.mrb[0].mxu0
    %v10454 = vpop.f32.mrb[0].mxu0
    %v10455 = vadd.f32 0.0, %v10454
    %v10456 = vpop.f32.mrb[0].mxu0
    %10457 = vmatprep.mubr.bf16.mxu0 0
    %10458 = vmatmul.mubr.bf16.gmra.mrb[0].mxu0 %v9025
    %v10459 = vpop.f32.mrb[0].mxu0
    %v10460 = vadd.f32 0.0, %v10459
    %v10461 = vpop.f32.mrb[0].mxu0
    %v10462 = vpop.f32.mrb[0].mxu0
    %v10463 = vadd.f32 0.0, %v10462
    %v10464 = vpop.f32.mrb[0].mxu0
    %10465 = vmatprep.mubr.bf16.mxu0 0
    %10466 = vmatmul.mubr.bf16.gmra.mrb[0].mxu0 %v9026
    %v10467 = vpop.f32.mrb[0].mxu0
    %v10468 = vadd.f32 0.0, %v10467
    %v10469 = vpop.f32.mrb[0].mxu0
    %v10470 = vpop.f32.mrb[0].mxu0
    %v10471 = vadd.f32 0.0, %v10470
    %v10472 = vpop.f32.mrb[0].mxu0
    %10473 = vmatprep.mubr.bf16.mxu0 0
    %10474 = vmatmul.mubr.bf16.gmra.mrb[0].mxu0 %v9704
    %v10475 = vpop.f32.mrb[0].mxu0
    %v10476 = vadd.f32 0.0, %v10475
    %v10477 = vpop.f32.mrb[0].mxu0
    %v10478 = vpop.f32.mrb[0].mxu0
    %v10479 = vadd.f32 0.0, %v10478
    %v10480 = vpop.f32.mrb[0].mxu0
    %10481 = vmatprep.mubr.bf16.mxu0 0
    %10482 = vmatmul.mubr.bf16.gmra.mrb[0].mxu0 %v9705
    %v10483 = vpop.f32.mrb[0].mxu0
    %v10484 = vadd.f32 0.0, %v10483
    %v10485 = vpop.f32.mrb[0].mxu0
    %v10486 = vpop.f32.mrb[0].mxu0
    %v10487 = vadd.f32 0.0, %v10486
    %v10488 = vpop.f32.mrb[0].mxu0
    %10489 = vmatprep.mubr.bf16.mxu0 0
    %10490 = vmatmul.mubr.bf16.gmra.mrb[0].mxu0 %v10341
    %v10491 = vpop.f32.mrb[0].mxu0
    %v10492 = vadd.f32 0.0, %v10491
    %v10493 = vpop.f32.mrb[0].mxu0
    %v10494 = vpop.f32.mrb[0].mxu0
    %v10495 = vadd.f32 0.0, %v10494
    %v10496 = vpop.f32.mrb[0].mxu0
    %10497 = vmatprep.mubr.bf16.mxu0 0
    %10498 = vmatmul.mubr.bf16.gmra.mrb[0].mxu0 %v10342
    %v10499 = vpop.f32.mrb[0].mxu0
    %v10500 = vadd.f32 0.0, %v10499
    %v10501 = vpop.f32.mrb[0].mxu0
    %v10502 = vpop.f32.mrb[0].mxu0
    %v10503 = vadd.f32 0.0, %v10502
    %v10504 = vpop.f32.mrb[0].mxu0
    %10505 = vdwg.mxu0
    %v10506 = vadd.f32 %v10299, %v10428
    %v10507 = vadd.f32 %v10300, %v10431
    %v10508 = vadd.f32 %v10301, %v10436
    %v10509 = vadd.f32 %v10302, %v10439
    %v10510 = vadd.f32 %v10303, %v10444
    %v10511 = vadd.f32 %v10304, %v10447
    %v10512 = vadd.f32 %v10305, %v10452
    %v10513 = vadd.f32 %v10306, %v10455
    %v10514 = vadd.f32 %v10307, %v10460
    %v10515 = vadd.f32 %v10308, %v10463
    %v10516 = vadd.f32 %v10309, %v10468
    %v10517 = vadd.f32 %v10310, %v10471
    %v10518 = vadd.f32 %v10311, %v10476
    %v10519 = vadd.f32 %v10312, %v10479
    %v10520 = vadd.f32 %v10313, %v10484
    %v10521 = vadd.f32 %v10314, %v10487
    %v10522 = vadd.f32 %v10315, %v10492
    %v10523 = vadd.f32 %v10316, %v10495
    %v10524 = vadd.f32 %v10317, %v10500
    %v10525 = vadd.f32 %v10318, %v10503
    %v10526 = vld [vmem:[%s1667] sm:$0xf]
    %v10527 = vld [vmem:[%s1667 + $0x4] sm:$0xf]
    %v10528 = vld [vmem:[%s1667 + $0x8] sm:$0xf]
    %v10529 = vld [vmem:[%s1667 + $0xc] sm:$0xf]
    %v10530 = vld [vmem:[%s1667 + $0x10] sm:$0xf]
    %v10531 = vld [vmem:[%s1667 + $0x14] sm:$0xf]
    %v10532 = vld [vmem:[%s1667 + $0x18] sm:$0xf]
    %v10533 = vld [vmem:[%s1667 + $0x1c] sm:$0xf]
    %v10534 = vld [vmem:[%s1667 + $0x20] sm:$0xf]
    %v10535 = vld [vmem:[%s1667 + $0x24] sm:$0xf]
    %v10536 = vld [vmem:[%s1667 + $0x28] sm:$0xf]
    %v10537 = vld [vmem:[%s1667 + $0x2c] sm:$0xf]
    %v10538 = vld [vmem:[%s1667 + $0x30] sm:$0xf]
    %v10539 = vld [vmem:[%s1667 + $0x34] sm:$0xf]
    %v10540 = vld [vmem:[%s1667 + $0x38] sm:$0xf]
    %v10541 = vld [vmem:[%s1667 + $0x3c] sm:$0xf]
    %v10543 = vunpack.c.l.b16 %v8942
    %v10544 = vpack.c.b16 %v10543, %v10543
    %v10546 = vshll.u32 %v10341, 16
    %v10548 = vrot.slane %v10546, 1
    %v10549 = vsel %vm162, %v9923, %v10548
    %v10550 = vshrl.u32 %v10341, 16
    %v10552 = vor.u32 %v10550, %v10548
    %v10554 = vshll.u32 %v10342, 16
    %v10556 = vrot.slane %v10554, 1
    %v10557 = vsel %vm162, %v10552, %v10556
    %v10558 = vshrl.u32 %v10342, 16
    %v10560 = vor.u32 %v10558, %v10556
    %v10562 = vshll.u32 %v10544, 16
    %v10564 = vrot.slane %v10562, 1
    %v10565 = vsel %vm162, %v10560, %v10564
    %v10585 = vunpack.c.l.b16 %v10526
    %v10586 = vunpack.c.l.b16 %v10527
    %v10587 = vunpack.c.l.b16 %v10528
    %v10588 = vunpack.c.l.b16 %v10529
    %v10589 = vunpack.c.l.b16 %v10530
    %v10590 = vunpack.c.l.b16 %v10531
    %v10591 = vunpack.c.l.b16 %v10532
    %v10592 = vunpack.c.l.b16 %v10533
    %v10593 = vunpack.c.l.b16 %v10534
    %v10594 = vunpack.c.l.b16 %v10535
    %v10595 = vunpack.c.l.b16 %v10536
    %v10596 = vunpack.c.l.b16 %v10537
    %v10597 = vunpack.c.l.b16 %v10538
    %v10598 = vunpack.c.l.b16 %v10539
    %v10599 = vunpack.c.l.b16 %v10540
    %v10600 = vunpack.c.l.b16 %v10541
    %v10601 = vpack.c.b16 %v10586, %v10585
    %v10602 = vpack.c.b16 %v10588, %v10587
    %v10603 = vpack.c.b16 %v10590, %v10589
    %v10604 = vpack.c.b16 %v10592, %v10591
    %v10605 = vpack.c.b16 %v10594, %v10593
    %v10606 = vpack.c.b16 %v10596, %v10595
    %v10607 = vpack.c.b16 %v10598, %v10597
    %v10608 = vpack.c.b16 %v10600, %v10599
    %10617 = vmatprep.subr.bf16.mxu0 0
    %10618 = vmatpush1.bf16.msra.mxu0 %v10601
    %10619 = vmatprep.subr.bf16.mxu0 0
    %10620 = vmatpush1.bf16.msra.mxu0 %v10602
    %10621 = vmatprep.subr.bf16.mxu0 0
    %10622 = vmatpush1.bf16.msra.mxu0 %v10603
    %10623 = vmatprep.subr.bf16.mxu0 0
    %10624 = vmatpush1.bf16.msra.mxu0 %v10604
    %10625 = vmatprep.subr.bf16.mxu0 0
    %10626 = vmatpush1.bf16.msra.mxu0 %v10605
    %10627 = vmatprep.subr.bf16.mxu0 0
    %10628 = vmatpush1.bf16.msra.mxu0 %v10606
    %10629 = vmatprep.subr.bf16.mxu0 0
    %10630 = vmatpush1.bf16.msra.mxu0 %v10607
    %10631 = vmatprep.subr.bf16.mxu0 0
    %10632 = vmatpush1.bf16.msra.mxu0 %v10608
    %10633 = vmatprep.subr.bf16.mxu0 0
    %10634 = vmatpush1.bf16.msra.mxu0 0
    %10635 = vmatprep.subr.bf16.mxu0 0
    %10636 = vmatpush1.bf16.msra.mxu0 0
    %10637 = vmatprep.subr.bf16.mxu0 0
    %10638 = vmatpush1.bf16.msra.mxu0 0
    %10639 = vmatprep.subr.bf16.mxu0 0
    %10640 = vmatpush1.bf16.msra.mxu0 0
    %10641 = vmatprep.subr.bf16.mxu0 0
    %10642 = vmatpush1.bf16.msra.mxu0 0
    %10643 = vmatprep.subr.bf16.mxu0 0
    %10644 = vmatpush1.bf16.msra.mxu0 0
    %10645 = vmatprep.subr.bf16.mxu0 0
    %10646 = vmatpush1.bf16.msra.mxu0 0
    %10647 = vmatprep.subr.bf16.mxu0 0
    %10648 = vmatpush1.bf16.msra.mxu0 0
    %10649 = vmatprep.mubr.bf16.mxu0 0
    %10650 = vmatmul.mubr.bf16.gmra.mrb[0].mxu0 %v9071
    %v10651 = vpop.f32.mrb[0].mxu0
    %v10652 = vadd.f32 0.0, %v10651
    %v10653 = vpop.f32.mrb[0].mxu0
    %v10654 = vpop.f32.mrb[0].mxu0
    %v10655 = vadd.f32 0.0, %v10654
    %v10656 = vpop.f32.mrb[0].mxu0
    %10657 = vmatprep.mubr.bf16.mxu0 0
    %10658 = vmatmul.mubr.bf16.gmra.mrb[0].mxu0 %v9079
    %v10659 = vpop.f32.mrb[0].mxu0
    %v10660 = vadd.f32 0.0, %v10659
    %v10661 = vpop.f32.mrb[0].mxu0
    %v10662 = vpop.f32.mrb[0].mxu0
    %v10663 = vadd.f32 0.0, %v10662
    %v10664 = vpop.f32.mrb[0].mxu0
    %10665 = vmatprep.mubr.bf16.mxu0 0
    %10666 = vmatmul.mubr.bf16.gmra.mrb[0].mxu0 %v9087
    %v10667 = vpop.f32.mrb[0].mxu0
    %v10668 = vadd.f32 0.0, %v10667
    %v10669 = vpop.f32.mrb[0].mxu0
    %v10670 = vpop.f32.mrb[0].mxu0
    %v10671 = vadd.f32 0.0, %v10670
    %v10672 = vpop.f32.mrb[0].mxu0
    %10673 = vmatprep.mubr.bf16.mxu0 0
    %10674 = vmatmul.mubr.bf16.gmra.mrb[0].mxu0 %v9095
    %v10675 = vpop.f32.mrb[0].mxu0
    %v10676 = vadd.f32 0.0, %v10675
    %v10677 = vpop.f32.mrb[0].mxu0
    %v10678 = vpop.f32.mrb[0].mxu0
    %v10679 = vadd.f32 0.0, %v10678
    %v10680 = vpop.f32.mrb[0].mxu0
    %10681 = vmatprep.mubr.bf16.mxu0 0
    %10682 = vmatmul.mubr.bf16.gmra.mrb[0].mxu0 %v9103
    %v10683 = vpop.f32.mrb[0].mxu0
    %v10684 = vadd.f32 0.0, %v10683
    %v10685 = vpop.f32.mrb[0].mxu0
    %v10686 = vpop.f32.mrb[0].mxu0
    %v10687 = vadd.f32 0.0, %v10686
    %v10688 = vpop.f32.mrb[0].mxu0
    %10689 = vmatprep.mubr.bf16.mxu0 0
    %10690 = vmatmul.mubr.bf16.gmra.mrb[0].mxu0 %v9912
    %v10691 = vpop.f32.mrb[0].mxu0
    %v10692 = vadd.f32 0.0, %v10691
    %v10693 = vpop.f32.mrb[0].mxu0
    %v10694 = vpop.f32.mrb[0].mxu0
    %v10695 = vadd.f32 0.0, %v10694
    %v10696 = vpop.f32.mrb[0].mxu0
    %10697 = vmatprep.mubr.bf16.mxu0 0
    %10698 = vmatmul.mubr.bf16.gmra.mrb[0].mxu0 %v9920
    %v10699 = vpop.f32.mrb[0].mxu0
    %v10700 = vadd.f32 0.0, %v10699
    %v10701 = vpop.f32.mrb[0].mxu0
    %v10702 = vpop.f32.mrb[0].mxu0
    %v10703 = vadd.f32 0.0, %v10702
    %v10704 = vpop.f32.mrb[0].mxu0
    %10705 = vmatprep.mubr.bf16.mxu0 0
    %10706 = vmatmul.mubr.bf16.gmra.mrb[0].mxu0 %v10549
    %v10707 = vpop.f32.mrb[0].mxu0
    %v10708 = vadd.f32 0.0, %v10707
    %v10709 = vpop.f32.mrb[0].mxu0
    %v10710 = vpop.f32.mrb[0].mxu0
    %v10711 = vadd.f32 0.0, %v10710
    %v10712 = vpop.f32.mrb[0].mxu0
    %10713 = vmatprep.mubr.bf16.mxu0 0
    %10714 = vmatmul.mubr.bf16.gmra.mrb[0].mxu0 %v10557
    %v10715 = vpop.f32.mrb[0].mxu0
    %v10716 = vadd.f32 0.0, %v10715
    %v10717 = vpop.f32.mrb[0].mxu0
    %v10718 = vpop.f32.mrb[0].mxu0
    %v10719 = vadd.f32 0.0, %v10718
    %v10720 = vpop.f32.mrb[0].mxu0
    %10721 = vmatprep.mubr.bf16.mxu0 0
    %10722 = vmatmul.mubr.bf16.gmra.mrb[0].mxu0 %v10565
    %v10723 = vpop.f32.mrb[0].mxu0
    %v10724 = vadd.f32 0.0, %v10723
    %v10725 = vpop.f32.mrb[0].mxu0
    %v10726 = vpop.f32.mrb[0].mxu0
    %v10727 = vadd.f32 0.0, %v10726
    %v10728 = vpop.f32.mrb[0].mxu0
    %10729 = vdwg.mxu0
    %v10730 = vadd.f32 %v10506, %v10652
    %v10731 = vadd.f32 %v10507, %v10655
    %v10732 = vadd.f32 %v10508, %v10660
    %v10733 = vadd.f32 %v10509, %v10663
    %v10734 = vadd.f32 %v10510, %v10668
    %v10735 = vadd.f32 %v10511, %v10671
    %v10736 = vadd.f32 %v10512, %v10676
    %v10737 = vadd.f32 %v10513, %v10679
    %v10738 = vadd.f32 %v10514, %v10684
    %v10739 = vadd.f32 %v10515, %v10687
    %v10740 = vadd.f32 %v10516, %v10692
    %v10741 = vadd.f32 %v10517, %v10695
    %v10742 = vadd.f32 %v10518, %v10700
    %v10743 = vadd.f32 %v10519, %v10703
    %v10744 = vadd.f32 %v10520, %v10708
    %v10745 = vadd.f32 %v10521, %v10711
    %v10746 = vadd.f32 %v10522, %v10716
    %v10747 = vadd.f32 %v10523, %v10719
    %v10748 = vadd.f32 %v10524, %v10724
    %v10749 = vadd.f32 %v10525, %v10727
    %v10750 = vld [vmem:[%s1892] sm:$0xf]
    %v10751 = vld [vmem:[%s1892 + $0x4] sm:$0xf]
    %v10752 = vld [vmem:[%s1892 + $0x8] sm:$0xf]
    %v10753 = vld [vmem:[%s1892 + $0xc] sm:$0xf]
    %v10754 = vld [vmem:[%s1892 + $0x10] sm:$0xf]
    %v10755 = vld [vmem:[%s1892 + $0x14] sm:$0xf]
    %v10756 = vld [vmem:[%s1892 + $0x18] sm:$0xf]
    %v10757 = vld [vmem:[%s1892 + $0x1c] sm:$0xf]
    %v10758 = vld [vmem:[%s1892 + $0x20] sm:$0xf]
    %v10759 = vld [vmem:[%s1892 + $0x24] sm:$0xf]
    %v10760 = vld [vmem:[%s1892 + $0x28] sm:$0xf]
    %v10761 = vld [vmem:[%s1892 + $0x2c] sm:$0xf]
    %v10762 = vld [vmem:[%s1892 + $0x30] sm:$0xf]
    %v10763 = vld [vmem:[%s1892 + $0x34] sm:$0xf]
    %v10764 = vld [vmem:[%s1892 + $0x38] sm:$0xf]
    %v10765 = vld [vmem:[%s1892 + $0x3c] sm:$0xf]
    %v10766 = vrot.slane %v10341, 1
    %v10767 = vsel %vm606, %v10131, %v10766
    %v10768 = vrot.slane %v10342, 1
    %v10769 = vsel %vm606, %v10766, %v10768
    %v10770 = vrot.slane %v10544, 1
    %v10771 = vsel %vm606, %v10768, %v10770
    %v10791 = vunpack.c.l.b16 %v10750
    %v10792 = vunpack.c.l.b16 %v10751
    %v10793 = vunpack.c.l.b16 %v10752
    %v10794 = vunpack.c.l.b16 %v10753
    %v10795 = vunpack.c.l.b16 %v10754
    %v10796 = vunpack.c.l.b16 %v10755
    %v10797 = vunpack.c.l.b16 %v10756
    %v10798 = vunpack.c.l.b16 %v10757
    %v10799 = vunpack.c.l.b16 %v10758
    %v10800 = vunpack.c.l.b16 %v10759
    %v10801 = vunpack.c.l.b16 %v10760
    %v10802 = vunpack.c.l.b16 %v10761
    %v10803 = vunpack.c.l.b16 %v10762
    %v10804 = vunpack.c.l.b16 %v10763
    %v10805 = vunpack.c.l.b16 %v10764
    %v10806 = vunpack.c.l.b16 %v10765
    %v10807 = vpack.c.b16 %v10792, %v10791
    %v10808 = vpack.c.b16 %v10794, %v10793
    %v10809 = vpack.c.b16 %v10796, %v10795
    %v10810 = vpack.c.b16 %v10798, %v10797
    %v10811 = vpack.c.b16 %v10800, %v10799
    %v10812 = vpack.c.b16 %v10802, %v10801
    %v10813 = vpack.c.b16 %v10804, %v10803
    %v10814 = vpack.c.b16 %v10806, %v10805
    %10823 = vmatprep.subr.bf16.mxu0 0
    %10824 = vmatpush1.bf16.msra.mxu0 %v10807
    %10825 = vmatprep.subr.bf16.mxu0 0
    %10826 = vmatpush1.bf16.msra.mxu0 %v10808
    %10827 = vmatprep.subr.bf16.mxu0 0
    %10828 = vmatpush1.bf16.msra.mxu0 %v10809
    %10829 = vmatprep.subr.bf16.mxu0 0
    %10830 = vmatpush1.bf16.msra.mxu0 %v10810
    %10831 = vmatprep.subr.bf16.mxu0 0
    %10832 = vmatpush1.bf16.msra.mxu0 %v10811
    %10833 = vmatprep.subr.bf16.mxu0 0
    %10834 = vmatpush1.bf16.msra.mxu0 %v10812
    %10835 = vmatprep.subr.bf16.mxu0 0
    %10836 = vmatpush1.bf16.msra.mxu0 %v10813
    %10837 = vmatprep.subr.bf16.mxu0 0
    %10838 = vmatpush1.bf16.msra.mxu0 %v10814
    %10839 = vmatprep.subr.bf16.mxu0 0
    %10840 = vmatpush1.bf16.msra.mxu0 0
    %10841 = vmatprep.subr.bf16.mxu0 0
    %10842 = vmatpush1.bf16.msra.mxu0 0
    %10843 = vmatprep.subr.bf16.mxu0 0
    %10844 = vmatpush1.bf16.msra.mxu0 0
    %10845 = vmatprep.subr.bf16.mxu0 0
    %10846 = vmatpush1.bf16.msra.mxu0 0
    %10847 = vmatprep.subr.bf16.mxu0 0
    %10848 = vmatpush1.bf16.msra.mxu0 0
    %10849 = vmatprep.subr.bf16.mxu0 0
    %10850 = vmatpush1.bf16.msra.mxu0 0
    %10851 = vmatprep.subr.bf16.mxu0 0
    %10852 = vmatpush1.bf16.msra.mxu0 0
    %10853 = vmatprep.subr.bf16.mxu0 0
    %10854 = vmatpush1.bf16.msra.mxu0 0
    %10855 = vmatprep.mubr.bf16.mxu0 0
    %10856 = vmatmul.mubr.bf16.gmra.mrb[0].mxu0 %v9480
    %v10857 = vpop.f32.mrb[0].mxu0
    %v10858 = vadd.f32 0.0, %v10857
    %v10859 = vpop.f32.mrb[0].mxu0
    %v10860 = vpop.f32.mrb[0].mxu0
    %v10861 = vadd.f32 0.0, %v10860
    %v10862 = vpop.f32.mrb[0].mxu0
    %10863 = vmatprep.mubr.bf16.mxu0 0
    %10864 = vmatmul.mubr.bf16.gmra.mrb[0].mxu0 %v9482
    %v10865 = vpop.f32.mrb[0].mxu0
    %v10866 = vadd.f32 0.0, %v10865
    %v10867 = vpop.f32.mrb[0].mxu0
    %v10868 = vpop.f32.mrb[0].mxu0
    %v10869 = vadd.f32 0.0, %v10868
    %v10870 = vpop.f32.mrb[0].mxu0
    %10871 = vmatprep.mubr.bf16.mxu0 0
    %10872 = vmatmul.mubr.bf16.gmra.mrb[0].mxu0 %v9484
    %v10873 = vpop.f32.mrb[0].mxu0
    %v10874 = vadd.f32 0.0, %v10873
    %v10875 = vpop.f32.mrb[0].mxu0
    %v10876 = vpop.f32.mrb[0].mxu0
    %v10877 = vadd.f32 0.0, %v10876
    %v10878 = vpop.f32.mrb[0].mxu0
    %10879 = vmatprep.mubr.bf16.mxu0 0
    %10880 = vmatmul.mubr.bf16.gmra.mrb[0].mxu0 %v9486
    %v10881 = vpop.f32.mrb[0].mxu0
    %v10882 = vadd.f32 0.0, %v10881
    %v10883 = vpop.f32.mrb[0].mxu0
    %v10884 = vpop.f32.mrb[0].mxu0
    %v10885 = vadd.f32 0.0, %v10884
    %v10886 = vpop.f32.mrb[0].mxu0
    %10887 = vmatprep.mubr.bf16.mxu0 0
    %10888 = vmatmul.mubr.bf16.gmra.mrb[0].mxu0 %v9488
    %v10889 = vpop.f32.mrb[0].mxu0
    %v10890 = vadd.f32 0.0, %v10889
    %v10891 = vpop.f32.mrb[0].mxu0
    %v10892 = vpop.f32.mrb[0].mxu0
    %v10893 = vadd.f32 0.0, %v10892
    %v10894 = vpop.f32.mrb[0].mxu0
    %10895 = vmatprep.mubr.bf16.mxu0 0
    %10896 = vmatmul.mubr.bf16.gmra.mrb[0].mxu0 %v10130
    %v10897 = vpop.f32.mrb[0].mxu0
    %v10898 = vadd.f32 0.0, %v10897
    %v10899 = vpop.f32.mrb[0].mxu0
    %v10900 = vpop.f32.mrb[0].mxu0
    %v10901 = vadd.f32 0.0, %v10900
    %v10902 = vpop.f32.mrb[0].mxu0
    %10903 = vmatprep.mubr.bf16.mxu0 0
    %10904 = vmatmul.mubr.bf16.gmra.mrb[0].mxu0 %v10132
    %v10905 = vpop.f32.mrb[0].mxu0
    %v10906 = vadd.f32 0.0, %v10905
    %v10907 = vpop.f32.mrb[0].mxu0
    %v10908 = vpop.f32.mrb[0].mxu0
    %v10909 = vadd.f32 0.0, %v10908
    %v10910 = vpop.f32.mrb[0].mxu0
    %10911 = vmatprep.mubr.bf16.mxu0 0
    %10912 = vmatmul.mubr.bf16.gmra.mrb[0].mxu0 %v10767
    %v10913 = vpop.f32.mrb[0].mxu0
    %v10914 = vadd.f32 0.0, %v10913
    %v10915 = vpop.f32.mrb[0].mxu0
    %v10916 = vpop.f32.mrb[0].mxu0
    %v10917 = vadd.f32 0.0, %v10916
    %v10918 = vpop.f32.mrb[0].mxu0
    %10919 = vmatprep.mubr.bf16.mxu0 0
    %10920 = vmatmul.mubr.bf16.gmra.mrb[0].mxu0 %v10769
    %v10921 = vpop.f32.mrb[0].mxu0
    %v10922 = vadd.f32 0.0, %v10921
    %v10923 = vpop.f32.mrb[0].mxu0
    %v10924 = vpop.f32.mrb[0].mxu0
    %v10925 = vadd.f32 0.0, %v10924
    %v10926 = vpop.f32.mrb[0].mxu0
    %10927 = vmatprep.mubr.bf16.mxu0 0
    %10928 = vmatmul.mubr.bf16.gmra.mrb[0].mxu0 %v10771
    %v10929 = vpop.f32.mrb[0].mxu0
    %v10930 = vadd.f32 0.0, %v10929
    %v10931 = vpop.f32.mrb[0].mxu0
    %v10932 = vpop.f32.mrb[0].mxu0
    %v10933 = vadd.f32 0.0, %v10932
    %v10934 = vpop.f32.mrb[0].mxu0
    %10935 = vdwg.mxu0
    %v10936 = vadd.f32 %v10730, %v10858
    %v10937 = vadd.f32 %v10731, %v10861
    %v10938 = vadd.f32 %v10732, %v10866
    %v10939 = vadd.f32 %v10733, %v10869
    %v10940 = vadd.f32 %v10734, %v10874
    %v10941 = vadd.f32 %v10735, %v10877
    %v10942 = vadd.f32 %v10736, %v10882
    %v10943 = vadd.f32 %v10737, %v10885
    %v10944 = vadd.f32 %v10738, %v10890
    %v10945 = vadd.f32 %v10739, %v10893
    %v10946 = vadd.f32 %v10740, %v10898
    %v10947 = vadd.f32 %v10741, %v10901
    %v10948 = vadd.f32 %v10742, %v10906
    %v10949 = vadd.f32 %v10743, %v10909
    %v10950 = vadd.f32 %v10744, %v10914
    %v10951 = vadd.f32 %v10745, %v10917
    %v10952 = vadd.f32 %v10746, %v10922
    %v10953 = vadd.f32 %v10747, %v10925
    %v10954 = vadd.f32 %v10748, %v10930
    %v10955 = vadd.f32 %v10749, %v10933
    %10956 = vst [vmem:[#allocation7 + $0x280] sm:$0xff] %v10936
    %10957 = vst [vmem:[#allocation7 + $0x288] sm:$0xff] %v10937
    %10958 = vst [vmem:[#allocation7 + $0x290] sm:$0xff] %v10938
    %10959 = vst [vmem:[#allocation7 + $0x298] sm:$0xff] %v10939
    %10960 = vst [vmem:[#allocation7 + $0x2a0] sm:$0xff] %v10940
    %10961 = vst [vmem:[#allocation7 + $0x2a8] sm:$0xff] %v10941
    %10962 = vst [vmem:[#allocation7 + $0x2b0] sm:$0xff] %v10942
    %10963 = vst [vmem:[#allocation7 + $0x2b8] sm:$0xff] %v10943
    %10964 = vst [vmem:[#allocation7 + $0x2c0] sm:$0xff] %v10944
    %10965 = vst [vmem:[#allocation7 + $0x2c8] sm:$0xff] %v10945
    %10966 = vst [vmem:[#allocation7 + $0x2d0] sm:$0xff] %v10946
    %10967 = vst [vmem:[#allocation7 + $0x2d8] sm:$0xff] %v10947
    %10968 = vst [vmem:[#allocation7 + $0x2e0] sm:$0xff] %v10948
    %10969 = vst [vmem:[#allocation7 + $0x2e8] sm:$0xff] %v10949
    %10970 = vst [vmem:[#allocation7 + $0x2f0] sm:$0xff] %v10950
    %10971 = vst [vmem:[#allocation7 + $0x2f8] sm:$0xff] %v10951
    %10972 = vst [vmem:[#allocation7 + $0x300] sm:$0xff] %v10952
    %10973 = vst [vmem:[#allocation7 + $0x308] sm:$0xff] %v10953
    %10974 = vst [vmem:[#allocation7 + $0x310] sm:$0xff] %v10954
    %10975 = vst [vmem:[#allocation7 + $0x318] sm:$0xff] %v10955
    %v10976 = vadd.s32 %v2120, 640
    %v10977 = vadd.s32 %v2121, 640
    %v10978 = vadd.s32 %v2122, 640
    %v10979 = vadd.s32 %v2123, 640
    %v10980 = vadd.s32 %v2124, 640
    %v10981 = vadd.s32 %v2125, 640
    %v10982 = vadd.s32 %v2126, 640
    %v10983 = vadd.s32 %v2127, 640
    %v10984 = vadd.s32 %v2128, 640
    %v10985 = vadd.s32 %v2129, 640
    %v10986 = vadd.s32 %v2130, 640
    %v10987 = vadd.s32 %v2131, 640
    %v10988 = vadd.s32 %v2132, 640
    %v10989 = vadd.s32 %v2133, 640
    %v10990 = vadd.s32 %v2134, 640
    %v10991 = vadd.s32 %v2135, 640
    %v10992 = vadd.s32 %v2136, 640
    %v10993 = vadd.s32 %v2137, 640
    %v10994 = vadd.s32 %v2138, 640
    %v10995 = vadd.s32 %v2139, 640
    %v10996 = vand.u32 %v10976, 31
    %v10997 = vand.u32 %v10977, 31
    %v10998 = vand.u32 %v10978, 31
    %v10999 = vand.u32 %v10979, 31
    %v11000 = vand.u32 %v10980, 31
    %v11001 = vand.u32 %v10981, 31
    %v11002 = vand.u32 %v10982, 31
    %v11003 = vand.u32 %v10983, 31
    %v11004 = vand.u32 %v10984, 31
    %v11005 = vand.u32 %v10985, 31
    %v11006 = vand.u32 %v10986, 31
    %v11007 = vand.u32 %v10987, 31
    %v11008 = vand.u32 %v10988, 31
    %v11009 = vand.u32 %v10989, 31
    %v11010 = vand.u32 %v10990, 31
    %v11011 = vand.u32 %v10991, 31
    %v11012 = vand.u32 %v10992, 31
    %v11013 = vand.u32 %v10993, 31
    %v11014 = vand.u32 %v10994, 31
    %v11015 = vand.u32 %v10995, 31
    %vm11016 = vcmp.lt.s32.totalorder %v10996, 25
    %vm11017 = vcmp.lt.s32.totalorder %v10997, 25
    %vm11018 = vcmp.lt.s32.totalorder %v10998, 25
    %vm11019 = vcmp.lt.s32.totalorder %v10999, 25
    %vm11020 = vcmp.lt.s32.totalorder %v11000, 25
    %vm11021 = vcmp.lt.s32.totalorder %v11001, 25
    %vm11022 = vcmp.lt.s32.totalorder %v11002, 25
    %vm11023 = vcmp.lt.s32.totalorder %v11003, 25
    %vm11024 = vcmp.lt.s32.totalorder %v11004, 25
    %vm11025 = vcmp.lt.s32.totalorder %v11005, 25
    %vm11026 = vcmp.lt.s32.totalorder %v11006, 25
    %vm11027 = vcmp.lt.s32.totalorder %v11007, 25
    %vm11028 = vcmp.lt.s32.totalorder %v11008, 25
    %vm11029 = vcmp.lt.s32.totalorder %v11009, 25
    %vm11030 = vcmp.lt.s32.totalorder %v11010, 25
    %vm11031 = vcmp.lt.s32.totalorder %v11011, 25
    %vm11032 = vcmp.lt.s32.totalorder %v11012, 25
    %vm11033 = vcmp.lt.s32.totalorder %v11013, 25
    %vm11034 = vcmp.lt.s32.totalorder %v11014, 25
    %vm11035 = vcmp.lt.s32.totalorder %v11015, 25
    %v11036 = vsel %vm11016, %v10936, 0.0
    %v11037 = vsel %vm11017, %v10937, 0.0
    %v11038 = vsel %vm11018, %v10938, 0.0
    %v11039 = vsel %vm11019, %v10939, 0.0
    %v11040 = vsel %vm11020, %v10940, 0.0
    %v11041 = vsel %vm11021, %v10941, 0.0
    %v11042 = vsel %vm11022, %v10942, 0.0
    %v11043 = vsel %vm11023, %v10943, 0.0
    %v11044 = vsel %vm11024, %v10944, 0.0
    %v11045 = vsel %vm11025, %v10945, 0.0
    %v11046 = vsel %vm11026, %v10946, 0.0
    %v11047 = vsel %vm11027, %v10947, 0.0
    %v11048 = vsel %vm11028, %v10948, 0.0
    %v11049 = vsel %vm11029, %v10949, 0.0
    %v11050 = vsel %vm11030, %v10950, 0.0
    %v11051 = vsel %vm11031, %v10951, 0.0
    %v11052 = vsel %vm11032, %v10952, 0.0
    %v11053 = vsel %vm11033, %v10953, 0.0
    %v11054 = vsel %vm11034, %v10954, 0.0
    %v11055 = vsel %vm11035, %v10955, 0.0
    %v11056 = vadd.f32 %v11036, %v11037
    %v11057 = vadd.f32 %v11056, %v11038
    %v11058 = vadd.f32 %v11057, %v11039
    %v11059 = vadd.f32 %v11058, %v11040
    %v11060 = vadd.f32 %v11059, %v11041
    %v11061 = vadd.f32 %v11060, %v11042
    %v11062 = vadd.f32 %v11061, %v11043
    %v11063 = vadd.f32 %v11062, %v11044
    %v11064 = vadd.f32 %v11063, %v11045
    %v11065 = vadd.f32 %v11064, %v11046
    %v11066 = vadd.f32 %v11065, %v11047
    %v11067 = vadd.f32 %v11066, %v11048
    %v11068 = vadd.f32 %v11067, %v11049
    %v11069 = vadd.f32 %v11068, %v11050
    %v11070 = vadd.f32 %v11069, %v11051
    %v11071 = vadd.f32 %v11070, %v11052
    %v11072 = vadd.f32 %v11071, %v11053
    %v11073 = vadd.f32 %v11072, %v11054
    %v11074 = vadd.f32 %v11073, %v11055
    %v11075 = vrot.slane %v11074, 4
    %v11076 = vadd.f32 %v11074, %v11075
    %v11077 = vrot.slane %v11076, 2
    %v11078 = vadd.f32 %v11076, %v11077
    %v11079 = vrot.slane %v11078, 1
    %v11080 = vadd.f32 %v11078, %v11079
    %v11081 = vadd.f32 %v8867, %v11080
    %v11082 = vmul.f32 %v11036, %v11036
    %v11083 = vmul.f32 %v11037, %v11037
    %v11084 = vmul.f32 %v11038, %v11038
    %v11085 = vmul.f32 %v11039, %v11039
    %v11086 = vmul.f32 %v11040, %v11040
    %v11087 = vmul.f32 %v11041, %v11041
    %v11088 = vmul.f32 %v11042, %v11042
    %v11089 = vmul.f32 %v11043, %v11043
    %v11090 = vmul.f32 %v11044, %v11044
    %v11091 = vmul.f32 %v11045, %v11045
    %v11092 = vmul.f32 %v11046, %v11046
    %v11093 = vmul.f32 %v11047, %v11047
    %v11094 = vmul.f32 %v11048, %v11048
    %v11095 = vmul.f32 %v11049, %v11049
    %v11096 = vmul.f32 %v11050, %v11050
    %v11097 = vmul.f32 %v11051, %v11051
    %v11098 = vmul.f32 %v11052, %v11052
    %v11099 = vmul.f32 %v11053, %v11053
    %v11100 = vmul.f32 %v11054, %v11054
    %v11101 = vmul.f32 %v11055, %v11055
    %v11102 = vadd.f32 %v11082, %v11083
    %v11103 = vadd.f32 %v11102, %v11084
    %v11104 = vadd.f32 %v11103, %v11085
    %v11105 = vadd.f32 %v11104, %v11086
    %v11106 = vadd.f32 %v11105, %v11087
    %v11107 = vadd.f32 %v11106, %v11088
    %v11108 = vadd.f32 %v11107, %v11089
    %v11109 = vadd.f32 %v11108, %v11090
    %v11110 = vadd.f32 %v11109, %v11091
    %v11111 = vadd.f32 %v11110, %v11092
    %v11112 = vadd.f32 %v11111, %v11093
    %v11113 = vadd.f32 %v11112, %v11094
    %v11114 = vadd.f32 %v11113, %v11095
    %v11115 = vadd.f32 %v11114, %v11096
    %v11116 = vadd.f32 %v11115, %v11097
    %v11117 = vadd.f32 %v11116, %v11098
    %v11118 = vadd.f32 %v11117, %v11099
    %v11119 = vadd.f32 %v11118, %v11100
    %v11120 = vadd.f32 %v11119, %v11101
    %v11121 = vrot.slane %v11120, 4
    %v11122 = vadd.f32 %v11120, %v11121
    %v11123 = vrot.slane %v11122, 2
    %v11124 = vadd.f32 %v11122, %v11123
    %v11125 = vrot.slane %v11124, 1
    %v11126 = vadd.f32 %v11124, %v11125
    %v11127 = vadd.f32 %v8913, %v11126
    %v11128 = vmul.f32 %v11081, 0.0016
    %v11129 = vmul.f32 %v11127, 0.0016
    %v11130 = vmul.f32 %v11128, %v11128
    %v11131 = vsub.f32 %v11129, %v11130
    %v11132 = vadd.f32 %v11131, 0.001
    %v11133 = vrsqrt.pop %v11132
    %v11134 = vld [vmem:[%s2] sm:$0x1]
    %v11135 = vmul.f32 %v11134, %v11133
    %v11136 = vld [vmem:[%s3] sm:$0x1]
    %v11137 = vmul.f32 %v11128, %v11135
    %v11138 = vsub.f32 %v11136, %v11137
    %v11139 = vld [vmem:[#allocation7] sm:$0xff]
    %v11140 = vld [vmem:[#allocation7 + $0x8] sm:$0xff]
    %v11141 = vld [vmem:[#allocation7 + $0x10] sm:$0xff]
    %v11142 = vld [vmem:[#allocation7 + $0x18] sm:$0xff]
    %v11143 = vld [vmem:[#allocation7 + $0x20] sm:$0xff]
    %v11144 = vld [vmem:[#allocation7 + $0x28] sm:$0xff]
    %v11145 = vld [vmem:[#allocation7 + $0x30] sm:$0xff]
    %v11146 = vld [vmem:[#allocation7 + $0x38] sm:$0xff]
    %v11147 = vld [vmem:[#allocation7 + $0x40] sm:$0xff]
    %v11148 = vld [vmem:[#allocation7 + $0x48] sm:$0xff]
    %v11149 = vld [vmem:[#allocation7 + $0x50] sm:$0xff]
    %v11150 = vld [vmem:[#allocation7 + $0x58] sm:$0xff]
    %v11151 = vld [vmem:[#allocation7 + $0x60] sm:$0xff]
    %v11152 = vld [vmem:[#allocation7 + $0x68] sm:$0xff]
    %v11153 = vld [vmem:[#allocation7 + $0x70] sm:$0xff]
    %v11154 = vld [vmem:[#allocation7 + $0x78] sm:$0xff]
    %v11155 = vld [vmem:[#allocation7 + $0x80] sm:$0xff]
    %v11156 = vld [vmem:[#allocation7 + $0x88] sm:$0xff]
    %v11157 = vld [vmem:[#allocation7 + $0x90] sm:$0xff]
    %v11158 = vld [vmem:[#allocation7 + $0x98] sm:$0xff]
    %v11160 = vlaneseq
    %v11161 = vshrl.u32 %v11160, 7
    %v11162 = vsub.s32 0, %v11161
    %v11163 = vrot.slane %v11135, %v11162
    %v11165 = vmul.f32 %v11139, %v11163
    %v11166 = vmul.f32 %v11140, %v11163
    %v11167 = vmul.f32 %v11141, %v11163
    %v11168 = vmul.f32 %v11142, %v11163
    %v11169 = vmul.f32 %v11143, %v11163
    %v11170 = vmul.f32 %v11144, %v11163
    %v11171 = vmul.f32 %v11145, %v11163
    %v11172 = vmul.f32 %v11146, %v11163
    %v11173 = vmul.f32 %v11147, %v11163
    %v11174 = vmul.f32 %v11148, %v11163
    %v11175 = vmul.f32 %v11149, %v11163
    %v11176 = vmul.f32 %v11150, %v11163
    %v11177 = vmul.f32 %v11151, %v11163
    %v11178 = vmul.f32 %v11152, %v11163
    %v11179 = vmul.f32 %v11153, %v11163
    %v11180 = vmul.f32 %v11154, %v11163
    %v11181 = vmul.f32 %v11155, %v11163
    %v11182 = vmul.f32 %v11156, %v11163
    %v11183 = vmul.f32 %v11157, %v11163
    %v11184 = vmul.f32 %v11158, %v11163
    %v11186 = vlaneseq
    %v11187 = vshrl.u32 %v11186, 7
    %v11188 = vsub.s32 0, %v11187
    %v11189 = vrot.slane %v11138, %v11188
    %v11191 = vadd.f32 %v11165, %v11189
    %v11192 = vadd.f32 %v11166, %v11189
    %v11193 = vadd.f32 %v11167, %v11189
    %v11194 = vadd.f32 %v11168, %v11189
    %v11195 = vadd.f32 %v11169, %v11189
    %v11196 = vadd.f32 %v11170, %v11189
    %v11197 = vadd.f32 %v11171, %v11189
    %v11198 = vadd.f32 %v11172, %v11189
    %v11199 = vadd.f32 %v11173, %v11189
    %v11200 = vadd.f32 %v11174, %v11189
    %v11201 = vadd.f32 %v11175, %v11189
    %v11202 = vadd.f32 %v11176, %v11189
    %v11203 = vadd.f32 %v11177, %v11189
    %v11204 = vadd.f32 %v11178, %v11189
    %v11205 = vadd.f32 %v11179, %v11189
    %v11206 = vadd.f32 %v11180, %v11189
    %v11207 = vadd.f32 %v11181, %v11189
    %v11208 = vadd.f32 %v11182, %v11189
    %v11209 = vadd.f32 %v11183, %v11189
    %v11210 = vadd.f32 %v11184, %v11189
    %v11211 = vmax.f32 %v11191, 0.0
    %v11212 = vmax.f32 %v11192, 0.0
    %v11213 = vmax.f32 %v11193, 0.0
    %v11214 = vmax.f32 %v11194, 0.0
    %v11215 = vmax.f32 %v11195, 0.0
    %v11216 = vmax.f32 %v11196, 0.0
    %v11217 = vmax.f32 %v11197, 0.0
    %v11218 = vmax.f32 %v11198, 0.0
    %v11219 = vmax.f32 %v11199, 0.0
    %v11220 = vmax.f32 %v11200, 0.0
    %v11221 = vmax.f32 %v11201, 0.0
    %v11222 = vmax.f32 %v11202, 0.0
    %v11223 = vmax.f32 %v11203, 0.0
    %v11224 = vmax.f32 %v11204, 0.0
    %v11225 = vmax.f32 %v11205, 0.0
    %v11226 = vmax.f32 %v11206, 0.0
    %v11227 = vmax.f32 %v11207, 0.0
    %v11228 = vmax.f32 %v11208, 0.0
    %v11229 = vmax.f32 %v11209, 0.0
    %v11230 = vmax.f32 %v11210, 0.0
    %11231 = vst [vmem:[#allocation7] sm:$0xff] %v11211
    %11232 = vst [vmem:[#allocation7 + $0x8] sm:$0xff] %v11212
    %11233 = vst [vmem:[#allocation7 + $0x10] sm:$0xff] %v11213
    %11234 = vst [vmem:[#allocation7 + $0x18] sm:$0xff] %v11214
    %11235 = vst [vmem:[#allocation7 + $0x20] sm:$0xff] %v11215
    %11236 = vst [vmem:[#allocation7 + $0x28] sm:$0xff] %v11216
    %11237 = vst [vmem:[#allocation7 + $0x30] sm:$0xff] %v11217
    %11238 = vst [vmem:[#allocation7 + $0x38] sm:$0xff] %v11218
    %11239 = vst [vmem:[#allocation7 + $0x40] sm:$0xff] %v11219
    %11240 = vst [vmem:[#allocation7 + $0x48] sm:$0xff] %v11220
    %11241 = vst [vmem:[#allocation7 + $0x50] sm:$0xff] %v11221
    %11242 = vst [vmem:[#allocation7 + $0x58] sm:$0xff] %v11222
    %11243 = vst [vmem:[#allocation7 + $0x60] sm:$0xff] %v11223
    %11244 = vst [vmem:[#allocation7 + $0x68] sm:$0xff] %v11224
    %11245 = vst [vmem:[#allocation7 + $0x70] sm:$0xff] %v11225
    %11246 = vst [vmem:[#allocation7 + $0x78] sm:$0xff] %v11226
    %11247 = vst [vmem:[#allocation7 + $0x80] sm:$0xff] %v11227
    %11248 = vst [vmem:[#allocation7 + $0x88] sm:$0xff] %v11228
    %11249 = vst [vmem:[#allocation7 + $0x90] sm:$0xff] %v11229
    %11250 = vst [vmem:[#allocation7 + $0x98] sm:$0xff] %v11230
    %v11251 = vld [vmem:[#allocation7 + $0xa0] sm:$0xff]
    %v11252 = vld [vmem:[#allocation7 + $0xa8] sm:$0xff]
    %v11253 = vld [vmem:[#allocation7 + $0xb0] sm:$0xff]
    %v11254 = vld [vmem:[#allocation7 + $0xb8] sm:$0xff]
    %v11255 = vld [vmem:[#allocation7 + $0xc0] sm:$0xff]
    %v11256 = vld [vmem:[#allocation7 + $0xc8] sm:$0xff]
    %v11257 = vld [vmem:[#allocation7 + $0xd0] sm:$0xff]
    %v11258 = vld [vmem:[#allocation7 + $0xd8] sm:$0xff]
    %v11259 = vld [vmem:[#allocation7 + $0xe0] sm:$0xff]
    %v11260 = vld [vmem:[#allocation7 + $0xe8] sm:$0xff]
    %v11261 = vld [vmem:[#allocation7 + $0xf0] sm:$0xff]
    %v11262 = vld [vmem:[#allocation7 + $0xf8] sm:$0xff]
    %v11263 = vld [vmem:[#allocation7 + $0x100] sm:$0xff]
    %v11264 = vld [vmem:[#allocation7 + $0x108] sm:$0xff]
    %v11265 = vld [vmem:[#allocation7 + $0x110] sm:$0xff]
    %v11266 = vld [vmem:[#allocation7 + $0x118] sm:$0xff]
    %v11267 = vld [vmem:[#allocation7 + $0x120] sm:$0xff]
    %v11268 = vld [vmem:[#allocation7 + $0x128] sm:$0xff]
    %v11269 = vld [vmem:[#allocation7 + $0x130] sm:$0xff]
    %v11270 = vld [vmem:[#allocation7 + $0x138] sm:$0xff]
    %v11271 = vmul.f32 %v11251, %v11163
    %v11272 = vmul.f32 %v11252, %v11163
    %v11273 = vmul.f32 %v11253, %v11163
    %v11274 = vmul.f32 %v11254, %v11163
    %v11275 = vmul.f32 %v11255, %v11163
    %v11276 = vmul.f32 %v11256, %v11163
    %v11277 = vmul.f32 %v11257, %v11163
    %v11278 = vmul.f32 %v11258, %v11163
    %v11279 = vmul.f32 %v11259, %v11163
    %v11280 = vmul.f32 %v11260, %v11163
    %v11281 = vmul.f32 %v11261, %v11163
    %v11282 = vmul.f32 %v11262, %v11163
    %v11283 = vmul.f32 %v11263, %v11163
    %v11284 = vmul.f32 %v11264, %v11163
    %v11285 = vmul.f32 %v11265, %v11163
    %v11286 = vmul.f32 %v11266, %v11163
    %v11287 = vmul.f32 %v11267, %v11163
    %v11288 = vmul.f32 %v11268, %v11163
    %v11289 = vmul.f32 %v11269, %v11163
    %v11290 = vmul.f32 %v11270, %v11163
    %v11291 = vadd.f32 %v11271, %v11189
    %v11292 = vadd.f32 %v11272, %v11189
    %v11293 = vadd.f32 %v11273, %v11189
    %v11294 = vadd.f32 %v11274, %v11189
    %v11295 = vadd.f32 %v11275, %v11189
    %v11296 = vadd.f32 %v11276, %v11189
    %v11297 = vadd.f32 %v11277, %v11189
    %v11298 = vadd.f32 %v11278, %v11189
    %v11299 = vadd.f32 %v11279, %v11189
    %v11300 = vadd.f32 %v11280, %v11189
    %v11301 = vadd.f32 %v11281, %v11189
    %v11302 = vadd.f32 %v11282, %v11189
    %v11303 = vadd.f32 %v11283, %v11189
    %v11304 = vadd.f32 %v11284, %v11189
    %v11305 = vadd.f32 %v11285, %v11189
    %v11306 = vadd.f32 %v11286, %v11189
    %v11307 = vadd.f32 %v11287, %v11189
    %v11308 = vadd.f32 %v11288, %v11189
    %v11309 = vadd.f32 %v11289, %v11189
    %v11310 = vadd.f32 %v11290, %v11189
    %v11311 = vmax.f32 %v11291, 0.0
    %v11312 = vmax.f32 %v11292, 0.0
    %v11313 = vmax.f32 %v11293, 0.0
    %v11314 = vmax.f32 %v11294, 0.0
    %v11315 = vmax.f32 %v11295, 0.0
    %v11316 = vmax.f32 %v11296, 0.0
    %v11317 = vmax.f32 %v11297, 0.0
    %v11318 = vmax.f32 %v11298, 0.0
    %v11319 = vmax.f32 %v11299, 0.0
    %v11320 = vmax.f32 %v11300, 0.0
    %v11321 = vmax.f32 %v11301, 0.0
    %v11322 = vmax.f32 %v11302, 0.0
    %v11323 = vmax.f32 %v11303, 0.0
    %v11324 = vmax.f32 %v11304, 0.0
    %v11325 = vmax.f32 %v11305, 0.0
    %v11326 = vmax.f32 %v11306, 0.0
    %v11327 = vmax.f32 %v11307, 0.0
    %v11328 = vmax.f32 %v11308, 0.0
    %v11329 = vmax.f32 %v11309, 0.0
    %v11330 = vmax.f32 %v11310, 0.0
    %11331 = vst [vmem:[#allocation7 + $0xa0] sm:$0xff] %v11311
    %11332 = vst [vmem:[#allocation7 + $0xa8] sm:$0xff] %v11312
    %11333 = vst [vmem:[#allocation7 + $0xb0] sm:$0xff] %v11313
    %11334 = vst [vmem:[#allocation7 + $0xb8] sm:$0xff] %v11314
    %11335 = vst [vmem:[#allocation7 + $0xc0] sm:$0xff] %v11315
    %11336 = vst [vmem:[#allocation7 + $0xc8] sm:$0xff] %v11316
    %11337 = vst [vmem:[#allocation7 + $0xd0] sm:$0xff] %v11317
    %11338 = vst [vmem:[#allocation7 + $0xd8] sm:$0xff] %v11318
    %11339 = vst [vmem:[#allocation7 + $0xe0] sm:$0xff] %v11319
    %11340 = vst [vmem:[#allocation7 + $0xe8] sm:$0xff] %v11320
    %11341 = vst [vmem:[#allocation7 + $0xf0] sm:$0xff] %v11321
    %11342 = vst [vmem:[#allocation7 + $0xf8] sm:$0xff] %v11322
    %11343 = vst [vmem:[#allocation7 + $0x100] sm:$0xff] %v11323
    %11344 = vst [vmem:[#allocation7 + $0x108] sm:$0xff] %v11324
    %11345 = vst [vmem:[#allocation7 + $0x110] sm:$0xff] %v11325
    %11346 = vst [vmem:[#allocation7 + $0x118] sm:$0xff] %v11326
    %11347 = vst [vmem:[#allocation7 + $0x120] sm:$0xff] %v11327
    %11348 = vst [vmem:[#allocation7 + $0x128] sm:$0xff] %v11328
    %11349 = vst [vmem:[#allocation7 + $0x130] sm:$0xff] %v11329
    %11350 = vst [vmem:[#allocation7 + $0x138] sm:$0xff] %v11330
    %v11351 = vld [vmem:[#allocation7 + $0x140] sm:$0xff]
    %v11352 = vld [vmem:[#allocation7 + $0x148] sm:$0xff]
    %v11353 = vld [vmem:[#allocation7 + $0x150] sm:$0xff]
    %v11354 = vld [vmem:[#allocation7 + $0x158] sm:$0xff]
    %v11355 = vld [vmem:[#allocation7 + $0x160] sm:$0xff]
    %v11356 = vld [vmem:[#allocation7 + $0x168] sm:$0xff]
    %v11357 = vld [vmem:[#allocation7 + $0x170] sm:$0xff]
    %v11358 = vld [vmem:[#allocation7 + $0x178] sm:$0xff]
    %v11359 = vld [vmem:[#allocation7 + $0x180] sm:$0xff]
    %v11360 = vld [vmem:[#allocation7 + $0x188] sm:$0xff]
    %v11361 = vld [vmem:[#allocation7 + $0x190] sm:$0xff]
    %v11362 = vld [vmem:[#allocation7 + $0x198] sm:$0xff]
    %v11363 = vld [vmem:[#allocation7 + $0x1a0] sm:$0xff]
    %v11364 = vld [vmem:[#allocation7 + $0x1a8] sm:$0xff]
    %v11365 = vld [vmem:[#allocation7 + $0x1b0] sm:$0xff]
    %v11366 = vld [vmem:[#allocation7 + $0x1b8] sm:$0xff]
    %v11367 = vld [vmem:[#allocation7 + $0x1c0] sm:$0xff]
    %v11368 = vld [vmem:[#allocation7 + $0x1c8] sm:$0xff]
    %v11369 = vld [vmem:[#allocation7 + $0x1d0] sm:$0xff]
    %v11370 = vld [vmem:[#allocation7 + $0x1d8] sm:$0xff]
    %v11371 = vmul.f32 %v11351, %v11163
    %v11372 = vmul.f32 %v11352, %v11163
    %v11373 = vmul.f32 %v11353, %v11163
    %v11374 = vmul.f32 %v11354, %v11163
    %v11375 = vmul.f32 %v11355, %v11163
    %v11376 = vmul.f32 %v11356, %v11163
    %v11377 = vmul.f32 %v11357, %v11163
    %v11378 = vmul.f32 %v11358, %v11163
    %v11379 = vmul.f32 %v11359, %v11163
    %v11380 = vmul.f32 %v11360, %v11163
    %v11381 = vmul.f32 %v11361, %v11163
    %v11382 = vmul.f32 %v11362, %v11163
    %v11383 = vmul.f32 %v11363, %v11163
    %v11384 = vmul.f32 %v11364, %v11163
    %v11385 = vmul.f32 %v11365, %v11163
    %v11386 = vmul.f32 %v11366, %v11163
    %v11387 = vmul.f32 %v11367, %v11163
    %v11388 = vmul.f32 %v11368, %v11163
    %v11389 = vmul.f32 %v11369, %v11163
    %v11390 = vmul.f32 %v11370, %v11163
    %v11391 = vadd.f32 %v11371, %v11189
    %v11392 = vadd.f32 %v11372, %v11189
    %v11393 = vadd.f32 %v11373, %v11189
    %v11394 = vadd.f32 %v11374, %v11189
    %v11395 = vadd.f32 %v11375, %v11189
    %v11396 = vadd.f32 %v11376, %v11189
    %v11397 = vadd.f32 %v11377, %v11189
    %v11398 = vadd.f32 %v11378, %v11189
    %v11399 = vadd.f32 %v11379, %v11189
    %v11400 = vadd.f32 %v11380, %v11189
    %v11401 = vadd.f32 %v11381, %v11189
    %v11402 = vadd.f32 %v11382, %v11189
    %v11403 = vadd.f32 %v11383, %v11189
    %v11404 = vadd.f32 %v11384, %v11189
    %v11405 = vadd.f32 %v11385, %v11189
    %v11406 = vadd.f32 %v11386, %v11189
    %v11407 = vadd.f32 %v11387, %v11189
    %v11408 = vadd.f32 %v11388, %v11189
    %v11409 = vadd.f32 %v11389, %v11189
    %v11410 = vadd.f32 %v11390, %v11189
    %v11411 = vmax.f32 %v11391, 0.0
    %v11412 = vmax.f32 %v11392, 0.0
    %v11413 = vmax.f32 %v11393, 0.0
    %v11414 = vmax.f32 %v11394, 0.0
    %v11415 = vmax.f32 %v11395, 0.0
    %v11416 = vmax.f32 %v11396, 0.0
    %v11417 = vmax.f32 %v11397, 0.0
    %v11418 = vmax.f32 %v11398, 0.0
    %v11419 = vmax.f32 %v11399, 0.0
    %v11420 = vmax.f32 %v11400, 0.0
    %v11421 = vmax.f32 %v11401, 0.0
    %v11422 = vmax.f32 %v11402, 0.0
    %v11423 = vmax.f32 %v11403, 0.0
    %v11424 = vmax.f32 %v11404, 0.0
    %v11425 = vmax.f32 %v11405, 0.0
    %v11426 = vmax.f32 %v11406, 0.0
    %v11427 = vmax.f32 %v11407, 0.0
    %v11428 = vmax.f32 %v11408, 0.0
    %v11429 = vmax.f32 %v11409, 0.0
    %v11430 = vmax.f32 %v11410, 0.0
    %11431 = vst [vmem:[#allocation7 + $0x140] sm:$0xff] %v11411
    %11432 = vst [vmem:[#allocation7 + $0x148] sm:$0xff] %v11412
    %11433 = vst [vmem:[#allocation7 + $0x150] sm:$0xff] %v11413
    %11434 = vst [vmem:[#allocation7 + $0x158] sm:$0xff] %v11414
    %11435 = vst [vmem:[#allocation7 + $0x160] sm:$0xff] %v11415
    %11436 = vst [vmem:[#allocation7 + $0x168] sm:$0xff] %v11416
    %11437 = vst [vmem:[#allocation7 + $0x170] sm:$0xff] %v11417
    %11438 = vst [vmem:[#allocation7 + $0x178] sm:$0xff] %v11418
    %11439 = vst [vmem:[#allocation7 + $0x180] sm:$0xff] %v11419
    %11440 = vst [vmem:[#allocation7 + $0x188] sm:$0xff] %v11420
    %11441 = vst [vmem:[#allocation7 + $0x190] sm:$0xff] %v11421
    %11442 = vst [vmem:[#allocation7 + $0x198] sm:$0xff] %v11422
    %11443 = vst [vmem:[#allocation7 + $0x1a0] sm:$0xff] %v11423
    %11444 = vst [vmem:[#allocation7 + $0x1a8] sm:$0xff] %v11424
    %11445 = vst [vmem:[#allocation7 + $0x1b0] sm:$0xff] %v11425
    %11446 = vst [vmem:[#allocation7 + $0x1b8] sm:$0xff] %v11426
    %11447 = vst [vmem:[#allocation7 + $0x1c0] sm:$0xff] %v11427
    %11448 = vst [vmem:[#allocation7 + $0x1c8] sm:$0xff] %v11428
    %11449 = vst [vmem:[#allocation7 + $0x1d0] sm:$0xff] %v11429
    %11450 = vst [vmem:[#allocation7 + $0x1d8] sm:$0xff] %v11430
    %v11451 = vld [vmem:[#allocation7 + $0x1e0] sm:$0xff]
    %v11452 = vld [vmem:[#allocation7 + $0x1e8] sm:$0xff]
    %v11453 = vld [vmem:[#allocation7 + $0x1f0] sm:$0xff]
    %v11454 = vld [vmem:[#allocation7 + $0x1f8] sm:$0xff]
    %v11455 = vld [vmem:[#allocation7 + $0x200] sm:$0xff]
    %v11456 = vld [vmem:[#allocation7 + $0x208] sm:$0xff]
    %v11457 = vld [vmem:[#allocation7 + $0x210] sm:$0xff]
    %v11458 = vld [vmem:[#allocation7 + $0x218] sm:$0xff]
    %v11459 = vld [vmem:[#allocation7 + $0x220] sm:$0xff]
    %v11460 = vld [vmem:[#allocation7 + $0x228] sm:$0xff]
    %v11461 = vld [vmem:[#allocation7 + $0x230] sm:$0xff]
    %v11462 = vld [vmem:[#allocation7 + $0x238] sm:$0xff]
    %v11463 = vld [vmem:[#allocation7 + $0x240] sm:$0xff]
    %v11464 = vld [vmem:[#allocation7 + $0x248] sm:$0xff]
    %v11465 = vld [vmem:[#allocation7 + $0x250] sm:$0xff]
    %v11466 = vld [vmem:[#allocation7 + $0x258] sm:$0xff]
    %v11467 = vld [vmem:[#allocation7 + $0x260] sm:$0xff]
    %v11468 = vld [vmem:[#allocation7 + $0x268] sm:$0xff]
    %v11469 = vld [vmem:[#allocation7 + $0x270] sm:$0xff]
    %v11470 = vld [vmem:[#allocation7 + $0x278] sm:$0xff]
    %v11471 = vmul.f32 %v11451, %v11163
    %v11472 = vmul.f32 %v11452, %v11163
    %v11473 = vmul.f32 %v11453, %v11163
    %v11474 = vmul.f32 %v11454, %v11163
    %v11475 = vmul.f32 %v11455, %v11163
    %v11476 = vmul.f32 %v11456, %v11163
    %v11477 = vmul.f32 %v11457, %v11163
    %v11478 = vmul.f32 %v11458, %v11163
    %v11479 = vmul.f32 %v11459, %v11163
    %v11480 = vmul.f32 %v11460, %v11163
    %v11481 = vmul.f32 %v11461, %v11163
    %v11482 = vmul.f32 %v11462, %v11163
    %v11483 = vmul.f32 %v11463, %v11163
    %v11484 = vmul.f32 %v11464, %v11163
    %v11485 = vmul.f32 %v11465, %v11163
    %v11486 = vmul.f32 %v11466, %v11163
    %v11487 = vmul.f32 %v11467, %v11163
    %v11488 = vmul.f32 %v11468, %v11163
    %v11489 = vmul.f32 %v11469, %v11163
    %v11490 = vmul.f32 %v11470, %v11163
    %v11491 = vadd.f32 %v11471, %v11189
    %v11492 = vadd.f32 %v11472, %v11189
    %v11493 = vadd.f32 %v11473, %v11189
    %v11494 = vadd.f32 %v11474, %v11189
    %v11495 = vadd.f32 %v11475, %v11189
    %v11496 = vadd.f32 %v11476, %v11189
    %v11497 = vadd.f32 %v11477, %v11189
    %v11498 = vadd.f32 %v11478, %v11189
    %v11499 = vadd.f32 %v11479, %v11189
    %v11500 = vadd.f32 %v11480, %v11189
    %v11501 = vadd.f32 %v11481, %v11189
    %v11502 = vadd.f32 %v11482, %v11189
    %v11503 = vadd.f32 %v11483, %v11189
    %v11504 = vadd.f32 %v11484, %v11189
    %v11505 = vadd.f32 %v11485, %v11189
    %v11506 = vadd.f32 %v11486, %v11189
    %v11507 = vadd.f32 %v11487, %v11189
    %v11508 = vadd.f32 %v11488, %v11189
    %v11509 = vadd.f32 %v11489, %v11189
    %v11510 = vadd.f32 %v11490, %v11189
    %v11511 = vmax.f32 %v11491, 0.0
    %v11512 = vmax.f32 %v11492, 0.0
    %v11513 = vmax.f32 %v11493, 0.0
    %v11514 = vmax.f32 %v11494, 0.0
    %v11515 = vmax.f32 %v11495, 0.0
    %v11516 = vmax.f32 %v11496, 0.0
    %v11517 = vmax.f32 %v11497, 0.0
    %v11518 = vmax.f32 %v11498, 0.0
    %v11519 = vmax.f32 %v11499, 0.0
    %v11520 = vmax.f32 %v11500, 0.0
    %v11521 = vmax.f32 %v11501, 0.0
    %v11522 = vmax.f32 %v11502, 0.0
    %v11523 = vmax.f32 %v11503, 0.0
    %v11524 = vmax.f32 %v11504, 0.0
    %v11525 = vmax.f32 %v11505, 0.0
    %v11526 = vmax.f32 %v11506, 0.0
    %v11527 = vmax.f32 %v11507, 0.0
    %v11528 = vmax.f32 %v11508, 0.0
    %v11529 = vmax.f32 %v11509, 0.0
    %v11530 = vmax.f32 %v11510, 0.0
    %11531 = vst [vmem:[#allocation7 + $0x1e0] sm:$0xff] %v11511
    %11532 = vst [vmem:[#allocation7 + $0x1e8] sm:$0xff] %v11512
    %11533 = vst [vmem:[#allocation7 + $0x1f0] sm:$0xff] %v11513
    %11534 = vst [vmem:[#allocation7 + $0x1f8] sm:$0xff] %v11514
    %11535 = vst [vmem:[#allocation7 + $0x200] sm:$0xff] %v11515
    %11536 = vst [vmem:[#allocation7 + $0x208] sm:$0xff] %v11516
    %11537 = vst [vmem:[#allocation7 + $0x210] sm:$0xff] %v11517
    %11538 = vst [vmem:[#allocation7 + $0x218] sm:$0xff] %v11518
    %11539 = vst [vmem:[#allocation7 + $0x220] sm:$0xff] %v11519
    %11540 = vst [vmem:[#allocation7 + $0x228] sm:$0xff] %v11520
    %11541 = vst [vmem:[#allocation7 + $0x230] sm:$0xff] %v11521
    %11542 = vst [vmem:[#allocation7 + $0x238] sm:$0xff] %v11522
    %11543 = vst [vmem:[#allocation7 + $0x240] sm:$0xff] %v11523
    %11544 = vst [vmem:[#allocation7 + $0x248] sm:$0xff] %v11524
    %11545 = vst [vmem:[#allocation7 + $0x250] sm:$0xff] %v11525
    %11546 = vst [vmem:[#allocation7 + $0x258] sm:$0xff] %v11526
    %11547 = vst [vmem:[#allocation7 + $0x260] sm:$0xff] %v11527
    %11548 = vst [vmem:[#allocation7 + $0x268] sm:$0xff] %v11528
    %11549 = vst [vmem:[#allocation7 + $0x270] sm:$0xff] %v11529
    %11550 = vst [vmem:[#allocation7 + $0x278] sm:$0xff] %v11530
    %v11551 = vld [vmem:[#allocation7 + $0x280] sm:$0xff]
    %v11552 = vld [vmem:[#allocation7 + $0x288] sm:$0xff]
    %v11553 = vld [vmem:[#allocation7 + $0x290] sm:$0xff]
    %v11554 = vld [vmem:[#allocation7 + $0x298] sm:$0xff]
    %v11555 = vld [vmem:[#allocation7 + $0x2a0] sm:$0xff]
    %v11556 = vld [vmem:[#allocation7 + $0x2a8] sm:$0xff]
    %v11557 = vld [vmem:[#allocation7 + $0x2b0] sm:$0xff]
    %v11558 = vld [vmem:[#allocation7 + $0x2b8] sm:$0xff]
    %v11559 = vld [vmem:[#allocation7 + $0x2c0] sm:$0xff]
    %v11560 = vld [vmem:[#allocation7 + $0x2c8] sm:$0xff]
    %v11561 = vld [vmem:[#allocation7 + $0x2d0] sm:$0xff]
    %v11562 = vld [vmem:[#allocation7 + $0x2d8] sm:$0xff]
    %v11563 = vld [vmem:[#allocation7 + $0x2e0] sm:$0xff]
    %v11564 = vld [vmem:[#allocation7 + $0x2e8] sm:$0xff]
    %v11565 = vld [vmem:[#allocation7 + $0x2f0] sm:$0xff]
    %v11566 = vld [vmem:[#allocation7 + $0x2f8] sm:$0xff]
    %v11567 = vld [vmem:[#allocation7 + $0x300] sm:$0xff]
    %v11568 = vld [vmem:[#allocation7 + $0x308] sm:$0xff]
    %v11569 = vld [vmem:[#allocation7 + $0x310] sm:$0xff]
    %v11570 = vld [vmem:[#allocation7 + $0x318] sm:$0xff]
    %v11571 = vmul.f32 %v11551, %v11163
    %v11572 = vmul.f32 %v11552, %v11163
    %v11573 = vmul.f32 %v11553, %v11163
    %v11574 = vmul.f32 %v11554, %v11163
    %v11575 = vmul.f32 %v11555, %v11163
    %v11576 = vmul.f32 %v11556, %v11163
    %v11577 = vmul.f32 %v11557, %v11163
    %v11578 = vmul.f32 %v11558, %v11163
    %v11579 = vmul.f32 %v11559, %v11163
    %v11580 = vmul.f32 %v11560, %v11163
    %v11581 = vmul.f32 %v11561, %v11163
    %v11582 = vmul.f32 %v11562, %v11163
    %v11583 = vmul.f32 %v11563, %v11163
    %v11584 = vmul.f32 %v11564, %v11163
    %v11585 = vmul.f32 %v11565, %v11163
    %v11586 = vmul.f32 %v11566, %v11163
    %v11587 = vmul.f32 %v11567, %v11163
    %v11588 = vmul.f32 %v11568, %v11163
    %v11589 = vmul.f32 %v11569, %v11163
    %v11590 = vmul.f32 %v11570, %v11163
    %v11591 = vadd.f32 %v11571, %v11189
    %v11592 = vadd.f32 %v11572, %v11189
    %v11593 = vadd.f32 %v11573, %v11189
    %v11594 = vadd.f32 %v11574, %v11189
    %v11595 = vadd.f32 %v11575, %v11189
    %v11596 = vadd.f32 %v11576, %v11189
    %v11597 = vadd.f32 %v11577, %v11189
    %v11598 = vadd.f32 %v11578, %v11189
    %v11599 = vadd.f32 %v11579, %v11189
    %v11600 = vadd.f32 %v11580, %v11189
    %v11601 = vadd.f32 %v11581, %v11189
    %v11602 = vadd.f32 %v11582, %v11189
    %v11603 = vadd.f32 %v11583, %v11189
    %v11604 = vadd.f32 %v11584, %v11189
    %v11605 = vadd.f32 %v11585, %v11189
    %v11606 = vadd.f32 %v11586, %v11189
    %v11607 = vadd.f32 %v11587, %v11189
    %v11608 = vadd.f32 %v11588, %v11189
    %v11609 = vadd.f32 %v11589, %v11189
    %v11610 = vadd.f32 %v11590, %v11189
    %v11611 = vmax.f32 %v11591, 0.0
    %v11612 = vmax.f32 %v11592, 0.0
    %v11613 = vmax.f32 %v11593, 0.0
    %v11614 = vmax.f32 %v11594, 0.0
    %v11615 = vmax.f32 %v11595, 0.0
    %v11616 = vmax.f32 %v11596, 0.0
    %v11617 = vmax.f32 %v11597, 0.0
    %v11618 = vmax.f32 %v11598, 0.0
    %v11619 = vmax.f32 %v11599, 0.0
    %v11620 = vmax.f32 %v11600, 0.0
    %v11621 = vmax.f32 %v11601, 0.0
    %v11622 = vmax.f32 %v11602, 0.0
    %v11623 = vmax.f32 %v11603, 0.0
    %v11624 = vmax.f32 %v11604, 0.0
    %v11625 = vmax.f32 %v11605, 0.0
    %v11626 = vmax.f32 %v11606, 0.0
    %v11627 = vmax.f32 %v11607, 0.0
    %v11628 = vmax.f32 %v11608, 0.0
    %v11629 = vmax.f32 %v11609, 0.0
    %v11630 = vmax.f32 %v11610, 0.0
    %11631 = vst [vmem:[#allocation7 + $0x280] sm:$0xff] %v11611
    %11632 = vst [vmem:[#allocation7 + $0x288] sm:$0xff] %v11612
    %11633 = vst [vmem:[#allocation7 + $0x290] sm:$0xff] %v11613
    %11634 = vst [vmem:[#allocation7 + $0x298] sm:$0xff] %v11614
    %11635 = vst [vmem:[#allocation7 + $0x2a0] sm:$0xff] %v11615
    %11636 = vst [vmem:[#allocation7 + $0x2a8] sm:$0xff] %v11616
    %11637 = vst [vmem:[#allocation7 + $0x2b0] sm:$0xff] %v11617
    %11638 = vst [vmem:[#allocation7 + $0x2b8] sm:$0xff] %v11618
    %11639 = vst [vmem:[#allocation7 + $0x2c0] sm:$0xff] %v11619
    %11640 = vst [vmem:[#allocation7 + $0x2c8] sm:$0xff] %v11620
    %11641 = vst [vmem:[#allocation7 + $0x2d0] sm:$0xff] %v11621
    %11642 = vst [vmem:[#allocation7 + $0x2d8] sm:$0xff] %v11622
    %11643 = vst [vmem:[#allocation7 + $0x2e0] sm:$0xff] %v11623
    %11644 = vst [vmem:[#allocation7 + $0x2e8] sm:$0xff] %v11624
    %11645 = vst [vmem:[#allocation7 + $0x2f0] sm:$0xff] %v11625
    %11646 = vst [vmem:[#allocation7 + $0x2f8] sm:$0xff] %v11626
    %11647 = vst [vmem:[#allocation7 + $0x300] sm:$0xff] %v11627
    %11648 = vst [vmem:[#allocation7 + $0x308] sm:$0xff] %v11628
    %11649 = vst [vmem:[#allocation7 + $0x310] sm:$0xff] %v11629
    %11650 = vst [vmem:[#allocation7 + $0x318] sm:$0xff] %v11630
    // Predicated region
    $region26: #{tpu_custom_call.1} parent=1 // pred_check
      _
    $region27: #{tpu_custom_call.1} parent=1 // pred_check_branch
      %11652 = sbr.rel (0) target = $region29
    $region28: #{tpu_custom_call.1} parent=1 // pred_region
      %s11654 = ssub.s32 12800, 12800
      %11655 = vsyncadd [#allocation4], %s11654
      %s11656 = sshll.u32 [#allocation7], 4
      %s11657 = int_to_ptr.vmem [resolvable:$true] %s11656
      %11662 = dma.vmem_to_hbm [thread:$0]  %s11657, 12800, %s4, [#allocation4], 128, 128, 8
    $region29: #{tpu_custom_call.1} parent=1 // pred_fallthru
      _
    // Predicated region
    $region30: #{tpu_custom_call.1} parent=1 // pred_check
      _
    $region31: #{tpu_custom_call.1} parent=1 // pred_check_branch
      %11664 = sbr.rel (0) target = $region33
    $region32: #{tpu_custom_call.1} parent=1 // pred_region
      %11665 = dma.done [#allocation4], 12800
    $region33: #{tpu_custom_call.1} parent=1 // pred_fallthru
      _
    %11666 = vsyncpa [#allocation3], 1
    %11667 = vsyncpa [#allocation6], 1
    %11668 = vsyncpa [#allocation4], 1

</llo_original>
